<compile_context>
chip_gen: v6e
topology: v6e:2x2x1
jax: 0.10.0
libtpu: 0.0.40
codegen_flags: <defaults>
</compile_context>

<pallas_src>
import functools
import math

import numpy as np
import jax
import jax.numpy as jnp
from jax import lax
from jax.experimental import pallas as pl
from jax.experimental.pallas import tpu as pltpu

_F32 = jnp.float32
_PAR1 = pltpu.CompilerParams(dimension_semantics=("parallel",))


# ----------------------------------------------------------------------------
# Constant matrices (moving-average decomposition & circular shift), built once
# at trace time and fed to the kernels so that decomp / circular conv run on
# the MXU instead of shifted-slice VPU loops.
# ----------------------------------------------------------------------------

def decomp_matrix(L, k):
    """A such that (A @ x)[t] == Autoformer moving_avg trend (edge replication)."""
    pad = (k - 1) // 2
    A = np.zeros((L, L), np.float32)
    for t in range(L):
        for i in range(k):
            j = min(max(t + i - pad, 0), L - 1)
            A[t, j] += 1.0 / k
    return jnp.asarray(A)


def shift_matrices(L):
    """Circular shift permutations: (Rp@x)[t]=x[t-1], (Rn@x)[t]=x[t+1]."""
    Rp = np.zeros((L, L), np.float32)
    Rn = np.zeros((L, L), np.float32)
    for t in range(L):
        Rp[t, (t - 1) % L] = 1.0
        Rn[t, (t + 1) % L] = 1.0
    return jnp.asarray(Rp), jnp.asarray(Rn)


# ----------------------------------------------------------------------------
# In-kernel helpers (operate on VMEM-resident values)
# ----------------------------------------------------------------------------

def _mha(q, k, v, wo, bo, n_heads, dh, D):
    """Multi-head softmax attention.  q:(Lq,D) k,v:(Lk,D); scale folded into wq.
    TODO(synk): MixSelf/MixCrossAttention Fourier-domain mixing not provided;
    standard softmax attention is used as the inner attention."""
    Lq = q.shape[0]
    acc = jnp.zeros((Lq, D), _F32)
    for h in range(n_heads):
        lo, hi = h * dh, (h + 1) * dh
        qh = q[:, lo:hi]
        kh = k[:, lo:hi]
        vh = v[:, lo:hi]
        s = jnp.dot(qh, kh.T, preferred_element_type=_F32)
        s = s - jnp.max(s, axis=-1, keepdims=True)
        p = jnp.exp(s)
        p = p * pl.reciprocal(jnp.sum(p, axis=-1, keepdims=True), approx=True)
        oh = jnp.dot(p, vh, preferred_element_type=_F32)
        # output projection folded per-head: concat(o_h) @ wo == sum_h o_h @ wo[h]
        acc = acc + jnp.dot(oh, wo[lo:hi, :], preferred_element_type=_F32)
    return acc + bo


def _ffn(x, w1, b1, w2, b2):
    y = jnp.dot(x, w1, preferred_element_type=_F32) + b1
    y = jax.nn.gelu(y)
    return jnp.dot(y, w2, preferred_element_type=_F32) + b2


def _ln(x, g, b, eps=1e-5):
    mu = jnp.mean(x, axis=-1, keepdims=True)
    var = jnp.mean((x - mu) ** 2, axis=-1, keepdims=True)
    return (x - mu) * lax.rsqrt(var + eps) * g + b


# ----------------------------------------------------------------------------
# Pallas kernels (one per structural block; grid=(B,), everything VMEM-resident)
# ----------------------------------------------------------------------------

def _decomp_kernel(x_ref, A_ref, seas_ref, trend_ref):
    x = x_ref[0].astype(_F32)
    t = jnp.dot(A_ref[...], x, preferred_element_type=_F32)   # moving-average on MXU
    seas_ref[0] = (x - t).astype(seas_ref.dtype)
    trend_ref[0] = t.astype(trend_ref.dtype)


def _emb_kernel(x_ref, mark_ref, tf_ref, rp_ref, rn_ref,
                wtp_ref, wtc_ref, wtn_ref, wmark_ref, bmark_ref, wtf_ref, btf_ref,
                emb_ref, embtf_ref):
    """DataEmbedding_wo_pos: token conv (circular k=3) + time-feature linear +
    time-frequency linear.  TODO(synk): exact internals unknown; streams are
    combined additively."""
    x = x_ref[0].astype(_F32)
    mark = mark_ref[0].astype(_F32)
    tfin = tf_ref[0].astype(_F32)
    x_prev = jnp.dot(rp_ref[...], x, preferred_element_type=_F32)   # circular shifts on MXU
    x_next = jnp.dot(rn_ref[...], x, preferred_element_type=_F32)
    val = (jnp.dot(x_prev, wtp_ref[...], preferred_element_type=_F32)
           + jnp.dot(x, wtc_ref[...], preferred_element_type=_F32)
           + jnp.dot(x_next, wtn_ref[...], preferred_element_type=_F32))
    temp = jnp.dot(mark, wmark_ref[...], preferred_element_type=_F32) + bmark_ref[...]
    tf = jnp.dot(tfin, wtf_ref[...], preferred_element_type=_F32) + btf_ref[...]
    emb_ref[0] = (val + temp).astype(emb_ref.dtype)
    embtf_ref[0] = (tf + temp).astype(embtf_ref.dtype)


def _enc_layer_kernel(x_ref, xtf_ref, A_ref,
                      wqkv_ref, bqkv_ref, wo_ref, bo_ref,
                      w1_ref, b1_ref, w2_ref, b2_ref,
                      o_ref, *, n_heads, dh, D):
    x = x_ref[0].astype(_F32)
    A = A_ref[...]
    # TODO(synk): additive merge of time / freq streams before attention.
    xa = x + xtf_ref[0].astype(_F32)
    qkv = jnp.dot(xa, wqkv_ref[...], preferred_element_type=_F32) + bqkv_ref[...]
    x = x + _mha(qkv[:, :D], qkv[:, D:2 * D], qkv[:, 2 * D:3 * D],
                 wo_ref[...], bo_ref[...], n_heads, dh, D)
    x = x - jnp.dot(A, x, preferred_element_type=_F32)          # decomp1 -> seasonal
    y = _ffn(x, w1_ref[...], b1_ref[...], w2_ref[...], b2_ref[...])
    xy = x + y
    o_ref[0] = (xy - jnp.dot(A, xy, preferred_element_type=_F32)).astype(o_ref.dtype)


def _dec_layer_kernel(x_ref, xtf_ref, cross_ref, A_ref, rp_ref, rn_ref,
                      wqkv_ref, bqkv_ref, wos_ref, bos_ref,
                      wqc_ref, bqc_ref, wkvc_ref, bkvc_ref, woc_ref, boc_ref,
                      w1_ref, b1_ref, w2_ref, b2_ref,
                      wtp_ref, wtc_ref, wtn_ref,
                      xo_ref, tro_ref, *, n_heads, dh, D):
    x = x_ref[0].astype(_F32)
    cross = cross_ref[0].astype(_F32)
    A = A_ref[...]

    # self-attention  (TODO(synk): no causal mask — MixSelfAttention body unknown)
    xa = x + xtf_ref[0].astype(_F32)
    qkv = jnp.dot(xa, wqkv_ref[...], preferred_element_type=_F32) + bqkv_ref[...]
    x = x + _mha(qkv[:, :D], qkv[:, D:2 * D], qkv[:, 2 * D:3 * D],
                 wos_ref[...], bos_ref[...], n_heads, dh, D)
    t1 = jnp.dot(A, x, preferred_element_type=_F32)
    x = x - t1

    # cross-attention
    q = jnp.dot(x, wqc_ref[...], preferred_element_type=_F32) + bqc_ref[...]
    kv = jnp.dot(cross, wkvc_ref[...], preferred_element_type=_F32) + bkvc_ref[...]
    x = x + _mha(q, kv[:, :D], kv[:, D:2 * D],
                 woc_ref[...], boc_ref[...], n_heads, dh, D)
    t2 = jnp.dot(A, x, preferred_element_type=_F32)
    x = x - t2

    # FFN + decomp3
    y = _ffn(x, w1_ref[...], b1_ref[...], w2_ref[...], b2_ref[...])
    xy = x + y
    t3 = jnp.dot(A, xy, preferred_element_type=_F32)
    x = xy - t3

    # residual trend projection: Conv1d(d_model->c_out, k=3, circular, no bias),
    # output padded to a 128-lane slab (sliced to c_out in the wrapper).
    trend = t1 + t2 + t3
    tr_prev = jnp.dot(rp_ref[...], trend, preferred_element_type=_F32)
    tr_next = jnp.dot(rn_ref[...], trend, preferred_element_type=_F32)
    tr_out = (jnp.dot(tr_prev, wtp_ref[...], preferred_element_type=_F32)
              + jnp.dot(trend, wtc_ref[...], preferred_element_type=_F32)
              + jnp.dot(tr_next, wtn_ref[...], preferred_element_type=_F32))

    xo_ref[0] = x.astype(xo_ref.dtype)
    tro_ref[0] = tr_out.astype(tro_ref.dtype)


def _mylayernorm_kernel(x_ref, g_ref, b_ref, o_ref, *, eps=1e-5):
    """my_Layernorm: LN over channels then subtract the per-channel time mean."""
    x = x_ref[0].astype(_F32)
    xh = _ln(x, g_ref[...], b_ref[...], eps)
    o_ref[0] = (xh - jnp.mean(xh, axis=0, keepdims=True)).astype(o_ref.dtype)


def _dec_final_kernel(x_ref, g_ref, b_ref, wp_ref, bp_ref, o_ref, *, eps=1e-5):
    """Decoder my_Layernorm fused with the final Linear(d_model -> c_out_padded)."""
    x = x_ref[0].astype(_F32)
    xh = _ln(x, g_ref[...], b_ref[...], eps)
    xh = xh - jnp.mean(xh, axis=0, keepdims=True)
    y = jnp.dot(xh, wp_ref[...], preferred_element_type=_F32) + bp_ref[...]
    o_ref[0] = y.astype(o_ref.dtype)


# ----------------------------------------------------------------------------
# pallas_call wrappers
# ----------------------------------------------------------------------------

def pallas_decomp(x, A):
    B, L, C = x.shape
    sd = jax.ShapeDtypeStruct((B, L, C), x.dtype)
    return pl.pallas_call(
        _decomp_kernel,
        out_shape=(sd, sd),
        grid=(B,),
        in_specs=[pl.BlockSpec((1, L, C), lambda i: (i, 0, 0)),
                  pl.BlockSpec((L, L), lambda i: (0, 0))],
        out_specs=(pl.BlockSpec((1, L, C), lambda i: (i, 0, 0)),
                   pl.BlockSpec((1, L, C), lambda i: (i, 0, 0))),
        compiler_params=_PAR1,
    )(x, A)


def embedding_call(p, x, tf_in, x_mark, Rp, Rn, d_model):
    B, L, Cin = x.shape
    md = x_mark.shape[-1]
    F2 = tf_in.shape[-1]
    D = d_model
    sd = jax.ShapeDtypeStruct((B, L, D), x.dtype)
    return pl.pallas_call(
        _emb_kernel,
        out_shape=(sd, sd),
        grid=(B,),
        in_specs=[pl.BlockSpec((1, L, Cin), lambda i: (i, 0, 0)),
                  pl.BlockSpec((1, L, md), lambda i: (i, 0, 0)),
                  pl.BlockSpec((1, L, F2), lambda i: (i, 0, 0)),
                  pl.BlockSpec((L, L), lambda i: (0, 0)),
                  pl.BlockSpec((L, L), lambda i: (0, 0)),
                  pl.BlockSpec((Cin, D), lambda i: (0, 0)),
                  pl.BlockSpec((Cin, D), lambda i: (0, 0)),
                  pl.BlockSpec((Cin, D), lambda i: (0, 0)),
                  pl.BlockSpec((md, D), lambda i: (0, 0)),
                  pl.BlockSpec((1, D), lambda i: (0, 0)),
                  pl.BlockSpec((F2, D), lambda i: (0, 0)),
                  pl.BlockSpec((1, D), lambda i: (0, 0))],
        out_specs=(pl.BlockSpec((1, L, D), lambda i: (i, 0, 0)),
                   pl.BlockSpec((1, L, D), lambda i: (i, 0, 0))),
        compiler_params=_PAR1,
    )(x, x_mark, tf_in, Rp, Rn,
      p["w_tok_prev"], p["w_tok_cur"], p["w_tok_next"],
      p["w_mark"], p["b_mark"], p["w_tf"], p["b_tf"])


def encoder_layer_call(lp, x, x_tf, A, cfg):
    B, L, D = x.shape
    dff = cfg["d_ff"]
    H = cfg["n_heads"]
    dh = D // H
    a = lp["attn"]
    kernel = functools.partial(_enc_layer_kernel, n_heads=H, dh=dh, D=D)
    return pl.pallas_call(
        kernel,
        out_shape=jax.ShapeDtypeStruct((B, L, D), x.dtype),
        grid=(B,),
        in_specs=[pl.BlockSpec((1, L, D), lambda i: (i, 0, 0)),
                  pl.BlockSpec((1, L, D), lambda i: (i, 0, 0)),
                  pl.BlockSpec((L, L), lambda i: (0, 0)),
                  pl.BlockSpec((D, 3 * D), lambda i: (0, 0)),
                  pl.BlockSpec((1, 3 * D), lambda i: (0, 0)),
                  pl.BlockSpec((D, D), lambda i: (0, 0)),
                  pl.BlockSpec((1, D), lambda i: (0, 0)),
                  pl.BlockSpec((D, dff), lambda i: (0, 0)),
                  pl.BlockSpec((1, dff), lambda i: (0, 0)),
                  pl.BlockSpec((dff, D), lambda i: (0, 0)),
                  pl.BlockSpec((1, D), lambda i: (0, 0))],
        out_specs=pl.BlockSpec((1, L, D), lambda i: (i, 0, 0)),
        compiler_params=_PAR1,
    )(x, x_tf, A, a["wqkv"], a["bqkv"], a["wo"], a["bo"],
      lp["w1"], lp["b1"], lp["w2"], lp["b2"])


def decoder_layer_call(lp, x, x_tf, cross, A, Rp, Rn, cfg):
    B, Ld, D = x.shape
    Le = cross.shape[1]
    dff = cfg["d_ff"]
    H = cfg["n_heads"]
    dh = D // H
    CP = lp["wt_cur"].shape[1]
    s, c = lp["self"], lp["cross"]
    kernel = functools.partial(_dec_layer_kernel, n_heads=H, dh=dh, D=D)
    return pl.pallas_call(
        kernel,
        out_shape=(jax.ShapeDtypeStruct((B, Ld, D), x.dtype),
                   jax.ShapeDtypeStruct((B, Ld, CP), x.dtype)),
        grid=(B,),
        in_specs=[pl.BlockSpec((1, Ld, D), lambda i: (i, 0, 0)),
                  pl.BlockSpec((1, Ld, D), lambda i: (i, 0, 0)),
                  pl.BlockSpec((1, Le, D), lambda i: (i, 0, 0)),
                  pl.BlockSpec((Ld, Ld), lambda i: (0, 0)),
                  pl.BlockSpec((Ld, Ld), lambda i: (0, 0)),
                  pl.BlockSpec((Ld, Ld), lambda i: (0, 0)),
                  pl.BlockSpec((D, 3 * D), lambda i: (0, 0)),
                  pl.BlockSpec((1, 3 * D), lambda i: (0, 0)),
                  pl.BlockSpec((D, D), lambda i: (0, 0)),
                  pl.BlockSpec((1, D), lambda i: (0, 0)),
                  pl.BlockSpec((D, D), lambda i: (0, 0)),
                  pl.BlockSpec((1, D), lambda i: (0, 0)),
                  pl.BlockSpec((D, 2 * D), lambda i: (0, 0)),
                  pl.BlockSpec((1, 2 * D), lambda i: (0, 0)),
                  pl.BlockSpec((D, D), lambda i: (0, 0)),
                  pl.BlockSpec((1, D), lambda i: (0, 0)),
                  pl.BlockSpec((D, dff), lambda i: (0, 0)),
                  pl.BlockSpec((1, dff), lambda i: (0, 0)),
                  pl.BlockSpec((dff, D), lambda i: (0, 0)),
                  pl.BlockSpec((1, D), lambda i: (0, 0)),
                  pl.BlockSpec((D, CP), lambda i: (0, 0)),
                  pl.BlockSpec((D, CP), lambda i: (0, 0)),
                  pl.BlockSpec((D, CP), lambda i: (0, 0))],
        out_specs=(pl.BlockSpec((1, Ld, D), lambda i: (i, 0, 0)),
                   pl.BlockSpec((1, Ld, CP), lambda i: (i, 0, 0))),
        compiler_params=_PAR1,
    )(x, x_tf, cross, A, Rp, Rn,
      s["wqkv"], s["bqkv"], s["wo"], s["bo"],
      c["wq"], c["bq"], c["wkv"], c["bkv"], c["wo"], c["bo"],
      lp["w1"], lp["b1"], lp["w2"], lp["b2"],
      lp["wt_prev"], lp["wt_cur"], lp["wt_next"])


def pallas_mylayernorm(x, g, b):
    B, L, D = x.shape
    return pl.pallas_call(
        _mylayernorm_kernel,
        out_shape=jax.ShapeDtypeStruct((B, L, D), x.dtype),
        grid=(B,),
        in_specs=[pl.BlockSpec((1, L, D), lambda i: (i, 0, 0)),
                  pl.BlockSpec((1, D), lambda i: (0, 0)),
                  pl.BlockSpec((1, D), lambda i: (0, 0))],
        out_specs=pl.BlockSpec((1, L, D), lambda i: (i, 0, 0)),
        compiler_params=_PAR1,
    )(x, g, b)


def decoder_final_call(x, g, b, w_proj, b_proj):
    B, L, D = x.shape
    CP = w_proj.shape[1]
    return pl.pallas_call(
        _dec_final_kernel,
        out_shape=jax.ShapeDtypeStruct((B, L, CP), x.dtype),
        grid=(B,),
        in_specs=[pl.BlockSpec((1, L, D), lambda i: (i, 0, 0)),
                  pl.BlockSpec((1, D), lambda i: (0, 0)),
                  pl.BlockSpec((1, D), lambda i: (0, 0)),
                  pl.BlockSpec((D, CP), lambda i: (0, 0)),
                  pl.BlockSpec((1, CP), lambda i: (0, 0))],
        out_specs=pl.BlockSpec((1, L, CP), lambda i: (i, 0, 0)),
        compiler_params=_PAR1,
    )(x, g, b, w_proj, b_proj)


# ----------------------------------------------------------------------------
# JAX glue
# ----------------------------------------------------------------------------

def timefreqfeatures(x, samp_freq, num_freq):
    # TODO(synk): original timefreqfeatures() definition not provided; use a
    # per-timestep sinusoidal (Goertzel-style) projection onto num_freq bins.
    B, L, C = x.shape
    t = jnp.arange(L, dtype=_F32)
    f = jnp.arange(1, num_freq + 1, dtype=_F32) * samp_freq
    ang = 2.0 * jnp.pi * t[:, None] * f[None, :] / L          # (L, F)
    xs = jnp.sum(x, axis=-1)                                   # (B, L)
    re = xs[:, :, None] * jnp.cos(ang)[None]
    im = -xs[:, :, None] * jnp.sin(ang)[None]
    amp = jnp.sqrt(re * re + im * im + 1e-12)
    pha = jnp.arctan2(im, re)
    return f, amp, pha


def forward(params, x_enc, x_mark_enc, x_dec, x_mark_dec, cfg):
    del x_dec  # only its shape is used in the reference model (unused zeros)
    pred_len, label_len = cfg["pred_len"], cfg["label_len"]
    c_out = cfg["c_out"]
    D = cfg["d_model"]
    _, L_enc, _ = x_enc.shape
    L_dec = label_len + pred_len
    k = cfg["moving_avg"]

    A_enc = decomp_matrix(L_enc, k)
    A_dec = decomp_matrix(L_dec, k)
    Rp_e, Rn_e = shift_matrices(L_enc)
    Rp_d, Rn_d = shift_matrices(L_dec)

    mean = jnp.repeat(jnp.mean(x_enc, axis=1, keepdims=True), pred_len, axis=1)
    seasonal_init, trend_init = pallas_decomp(x_enc, A_enc)
    trend_init = jnp.concatenate([trend_init[:, -label_len:, :], mean], axis=1)

    _, x_enc_amp, x_enc_pha = timefreqfeatures(x_enc, cfg["samp_freq"], cfg["num_freq"])
    _, x_dec_amp, x_dec_pha = timefreqfeatures(seasonal_init, cfg["samp_freq"], cfg["num_freq"])

    pad_t = ((0, 0), (0, pred_len), (0, 0))
    x_dec_amp = jnp.pad(x_dec_amp[:, -label_len:, :], pad_t)
    x_dec_pha = jnp.pad(x_dec_pha[:, -label_len:, :], pad_t)
    seasonal_dec = jnp.pad(seasonal_init[:, -label_len:, :], pad_t)

    # ---------------- encoder ----------------
    enc_out, enc_out_tf = embedding_call(
        params["enc_emb"], x_enc,
        jnp.concatenate([x_enc_amp, x_enc_pha], axis=-1), x_mark_enc, Rp_e, Rn_e, D)
    for lp in params["encoder"]["layers"]:
        enc_out = encoder_layer_call(lp, enc_out, enc_out_tf, A_enc, cfg)
    enc_out = pallas_mylayernorm(enc_out, params["encoder"]["norm_g"],
                                 params["encoder"]["norm_b"])

    # ---------------- decoder ----------------
    dec_out, dec_out_tf = embedding_call(
        params["dec_emb"], seasonal_dec,
        jnp.concatenate([x_dec_amp, x_dec_pha], axis=-1), x_mark_dec, Rp_d, Rn_d, D)
    trend = trend_init
    for lp in params["decoder"]["layers"]:
        dec_out, rt = decoder_layer_call(lp, dec_out, dec_out_tf, enc_out,
                                         A_dec, Rp_d, Rn_d, cfg)
        trend = trend + rt[:, :, :c_out]        # slice the 128-lane padded slab
    seasonal_part = decoder_final_call(
        dec_out, params["decoder"]["norm_g"], params["decoder"]["norm_b"],
        params["decoder"]["w_proj"], params["decoder"]["b_proj"])[:, :, :c_out]

    out = trend + seasonal_part
    return out[:, -pred_len:, :]


# ----------------------------------------------------------------------------
# Deterministic parameter init (QKV fused, attention scale folded into wq,
# c_out projections zero-padded to a 128-lane slab for full vst stores)
# ----------------------------------------------------------------------------

def _dense(key, shape, scale=0.02):
    return scale * jax.random.normal(key, shape, _F32)


def init_params(key, cfg):
    D, dff, H = cfg["d_model"], cfg["d_ff"], cfg["n_heads"]
    dh = D // H
    att_scale = 1.0 / math.sqrt(dh)
    nf, md, c_out = cfg["num_freq"], cfg["mark_dim"], cfg["c_out"]
    CP = max(128, ((c_out + 127) // 128) * 128)
    keys = iter(jax.random.split(key, 256))

    def attn_self():
        wq, wk, wv, wo = (_dense(next(keys), (D, D)) for _ in range(4))
        return dict(wqkv=jnp.concatenate([wq * att_scale, wk, wv], axis=1),
                    bqkv=jnp.zeros((1, 3 * D), _F32),
                    wo=wo, bo=jnp.zeros((1, D), _F32))

    def attn_cross():
        wq, wk, wv, wo = (_dense(next(keys), (D, D)) for _ in range(4))
        return dict(wq=wq * att_scale, bq=jnp.zeros((1, D), _F32),
                    wkv=jnp.concatenate([wk, wv], axis=1),
                    bkv=jnp.zeros((1, 2 * D), _F32),
                    wo=wo, bo=jnp.zeros((1, D), _F32))

    def emb(cin):
        return dict(w_tok_prev=_dense(next(keys), (cin, D)),
                    w_tok_cur=_dense(next(keys), (cin, D)),
                    w_tok_next=_dense(next(keys), (cin, D)),
                    w_mark=_dense(next(keys), (md, D)),
                    b_mark=jnp.zeros((1, D), _F32),
                    w_tf=_dense(next(keys), (2 * nf, D)),
                    b_tf=jnp.zeros((1, D), _F32))

    def pad_cols(w):
        return jnp.zeros((w.shape[0], CP), _F32).at[:, :w.shape[1]].set(w)

    enc_layers = [dict(attn=attn_self(),
                       w1=_dense(next(keys), (D, dff)), b1=jnp.zeros((1, dff), _F32),
                       w2=_dense(next(keys), (dff, D)), b2=jnp.zeros((1, D), _F32))
                  for _ in range(cfg["e_layers"])]

    dec_layers = [dict(self=attn_self(), cross=attn_cross(),
                       w1=_dense(next(keys), (D, dff)), b1=jnp.zeros((1, dff), _F32),
                       w2=_dense(next(keys), (dff, D)), b2=jnp.zeros((1, D), _F32),
                       wt_prev=pad_cols(_dense(next(keys), (D, c_out))),
                       wt_cur=pad_cols(_dense(next(keys), (D, c_out))),
                       wt_next=pad_cols(_dense(next(keys), (D, c_out))))
                  for _ in range(cfg["d_layers"])]

    return dict(
        enc_emb=emb(cfg["enc_in"]),
        dec_emb=emb(cfg["dec_in"]),
        encoder=dict(layers=enc_layers,
                     norm_g=jnp.ones((1, D), _F32), norm_b=jnp.zeros((1, D), _F32)),
        decoder=dict(layers=dec_layers,
                     norm_g=jnp.ones((1, D), _F32), norm_b=jnp.zeros((1, D), _F32),
                     w_proj=pad_cols(_dense(next(keys), (D, c_out))),
                     b_proj=jnp.zeros((1, CP), _F32)))


# ----------------------------------------------------------------------------
# Main
# ----------------------------------------------------------------------------

if __name__ == "__main__":
    cfg = dict(seq_len=16, label_len=8, pred_len=8,
               enc_in=4, dec_in=4, c_out=4,
               d_model=32, n_heads=4, d_ff=64,
               e_layers=1, d_layers=1,
               moving_avg=5, num_freq=4, samp_freq=1.0, mark_dim=4)

    params = init_params(jax.random.PRNGKey(0), cfg)

    k1, k2, k3, k4 = jax.random.split(jax.random.PRNGKey(0), 4)
    x_enc = jax.random.normal(k1, (2, cfg["seq_len"], cfg["enc_in"]), _F32)
    x_mark_enc = jax.random.normal(k2, (2, cfg["seq_len"], cfg["mark_dim"]), _F32)
    dec_len = cfg["label_len"] + cfg["pred_len"]
    x_dec = jax.random.normal(k3, (2, dec_len, cfg["dec_in"]), _F32)
    x_mark_dec = jax.random.normal(k4, (2, dec_len, cfg["mark_dim"]), _F32)

    fwd = jax.jit(functools.partial(forward, cfg=cfg))
    out = fwd(params, x_enc, x_mark_enc, x_dec, x_mark_dec)
    out = jax.block_until_ready(out)
    assert out.shape == (2, cfg["pred_len"], cfg["c_out"]), out.shape
    assert bool(jnp.all(jnp.isfinite(out)))
    print("KERNEL_OK")
</pallas_src>

<mosaic_0001>
module attributes {stable_mosaic.version = 11 : i64} {
  func.func @_decomp_kernel(%arg0: i32, %arg1: memref<1x16x4xf32, #tpu.memory_space<vmem>>, %arg2: memref<16x16xf32, #tpu.memory_space<vmem>>, %arg3: memref<1x16x4xf32, #tpu.memory_space<vmem>>, %arg4: memref<1x16x4xf32, #tpu.memory_space<vmem>>) attributes {dimension_semantics = [#tpu.dimension_semantics<parallel>], iteration_bounds = array<i64: 2>, scalar_prefetch = 0 : i64, scratch_operands = 0 : i64, tpu.core_type = #tpu.core_type<tc>, window_params = [{transform_indices = @transform_0, window_bounds = array<i64: 1, 16, 4>}, {pipeline_mode = #tpu.pipeline_mode<synchronous>, transform_indices = @transform_1, window_bounds = array<i64: 16, 16>}, {transform_indices = @transform_2, window_bounds = array<i64: 1, 16, 4>}, {transform_indices = @transform_3, window_bounds = array<i64: 1, 16, 4>}]} {
    %c0 = arith.constant 0 : index
    %c0_0 = arith.constant 0 : index
    %c0_1 = arith.constant 0 : index
    %0 = vector.load %arg1[%c0, %c0_0, %c0_1] : memref<1x16x4xf32, #tpu.memory_space<vmem>>, vector<1x16x4xf32>
    %1 = vector.shape_cast %0 : vector<1x16x4xf32> to vector<16x4xf32>
    %c0_2 = arith.constant 0 : index
    %c0_3 = arith.constant 0 : index
    %2 = vector.load %arg2[%c0_2, %c0_3] : memref<16x16xf32, #tpu.memory_space<vmem>>, vector<16x16xf32>
    %cst = arith.constant dense<0.000000e+00> : vector<16x4xf32>
    %3 = tpu.matmul %2, %1, %cst {dimension_numbers = #tpu.dot_dimension_numbers<[1], [0], [0], [1], [0, 0, 1, 1], [], []>} : vector<16x16xf32>, vector<16x4xf32>, vector<16x4xf32> -> vector<16x4xf32>
    %4 = arith.subf %1, %3 : vector<16x4xf32>
    %c0_4 = arith.constant 0 : index
    %c0_5 = arith.constant 0 : index
    %c0_6 = arith.constant 0 : index
    %5 = vector.load %arg3[%c0_4, %c0_5, %c0_6] : memref<1x16x4xf32, #tpu.memory_space<vmem>>, vector<1x16x4xf32>
    %6 = vector.shape_cast %5 : vector<1x16x4xf32> to vector<16x4xf32>
    %7 = vector.shape_cast %4 : vector<16x4xf32> to vector<1x16x4xf32>
    tpu.vector_store %arg3[%c0_4, %c0_5, %c0_6], %7 {strides = array<i32>} : memref<1x16x4xf32, #tpu.memory_space<vmem>>, vector<1x16x4xf32>,
    %c0_7 = arith.constant 0 : index
    %c0_8 = arith.constant 0 : index
    %c0_9 = arith.constant 0 : index
    %8 = vector.load %arg4[%c0_7, %c0_8, %c0_9] : memref<1x16x4xf32, #tpu.memory_space<vmem>>, vector<1x16x4xf32>
    %9 = vector.shape_cast %8 : vector<1x16x4xf32> to vector<16x4xf32>
    %10 = vector.shape_cast %3 : vector<16x4xf32> to vector<1x16x4xf32>
    tpu.vector_store %arg4[%c0_7, %c0_8, %c0_9], %10 {strides = array<i32>} : memref<1x16x4xf32, #tpu.memory_space<vmem>>, vector<1x16x4xf32>,
    return
  }
  func.func @transform_0(%arg0: i32) -> (i32, i32, i32) {
    %c0_i32 = arith.constant 0 : i32
    %c0_i32_0 = arith.constant 0 : i32
    %c0_i32_1 = arith.constant 0 : i32
    return %arg0, %c0_i32, %c0_i32_0 : i32, i32, i32
  }
  func.func @transform_1(%arg0: i32) -> (i32, i32) {
    %c0_i32 = arith.constant 0 : i32
    %c0_i32_0 = arith.constant 0 : i32
    %c0_i32_1 = arith.constant 0 : i32
    return %c0_i32, %c0_i32_0 : i32, i32
  }
  func.func @transform_2(%arg0: i32) -> (i32, i32, i32) {
    %c0_i32 = arith.constant 0 : i32
    %c0_i32_0 = arith.constant 0 : i32
    %c0_i32_1 = arith.constant 0 : i32
    return %arg0, %c0_i32, %c0_i32_0 : i32, i32, i32
  }
  func.func @transform_3(%arg0: i32) -> (i32, i32, i32) {
    %c0_i32 = arith.constant 0 : i32
    %c0_i32_0 = arith.constant 0 : i32
    %c0_i32_1 = arith.constant 0 : i32
    return %arg0, %c0_i32, %c0_i32_0 : i32, i32, i32
  }
}

module attributes {stable_mosaic.version = 11 : i64} {
  func.func @_emb_kernel(%arg0: i32, %arg1: memref<1x16x4xf32, #tpu.memory_space<vmem>>, %arg2: memref<1x16x4xf32, #tpu.memory_space<vmem>>, %arg3: memref<1x16x8xf32, #tpu.memory_space<vmem>>, %arg4: memref<16x16xf32, #tpu.memory_space<vmem>>, %arg5: memref<16x16xf32, #tpu.memory_space<vmem>>, %arg6: memref<4x32xf32, #tpu.memory_space<vmem>>, %arg7: memref<4x32xf32, #tpu.memory_space<vmem>>, %arg8: memref<4x32xf32, #tpu.memory_space<vmem>>, %arg9: memref<4x32xf32, #tpu.memory_space<vmem>>, %arg10: memref<1x32xf32, #tpu.memory_space<vmem>>, %arg11: memref<8x32xf32, #tpu.memory_space<vmem>>, %arg12: memref<1x32xf32, #tpu.memory_space<vmem>>, %arg13: memref<1x16x32xf32, #tpu.memory_space<vmem>>, %arg14: memref<1x16x32xf32, #tpu.memory_space<vmem>>) attributes {dimension_semantics = [#tpu.dimension_semantics<parallel>], iteration_bounds = array<i64: 2>, scalar_prefetch = 0 : i64, scratch_operands = 0 : i64, tpu.core_type = #tpu.core_type<tc>, window_params = [{transform_indices = @transform_0, window_bounds = array<i64: 1, 16, 4>}, {transform_indices = @transform_1, window_bounds = array<i64: 1, 16, 4>}, {transform_indices = @transform_2, window_bounds = array<i64: 1, 16, 8>}, {pipeline_mode = #tpu.pipeline_mode<synchronous>, transform_indices = @transform_3, window_bounds = array<i64: 16, 16>}, {pipeline_mode = #tpu.pipeline_mode<synchronous>, transform_indices = @transform_4, window_bounds = array<i64: 16, 16>}, {pipeline_mode = #tpu.pipeline_mode<synchronous>, transform_indices = @transform_5, window_bounds = array<i64: 4, 32>}, {pipeline_mode = #tpu.pipeline_mode<synchronous>, transform_indices = @transform_6, window_bounds = array<i64: 4, 32>}, {pipeline_mode = #tpu.pipeline_mode<synchronous>, transform_indices = @transform_7, window_bounds = array<i64: 4, 32>}, {pipeline_mode = #tpu.pipeline_mode<synchronous>, transform_indices = @transform_8, window_bounds = array<i64: 4, 32>}, {pipeline_mode = #tpu.pipeline_mode<synchronous>, transform_indices = @transform_9, window_bounds = array<i64: 1, 32>}, {pipeline_mode = #tpu.pipeline_mode<synchronous>, transform_indices = @transform_10, window_bounds = array<i64: 8, 32>}, {pipeline_mode = #tpu.pipeline_mode<synchronous>, transform_indices = @transform_11, window_bounds = array<i64: 1, 32>}, {transform_indices = @transform_12, window_bounds = array<i64: 1, 16, 32>}, {transform_indices = @transform_13, window_bounds = array<i64: 1, 16, 32>}]} {
    %c0 = arith.constant 0 : index
    %c0_0 = arith.constant 0 : index
    %c0_1 = arith.constant 0 : index
    %0 = vector.load %arg1[%c0, %c0_0, %c0_1] : memref<1x16x4xf32, #tpu.memory_space<vmem>>, vector<1x16x4xf32>
    %1 = vector.shape_cast %0 : vector<1x16x4xf32> to vector<16x4xf32>
    %c0_2 = arith.constant 0 : index
    %c0_3 = arith.constant 0 : index
    %c0_4 = arith.constant 0 : index
    %2 = vector.load %arg2[%c0_2, %c0_3, %c0_4] : memref<1x16x4xf32, #tpu.memory_space<vmem>>, vector<1x16x4xf32>
    %3 = vector.shape_cast %2 : vector<1x16x4xf32> to vector<16x4xf32>
    %c0_5 = arith.constant 0 : index
    %c0_6 = arith.constant 0 : index
    %c0_7 = arith.constant 0 : index
    %4 = vector.load %arg3[%c0_5, %c0_6, %c0_7] : memref<1x16x8xf32, #tpu.memory_space<vmem>>, vector<1x16x8xf32>
    %5 = vector.shape_cast %4 : vector<1x16x8xf32> to vector<16x8xf32>
    %c0_8 = arith.constant 0 : index
    %c0_9 = arith.constant 0 : index
    %6 = vector.load %arg4[%c0_8, %c0_9] : memref<16x16xf32, #tpu.memory_space<vmem>>, vector<16x16xf32>
    %cst = arith.constant dense<0.000000e+00> : vector<16x4xf32>
    %7 = tpu.matmul %6, %1, %cst {dimension_numbers = #tpu.dot_dimension_numbers<[1], [0], [0], [1], [0, 0, 1, 1], [], []>} : vector<16x16xf32>, vector<16x4xf32>, vector<16x4xf32> -> vector<16x4xf32>
    %c0_10 = arith.constant 0 : index
    %c0_11 = arith.constant 0 : index
    %8 = vector.load %arg5[%c0_10, %c0_11] : memref<16x16xf32, #tpu.memory_space<vmem>>, vector<16x16xf32>
    %cst_12 = arith.constant dense<0.000000e+00> : vector<16x4xf32>
    %9 = tpu.matmul %8, %1, %cst_12 {dimension_numbers = #tpu.dot_dimension_numbers<[1], [0], [0], [1], [0, 0, 1, 1], [], []>} : vector<16x16xf32>, vector<16x4xf32>, vector<16x4xf32> -> vector<16x4xf32>
    %c0_13 = arith.constant 0 : index
    %c0_14 = arith.constant 0 : index
    %10 = vector.load %arg6[%c0_13, %c0_14] : memref<4x32xf32, #tpu.memory_space<vmem>>, vector<4x32xf32>
    %cst_15 = arith.constant dense<0.000000e+00> : vector<16x32xf32>
    %11 = tpu.matmul %7, %10, %cst_15 {dimension_numbers = #tpu.dot_dimension_numbers<[1], [0], [0], [1], [0, 0, 1, 1], [], []>} : vector<16x4xf32>, vector<4x32xf32>, vector<16x32xf32> -> vector<16x32xf32>
    %c0_16 = arith.constant 0 : index
    %c0_17 = arith.constant 0 : index
    %12 = vector.load %arg7[%c0_16, %c0_17] : memref<4x32xf32, #tpu.memory_space<vmem>>, vector<4x32xf32>
    %cst_18 = arith.constant dense<0.000000e+00> : vector<16x32xf32>
    %13 = tpu.matmul %1, %12, %cst_18 {dimension_numbers = #tpu.dot_dimension_numbers<[1], [0], [0], [1], [0, 0, 1, 1], [], []>} : vector<16x4xf32>, vector<4x32xf32>, vector<16x32xf32> -> vector<16x32xf32>
    %14 = arith.addf %11, %13 : vector<16x32xf32>
    %c0_19 = arith.constant 0 : index
    %c0_20 = arith.constant 0 : index
    %15 = vector.load %arg8[%c0_19, %c0_20] : memref<4x32xf32, #tpu.memory_space<vmem>>, vector<4x32xf32>
    %cst_21 = arith.constant dense<0.000000e+00> : vector<16x32xf32>
    %16 = tpu.matmul %9, %15, %cst_21 {dimension_numbers = #tpu.dot_dimension_numbers<[1], [0], [0], [1], [0, 0, 1, 1], [], []>} : vector<16x4xf32>, vector<4x32xf32>, vector<16x32xf32> -> vector<16x32xf32>
    %17 = arith.addf %14, %16 : vector<16x32xf32>
    %c0_22 = arith.constant 0 : index
    %c0_23 = arith.constant 0 : index
    %18 = vector.load %arg9[%c0_22, %c0_23] : memref<4x32xf32, #tpu.memory_space<vmem>>, vector<4x32xf32>
    %cst_24 = arith.constant dense<0.000000e+00> : vector<16x32xf32>
    %19 = tpu.matmul %3, %18, %cst_24 {dimension_numbers = #tpu.dot_dimension_numbers<[1], [0], [0], [1], [0, 0, 1, 1], [], []>} : vector<16x4xf32>, vector<4x32xf32>, vector<16x32xf32> -> vector<16x32xf32>
    %c0_25 = arith.constant 0 : index
    %c0_26 = arith.constant 0 : index
    %20 = vector.load %arg10[%c0_25, %c0_26] : memref<1x32xf32, #tpu.memory_space<vmem>>, vector<1x32xf32>
    %21 = vector.broadcast %20 : vector<1x32xf32> to vector<16x32xf32>
    %22 = arith.addf %19, %21 : vector<16x32xf32>
    %c0_27 = arith.constant 0 : index
    %c0_28 = arith.constant 0 : index
    %23 = vector.load %arg11[%c0_27, %c0_28] : memref<8x32xf32, #tpu.memory_space<vmem>>, vector<8x32xf32>
    %cst_29 = arith.constant dense<0.000000e+00> : vector<16x32xf32>
    %24 = tpu.matmul %5, %23, %cst_29 {dimension_numbers = #tpu.dot_dimension_numbers<[1], [0], [0], [1], [0, 0, 1, 1], [], []>} : vector<16x8xf32>, vector<8x32xf32>, vector<16x32xf32> -> vector<16x32xf32>
    %c0_30 = arith.constant 0 : index
    %c0_31 = arith.constant 0 : index
    %25 = vector.load %arg12[%c0_30, %c0_31] : memref<1x32xf32, #tpu.memory_space<vmem>>, vector<1x32xf32>
    %26 = vector.broadcast %25 : vector<1x32xf32> to vector<16x32xf32>
    %27 = arith.addf %24, %26 : vector<16x32xf32>
    %28 = arith.addf %17, %22 : vector<16x32xf32>
    %c0_32 = arith.constant 0 : index
    %c0_33 = arith.constant 0 : index
    %c0_34 = arith.constant 0 : index
    %29 = vector.load %arg13[%c0_32, %c0_33, %c0_34] : memref<1x16x32xf32, #tpu.memory_space<vmem>>, vector<1x16x32xf32>
    %30 = vector.shape_cast %29 : vector<1x16x32xf32> to vector<16x32xf32>
    %31 = vector.shape_cast %28 : vector<16x32xf32> to vector<1x16x32xf32>
    tpu.vector_store %arg13[%c0_32, %c0_33, %c0_34], %31 {strides = array<i32>} : memref<1x16x32xf32, #tpu.memory_space<vmem>>, vector<1x16x32xf32>,
    %32 = arith.addf %27, %22 : vector<16x32xf32>
    %c0_35 = arith.constant 0 : index
    %c0_36 = arith.constant 0 : index
    %c0_37 = arith.constant 0 : index
    %33 = vector.load %arg14[%c0_35, %c0_36, %c0_37] : memref<1x16x32xf32, #tpu.memory_space<vmem>>, vector<1x16x32xf32>
    %34 = vector.shape_cast %33 : vector<1x16x32xf32> to vector<16x32xf32>
    %35 = vector.shape_cast %32 : vector<16x32xf32> to vector<1x16x32xf32>
    tpu.vector_store %arg14[%c0_35, %c0_36, %c0_37], %35 {strides = array<i32>} : memref<1x16x32xf32, #tpu.memory_space<vmem>>, vector<1x16x32xf32>,
    return
  }
  func.func @transform_0(%arg0: i32) -> (i32, i32, i32) {
    %c0_i32 = arith.constant 0 : i32
    %c0_i32_0 = arith.constant 0 : i32
    %c0_i32_1 = arith.constant 0 : i32
    return %arg0, %c0_i32, %c0_i32_0 : i32, i32, i32
  }
  func.func @transform_1(%arg0: i32) -> (i32, i32, i32) {
    %c0_i32 = arith.constant 0 : i32
    %c0_i32_0 = arith.constant 0 : i32
    %c0_i32_1 = arith.constant 0 : i32
    return %arg0, %c0_i32, %c0_i32_0 : i32, i32, i32
  }
  func.func @transform_2(%arg0: i32) -> (i32, i32, i32) {
    %c0_i32 = arith.constant 0 : i32
    %c0_i32_0 = arith.constant 0 : i32
    %c0_i32_1 = arith.constant 0 : i32
    return %arg0, %c0_i32, %c0_i32_0 : i32, i32, i32
  }
  func.func @transform_3(%arg0: i32) -> (i32, i32) {
    %c0_i32 = arith.constant 0 : i32
    %c0_i32_0 = arith.constant 0 : i32
    %c0_i32_1 = arith.constant 0 : i32
    return %c0_i32, %c0_i32_0 : i32, i32
  }
  func.func @transform_4(%arg0: i32) -> (i32, i32) {
    %c0_i32 = arith.constant 0 : i32
    %c0_i32_0 = arith.constant 0 : i32
    %c0_i32_1 = arith.constant 0 : i32
    return %c0_i32, %c0_i32_0 : i32, i32
  }
  func.func @transform_5(%arg0: i32) -> (i32, i32) {
    %c0_i32 = arith.constant 0 : i32
    %c0_i32_0 = arith.constant 0 : i32
    %c0_i32_1 = arith.constant 0 : i32
    return %c0_i32, %c0_i32_0 : i32, i32
  }
  func.func @transform_6(%arg0: i32) -> (i32, i32) {
    %c0_i32 = arith.constant 0 : i32
    %c0_i32_0 = arith.constant 0 : i32
    %c0_i32_1 = arith.constant 0 : i32
    return %c0_i32, %c0_i32_0 : i32, i32
  }
  func.func @transform_7(%arg0: i32) -> (i32, i32) {
    %c0_i32 = arith.constant 0 : i32
    %c0_i32_0 = arith.constant 0 : i32
    %c0_i32_1 = arith.constant 0 : i32
    return %c0_i32, %c0_i32_0 : i32, i32
  }
  func.func @transform_8(%arg0: i32) -> (i32, i32) {
    %c0_i32 = arith.constant 0 : i32
    %c0_i32_0 = arith.constant 0 : i32
    %c0_i32_1 = arith.constant 0 : i32
    return %c0_i32, %c0_i32_0 : i32, i32
  }
  func.func @transform_9(%arg0: i32) -> (i32, i32) {
    %c0_i32 = arith.constant 0 : i32
    %c0_i32_0 = arith.constant 0 : i32
    %c0_i32_1 = arith.constant 0 : i32
    return %c0_i32, %c0_i32_0 : i32, i32
  }
  func.func @transform_10(%arg0: i32) -> (i32, i32) {
    %c0_i32 = arith.constant 0 : i32
    %c0_i32_0 = arith.constant 0 : i32
    %c0_i32_1 = arith.constant 0 : i32
    return %c0_i32, %c0_i32_0 : i32, i32
  }
  func.func @transform_11(%arg0: i32) -> (i32, i32) {
    %c0_i32 = arith.constant 0 : i32
    %c0_i32_0 = arith.constant 0 : i32
    %c0_i32_1 = arith.constant 0 : i32
    return %c0_i32, %c0_i32_0 : i32, i32
  }
  func.func @transform_12(%arg0: i32) -> (i32, i32, i32) {
    %c0_i32 = arith.constant 0 : i32
    %c0_i32_0 = arith.constant 0 : i32
    %c0_i32_1 = arith.constant 0 : i32
    return %arg0, %c0_i32, %c0_i32_0 : i32, i32, i32
  }
  func.func @transform_13(%arg0: i32) -> (i32, i32, i32) {
    %c0_i32 = arith.constant 0 : i32
    %c0_i32_0 = arith.constant 0 : i32
    %c0_i32_1 = arith.constant 0 : i32
    return %arg0, %c0_i32, %c0_i32_0 : i32, i32, i32
  }
}

module attributes {stable_mosaic.version = 11 : i64} {
  func.func @_mylayernorm_kernel(%arg0: i32, %arg1: memref<1x16x32xf32, #tpu.memory_space<vmem>>, %arg2: memref<1x32xf32, #tpu.memory_space<vmem>>, %arg3: memref<1x32xf32, #tpu.memory_space<vmem>>, %arg4: memref<1x16x32xf32, #tpu.memory_space<vmem>>) attributes {dimension_semantics = [#tpu.dimension_semantics<parallel>], iteration_bounds = array<i64: 2>, scalar_prefetch = 0 : i64, scratch_operands = 0 : i64, tpu.core_type = #tpu.core_type<tc>, window_params = [{transform_indices = @transform_0, window_bounds = array<i64: 1, 16, 32>}, {pipeline_mode = #tpu.pipeline_mode<synchronous>, transform_indices = @transform_1, window_bounds = array<i64: 1, 32>}, {pipeline_mode = #tpu.pipeline_mode<synchronous>, transform_indices = @transform_2, window_bounds = array<i64: 1, 32>}, {transform_indices = @transform_3, window_bounds = array<i64: 1, 16, 32>}]} {
    %c0 = arith.constant 0 : index
    %c0_0 = arith.constant 0 : index
    %c0_1 = arith.constant 0 : index
    %0 = vector.load %arg1[%c0, %c0_0, %c0_1] : memref<1x16x32xf32, #tpu.memory_space<vmem>>, vector<1x16x32xf32>
    %1 = vector.shape_cast %0 : vector<1x16x32xf32> to vector<16x32xf32>
    %c0_2 = arith.constant 0 : index
    %c0_3 = arith.constant 0 : index
    %2 = vector.load %arg2[%c0_2, %c0_3] : memref<1x32xf32, #tpu.memory_space<vmem>>, vector<1x32xf32>
    %c0_4 = arith.constant 0 : index
    %c0_5 = arith.constant 0 : index
    %3 = vector.load %arg3[%c0_4, %c0_5] : memref<1x32xf32, #tpu.memory_space<vmem>>, vector<1x32xf32>
    %cst = arith.constant dense<0.000000e+00> : vector<16xf32>
    %4 = vector.multi_reduction <add>, %1, %cst [1] : vector<16x32xf32> to vector<16xf32>
    %5 = vector.shape_cast %4 : vector<16xf32> to vector<16x1xf32>
    %cst_6 = arith.constant 3.200000e+01 : f32
    %6 = vector.broadcast %cst_6 : f32 to vector<16x1xf32>
    %7 = arith.divf %5, %6 : vector<16x1xf32>
    %8 = vector.broadcast %7 : vector<16x1xf32> to vector<16x32xf32>
    %9 = arith.subf %1, %8 : vector<16x32xf32>
    %10 = arith.mulf %9, %9 : vector<16x32xf32>
    %cst_7 = arith.constant dense<0.000000e+00> : vector<16xf32>
    %11 = vector.multi_reduction <add>, %10, %cst_7 [1] : vector<16x32xf32> to vector<16xf32>
    %12 = vector.shape_cast %11 : vector<16xf32> to vector<16x1xf32>
    %cst_8 = arith.constant 3.200000e+01 : f32
    %13 = vector.broadcast %cst_8 : f32 to vector<16x1xf32>
    %14 = arith.divf %12, %13 : vector<16x1xf32>
    %15 = vector.broadcast %7 : vector<16x1xf32> to vector<16x32xf32>
    %16 = arith.subf %1, %15 : vector<16x32xf32>
    %cst_9 = arith.constant 9.99999974E-6 : f32
    %17 = vector.broadcast %cst_9 : f32 to vector<16x1xf32>
    %18 = arith.addf %14, %17 : vector<16x1xf32>
    %19 = math.rsqrt %18 : vector<16x1xf32>
    %20 = vector.broadcast %19 : vector<16x1xf32> to vector<16x32xf32>
    %21 = arith.mulf %16, %20 : vector<16x32xf32>
    %22 = vector.broadcast %2 : vector<1x32xf32> to vector<16x32xf32>
    %23 = arith.mulf %21, %22 : vector<16x32xf32>
    %24 = vector.broadcast %3 : vector<1x32xf32> to vector<16x32xf32>
    %25 = arith.addf %23, %24 : vector<16x32xf32>
    %cst_10 = arith.constant dense<0.000000e+00> : vector<32xf32>
    %26 = vector.multi_reduction <add>, %25, %cst_10 [0] : vector<16x32xf32> to vector<32xf32>
    %27 = vector.shape_cast %26 : vector<32xf32> to vector<1x32xf32>
    %cst_11 = arith.constant 1.600000e+01 : f32
    %28 = vector.broadcast %cst_11 : f32 to vector<1x32xf32>
    %29 = arith.divf %27, %28 : vector<1x32xf32>
    %30 = vector.broadcast %29 : vector<1x32xf32> to vector<16x32xf32>
    %31 = arith.subf %25, %30 : vector<16x32xf32>
    %c0_12 = arith.constant 0 : index
    %c0_13 = arith.constant 0 : index
    %c0_14 = arith.constant 0 : index
    %32 = vector.load %arg4[%c0_12, %c0_13, %c0_14] : memref<1x16x32xf32, #tpu.memory_space<vmem>>, vector<1x16x32xf32>
    %33 = vector.shape_cast %32 : vector<1x16x32xf32> to vector<16x32xf32>
    %34 = vector.shape_cast %31 : vector<16x32xf32> to vector<1x16x32xf32>
    tpu.vector_store %arg4[%c0_12, %c0_13, %c0_14], %34 {strides = array<i32>} : memref<1x16x32xf32, #tpu.memory_space<vmem>>, vector<1x16x32xf32>,
    return
  }
  func.func @transform_0(%arg0: i32) -> (i32, i32, i32) {
    %c0_i32 = arith.constant 0 : i32
    %c0_i32_0 = arith.constant 0 : i32
    %c0_i32_1 = arith.constant 0 : i32
    return %arg0, %c0_i32, %c0_i32_0 : i32, i32, i32
  }
  func.func @transform_1(%arg0: i32) -> (i32, i32) {
    %c0_i32 = arith.constant 0 : i32
    %c0_i32_0 = arith.constant 0 : i32
    %c0_i32_1 = arith.constant 0 : i32
    return %c0_i32, %c0_i32_0 : i32, i32
  }
  func.func @transform_2(%arg0: i32) -> (i32, i32) {
    %c0_i32 = arith.constant 0 : i32
    %c0_i32_0 = arith.constant 0 : i32
    %c0_i32_1 = arith.constant 0 : i32
    return %c0_i32, %c0_i32_0 : i32, i32
  }
  func.func @transform_3(%arg0: i32) -> (i32, i32, i32) {
    %c0_i32 = arith.constant 0 : i32
    %c0_i32_0 = arith.constant 0 : i32
    %c0_i32_1 = arith.constant 0 : i32
    return %arg0, %c0_i32, %c0_i32_0 : i32, i32, i32
  }
}

module attributes {stable_mosaic.version = 11 : i64} {
  func.func @_enc_layer_kernel(%arg0: i32, %arg1: memref<1x16x32xf32, #tpu.memory_space<vmem>>, %arg2: memref<1x16x32xf32, #tpu.memory_space<vmem>>, %arg3: memref<16x16xf32, #tpu.memory_space<vmem>>, %arg4: memref<32x96xf32, #tpu.memory_space<vmem>>, %arg5: memref<1x96xf32, #tpu.memory_space<vmem>>, %arg6: memref<32x32xf32, #tpu.memory_space<vmem>>, %arg7: memref<1x32xf32, #tpu.memory_space<vmem>>, %arg8: memref<32x64xf32, #tpu.memory_space<vmem>>, %arg9: memref<1x64xf32, #tpu.memory_space<vmem>>, %arg10: memref<64x32xf32, #tpu.memory_space<vmem>>, %arg11: memref<1x32xf32, #tpu.memory_space<vmem>>, %arg12: memref<1x16x32xf32, #tpu.memory_space<vmem>>) attributes {dimension_semantics = [#tpu.dimension_semantics<parallel>], iteration_bounds = array<i64: 2>, scalar_prefetch = 0 : i64, scratch_operands = 0 : i64, tpu.core_type = #tpu.core_type<tc>, window_params = [{transform_indices = @transform_0, window_bounds = array<i64: 1, 16, 32>}, {transform_indices = @transform_1, window_bounds = array<i64: 1, 16, 32>}, {pipeline_mode = #tpu.pipeline_mode<synchronous>, transform_indices = @transform_2, window_bounds = array<i64: 16, 16>}, {pipeline_mode = #tpu.pipeline_mode<synchronous>, transform_indices = @transform_3, window_bounds = array<i64: 32, 96>}, {pipeline_mode = #tpu.pipeline_mode<synchronous>, transform_indices = @transform_4, window_bounds = array<i64: 1, 96>}, {pipeline_mode = #tpu.pipeline_mode<synchronous>, transform_indices = @transform_5, window_bounds = array<i64: 32, 32>}, {pipeline_mode = #tpu.pipeline_mode<synchronous>, transform_indices = @transform_6, window_bounds = array<i64: 1, 32>}, {pipeline_mode = #tpu.pipeline_mode<synchronous>, transform_indices = @transform_7, window_bounds = array<i64: 32, 64>}, {pipeline_mode = #tpu.pipeline_mode<synchronous>, transform_indices = @transform_8, window_bounds = array<i64: 1, 64>}, {pipeline_mode = #tpu.pipeline_mode<synchronous>, transform_indices = @transform_9, window_bounds = array<i64: 64, 32>}, {pipeline_mode = #tpu.pipeline_mode<synchronous>, transform_indices = @transform_10, window_bounds = array<i64: 1, 32>}, {transform_indices = @transform_11, window_bounds = array<i64: 1, 16, 32>}]} {
    %c0 = arith.constant 0 : index
    %c0_0 = arith.constant 0 : index
    %c0_1 = arith.constant 0 : index
    %0 = vector.load %arg1[%c0, %c0_0, %c0_1] : memref<1x16x32xf32, #tpu.memory_space<vmem>>, vector<1x16x32xf32>
    %1 = vector.shape_cast %0 : vector<1x16x32xf32> to vector<16x32xf32>
    %c0_2 = arith.constant 0 : index
    %c0_3 = arith.constant 0 : index
    %2 = vector.load %arg3[%c0_2, %c0_3] : memref<16x16xf32, #tpu.memory_space<vmem>>, vector<16x16xf32>
    %c0_4 = arith.constant 0 : index
    %c0_5 = arith.constant 0 : index
    %c0_6 = arith.constant 0 : index
    %3 = vector.load %arg2[%c0_4, %c0_5, %c0_6] : memref<1x16x32xf32, #tpu.memory_space<vmem>>, vector<1x16x32xf32>
    %4 = vector.shape_cast %3 : vector<1x16x32xf32> to vector<16x32xf32>
    %5 = arith.addf %1, %4 : vector<16x32xf32>
    %c0_7 = arith.constant 0 : index
    %c0_8 = arith.constant 0 : index
    %6 = vector.load %arg4[%c0_7, %c0_8] : memref<32x96xf32, #tpu.memory_space<vmem>>, vector<32x96xf32>
    %cst = arith.constant dense<0.000000e+00> : vector<16x96xf32>
    %7 = tpu.matmul %5, %6, %cst {dimension_numbers = #tpu.dot_dimension_numbers<[1], [0], [0], [1], [0, 0, 1, 1], [], []>} : vector<16x32xf32>, vector<32x96xf32>, vector<16x96xf32> -> vector<16x96xf32>
    %c0_9 = arith.constant 0 : index
    %c0_10 = arith.constant 0 : index
    %8 = vector.load %arg5[%c0_9, %c0_10] : memref<1x96xf32, #tpu.memory_space<vmem>>, vector<1x96xf32>
    %9 = vector.broadcast %8 : vector<1x96xf32> to vector<16x96xf32>
    %10 = arith.addf %7, %9 : vector<16x96xf32>
    %11 = vector.extract_strided_slice %10 {offsets = [0, 0], sizes = [16, 32], strides = [1, 1]} : vector<16x96xf32> to vector<16x32xf32>
    %12 = vector.extract_strided_slice %10 {offsets = [0, 32], sizes = [16, 32], strides = [1, 1]} : vector<16x96xf32> to vector<16x32xf32>
    %13 = vector.extract_strided_slice %10 {offsets = [0, 64], sizes = [16, 32], strides = [1, 1]} : vector<16x96xf32> to vector<16x32xf32>
    %c0_11 = arith.constant 0 : index
    %c0_12 = arith.constant 0 : index
    %14 = vector.load %arg6[%c0_11, %c0_12] : memref<32x32xf32, #tpu.memory_space<vmem>>, vector<32x32xf32>
    %c0_13 = arith.constant 0 : index
    %c0_14 = arith.constant 0 : index
    %15 = vector.load %arg7[%c0_13, %c0_14] : memref<1x32xf32, #tpu.memory_space<vmem>>, vector<1x32xf32>
    %cst_15 = arith.constant 0.000000e+00 : f32
    %16 = vector.broadcast %cst_15 : f32 to vector<16x32xf32>
    %17 = vector.extract_strided_slice %11 {offsets = [0, 0], sizes = [16, 8], strides = [1, 1]} : vector<16x32xf32> to vector<16x8xf32>
    %18 = vector.extract_strided_slice %12 {offsets = [0, 0], sizes = [16, 8], strides = [1, 1]} : vector<16x32xf32> to vector<16x8xf32>
    %19 = vector.extract_strided_slice %13 {offsets = [0, 0], sizes = [16, 8], strides = [1, 1]} : vector<16x32xf32> to vector<16x8xf32>
    %20 = tpu.transpose %18, [1, 0] : vector<16x8xf32> -> vector<8x16xf32>
    %cst_16 = arith.constant dense<0.000000e+00> : vector<16x16xf32>
    %21 = tpu.matmul %17, %20, %cst_16 {dimension_numbers = #tpu.dot_dimension_numbers<[1], [0], [0], [1], [0, 0, 1, 1], [], []>} : vector<16x8xf32>, vector<8x16xf32>, vector<16x16xf32> -> vector<16x16xf32>
    %cst_17 = arith.constant dense<0xFF800000> : vector<16xf32>
    %22 = vector.multi_reduction <maximumf>, %21, %cst_17 [1] : vector<16x16xf32> to vector<16xf32>
    %23 = vector.shape_cast %22 : vector<16xf32> to vector<16x1xf32>
    %24 = vector.broadcast %23 : vector<16x1xf32> to vector<16x16xf32>
    %25 = arith.subf %21, %24 : vector<16x16xf32>
    %26 = math.exp %25 : vector<16x16xf32>
    %cst_18 = arith.constant dense<0.000000e+00> : vector<16xf32>
    %27 = vector.multi_reduction <add>, %26, %cst_18 [1] : vector<16x16xf32> to vector<16xf32>
    %28 = vector.shape_cast %27 : vector<16xf32> to vector<16x1xf32>
    %29 = tpu.reciprocal %28 {approx = true} : vector<16x1xf32> -> vector<16x1xf32>
    %30 = vector.broadcast %29 : vector<16x1xf32> to vector<16x16xf32>
    %31 = arith.mulf %26, %30 : vector<16x16xf32>
    %cst_19 = arith.constant dense<0.000000e+00> : vector<16x8xf32>
    %32 = tpu.matmul %31, %19, %cst_19 {dimension_numbers = #tpu.dot_dimension_numbers<[1], [0], [0], [1], [0, 0, 1, 1], [], []>} : vector<16x16xf32>, vector<16x8xf32>, vector<16x8xf32> -> vector<16x8xf32>
    %33 = vector.extract_strided_slice %14 {offsets = [0, 0], sizes = [8, 32], strides = [1, 1]} : vector<32x32xf32> to vector<8x32xf32>
    %cst_20 = arith.constant dense<0.000000e+00> : vector<16x32xf32>
    %34 = tpu.matmul %32, %33, %cst_20 {dimension_numbers = #tpu.dot_dimension_numbers<[1], [0], [0], [1], [0, 0, 1, 1], [], []>} : vector<16x8xf32>, vector<8x32xf32>, vector<16x32xf32> -> vector<16x32xf32>
    %35 = arith.addf %16, %34 : vector<16x32xf32>
    %36 = vector.extract_strided_slice %11 {offsets = [0, 8], sizes = [16, 8], strides = [1, 1]} : vector<16x32xf32> to vector<16x8xf32>
    %37 = vector.extract_strided_slice %12 {offsets = [0, 8], sizes = [16, 8], strides = [1, 1]} : vector<16x32xf32> to vector<16x8xf32>
    %38 = vector.extract_strided_slice %13 {offsets = [0, 8], sizes = [16, 8], strides = [1, 1]} : vector<16x32xf32> to vector<16x8xf32>
    %39 = tpu.transpose %37, [1, 0] : vector<16x8xf32> -> vector<8x16xf32>
    %cst_21 = arith.constant dense<0.000000e+00> : vector<16x16xf32>
    %40 = tpu.matmul %36, %39, %cst_21 {dimension_numbers = #tpu.dot_dimension_numbers<[1], [0], [0], [1], [0, 0, 1, 1], [], []>} : vector<16x8xf32>, vector<8x16xf32>, vector<16x16xf32> -> vector<16x16xf32>
    %cst_22 = arith.constant dense<0xFF800000> : vector<16xf32>
    %41 = vector.multi_reduction <maximumf>, %40, %cst_22 [1] : vector<16x16xf32> to vector<16xf32>
    %42 = vector.shape_cast %41 : vector<16xf32> to vector<16x1xf32>
    %43 = vector.broadcast %42 : vector<16x1xf32> to vector<16x16xf32>
    %44 = arith.subf %40, %43 : vector<16x16xf32>
    %45 = math.exp %44 : vector<16x16xf32>
    %cst_23 = arith.constant dense<0.000000e+00> : vector<16xf32>
    %46 = vector.multi_reduction <add>, %45, %cst_23 [1] : vector<16x16xf32> to vector<16xf32>
    %47 = vector.shape_cast %46 : vector<16xf32> to vector<16x1xf32>
    %48 = tpu.reciprocal %47 {approx = true} : vector<16x1xf32> -> vector<16x1xf32>
    %49 = vector.broadcast %48 : vector<16x1xf32> to vector<16x16xf32>
    %50 = arith.mulf %45, %49 : vector<16x16xf32>
    %cst_24 = arith.constant dense<0.000000e+00> : vector<16x8xf32>
    %51 = tpu.matmul %50, %38, %cst_24 {dimension_numbers = #tpu.dot_dimension_numbers<[1], [0], [0], [1], [0, 0, 1, 1], [], []>} : vector<16x16xf32>, vector<16x8xf32>, vector<16x8xf32> -> vector<16x8xf32>
    %52 = vector.extract_strided_slice %14 {offsets = [8, 0], sizes = [8, 32], strides = [1, 1]} : vector<32x32xf32> to vector<8x32xf32>
    %cst_25 = arith.constant dense<0.000000e+00> : vector<16x32xf32>
    %53 = tpu.matmul %51, %52, %cst_25 {dimension_numbers = #tpu.dot_dimension_numbers<[1], [0], [0], [1], [0, 0, 1, 1], [], []>} : vector<16x8xf32>, vector<8x32xf32>, vector<16x32xf32> -> vector<16x32xf32>
    %54 = arith.addf %35, %53 : vector<16x32xf32>
    %55 = vector.extract_strided_slice %11 {offsets = [0, 16], sizes = [16, 8], strides = [1, 1]} : vector<16x32xf32> to vector<16x8xf32>
    %56 = vector.extract_strided_slice %12 {offsets = [0, 16], sizes = [16, 8], strides = [1, 1]} : vector<16x32xf32> to vector<16x8xf32>
    %57 = vector.extract_strided_slice %13 {offsets = [0, 16], sizes = [16, 8], strides = [1, 1]} : vector<16x32xf32> to vector<16x8xf32>
    %58 = tpu.transpose %56, [1, 0] : vector<16x8xf32> -> vector<8x16xf32>
    %cst_26 = arith.constant dense<0.000000e+00> : vector<16x16xf32>
    %59 = tpu.matmul %55, %58, %cst_26 {dimension_numbers = #tpu.dot_dimension_numbers<[1], [0], [0], [1], [0, 0, 1, 1], [], []>} : vector<16x8xf32>, vector<8x16xf32>, vector<16x16xf32> -> vector<16x16xf32>
    %cst_27 = arith.constant dense<0xFF800000> : vector<16xf32>
    %60 = vector.multi_reduction <maximumf>, %59, %cst_27 [1] : vector<16x16xf32> to vector<16xf32>
    %61 = vector.shape_cast %60 : vector<16xf32> to vector<16x1xf32>
    %62 = vector.broadcast %61 : vector<16x1xf32> to vector<16x16xf32>
    %63 = arith.subf %59, %62 : vector<16x16xf32>
    %64 = math.exp %63 : vector<16x16xf32>
    %cst_28 = arith.constant dense<0.000000e+00> : vector<16xf32>
    %65 = vector.multi_reduction <add>, %64, %cst_28 [1] : vector<16x16xf32> to vector<16xf32>
    %66 = vector.shape_cast %65 : vector<16xf32> to vector<16x1xf32>
    %67 = tpu.reciprocal %66 {approx = true} : vector<16x1xf32> -> vector<16x1xf32>
    %68 = vector.broadcast %67 : vector<16x1xf32> to vector<16x16xf32>
    %69 = arith.mulf %64, %68 : vector<16x16xf32>
    %cst_29 = arith.constant dense<0.000000e+00> : vector<16x8xf32>
    %70 = tpu.matmul %69, %57, %cst_29 {dimension_numbers = #tpu.dot_dimension_numbers<[1], [0], [0], [1], [0, 0, 1, 1], [], []>} : vector<16x16xf32>, vector<16x8xf32>, vector<16x8xf32> -> vector<16x8xf32>
    %71 = vector.extract_strided_slice %14 {offsets = [16, 0], sizes = [8, 32], strides = [1, 1]} : vector<32x32xf32> to vector<8x32xf32>
    %cst_30 = arith.constant dense<0.000000e+00> : vector<16x32xf32>
    %72 = tpu.matmul %70, %71, %cst_30 {dimension_numbers = #tpu.dot_dimension_numbers<[1], [0], [0], [1], [0, 0, 1, 1], [], []>} : vector<16x8xf32>, vector<8x32xf32>, vector<16x32xf32> -> vector<16x32xf32>
    %73 = arith.addf %54, %72 : vector<16x32xf32>
    %74 = vector.extract_strided_slice %11 {offsets = [0, 24], sizes = [16, 8], strides = [1, 1]} : vector<16x32xf32> to vector<16x8xf32>
    %75 = vector.extract_strided_slice %12 {offsets = [0, 24], sizes = [16, 8], strides = [1, 1]} : vector<16x32xf32> to vector<16x8xf32>
    %76 = vector.extract_strided_slice %13 {offsets = [0, 24], sizes = [16, 8], strides = [1, 1]} : vector<16x32xf32> to vector<16x8xf32>
    %77 = tpu.transpose %75, [1, 0] : vector<16x8xf32> -> vector<8x16xf32>
    %cst_31 = arith.constant dense<0.000000e+00> : vector<16x16xf32>
    %78 = tpu.matmul %74, %77, %cst_31 {dimension_numbers = #tpu.dot_dimension_numbers<[1], [0], [0], [1], [0, 0, 1, 1], [], []>} : vector<16x8xf32>, vector<8x16xf32>, vector<16x16xf32> -> vector<16x16xf32>
    %cst_32 = arith.constant dense<0xFF800000> : vector<16xf32>
    %79 = vector.multi_reduction <maximumf>, %78, %cst_32 [1] : vector<16x16xf32> to vector<16xf32>
    %80 = vector.shape_cast %79 : vector<16xf32> to vector<16x1xf32>
    %81 = vector.broadcast %80 : vector<16x1xf32> to vector<16x16xf32>
    %82 = arith.subf %78, %81 : vector<16x16xf32>
    %83 = math.exp %82 : vector<16x16xf32>
    %cst_33 = arith.constant dense<0.000000e+00> : vector<16xf32>
    %84 = vector.multi_reduction <add>, %83, %cst_33 [1] : vector<16x16xf32> to vector<16xf32>
    %85 = vector.shape_cast %84 : vector<16xf32> to vector<16x1xf32>
    %86 = tpu.reciprocal %85 {approx = true} : vector<16x1xf32> -> vector<16x1xf32>
    %87 = vector.broadcast %86 : vector<16x1xf32> to vector<16x16xf32>
    %88 = arith.mulf %83, %87 : vector<16x16xf32>
    %cst_34 = arith.constant dense<0.000000e+00> : vector<16x8xf32>
    %89 = tpu.matmul %88, %76, %cst_34 {dimension_numbers = #tpu.dot_dimension_numbers<[1], [0], [0], [1], [0, 0, 1, 1], [], []>} : vector<16x16xf32>, vector<16x8xf32>, vector<16x8xf32> -> vector<16x8xf32>
    %90 = vector.extract_strided_slice %14 {offsets = [24, 0], sizes = [8, 32], strides = [1, 1]} : vector<32x32xf32> to vector<8x32xf32>
    %cst_35 = arith.constant dense<0.000000e+00> : vector<16x32xf32>
    %91 = tpu.matmul %89, %90, %cst_35 {dimension_numbers = #tpu.dot_dimension_numbers<[1], [0], [0], [1], [0, 0, 1, 1], [], []>} : vector<16x8xf32>, vector<8x32xf32>, vector<16x32xf32> -> vector<16x32xf32>
    %92 = arith.addf %73, %91 : vector<16x32xf32>
    %93 = vector.broadcast %15 : vector<1x32xf32> to vector<16x32xf32>
    %94 = arith.addf %92, %93 : vector<16x32xf32>
    %95 = arith.addf %1, %94 : vector<16x32xf32>
    %cst_36 = arith.constant dense<0.000000e+00> : vector<16x32xf32>
    %96 = tpu.matmul %2, %95, %cst_36 {dimension_numbers = #tpu.dot_dimension_numbers<[1], [0], [0], [1], [0, 0, 1, 1], [], []>} : vector<16x16xf32>, vector<16x32xf32>, vector<16x32xf32> -> vector<16x32xf32>
    %97 = arith.subf %95, %96 : vector<16x32xf32>
    %c0_37 = arith.constant 0 : index
    %c0_38 = arith.constant 0 : index
    %98 = vector.load %arg8[%c0_37, %c0_38] : memref<32x64xf32, #tpu.memory_space<vmem>>, vector<32x64xf32>
    %c0_39 = arith.constant 0 : index
    %c0_40 = arith.constant 0 : index
    %99 = vector.load %arg9[%c0_39, %c0_40] : memref<1x64xf32, #tpu.memory_space<vmem>>, vector<1x64xf32>
    %c0_41 = arith.constant 0 : index
    %c0_42 = arith.constant 0 : index
    %100 = vector.load %arg10[%c0_41, %c0_42] : memref<64x32xf32, #tpu.memory_space<vmem>>, vector<64x32xf32>
    %c0_43 = arith.constant 0 : index
    %c0_44 = arith.constant 0 : index
    %101 = vector.load %arg11[%c0_43, %c0_44] : memref<1x32xf32, #tpu.memory_space<vmem>>, vector<1x32xf32>
    %cst_45 = arith.constant dense<0.000000e+00> : vector<16x64xf32>
    %102 = tpu.matmul %97, %98, %cst_45 {dimension_numbers = #tpu.dot_dimension_numbers<[1], [0], [0], [1], [0, 0, 1, 1], [], []>} : vector<16x32xf32>, vector<32x64xf32>, vector<16x64xf32> -> vector<16x64xf32>
    %103 = vector.broadcast %99 : vector<1x64xf32> to vector<16x64xf32>
    %104 = arith.addf %102, %103 : vector<16x64xf32>
    %105 = arith.mulf %104, %104 : vector<16x64xf32>
    %106 = arith.mulf %104, %105 : vector<16x64xf32>
    %cst_46 = arith.constant 4.471500e-02 : f32
    %107 = vector.broadcast %cst_46 : f32 to vector<16x64xf32>
    %108 = arith.mulf %107, %106 : vector<16x64xf32>
    %109 = arith.addf %104, %108 : vector<16x64xf32>
    %cst_47 = arith.constant 0.797884583 : f32
    %110 = vector.broadcast %cst_47 : f32 to vector<16x64xf32>
    %111 = arith.mulf %110, %109 : vector<16x64xf32>
    %112 = math.tanh %111 : vector<16x64xf32>
    %cst_48 = arith.constant 1.000000e+00 : f32
    %113 = vector.broadcast %cst_48 : f32 to vector<16x64xf32>
    %114 = arith.addf %113, %112 : vector<16x64xf32>
    %cst_49 = arith.constant 5.000000e-01 : f32
    %115 = vector.broadcast %cst_49 : f32 to vector<16x64xf32>
    %116 = arith.mulf %115, %114 : vector<16x64xf32>
    %117 = arith.mulf %104, %116 : vector<16x64xf32>
    %cst_50 = arith.constant dense<0.000000e+00> : vector<16x32xf32>
    %118 = tpu.matmul %117, %100, %cst_50 {dimension_numbers = #tpu.dot_dimension_numbers<[1], [0], [0], [1], [0, 0, 1, 1], [], []>} : vector<16x64xf32>, vector<64x32xf32>, vector<16x32xf32> -> vector<16x32xf32>
    %119 = vector.broadcast %101 : vector<1x32xf32> to vector<16x32xf32>
    %120 = arith.addf %118, %119 : vector<16x32xf32>
    %121 = arith.addf %97, %120 : vector<16x32xf32>
    %cst_51 = arith.constant dense<0.000000e+00> : vector<16x32xf32>
    %122 = tpu.matmul %2, %121, %cst_51 {dimension_numbers = #tpu.dot_dimension_numbers<[1], [0], [0], [1], [0, 0, 1, 1], [], []>} : vector<16x16xf32>, vector<16x32xf32>, vector<16x32xf32> -> vector<16x32xf32>
    %123 = arith.subf %121, %122 : vector<16x32xf32>
    %c0_52 = arith.constant 0 : index
    %c0_53 = arith.constant 0 : index
    %c0_54 = arith.constant 0 : index
    %124 = vector.load %arg12[%c0_52, %c0_53, %c0_54] : memref<1x16x32xf32, #tpu.memory_space<vmem>>, vector<1x16x32xf32>
    %125 = vector.shape_cast %124 : vector<1x16x32xf32> to vector<16x32xf32>
    %126 = vector.shape_cast %123 : vector<16x32xf32> to vector<1x16x32xf32>
    tpu.vector_store %arg12[%c0_52, %c0_53, %c0_54], %126 {strides = array<i32>} : memref<1x16x32xf32, #tpu.memory_space<vmem>>, vector<1x16x32xf32>,
    return
  }
  func.func @transform_0(%arg0: i32) -> (i32, i32, i32) {
    %c0_i32 = arith.constant 0 : i32
    %c0_i32_0 = arith.constant 0 : i32
    %c0_i32_1 = arith.constant 0 : i32
    return %arg0, %c0_i32, %c0_i32_0 : i32, i32, i32
  }
  func.func @transform_1(%arg0: i32) -> (i32, i32, i32) {
    %c0_i32 = arith.constant 0 : i32
    %c0_i32_0 = arith.constant 0 : i32
    %c0_i32_1 = arith.constant 0 : i32
    return %arg0, %c0_i32, %c0_i32_0 : i32, i32, i32
  }
  func.func @transform_2(%arg0: i32) -> (i32, i32) {
    %c0_i32 = arith.constant 0 : i32
    %c0_i32_0 = arith.constant 0 : i32
    %c0_i32_1 = arith.constant 0 : i32
    return %c0_i32, %c0_i32_0 : i32, i32
  }
  func.func @transform_3(%arg0: i32) -> (i32, i32) {
    %c0_i32 = arith.constant 0 : i32
    %c0_i32_0 = arith.constant 0 : i32
    %c0_i32_1 = arith.constant 0 : i32
    return %c0_i32, %c0_i32_0 : i32, i32
  }
  func.func @transform_4(%arg0: i32) -> (i32, i32) {
    %c0_i32 = arith.constant 0 : i32
    %c0_i32_0 = arith.constant 0 : i32
    %c0_i32_1 = arith.constant 0 : i32
    return %c0_i32, %c0_i32_0 : i32, i32
  }
  func.func @transform_5(%arg0: i32) -> (i32, i32) {
    %c0_i32 = arith.constant 0 : i32
    %c0_i32_0 = arith.constant 0 : i32
    %c0_i32_1 = arith.constant 0 : i32
    return %c0_i32, %c0_i32_0 : i32, i32
  }
  func.func @transform_6(%arg0: i32) -> (i32, i32) {
    %c0_i32 = arith.constant 0 : i32
    %c0_i32_0 = arith.constant 0 : i32
    %c0_i32_1 = arith.constant 0 : i32
    return %c0_i32, %c0_i32_0 : i32, i32
  }
  func.func @transform_7(%arg0: i32) -> (i32, i32) {
    %c0_i32 = arith.constant 0 : i32
    %c0_i32_0 = arith.constant 0 : i32
    %c0_i32_1 = arith.constant 0 : i32
    return %c0_i32, %c0_i32_0 : i32, i32
  }
  func.func @transform_8(%arg0: i32) -> (i32, i32) {
    %c0_i32 = arith.constant 0 : i32
    %c0_i32_0 = arith.constant 0 : i32
    %c0_i32_1 = arith.constant 0 : i32
    return %c0_i32, %c0_i32_0 : i32, i32
  }
  func.func @transform_9(%arg0: i32) -> (i32, i32) {
    %c0_i32 = arith.constant 0 : i32
    %c0_i32_0 = arith.constant 0 : i32
    %c0_i32_1 = arith.constant 0 : i32
    return %c0_i32, %c0_i32_0 : i32, i32
  }
  func.func @transform_10(%arg0: i32) -> (i32, i32) {
    %c0_i32 = arith.constant 0 : i32
    %c0_i32_0 = arith.constant 0 : i32
    %c0_i32_1 = arith.constant 0 : i32
    return %c0_i32, %c0_i32_0 : i32, i32
  }
  func.func @transform_11(%arg0: i32) -> (i32, i32, i32) {
    %c0_i32 = arith.constant 0 : i32
    %c0_i32_0 = arith.constant 0 : i32
    %c0_i32_1 = arith.constant 0 : i32
    return %arg0, %c0_i32, %c0_i32_0 : i32, i32, i32
  }
}

module attributes {stable_mosaic.version = 11 : i64} {
  func.func @_dec_layer_kernel(%arg0: i32, %arg1: memref<1x16x32xf32, #tpu.memory_space<vmem>>, %arg2: memref<1x16x32xf32, #tpu.memory_space<vmem>>, %arg3: memref<1x16x32xf32, #tpu.memory_space<vmem>>, %arg4: memref<16x16xf32, #tpu.memory_space<vmem>>, %arg5: memref<16x16xf32, #tpu.memory_space<vmem>>, %arg6: memref<16x16xf32, #tpu.memory_space<vmem>>, %arg7: memref<32x96xf32, #tpu.memory_space<vmem>>, %arg8: memref<1x96xf32, #tpu.memory_space<vmem>>, %arg9: memref<32x32xf32, #tpu.memory_space<vmem>>, %arg10: memref<1x32xf32, #tpu.memory_space<vmem>>, %arg11: memref<32x32xf32, #tpu.memory_space<vmem>>, %arg12: memref<1x32xf32, #tpu.memory_space<vmem>>, %arg13: memref<32x64xf32, #tpu.memory_space<vmem>>, %arg14: memref<1x64xf32, #tpu.memory_space<vmem>>, %arg15: memref<32x32xf32, #tpu.memory_space<vmem>>, %arg16: memref<1x32xf32, #tpu.memory_space<vmem>>, %arg17: memref<32x64xf32, #tpu.memory_space<vmem>>, %arg18: memref<1x64xf32, #tpu.memory_space<vmem>>, %arg19: memref<64x32xf32, #tpu.memory_space<vmem>>, %arg20: memref<1x32xf32, #tpu.memory_space<vmem>>, %arg21: memref<32x128xf32, #tpu.memory_space<vmem>>, %arg22: memref<32x128xf32, #tpu.memory_space<vmem>>, %arg23: memref<32x128xf32, #tpu.memory_space<vmem>>, %arg24: memref<1x16x32xf32, #tpu.memory_space<vmem>>, %arg25: memref<1x16x128xf32, #tpu.memory_space<vmem>>) attributes {dimension_semantics = [#tpu.dimension_semantics<parallel>], iteration_bounds = array<i64: 2>, scalar_prefetch = 0 : i64, scratch_operands = 0 : i64, tpu.core_type = #tpu.core_type<tc>, window_params = [{transform_indices = @transform_0, window_bounds = array<i64: 1, 16, 32>}, {transform_indices = @transform_1, window_bounds = array<i64: 1, 16, 32>}, {transform_indices = @transform_2, window_bounds = array<i64: 1, 16, 32>}, {pipeline_mode = #tpu.pipeline_mode<synchronous>, transform_indices = @transform_3, window_bounds = array<i64: 16, 16>}, {pipeline_mode = #tpu.pipeline_mode<synchronous>, transform_indices = @transform_4, window_bounds = array<i64: 16, 16>}, {pipeline_mode = #tpu.pipeline_mode<synchronous>, transform_indices = @transform_5, window_bounds = array<i64: 16, 16>}, {pipeline_mode = #tpu.pipeline_mode<synchronous>, transform_indices = @transform_6, window_bounds = array<i64: 32, 96>}, {pipeline_mode = #tpu.pipeline_mode<synchronous>, transform_indices = @transform_7, window_bounds = array<i64: 1, 96>}, {pipeline_mode = #tpu.pipeline_mode<synchronous>, transform_indices = @transform_8, window_bounds = array<i64: 32, 32>}, {pipeline_mode = #tpu.pipeline_mode<synchronous>, transform_indices = @transform_9, window_bounds = array<i64: 1, 32>}, {pipeline_mode = #tpu.pipeline_mode<synchronous>, transform_indices = @transform_10, window_bounds = array<i64: 32, 32>}, {pipeline_mode = #tpu.pipeline_mode<synchronous>, transform_indices = @transform_11, window_bounds = array<i64: 1, 32>}, {pipeline_mode = #tpu.pipeline_mode<synchronous>, transform_indices = @transform_12, window_bounds = array<i64: 32, 64>}, {pipeline_mode = #tpu.pipeline_mode<synchronous>, transform_indices = @transform_13, window_bounds = array<i64: 1, 64>}, {pipeline_mode = #tpu.pipeline_mode<synchronous>, transform_indices = @transform_14, window_bounds = array<i64: 32, 32>}, {pipeline_mode = #tpu.pipeline_mode<synchronous>, transform_indices = @transform_15, window_bounds = array<i64: 1, 32>}, {pipeline_mode = #tpu.pipeline_mode<synchronous>, transform_indices = @transform_16, window_bounds = array<i64: 32, 64>}, {pipeline_mode = #tpu.pipeline_mode<synchronous>, transform_indices = @transform_17, window_bounds = array<i64: 1, 64>}, {pipeline_mode = #tpu.pipeline_mode<synchronous>, transform_indices = @transform_18, window_bounds = array<i64: 64, 32>}, {pipeline_mode = #tpu.pipeline_mode<synchronous>, transform_indices = @transform_19, window_bounds = array<i64: 1, 32>}, {pipeline_mode = #tpu.pipeline_mode<synchronous>, transform_indices = @transform_20, window_bounds = array<i64: 32, 128>}, {pipeline_mode = #tpu.pipeline_mode<synchronous>, transform_indices = @transform_21, window_bounds = array<i64: 32, 128>}, {pipeline_mode = #tpu.pipeline_mode<synchronous>, transform_indices = @transform_22, window_bounds = array<i64: 32, 128>}, {transform_indices = @transform_23, window_bounds = array<i64: 1, 16, 32>}, {transform_indices = @transform_24, window_bounds = array<i64: 1, 16, 128>}]} {
    %c0 = arith.constant 0 : index
    %c0_0 = arith.constant 0 : index
    %c0_1 = arith.constant 0 : index
    %0 = vector.load %arg1[%c0, %c0_0, %c0_1] : memref<1x16x32xf32, #tpu.memory_space<vmem>>, vector<1x16x32xf32>
    %1 = vector.shape_cast %0 : vector<1x16x32xf32> to vector<16x32xf32>
    %c0_2 = arith.constant 0 : index
    %c0_3 = arith.constant 0 : index
    %c0_4 = arith.constant 0 : index
    %2 = vector.load %arg3[%c0_2, %c0_3, %c0_4] : memref<1x16x32xf32, #tpu.memory_space<vmem>>, vector<1x16x32xf32>
    %3 = vector.shape_cast %2 : vector<1x16x32xf32> to vector<16x32xf32>
    %c0_5 = arith.constant 0 : index
    %c0_6 = arith.constant 0 : index
    %4 = vector.load %arg4[%c0_5, %c0_6] : memref<16x16xf32, #tpu.memory_space<vmem>>, vector<16x16xf32>
    %c0_7 = arith.constant 0 : index
    %c0_8 = arith.constant 0 : index
    %c0_9 = arith.constant 0 : index
    %5 = vector.load %arg2[%c0_7, %c0_8, %c0_9] : memref<1x16x32xf32, #tpu.memory_space<vmem>>, vector<1x16x32xf32>
    %6 = vector.shape_cast %5 : vector<1x16x32xf32> to vector<16x32xf32>
    %7 = arith.addf %1, %6 : vector<16x32xf32>
    %c0_10 = arith.constant 0 : index
    %c0_11 = arith.constant 0 : index
    %8 = vector.load %arg7[%c0_10, %c0_11] : memref<32x96xf32, #tpu.memory_space<vmem>>, vector<32x96xf32>
    %cst = arith.constant dense<0.000000e+00> : vector<16x96xf32>
    %9 = tpu.matmul %7, %8, %cst {dimension_numbers = #tpu.dot_dimension_numbers<[1], [0], [0], [1], [0, 0, 1, 1], [], []>} : vector<16x32xf32>, vector<32x96xf32>, vector<16x96xf32> -> vector<16x96xf32>
    %c0_12 = arith.constant 0 : index
    %c0_13 = arith.constant 0 : index
    %10 = vector.load %arg8[%c0_12, %c0_13] : memref<1x96xf32, #tpu.memory_space<vmem>>, vector<1x96xf32>
    %11 = vector.broadcast %10 : vector<1x96xf32> to vector<16x96xf32>
    %12 = arith.addf %9, %11 : vector<16x96xf32>
    %13 = vector.extract_strided_slice %12 {offsets = [0, 0], sizes = [16, 32], strides = [1, 1]} : vector<16x96xf32> to vector<16x32xf32>
    %14 = vector.extract_strided_slice %12 {offsets = [0, 32], sizes = [16, 32], strides = [1, 1]} : vector<16x96xf32> to vector<16x32xf32>
    %15 = vector.extract_strided_slice %12 {offsets = [0, 64], sizes = [16, 32], strides = [1, 1]} : vector<16x96xf32> to vector<16x32xf32>
    %c0_14 = arith.constant 0 : index
    %c0_15 = arith.constant 0 : index
    %16 = vector.load %arg9[%c0_14, %c0_15] : memref<32x32xf32, #tpu.memory_space<vmem>>, vector<32x32xf32>
    %c0_16 = arith.constant 0 : index
    %c0_17 = arith.constant 0 : index
    %17 = vector.load %arg10[%c0_16, %c0_17] : memref<1x32xf32, #tpu.memory_space<vmem>>, vector<1x32xf32>
    %cst_18 = arith.constant 0.000000e+00 : f32
    %18 = vector.broadcast %cst_18 : f32 to vector<16x32xf32>
    %19 = vector.extract_strided_slice %13 {offsets = [0, 0], sizes = [16, 8], strides = [1, 1]} : vector<16x32xf32> to vector<16x8xf32>
    %20 = vector.extract_strided_slice %14 {offsets = [0, 0], sizes = [16, 8], strides = [1, 1]} : vector<16x32xf32> to vector<16x8xf32>
    %21 = vector.extract_strided_slice %15 {offsets = [0, 0], sizes = [16, 8], strides = [1, 1]} : vector<16x32xf32> to vector<16x8xf32>
    %22 = tpu.transpose %20, [1, 0] : vector<16x8xf32> -> vector<8x16xf32>
    %cst_19 = arith.constant dense<0.000000e+00> : vector<16x16xf32>
    %23 = tpu.matmul %19, %22, %cst_19 {dimension_numbers = #tpu.dot_dimension_numbers<[1], [0], [0], [1], [0, 0, 1, 1], [], []>} : vector<16x8xf32>, vector<8x16xf32>, vector<16x16xf32> -> vector<16x16xf32>
    %cst_20 = arith.constant dense<0xFF800000> : vector<16xf32>
    %24 = vector.multi_reduction <maximumf>, %23, %cst_20 [1] : vector<16x16xf32> to vector<16xf32>
    %25 = vector.shape_cast %24 : vector<16xf32> to vector<16x1xf32>
    %26 = vector.broadcast %25 : vector<16x1xf32> to vector<16x16xf32>
    %27 = arith.subf %23, %26 : vector<16x16xf32>
    %28 = math.exp %27 : vector<16x16xf32>
    %cst_21 = arith.constant dense<0.000000e+00> : vector<16xf32>
    %29 = vector.multi_reduction <add>, %28, %cst_21 [1] : vector<16x16xf32> to vector<16xf32>
    %30 = vector.shape_cast %29 : vector<16xf32> to vector<16x1xf32>
    %31 = tpu.reciprocal %30 {approx = true} : vector<16x1xf32> -> vector<16x1xf32>
    %32 = vector.broadcast %31 : vector<16x1xf32> to vector<16x16xf32>
    %33 = arith.mulf %28, %32 : vector<16x16xf32>
    %cst_22 = arith.constant dense<0.000000e+00> : vector<16x8xf32>
    %34 = tpu.matmul %33, %21, %cst_22 {dimension_numbers = #tpu.dot_dimension_numbers<[1], [0], [0], [1], [0, 0, 1, 1], [], []>} : vector<16x16xf32>, vector<16x8xf32>, vector<16x8xf32> -> vector<16x8xf32>
    %35 = vector.extract_strided_slice %16 {offsets = [0, 0], sizes = [8, 32], strides = [1, 1]} : vector<32x32xf32> to vector<8x32xf32>
    %cst_23 = arith.constant dense<0.000000e+00> : vector<16x32xf32>
    %36 = tpu.matmul %34, %35, %cst_23 {dimension_numbers = #tpu.dot_dimension_numbers<[1], [0], [0], [1], [0, 0, 1, 1], [], []>} : vector<16x8xf32>, vector<8x32xf32>, vector<16x32xf32> -> vector<16x32xf32>
    %37 = arith.addf %18, %36 : vector<16x32xf32>
    %38 = vector.extract_strided_slice %13 {offsets = [0, 8], sizes = [16, 8], strides = [1, 1]} : vector<16x32xf32> to vector<16x8xf32>
    %39 = vector.extract_strided_slice %14 {offsets = [0, 8], sizes = [16, 8], strides = [1, 1]} : vector<16x32xf32> to vector<16x8xf32>
    %40 = vector.extract_strided_slice %15 {offsets = [0, 8], sizes = [16, 8], strides = [1, 1]} : vector<16x32xf32> to vector<16x8xf32>
    %41 = tpu.transpose %39, [1, 0] : vector<16x8xf32> -> vector<8x16xf32>
    %cst_24 = arith.constant dense<0.000000e+00> : vector<16x16xf32>
    %42 = tpu.matmul %38, %41, %cst_24 {dimension_numbers = #tpu.dot_dimension_numbers<[1], [0], [0], [1], [0, 0, 1, 1], [], []>} : vector<16x8xf32>, vector<8x16xf32>, vector<16x16xf32> -> vector<16x16xf32>
    %cst_25 = arith.constant dense<0xFF800000> : vector<16xf32>
    %43 = vector.multi_reduction <maximumf>, %42, %cst_25 [1] : vector<16x16xf32> to vector<16xf32>
    %44 = vector.shape_cast %43 : vector<16xf32> to vector<16x1xf32>
    %45 = vector.broadcast %44 : vector<16x1xf32> to vector<16x16xf32>
    %46 = arith.subf %42, %45 : vector<16x16xf32>
    %47 = math.exp %46 : vector<16x16xf32>
    %cst_26 = arith.constant dense<0.000000e+00> : vector<16xf32>
    %48 = vector.multi_reduction <add>, %47, %cst_26 [1] : vector<16x16xf32> to vector<16xf32>
    %49 = vector.shape_cast %48 : vector<16xf32> to vector<16x1xf32>
    %50 = tpu.reciprocal %49 {approx = true} : vector<16x1xf32> -> vector<16x1xf32>
    %51 = vector.broadcast %50 : vector<16x1xf32> to vector<16x16xf32>
    %52 = arith.mulf %47, %51 : vector<16x16xf32>
    %cst_27 = arith.constant dense<0.000000e+00> : vector<16x8xf32>
    %53 = tpu.matmul %52, %40, %cst_27 {dimension_numbers = #tpu.dot_dimension_numbers<[1], [0], [0], [1], [0, 0, 1, 1], [], []>} : vector<16x16xf32>, vector<16x8xf32>, vector<16x8xf32> -> vector<16x8xf32>
    %54 = vector.extract_strided_slice %16 {offsets = [8, 0], sizes = [8, 32], strides = [1, 1]} : vector<32x32xf32> to vector<8x32xf32>
    %cst_28 = arith.constant dense<0.000000e+00> : vector<16x32xf32>
    %55 = tpu.matmul %53, %54, %cst_28 {dimension_numbers = #tpu.dot_dimension_numbers<[1], [0], [0], [1], [0, 0, 1, 1], [], []>} : vector<16x8xf32>, vector<8x32xf32>, vector<16x32xf32> -> vector<16x32xf32>
    %56 = arith.addf %37, %55 : vector<16x32xf32>
    %57 = vector.extract_strided_slice %13 {offsets = [0, 16], sizes = [16, 8], strides = [1, 1]} : vector<16x32xf32> to vector<16x8xf32>
    %58 = vector.extract_strided_slice %14 {offsets = [0, 16], sizes = [16, 8], strides = [1, 1]} : vector<16x32xf32> to vector<16x8xf32>
    %59 = vector.extract_strided_slice %15 {offsets = [0, 16], sizes = [16, 8], strides = [1, 1]} : vector<16x32xf32> to vector<16x8xf32>
    %60 = tpu.transpose %58, [1, 0] : vector<16x8xf32> -> vector<8x16xf32>
    %cst_29 = arith.constant dense<0.000000e+00> : vector<16x16xf32>
    %61 = tpu.matmul %57, %60, %cst_29 {dimension_numbers = #tpu.dot_dimension_numbers<[1], [0], [0], [1], [0, 0, 1, 1], [], []>} : vector<16x8xf32>, vector<8x16xf32>, vector<16x16xf32> -> vector<16x16xf32>
    %cst_30 = arith.constant dense<0xFF800000> : vector<16xf32>
    %62 = vector.multi_reduction <maximumf>, %61, %cst_30 [1] : vector<16x16xf32> to vector<16xf32>
    %63 = vector.shape_cast %62 : vector<16xf32> to vector<16x1xf32>
    %64 = vector.broadcast %63 : vector<16x1xf32> to vector<16x16xf32>
    %65 = arith.subf %61, %64 : vector<16x16xf32>
    %66 = math.exp %65 : vector<16x16xf32>
    %cst_31 = arith.constant dense<0.000000e+00> : vector<16xf32>
    %67 = vector.multi_reduction <add>, %66, %cst_31 [1] : vector<16x16xf32> to vector<16xf32>
    %68 = vector.shape_cast %67 : vector<16xf32> to vector<16x1xf32>
    %69 = tpu.reciprocal %68 {approx = true} : vector<16x1xf32> -> vector<16x1xf32>
    %70 = vector.broadcast %69 : vector<16x1xf32> to vector<16x16xf32>
    %71 = arith.mulf %66, %70 : vector<16x16xf32>
    %cst_32 = arith.constant dense<0.000000e+00> : vector<16x8xf32>
    %72 = tpu.matmul %71, %59, %cst_32 {dimension_numbers = #tpu.dot_dimension_numbers<[1], [0], [0], [1], [0, 0, 1, 1], [], []>} : vector<16x16xf32>, vector<16x8xf32>, vector<16x8xf32> -> vector<16x8xf32>
    %73 = vector.extract_strided_slice %16 {offsets = [16, 0], sizes = [8, 32], strides = [1, 1]} : vector<32x32xf32> to vector<8x32xf32>
    %cst_33 = arith.constant dense<0.000000e+00> : vector<16x32xf32>
    %74 = tpu.matmul %72, %73, %cst_33 {dimension_numbers = #tpu.dot_dimension_numbers<[1], [0], [0], [1], [0, 0, 1, 1], [], []>} : vector<16x8xf32>, vector<8x32xf32>, vector<16x32xf32> -> vector<16x32xf32>
    %75 = arith.addf %56, %74 : vector<16x32xf32>
    %76 = vector.extract_strided_slice %13 {offsets = [0, 24], sizes = [16, 8], strides = [1, 1]} : vector<16x32xf32> to vector<16x8xf32>
    %77 = vector.extract_strided_slice %14 {offsets = [0, 24], sizes = [16, 8], strides = [1, 1]} : vector<16x32xf32> to vector<16x8xf32>
    %78 = vector.extract_strided_slice %15 {offsets = [0, 24], sizes = [16, 8], strides = [1, 1]} : vector<16x32xf32> to vector<16x8xf32>
    %79 = tpu.transpose %77, [1, 0] : vector<16x8xf32> -> vector<8x16xf32>
    %cst_34 = arith.constant dense<0.000000e+00> : vector<16x16xf32>
    %80 = tpu.matmul %76, %79, %cst_34 {dimension_numbers = #tpu.dot_dimension_numbers<[1], [0], [0], [1], [0, 0, 1, 1], [], []>} : vector<16x8xf32>, vector<8x16xf32>, vector<16x16xf32> -> vector<16x16xf32>
    %cst_35 = arith.constant dense<0xFF800000> : vector<16xf32>
    %81 = vector.multi_reduction <maximumf>, %80, %cst_35 [1] : vector<16x16xf32> to vector<16xf32>
    %82 = vector.shape_cast %81 : vector<16xf32> to vector<16x1xf32>
    %83 = vector.broadcast %82 : vector<16x1xf32> to vector<16x16xf32>
    %84 = arith.subf %80, %83 : vector<16x16xf32>
    %85 = math.exp %84 : vector<16x16xf32>
    %cst_36 = arith.constant dense<0.000000e+00> : vector<16xf32>
    %86 = vector.multi_reduction <add>, %85, %cst_36 [1] : vector<16x16xf32> to vector<16xf32>
    %87 = vector.shape_cast %86 : vector<16xf32> to vector<16x1xf32>
    %88 = tpu.reciprocal %87 {approx = true} : vector<16x1xf32> -> vector<16x1xf32>
    %89 = vector.broadcast %88 : vector<16x1xf32> to vector<16x16xf32>
    %90 = arith.mulf %85, %89 : vector<16x16xf32>
    %cst_37 = arith.constant dense<0.000000e+00> : vector<16x8xf32>
    %91 = tpu.matmul %90, %78, %cst_37 {dimension_numbers = #tpu.dot_dimension_numbers<[1], [0], [0], [1], [0, 0, 1, 1], [], []>} : vector<16x16xf32>, vector<16x8xf32>, vector<16x8xf32> -> vector<16x8xf32>
    %92 = vector.extract_strided_slice %16 {offsets = [24, 0], sizes = [8, 32], strides = [1, 1]} : vector<32x32xf32> to vector<8x32xf32>
    %cst_38 = arith.constant dense<0.000000e+00> : vector<16x32xf32>
    %93 = tpu.matmul %91, %92, %cst_38 {dimension_numbers = #tpu.dot_dimension_numbers<[1], [0], [0], [1], [0, 0, 1, 1], [], []>} : vector<16x8xf32>, vector<8x32xf32>, vector<16x32xf32> -> vector<16x32xf32>
    %94 = arith.addf %75, %93 : vector<16x32xf32>
    %95 = vector.broadcast %17 : vector<1x32xf32> to vector<16x32xf32>
    %96 = arith.addf %94, %95 : vector<16x32xf32>
    %97 = arith.addf %1, %96 : vector<16x32xf32>
    %cst_39 = arith.constant dense<0.000000e+00> : vector<16x32xf32>
    %98 = tpu.matmul %4, %97, %cst_39 {dimension_numbers = #tpu.dot_dimension_numbers<[1], [0], [0], [1], [0, 0, 1, 1], [], []>} : vector<16x16xf32>, vector<16x32xf32>, vector<16x32xf32> -> vector<16x32xf32>
    %99 = arith.subf %97, %98 : vector<16x32xf32>
    %c0_40 = arith.constant 0 : index
    %c0_41 = arith.constant 0 : index
    %100 = vector.load %arg11[%c0_40, %c0_41] : memref<32x32xf32, #tpu.memory_space<vmem>>, vector<32x32xf32>
    %cst_42 = arith.constant dense<0.000000e+00> : vector<16x32xf32>
    %101 = tpu.matmul %99, %100, %cst_42 {dimension_numbers = #tpu.dot_dimension_numbers<[1], [0], [0], [1], [0, 0, 1, 1], [], []>} : vector<16x32xf32>, vector<32x32xf32>, vector<16x32xf32> -> vector<16x32xf32>
    %c0_43 = arith.constant 0 : index
    %c0_44 = arith.constant 0 : index
    %102 = vector.load %arg12[%c0_43, %c0_44] : memref<1x32xf32, #tpu.memory_space<vmem>>, vector<1x32xf32>
    %103 = vector.broadcast %102 : vector<1x32xf32> to vector<16x32xf32>
    %104 = arith.addf %101, %103 : vector<16x32xf32>
    %c0_45 = arith.constant 0 : index
    %c0_46 = arith.constant 0 : index
    %105 = vector.load %arg13[%c0_45, %c0_46] : memref<32x64xf32, #tpu.memory_space<vmem>>, vector<32x64xf32>
    %cst_47 = arith.constant dense<0.000000e+00> : vector<16x64xf32>
    %106 = tpu.matmul %3, %105, %cst_47 {dimension_numbers = #tpu.dot_dimension_numbers<[1], [0], [0], [1], [0, 0, 1, 1], [], []>} : vector<16x32xf32>, vector<32x64xf32>, vector<16x64xf32> -> vector<16x64xf32>
    %c0_48 = arith.constant 0 : index
    %c0_49 = arith.constant 0 : index
    %107 = vector.load %arg14[%c0_48, %c0_49] : memref<1x64xf32, #tpu.memory_space<vmem>>, vector<1x64xf32>
    %108 = vector.broadcast %107 : vector<1x64xf32> to vector<16x64xf32>
    %109 = arith.addf %106, %108 : vector<16x64xf32>
    %110 = vector.extract_strided_slice %109 {offsets = [0, 0], sizes = [16, 32], strides = [1, 1]} : vector<16x64xf32> to vector<16x32xf32>
    %111 = vector.extract_strided_slice %109 {offsets = [0, 32], sizes = [16, 32], strides = [1, 1]} : vector<16x64xf32> to vector<16x32xf32>
    %c0_50 = arith.constant 0 : index
    %c0_51 = arith.constant 0 : index
    %112 = vector.load %arg15[%c0_50, %c0_51] : memref<32x32xf32, #tpu.memory_space<vmem>>, vector<32x32xf32>
    %c0_52 = arith.constant 0 : index
    %c0_53 = arith.constant 0 : index
    %113 = vector.load %arg16[%c0_52, %c0_53] : memref<1x32xf32, #tpu.memory_space<vmem>>, vector<1x32xf32>
    %cst_54 = arith.constant 0.000000e+00 : f32
    %114 = vector.broadcast %cst_54 : f32 to vector<16x32xf32>
    %115 = vector.extract_strided_slice %104 {offsets = [0, 0], sizes = [16, 8], strides = [1, 1]} : vector<16x32xf32> to vector<16x8xf32>
    %116 = vector.extract_strided_slice %110 {offsets = [0, 0], sizes = [16, 8], strides = [1, 1]} : vector<16x32xf32> to vector<16x8xf32>
    %117 = vector.extract_strided_slice %111 {offsets = [0, 0], sizes = [16, 8], strides = [1, 1]} : vector<16x32xf32> to vector<16x8xf32>
    %118 = tpu.transpose %116, [1, 0] : vector<16x8xf32> -> vector<8x16xf32>
    %cst_55 = arith.constant dense<0.000000e+00> : vector<16x16xf32>
    %119 = tpu.matmul %115, %118, %cst_55 {dimension_numbers = #tpu.dot_dimension_numbers<[1], [0], [0], [1], [0, 0, 1, 1], [], []>} : vector<16x8xf32>, vector<8x16xf32>, vector<16x16xf32> -> vector<16x16xf32>
    %cst_56 = arith.constant dense<0xFF800000> : vector<16xf32>
    %120 = vector.multi_reduction <maximumf>, %119, %cst_56 [1] : vector<16x16xf32> to vector<16xf32>
    %121 = vector.shape_cast %120 : vector<16xf32> to vector<16x1xf32>
    %122 = vector.broadcast %121 : vector<16x1xf32> to vector<16x16xf32>
    %123 = arith.subf %119, %122 : vector<16x16xf32>
    %124 = math.exp %123 : vector<16x16xf32>
    %cst_57 = arith.constant dense<0.000000e+00> : vector<16xf32>
    %125 = vector.multi_reduction <add>, %124, %cst_57 [1] : vector<16x16xf32> to vector<16xf32>
    %126 = vector.shape_cast %125 : vector<16xf32> to vector<16x1xf32>
    %127 = tpu.reciprocal %126 {approx = true} : vector<16x1xf32> -> vector<16x1xf32>
    %128 = vector.broadcast %127 : vector<16x1xf32> to vector<16x16xf32>
    %129 = arith.mulf %124, %128 : vector<16x16xf32>
    %cst_58 = arith.constant dense<0.000000e+00> : vector<16x8xf32>
    %130 = tpu.matmul %129, %117, %cst_58 {dimension_numbers = #tpu.dot_dimension_numbers<[1], [0], [0], [1], [0, 0, 1, 1], [], []>} : vector<16x16xf32>, vector<16x8xf32>, vector<16x8xf32> -> vector<16x8xf32>
    %131 = vector.extract_strided_slice %112 {offsets = [0, 0], sizes = [8, 32], strides = [1, 1]} : vector<32x32xf32> to vector<8x32xf32>
    %cst_59 = arith.constant dense<0.000000e+00> : vector<16x32xf32>
    %132 = tpu.matmul %130, %131, %cst_59 {dimension_numbers = #tpu.dot_dimension_numbers<[1], [0], [0], [1], [0, 0, 1, 1], [], []>} : vector<16x8xf32>, vector<8x32xf32>, vector<16x32xf32> -> vector<16x32xf32>
    %133 = arith.addf %114, %132 : vector<16x32xf32>
    %134 = vector.extract_strided_slice %104 {offsets = [0, 8], sizes = [16, 8], strides = [1, 1]} : vector<16x32xf32> to vector<16x8xf32>
    %135 = vector.extract_strided_slice %110 {offsets = [0, 8], sizes = [16, 8], strides = [1, 1]} : vector<16x32xf32> to vector<16x8xf32>
    %136 = vector.extract_strided_slice %111 {offsets = [0, 8], sizes = [16, 8], strides = [1, 1]} : vector<16x32xf32> to vector<16x8xf32>
    %137 = tpu.transpose %135, [1, 0] : vector<16x8xf32> -> vector<8x16xf32>
    %cst_60 = arith.constant dense<0.000000e+00> : vector<16x16xf32>
    %138 = tpu.matmul %134, %137, %cst_60 {dimension_numbers = #tpu.dot_dimension_numbers<[1], [0], [0], [1], [0, 0, 1, 1], [], []>} : vector<16x8xf32>, vector<8x16xf32>, vector<16x16xf32> -> vector<16x16xf32>
    %cst_61 = arith.constant dense<0xFF800000> : vector<16xf32>
    %139 = vector.multi_reduction <maximumf>, %138, %cst_61 [1] : vector<16x16xf32> to vector<16xf32>
    %140 = vector.shape_cast %139 : vector<16xf32> to vector<16x1xf32>
    %141 = vector.broadcast %140 : vector<16x1xf32> to vector<16x16xf32>
    %142 = arith.subf %138, %141 : vector<16x16xf32>
    %143 = math.exp %142 : vector<16x16xf32>
    %cst_62 = arith.constant dense<0.000000e+00> : vector<16xf32>
    %144 = vector.multi_reduction <add>, %143, %cst_62 [1] : vector<16x16xf32> to vector<16xf32>
    %145 = vector.shape_cast %144 : vector<16xf32> to vector<16x1xf32>
    %146 = tpu.reciprocal %145 {approx = true} : vector<16x1xf32> -> vector<16x1xf32>
    %147 = vector.broadcast %146 : vector<16x1xf32> to vector<16x16xf32>
    %148 = arith.mulf %143, %147 : vector<16x16xf32>
    %cst_63 = arith.constant dense<0.000000e+00> : vector<16x8xf32>
    %149 = tpu.matmul %148, %136, %cst_63 {dimension_numbers = #tpu.dot_dimension_numbers<[1], [0], [0], [1], [0, 0, 1, 1], [], []>} : vector<16x16xf32>, vector<16x8xf32>, vector<16x8xf32> -> vector<16x8xf32>
    %150 = vector.extract_strided_slice %112 {offsets = [8, 0], sizes = [8, 32], strides = [1, 1]} : vector<32x32xf32> to vector<8x32xf32>
    %cst_64 = arith.constant dense<0.000000e+00> : vector<16x32xf32>
    %151 = tpu.matmul %149, %150, %cst_64 {dimension_numbers = #tpu.dot_dimension_numbers<[1], [0], [0], [1], [0, 0, 1, 1], [], []>} : vector<16x8xf32>, vector<8x32xf32>, vector<16x32xf32> -> vector<16x32xf32>
    %152 = arith.addf %133, %151 : vector<16x32xf32>
    %153 = vector.extract_strided_slice %104 {offsets = [0, 16], sizes = [16, 8], strides = [1, 1]} : vector<16x32xf32> to vector<16x8xf32>
    %154 = vector.extract_strided_slice %110 {offsets = [0, 16], sizes = [16, 8], strides = [1, 1]} : vector<16x32xf32> to vector<16x8xf32>
    %155 = vector.extract_strided_slice %111 {offsets = [0, 16], sizes = [16, 8], strides = [1, 1]} : vector<16x32xf32> to vector<16x8xf32>
    %156 = tpu.transpose %154, [1, 0] : vector<16x8xf32> -> vector<8x16xf32>
    %cst_65 = arith.constant dense<0.000000e+00> : vector<16x16xf32>
    %157 = tpu.matmul %153, %156, %cst_65 {dimension_numbers = #tpu.dot_dimension_numbers<[1], [0], [0], [1], [0, 0, 1, 1], [], []>} : vector<16x8xf32>, vector<8x16xf32>, vector<16x16xf32> -> vector<16x16xf32>
    %cst_66 = arith.constant dense<0xFF800000> : vector<16xf32>
    %158 = vector.multi_reduction <maximumf>, %157, %cst_66 [1] : vector<16x16xf32> to vector<16xf32>
    %159 = vector.shape_cast %158 : vector<16xf32> to vector<16x1xf32>
    %160 = vector.broadcast %159 : vector<16x1xf32> to vector<16x16xf32>
    %161 = arith.subf %157, %160 : vector<16x16xf32>
    %162 = math.exp %161 : vector<16x16xf32>
    %cst_67 = arith.constant dense<0.000000e+00> : vector<16xf32>
    %163 = vector.multi_reduction <add>, %162, %cst_67 [1] : vector<16x16xf32> to vector<16xf32>
    %164 = vector.shape_cast %163 : vector<16xf32> to vector<16x1xf32>
    %165 = tpu.reciprocal %164 {approx = true} : vector<16x1xf32> -> vector<16x1xf32>
    %166 = vector.broadcast %165 : vector<16x1xf32> to vector<16x16xf32>
    %167 = arith.mulf %162, %166 : vector<16x16xf32>
    %cst_68 = arith.constant dense<0.000000e+00> : vector<16x8xf32>
    %168 = tpu.matmul %167, %155, %cst_68 {dimension_numbers = #tpu.dot_dimension_numbers<[1], [0], [0], [1], [0, 0, 1, 1], [], []>} : vector<16x16xf32>, vector<16x8xf32>, vector<16x8xf32> -> vector<16x8xf32>
    %169 = vector.extract_strided_slice %112 {offsets = [16, 0], sizes = [8, 32], strides = [1, 1]} : vector<32x32xf32> to vector<8x32xf32>
    %cst_69 = arith.constant dense<0.000000e+00> : vector<16x32xf32>
    %170 = tpu.matmul %168, %169, %cst_69 {dimension_numbers = #tpu.dot_dimension_numbers<[1], [0], [0], [1], [0, 0, 1, 1], [], []>} : vector<16x8xf32>, vector<8x32xf32>, vector<16x32xf32> -> vector<16x32xf32>
    %171 = arith.addf %152, %170 : vector<16x32xf32>
    %172 = vector.extract_strided_slice %104 {offsets = [0, 24], sizes = [16, 8], strides = [1, 1]} : vector<16x32xf32> to vector<16x8xf32>
    %173 = vector.extract_strided_slice %110 {offsets = [0, 24], sizes = [16, 8], strides = [1, 1]} : vector<16x32xf32> to vector<16x8xf32>
    %174 = vector.extract_strided_slice %111 {offsets = [0, 24], sizes = [16, 8], strides = [1, 1]} : vector<16x32xf32> to vector<16x8xf32>
    %175 = tpu.transpose %173, [1, 0] : vector<16x8xf32> -> vector<8x16xf32>
    %cst_70 = arith.constant dense<0.000000e+00> : vector<16x16xf32>
    %176 = tpu.matmul %172, %175, %cst_70 {dimension_numbers = #tpu.dot_dimension_numbers<[1], [0], [0], [1], [0, 0, 1, 1], [], []>} : vector<16x8xf32>, vector<8x16xf32>, vector<16x16xf32> -> vector<16x16xf32>
    %cst_71 = arith.constant dense<0xFF800000> : vector<16xf32>
    %177 = vector.multi_reduction <maximumf>, %176, %cst_71 [1] : vector<16x16xf32> to vector<16xf32>
    %178 = vector.shape_cast %177 : vector<16xf32> to vector<16x1xf32>
    %179 = vector.broadcast %178 : vector<16x1xf32> to vector<16x16xf32>
    %180 = arith.subf %176, %179 : vector<16x16xf32>
    %181 = math.exp %180 : vector<16x16xf32>
    %cst_72 = arith.constant dense<0.000000e+00> : vector<16xf32>
    %182 = vector.multi_reduction <add>, %181, %cst_72 [1] : vector<16x16xf32> to vector<16xf32>
    %183 = vector.shape_cast %182 : vector<16xf32> to vector<16x1xf32>
    %184 = tpu.reciprocal %183 {approx = true} : vector<16x1xf32> -> vector<16x1xf32>
    %185 = vector.broadcast %184 : vector<16x1xf32> to vector<16x16xf32>
    %186 = arith.mulf %181, %185 : vector<16x16xf32>
    %cst_73 = arith.constant dense<0.000000e+00> : vector<16x8xf32>
    %187 = tpu.matmul %186, %174, %cst_73 {dimension_numbers = #tpu.dot_dimension_numbers<[1], [0], [0], [1], [0, 0, 1, 1], [], []>} : vector<16x16xf32>, vector<16x8xf32>, vector<16x8xf32> -> vector<16x8xf32>
    %188 = vector.extract_strided_slice %112 {offsets = [24, 0], sizes = [8, 32], strides = [1, 1]} : vector<32x32xf32> to vector<8x32xf32>
    %cst_74 = arith.constant dense<0.000000e+00> : vector<16x32xf32>
    %189 = tpu.matmul %187, %188, %cst_74 {dimension_numbers = #tpu.dot_dimension_numbers<[1], [0], [0], [1], [0, 0, 1, 1], [], []>} : vector<16x8xf32>, vector<8x32xf32>, vector<16x32xf32> -> vector<16x32xf32>
    %190 = arith.addf %171, %189 : vector<16x32xf32>
    %191 = vector.broadcast %113 : vector<1x32xf32> to vector<16x32xf32>
    %192 = arith.addf %190, %191 : vector<16x32xf32>
    %193 = arith.addf %99, %192 : vector<16x32xf32>
    %cst_75 = arith.constant dense<0.000000e+00> : vector<16x32xf32>
    %194 = tpu.matmul %4, %193, %cst_75 {dimension_numbers = #tpu.dot_dimension_numbers<[1], [0], [0], [1], [0, 0, 1, 1], [], []>} : vector<16x16xf32>, vector<16x32xf32>, vector<16x32xf32> -> vector<16x32xf32>
    %195 = arith.subf %193, %194 : vector<16x32xf32>
    %c0_76 = arith.constant 0 : index
    %c0_77 = arith.constant 0 : index
    %196 = vector.load %arg17[%c0_76, %c0_77] : memref<32x64xf32, #tpu.memory_space<vmem>>, vector<32x64xf32>
    %c0_78 = arith.constant 0 : index
    %c0_79 = arith.constant 0 : index
    %197 = vector.load %arg18[%c0_78, %c0_79] : memref<1x64xf32, #tpu.memory_space<vmem>>, vector<1x64xf32>
    %c0_80 = arith.constant 0 : index
    %c0_81 = arith.constant 0 : index
    %198 = vector.load %arg19[%c0_80, %c0_81] : memref<64x32xf32, #tpu.memory_space<vmem>>, vector<64x32xf32>
    %c0_82 = arith.constant 0 : index
    %c0_83 = arith.constant 0 : index
    %199 = vector.load %arg20[%c0_82, %c0_83] : memref<1x32xf32, #tpu.memory_space<vmem>>, vector<1x32xf32>
    %cst_84 = arith.constant dense<0.000000e+00> : vector<16x64xf32>
    %200 = tpu.matmul %195, %196, %cst_84 {dimension_numbers = #tpu.dot_dimension_numbers<[1], [0], [0], [1], [0, 0, 1, 1], [], []>} : vector<16x32xf32>, vector<32x64xf32>, vector<16x64xf32> -> vector<16x64xf32>
    %201 = vector.broadcast %197 : vector<1x64xf32> to vector<16x64xf32>
    %202 = arith.addf %200, %201 : vector<16x64xf32>
    %203 = arith.mulf %202, %202 : vector<16x64xf32>
    %204 = arith.mulf %202, %203 : vector<16x64xf32>
    %cst_85 = arith.constant 4.471500e-02 : f32
    %205 = vector.broadcast %cst_85 : f32 to vector<16x64xf32>
    %206 = arith.mulf %205, %204 : vector<16x64xf32>
    %207 = arith.addf %202, %206 : vector<16x64xf32>
    %cst_86 = arith.constant 0.797884583 : f32
    %208 = vector.broadcast %cst_86 : f32 to vector<16x64xf32>
    %209 = arith.mulf %208, %207 : vector<16x64xf32>
    %210 = math.tanh %209 : vector<16x64xf32>
    %cst_87 = arith.constant 1.000000e+00 : f32
    %211 = vector.broadcast %cst_87 : f32 to vector<16x64xf32>
    %212 = arith.addf %211, %210 : vector<16x64xf32>
    %cst_88 = arith.constant 5.000000e-01 : f32
    %213 = vector.broadcast %cst_88 : f32 to vector<16x64xf32>
    %214 = arith.mulf %213, %212 : vector<16x64xf32>
    %215 = arith.mulf %202, %214 : vector<16x64xf32>
    %cst_89 = arith.constant dense<0.000000e+00> : vector<16x32xf32>
    %216 = tpu.matmul %215, %198, %cst_89 {dimension_numbers = #tpu.dot_dimension_numbers<[1], [0], [0], [1], [0, 0, 1, 1], [], []>} : vector<16x64xf32>, vector<64x32xf32>, vector<16x32xf32> -> vector<16x32xf32>
    %217 = vector.broadcast %199 : vector<1x32xf32> to vector<16x32xf32>
    %218 = arith.addf %216, %217 : vector<16x32xf32>
    %219 = arith.addf %195, %218 : vector<16x32xf32>
    %cst_90 = arith.constant dense<0.000000e+00> : vector<16x32xf32>
    %220 = tpu.matmul %4, %219, %cst_90 {dimension_numbers = #tpu.dot_dimension_numbers<[1], [0], [0], [1], [0, 0, 1, 1], [], []>} : vector<16x16xf32>, vector<16x32xf32>, vector<16x32xf32> -> vector<16x32xf32>
    %221 = arith.subf %219, %220 : vector<16x32xf32>
    %222 = arith.addf %98, %194 : vector<16x32xf32>
    %223 = arith.addf %222, %220 : vector<16x32xf32>
    %c0_91 = arith.constant 0 : index
    %c0_92 = arith.constant 0 : index
    %224 = vector.load %arg5[%c0_91, %c0_92] : memref<16x16xf32, #tpu.memory_space<vmem>>, vector<16x16xf32>
    %cst_93 = arith.constant dense<0.000000e+00> : vector<16x32xf32>
    %225 = tpu.matmul %224, %223, %cst_93 {dimension_numbers = #tpu.dot_dimension_numbers<[1], [0], [0], [1], [0, 0, 1, 1], [], []>} : vector<16x16xf32>, vector<16x32xf32>, vector<16x32xf32> -> vector<16x32xf32>
    %c0_94 = arith.constant 0 : index
    %c0_95 = arith.constant 0 : index
    %226 = vector.load %arg6[%c0_94, %c0_95] : memref<16x16xf32, #tpu.memory_space<vmem>>, vector<16x16xf32>
    %cst_96 = arith.constant dense<0.000000e+00> : vector<16x32xf32>
    %227 = tpu.matmul %226, %223, %cst_96 {dimension_numbers = #tpu.dot_dimension_numbers<[1], [0], [0], [1], [0, 0, 1, 1], [], []>} : vector<16x16xf32>, vector<16x32xf32>, vector<16x32xf32> -> vector<16x32xf32>
    %c0_97 = arith.constant 0 : index
    %c0_98 = arith.constant 0 : index
    %228 = vector.load %arg21[%c0_97, %c0_98] : memref<32x128xf32, #tpu.memory_space<vmem>>, vector<32x128xf32>
    %cst_99 = arith.constant dense<0.000000e+00> : vector<16x128xf32>
    %229 = tpu.matmul %225, %228, %cst_99 {dimension_numbers = #tpu.dot_dimension_numbers<[1], [0], [0], [1], [0, 0, 1, 1], [], []>} : vector<16x32xf32>, vector<32x128xf32>, vector<16x128xf32> -> vector<16x128xf32>
    %c0_100 = arith.constant 0 : index
    %c0_101 = arith.constant 0 : index
    %230 = vector.load %arg22[%c0_100, %c0_101] : memref<32x128xf32, #tpu.memory_space<vmem>>, vector<32x128xf32>
    %cst_102 = arith.constant dense<0.000000e+00> : vector<16x128xf32>
    %231 = tpu.matmul %223, %230, %cst_102 {dimension_numbers = #tpu.dot_dimension_numbers<[1], [0], [0], [1], [0, 0, 1, 1], [], []>} : vector<16x32xf32>, vector<32x128xf32>, vector<16x128xf32> -> vector<16x128xf32>
    %232 = arith.addf %229, %231 : vector<16x128xf32>
    %c0_103 = arith.constant 0 : index
    %c0_104 = arith.constant 0 : index
    %233 = vector.load %arg23[%c0_103, %c0_104] : memref<32x128xf32, #tpu.memory_space<vmem>>, vector<32x128xf32>
    %cst_105 = arith.constant dense<0.000000e+00> : vector<16x128xf32>
    %234 = tpu.matmul %227, %233, %cst_105 {dimension_numbers = #tpu.dot_dimension_numbers<[1], [0], [0], [1], [0, 0, 1, 1], [], []>} : vector<16x32xf32>, vector<32x128xf32>, vector<16x128xf32> -> vector<16x128xf32>
    %235 = arith.addf %232, %234 : vector<16x128xf32>
    %c0_106 = arith.constant 0 : index
    %c0_107 = arith.constant 0 : index
    %c0_108 = arith.constant 0 : index
    %236 = vector.load %arg24[%c0_106, %c0_107, %c0_108] : memref<1x16x32xf32, #tpu.memory_space<vmem>>, vector<1x16x32xf32>
    %237 = vector.shape_cast %236 : vector<1x16x32xf32> to vector<16x32xf32>
    %238 = vector.shape_cast %221 : vector<16x32xf32> to vector<1x16x32xf32>
    tpu.vector_store %arg24[%c0_106, %c0_107, %c0_108], %238 {strides = array<i32>} : memref<1x16x32xf32, #tpu.memory_space<vmem>>, vector<1x16x32xf32>,
    %c0_109 = arith.constant 0 : index
    %c0_110 = arith.constant 0 : index
    %c0_111 = arith.constant 0 : index
    %239 = vector.load %arg25[%c0_109, %c0_110, %c0_111] : memref<1x16x128xf32, #tpu.memory_space<vmem>>, vector<1x16x128xf32>
    %240 = vector.shape_cast %239 : vector<1x16x128xf32> to vector<16x128xf32>
    %241 = vector.shape_cast %235 : vector<16x128xf32> to vector<1x16x128xf32>
    tpu.vector_store %arg25[%c0_109, %c0_110, %c0_111], %241 {strides = array<i32>} : memref<1x16x128xf32, #tpu.memory_space<vmem>>, vector<1x16x128xf32>,
    return
  }
  func.func @transform_0(%arg0: i32) -> (i32, i32, i32) {
    %c0_i32 = arith.constant 0 : i32
    %c0_i32_0 = arith.constant 0 : i32
    %c0_i32_1 = arith.constant 0 : i32
    return %arg0, %c0_i32, %c0_i32_0 : i32, i32, i32
  }
  func.func @transform_1(%arg0: i32) -> (i32, i32, i32) {
    %c0_i32 = arith.constant 0 : i32
    %c0_i32_0 = arith.constant 0 : i32
    %c0_i32_1 = arith.constant 0 : i32
    return %arg0, %c0_i32, %c0_i32_0 : i32, i32, i32
  }
  func.func @transform_2(%arg0: i32) -> (i32, i32, i32) {
    %c0_i32 = arith.constant 0 : i32
    %c0_i32_0 = arith.constant 0 : i32
    %c0_i32_1 = arith.constant 0 : i32
    return %arg0, %c0_i32, %c0_i32_0 : i32, i32, i32
  }
  func.func @transform_3(%arg0: i32) -> (i32, i32) {
    %c0_i32 = arith.constant 0 : i32
    %c0_i32_0 = arith.constant 0 : i32
    %c0_i32_1 = arith.constant 0 : i32
    return %c0_i32, %c0_i32_0 : i32, i32
  }
  func.func @transform_4(%arg0: i32) -> (i32, i32) {
    %c0_i32 = arith.constant 0 : i32
    %c0_i32_0 = arith.constant 0 : i32
    %c0_i32_1 = arith.constant 0 : i32
    return %c0_i32, %c0_i32_0 : i32, i32
  }
  func.func @transform_5(%arg0: i32) -> (i32, i32) {
    %c0_i32 = arith.constant 0 : i32
    %c0_i32_0 = arith.constant 0 : i32
    %c0_i32_1 = arith.constant 0 : i32
    return %c0_i32, %c0_i32_0 : i32, i32
  }
  func.func @transform_6(%arg0: i32) -> (i32, i32) {
    %c0_i32 = arith.constant 0 : i32
    %c0_i32_0 = arith.constant 0 : i32
    %c0_i32_1 = arith.constant 0 : i32
    return %c0_i32, %c0_i32_0 : i32, i32
  }
  func.func @transform_7(%arg0: i32) -> (i32, i32) {
    %c0_i32 = arith.constant 0 : i32
    %c0_i32_0 = arith.constant 0 : i32
    %c0_i32_1 = arith.constant 0 : i32
    return %c0_i32, %c0_i32_0 : i32, i32
  }
  func.func @transform_8(%arg0: i32) -> (i32, i32) {
    %c0_i32 = arith.constant 0 : i32
    %c0_i32_0 = arith.constant 0 : i32
    %c0_i32_1 = arith.constant 0 : i32
    return %c0_i32, %c0_i32_0 : i32, i32
  }
  func.func @transform_9(%arg0: i32) -> (i32, i32) {
    %c0_i32 = arith.constant 0 : i32
    %c0_i32_0 = arith.constant 0 : i32
    %c0_i32_1 = arith.constant 0 : i32
    return %c0_i32, %c0_i32_0 : i32, i32
  }
  func.func @transform_10(%arg0: i32) -> (i32, i32) {
    %c0_i32 = arith.constant 0 : i32
    %c0_i32_0 = arith.constant 0 : i32
    %c0_i32_1 = arith.constant 0 : i32
    return %c0_i32, %c0_i32_0 : i32, i32
  }
  func.func @transform_11(%arg0: i32) -> (i32, i32) {
    %c0_i32 = arith.constant 0 : i32
    %c0_i32_0 = arith.constant 0 : i32
    %c0_i32_1 = arith.constant 0 : i32
    return %c0_i32, %c0_i32_0 : i32, i32
  }
  func.func @transform_12(%arg0: i32) -> (i32, i32) {
    %c0_i32 = arith.constant 0 : i32
    %c0_i32_0 = arith.constant 0 : i32
    %c0_i32_1 = arith.constant 0 : i32
    return %c0_i32, %c0_i32_0 : i32, i32
  }
  func.func @transform_13(%arg0: i32) -> (i32, i32) {
    %c0_i32 = arith.constant 0 : i32
    %c0_i32_0 = arith.constant 0 : i32
    %c0_i32_1 = arith.constant 0 : i32
    return %c0_i32, %c0_i32_0 : i32, i32
  }
  func.func @transform_14(%arg0: i32) -> (i32, i32) {
    %c0_i32 = arith.constant 0 : i32
    %c0_i32_0 = arith.constant 0 : i32
    %c0_i32_1 = arith.constant 0 : i32
    return %c0_i32, %c0_i32_0 : i32, i32
  }
  func.func @transform_15(%arg0: i32) -> (i32, i32) {
    %c0_i32 = arith.constant 0 : i32
    %c0_i32_0 = arith.constant 0 : i32
    %c0_i32_1 = arith.constant 0 : i32
    return %c0_i32, %c0_i32_0 : i32, i32
  }
  func.func @transform_16(%arg0: i32) -> (i32, i32) {
    %c0_i32 = arith.constant 0 : i32
    %c0_i32_0 = arith.constant 0 : i32
    %c0_i32_1 = arith.constant 0 : i32
    return %c0_i32, %c0_i32_0 : i32, i32
  }
  func.func @transform_17(%arg0: i32) -> (i32, i32) {
    %c0_i32 = arith.constant 0 : i32
    %c0_i32_0 = arith.constant 0 : i32
    %c0_i32_1 = arith.constant 0 : i32
    return %c0_i32, %c0_i32_0 : i32, i32
  }
  func.func @transform_18(%arg0: i32) -> (i32, i32) {
    %c0_i32 = arith.constant 0 : i32
    %c0_i32_0 = arith.constant 0 : i32
    %c0_i32_1 = arith.constant 0 : i32
    return %c0_i32, %c0_i32_0 : i32, i32
  }
  func.func @transform_19(%arg0: i32) -> (i32, i32) {
    %c0_i32 = arith.constant 0 : i32
    %c0_i32_0 = arith.constant 0 : i32
    %c0_i32_1 = arith.constant 0 : i32
    return %c0_i32, %c0_i32_0 : i32, i32
  }
  func.func @transform_20(%arg0: i32) -> (i32, i32) {
    %c0_i32 = arith.constant 0 : i32
    %c0_i32_0 = arith.constant 0 : i32
    %c0_i32_1 = arith.constant 0 : i32
    return %c0_i32, %c0_i32_0 : i32, i32
  }
  func.func @transform_21(%arg0: i32) -> (i32, i32) {
    %c0_i32 = arith.constant 0 : i32
    %c0_i32_0 = arith.constant 0 : i32
    %c0_i32_1 = arith.constant 0 : i32
    return %c0_i32, %c0_i32_0 : i32, i32
  }
  func.func @transform_22(%arg0: i32) -> (i32, i32) {
    %c0_i32 = arith.constant 0 : i32
    %c0_i32_0 = arith.constant 0 : i32
    %c0_i32_1 = arith.constant 0 : i32
    return %c0_i32, %c0_i32_0 : i32, i32
  }
  func.func @transform_23(%arg0: i32) -> (i32, i32, i32) {
    %c0_i32 = arith.constant 0 : i32
    %c0_i32_0 = arith.constant 0 : i32
    %c0_i32_1 = arith.constant 0 : i32
    return %arg0, %c0_i32, %c0_i32_0 : i32, i32, i32
  }
  func.func @transform_24(%arg0: i32) -> (i32, i32, i32) {
    %c0_i32 = arith.constant 0 : i32
    %c0_i32_0 = arith.constant 0 : i32
    %c0_i32_1 = arith.constant 0 : i32
    return %arg0, %c0_i32, %c0_i32_0 : i32, i32, i32
  }
}

module attributes {stable_mosaic.version = 11 : i64} {
  func.func @_dec_final_kernel(%arg0: i32, %arg1: memref<1x16x32xf32, #tpu.memory_space<vmem>>, %arg2: memref<1x32xf32, #tpu.memory_space<vmem>>, %arg3: memref<1x32xf32, #tpu.memory_space<vmem>>, %arg4: memref<32x128xf32, #tpu.memory_space<vmem>>, %arg5: memref<1x128xf32, #tpu.memory_space<vmem>>, %arg6: memref<1x16x128xf32, #tpu.memory_space<vmem>>) attributes {dimension_semantics = [#tpu.dimension_semantics<parallel>], iteration_bounds = array<i64: 2>, scalar_prefetch = 0 : i64, scratch_operands = 0 : i64, tpu.core_type = #tpu.core_type<tc>, window_params = [{transform_indices = @transform_0, window_bounds = array<i64: 1, 16, 32>}, {pipeline_mode = #tpu.pipeline_mode<synchronous>, transform_indices = @transform_1, window_bounds = array<i64: 1, 32>}, {pipeline_mode = #tpu.pipeline_mode<synchronous>, transform_indices = @transform_2, window_bounds = array<i64: 1, 32>}, {pipeline_mode = #tpu.pipeline_mode<synchronous>, transform_indices = @transform_3, window_bounds = array<i64: 32, 128>}, {pipeline_mode = #tpu.pipeline_mode<synchronous>, transform_indices = @transform_4, window_bounds = array<i64: 1, 128>}, {transform_indices = @transform_5, window_bounds = array<i64: 1, 16, 128>}]} {
    %c0 = arith.constant 0 : index
    %c0_0 = arith.constant 0 : index
    %c0_1 = arith.constant 0 : index
    %0 = vector.load %arg1[%c0, %c0_0, %c0_1] : memref<1x16x32xf32, #tpu.memory_space<vmem>>, vector<1x16x32xf32>
    %1 = vector.shape_cast %0 : vector<1x16x32xf32> to vector<16x32xf32>
    %c0_2 = arith.constant 0 : index
    %c0_3 = arith.constant 0 : index
    %2 = vector.load %arg2[%c0_2, %c0_3] : memref<1x32xf32, #tpu.memory_space<vmem>>, vector<1x32xf32>
    %c0_4 = arith.constant 0 : index
    %c0_5 = arith.constant 0 : index
    %3 = vector.load %arg3[%c0_4, %c0_5] : memref<1x32xf32, #tpu.memory_space<vmem>>, vector<1x32xf32>
    %cst = arith.constant dense<0.000000e+00> : vector<16xf32>
    %4 = vector.multi_reduction <add>, %1, %cst [1] : vector<16x32xf32> to vector<16xf32>
    %5 = vector.shape_cast %4 : vector<16xf32> to vector<16x1xf32>
    %cst_6 = arith.constant 3.200000e+01 : f32
    %6 = vector.broadcast %cst_6 : f32 to vector<16x1xf32>
    %7 = arith.divf %5, %6 : vector<16x1xf32>
    %8 = vector.broadcast %7 : vector<16x1xf32> to vector<16x32xf32>
    %9 = arith.subf %1, %8 : vector<16x32xf32>
    %10 = arith.mulf %9, %9 : vector<16x32xf32>
    %cst_7 = arith.constant dense<0.000000e+00> : vector<16xf32>
    %11 = vector.multi_reduction <add>, %10, %cst_7 [1] : vector<16x32xf32> to vector<16xf32>
    %12 = vector.shape_cast %11 : vector<16xf32> to vector<16x1xf32>
    %cst_8 = arith.constant 3.200000e+01 : f32
    %13 = vector.broadcast %cst_8 : f32 to vector<16x1xf32>
    %14 = arith.divf %12, %13 : vector<16x1xf32>
    %15 = vector.broadcast %7 : vector<16x1xf32> to vector<16x32xf32>
    %16 = arith.subf %1, %15 : vector<16x32xf32>
    %cst_9 = arith.constant 9.99999974E-6 : f32
    %17 = vector.broadcast %cst_9 : f32 to vector<16x1xf32>
    %18 = arith.addf %14, %17 : vector<16x1xf32>
    %19 = math.rsqrt %18 : vector<16x1xf32>
    %20 = vector.broadcast %19 : vector<16x1xf32> to vector<16x32xf32>
    %21 = arith.mulf %16, %20 : vector<16x32xf32>
    %22 = vector.broadcast %2 : vector<1x32xf32> to vector<16x32xf32>
    %23 = arith.mulf %21, %22 : vector<16x32xf32>
    %24 = vector.broadcast %3 : vector<1x32xf32> to vector<16x32xf32>
    %25 = arith.addf %23, %24 : vector<16x32xf32>
    %cst_10 = arith.constant dense<0.000000e+00> : vector<32xf32>
    %26 = vector.multi_reduction <add>, %25, %cst_10 [0] : vector<16x32xf32> to vector<32xf32>
    %27 = vector.shape_cast %26 : vector<32xf32> to vector<1x32xf32>
    %cst_11 = arith.constant 1.600000e+01 : f32
    %28 = vector.broadcast %cst_11 : f32 to vector<1x32xf32>
    %29 = arith.divf %27, %28 : vector<1x32xf32>
    %30 = vector.broadcast %29 : vector<1x32xf32> to vector<16x32xf32>
    %31 = arith.subf %25, %30 : vector<16x32xf32>
    %c0_12 = arith.constant 0 : index
    %c0_13 = arith.constant 0 : index
    %32 = vector.load %arg4[%c0_12, %c0_13] : memref<32x128xf32, #tpu.memory_space<vmem>>, vector<32x128xf32>
    %cst_14 = arith.constant dense<0.000000e+00> : vector<16x128xf32>
    %33 = tpu.matmul %31, %32, %cst_14 {dimension_numbers = #tpu.dot_dimension_numbers<[1], [0], [0], [1], [0, 0, 1, 1], [], []>} : vector<16x32xf32>, vector<32x128xf32>, vector<16x128xf32> -> vector<16x128xf32>
    %c0_15 = arith.constant 0 : index
    %c0_16 = arith.constant 0 : index
    %34 = vector.load %arg5[%c0_15, %c0_16] : memref<1x128xf32, #tpu.memory_space<vmem>>, vector<1x128xf32>
    %35 = vector.broadcast %34 : vector<1x128xf32> to vector<16x128xf32>
    %36 = arith.addf %33, %35 : vector<16x128xf32>
    %c0_17 = arith.constant 0 : index
    %c0_18 = arith.constant 0 : index
    %c0_19 = arith.constant 0 : index
    %37 = vector.load %arg6[%c0_17, %c0_18, %c0_19] : memref<1x16x128xf32, #tpu.memory_space<vmem>>, vector<1x16x128xf32>
    %38 = vector.shape_cast %37 : vector<1x16x128xf32> to vector<16x128xf32>
    %39 = vector.shape_cast %36 : vector<16x128xf32> to vector<1x16x128xf32>
    tpu.vector_store %arg6[%c0_17, %c0_18, %c0_19], %39 {strides = array<i32>} : memref<1x16x128xf32, #tpu.memory_space<vmem>>, vector<1x16x128xf32>,
    return
  }
  func.func @transform_0(%arg0: i32) -> (i32, i32, i32) {
    %c0_i32 = arith.constant 0 : i32
    %c0_i32_0 = arith.constant 0 : i32
    %c0_i32_1 = arith.constant 0 : i32
    return %arg0, %c0_i32, %c0_i32_0 : i32, i32, i32
  }
  func.func @transform_1(%arg0: i32) -> (i32, i32) {
    %c0_i32 = arith.constant 0 : i32
    %c0_i32_0 = arith.constant 0 : i32
    %c0_i32_1 = arith.constant 0 : i32
    return %c0_i32, %c0_i32_0 : i32, i32
  }
  func.func @transform_2(%arg0: i32) -> (i32, i32) {
    %c0_i32 = arith.constant 0 : i32
    %c0_i32_0 = arith.constant 0 : i32
    %c0_i32_1 = arith.constant 0 : i32
    return %c0_i32, %c0_i32_0 : i32, i32
  }
  func.func @transform_3(%arg0: i32) -> (i32, i32) {
    %c0_i32 = arith.constant 0 : i32
    %c0_i32_0 = arith.constant 0 : i32
    %c0_i32_1 = arith.constant 0 : i32
    return %c0_i32, %c0_i32_0 : i32, i32
  }
  func.func @transform_4(%arg0: i32) -> (i32, i32) {
    %c0_i32 = arith.constant 0 : i32
    %c0_i32_0 = arith.constant 0 : i32
    %c0_i32_1 = arith.constant 0 : i32
    return %c0_i32, %c0_i32_0 : i32, i32
  }
  func.func @transform_5(%arg0: i32) -> (i32, i32, i32) {
    %c0_i32 = arith.constant 0 : i32
    %c0_i32_0 = arith.constant 0 : i32
    %c0_i32_1 = arith.constant 0 : i32
    return %arg0, %c0_i32, %c0_i32_0 : i32, i32, i32
  }
}

</mosaic_0001>

<llo_original>
// kernel: neg.9
$region0: #{neg.9}
  #allocation0 [shape = 's32[1]{0}', space=sflag, size = 0x4, scoped, tag = 'scoped memory for neg.9']
  %s0 = inlined_call_operand.vmem [shape: f32[2,16], index: 0, kind: input, shape index: {}]
  %s1 = inlined_call_operand.vmem [shape: f32[2,16], index: 1, kind: output, shape index: {}]
  %v2 = vld [vmem:[%s0] sm:$0x3]
  %3 = xla_tuple %v2
  %4 = xla_tuple %3
  %v5 = vxor.u32 %v2, 2147483648
  %6 = xla_tuple %v5
  %7 = vst [vmem:[%s1] sm:$0x3] %v5

// kernel: forward.7
$region0: #{forward.7}
  #allocation0 [shape = 'u32[]', space=smem, size = 0x4, offset = 0x4, fixed_abs, tag = 'smem constant byte address 0x4 - core index']
  #allocation1 [shape = 'u32[144,128]{1,0:T(1,128)}', space=vmem, size = 0x12000, scoped, tag = 'internal scratch']
  %s0 = inlined_call_operand.vmem [shape: f32[2,16,4], index: 0, kind: input, shape index: {}]
  %s1 = inlined_call_operand.vmem [shape: f32[16,16], index: 1, kind: input, shape index: {}]
  %s2 = inlined_call_operand.vmem [shape: f32[2,16,4], index: 2, kind: output, shape index: {0}]
  %s3 = inlined_call_operand.vmem [shape: f32[2,16,4], index: 3, kind: output, shape index: {1}]
  %4 = xla_tuple %s2, %s3
  %s5 = sld [smem:[#allocation0]]
  $region49: #{forward.7} parent=0
    _
  %s7 = ssub.s32 1, %s5
  %s8 = scalar_select 0, %s7, %s5
  loop: start=0, step=1, limit=4
  $region2: #{forward.7} parent=0 // loop_pre_header
    _
  $region3: #{forward.7} parent=0 // loop_header
    %s10 = sphi 0, %s14
    %p11 = scmp.ge.s32.totalorder %s10, 4
    %s20 = sphi 0, %s22
    %s23 = sphi 0, %s20
    %s24 = sphi 0, %s23
    %s40 = sphi 0, %s24
    %s44 = sphi 0, %s44
    %s46 = sphi 0, %s44
    %s47 = sphi 0, %s46
    %s61 = sphi 0, %s47
    %s67 = sphi 0, %s69
    %s70 = sphi 0, %s67
    %s71 = sphi 0, %s70
    %s87 = sphi 0, %s71
    %s93 = sphi 0, %s95
    %s96 = sphi 0, %s93
    %s97 = sphi 0, %s96
    %s113 = sphi 0, %s97
  $region4: #{forward.7} parent=0 // loop_header_branch
    %13 = sbr.rel (%p11) target = $region8
  $region5: #{forward.7} parent=0 // loop_body
    %s15 = ssub.s32 %s10, 1
    %s16 = ssub.s32 %s10, 2
    %s17 = sadd.s32 %s10, 1
    %s18 = ssub.s32 %s10, %s17
    %p19 = scmp.eq.s32.totalorder %s18, 0
    %s21 = sadd.s32 %s20, 1
    %s22 = scalar_select %p19, %s20, %s21
    %p25 = pneg %p19
    %p26 = scmp.eq.s32.totalorder %s10, 1
    %p27 = por %p25, %p26
    %p28 = scmp.ne.s32.totalorder %s20, %s23
    %p29 = scmp.eq.s32.totalorder %s10, 0
    %p30 = por %p28, %p29
    %p31 = scmp.ne.s32.totalorder %s20, %s23
    %p32 = scmp.eq.s32.totalorder %s15, 1
    %p33 = por %p31, %p32
    %p34 = scmp.ne.s32.totalorder %s23, %s24
    %p35 = scmp.eq.s32.totalorder %s15, 0
    %p36 = por %p34, %p35
    %p37 = scmp.ne.s32.totalorder %s23, %s24
    %p38 = scmp.eq.s32.totalorder %s16, 1
    %p39 = por %p37, %p38
    %p41 = scmp.ne.s32.totalorder %s24, %s40
    %p42 = scmp.eq.s32.totalorder %s16, 0
    %p43 = por %p41, %p42
    %s45 = sadd.s32 %s44, 1
    %p48 = scmp.eq.s32.totalorder %s10, 1
    %p49 = scmp.ne.s32.totalorder %s44, %s46
    %p50 = scmp.eq.s32.totalorder %s10, 0
    %p51 = por %p49, %p50
    %p52 = scmp.ne.s32.totalorder %s44, %s46
    %p53 = scmp.eq.s32.totalorder %s15, 1
    %p54 = por %p52, %p53
    %p55 = scmp.ne.s32.totalorder %s46, %s47
    %p56 = scmp.eq.s32.totalorder %s15, 0
    %p57 = por %p55, %p56
    %p58 = scmp.ne.s32.totalorder %s46, %s47
    %p59 = scmp.eq.s32.totalorder %s16, 1
    %p60 = por %p58, %p59
    %p62 = scmp.ne.s32.totalorder %s47, %s61
    %p63 = scmp.eq.s32.totalorder %s16, 0
    %p64 = por %p62, %p63
    %s65 = ssub.s32 %s10, %s17
    %p66 = scmp.eq.s32.totalorder %s65, 0
    %s68 = sadd.s32 %s67, 1
    %s69 = scalar_select %p66, %s67, %s68
    %p72 = pneg %p66
    %p73 = scmp.eq.s32.totalorder %s10, 1
    %p74 = por %p72, %p73
    %p75 = scmp.ne.s32.totalorder %s67, %s70
    %p76 = scmp.eq.s32.totalorder %s10, 0
    %p77 = por %p75, %p76
    %p78 = scmp.ne.s32.totalorder %s67, %s70
    %p79 = scmp.eq.s32.totalorder %s15, 1
    %p80 = por %p78, %p79
    %p81 = scmp.ne.s32.totalorder %s70, %s71
    %p82 = scmp.eq.s32.totalorder %s15, 0
    %p83 = por %p81, %p82
    %p84 = scmp.ne.s32.totalorder %s70, %s71
    %p85 = scmp.eq.s32.totalorder %s16, 1
    %p86 = por %p84, %p85
    %p88 = scmp.ne.s32.totalorder %s71, %s87
    %p89 = scmp.eq.s32.totalorder %s16, 0
    %p90 = por %p88, %p89
    %s91 = ssub.s32 %s10, %s17
    %p92 = scmp.eq.s32.totalorder %s91, 0
    %s94 = sadd.s32 %s93, 1
    %s95 = scalar_select %p92, %s93, %s94
    %p98 = pneg %p92
    %p99 = scmp.eq.s32.totalorder %s10, 1
    %p100 = por %p98, %p99
    %p101 = scmp.ne.s32.totalorder %s93, %s96
    %p102 = scmp.eq.s32.totalorder %s10, 0
    %p103 = por %p101, %p102
    %p104 = scmp.ne.s32.totalorder %s93, %s96
    %p105 = scmp.eq.s32.totalorder %s15, 1
    %p106 = por %p104, %p105
    %p107 = scmp.ne.s32.totalorder %s96, %s97
    %p108 = scmp.eq.s32.totalorder %s15, 0
    %p109 = por %p107, %p108
    %p110 = scmp.ne.s32.totalorder %s96, %s97
    %p111 = scmp.eq.s32.totalorder %s16, 1
    %p112 = por %p110, %p111
    %p114 = scmp.ne.s32.totalorder %s97, %s113
    %p115 = scmp.eq.s32.totalorder %s16, 0
    %p116 = por %p114, %p115
    %p117 = scmp.le.s32.totalorder 1, %s10
    %p118 = scmp.lt.s32.totalorder %s10, 3
    %p119 = pnand %p117, %p118
    %p120 = pneg %p119
    // Predicated region
    $region9: #{forward.7} parent=5 // pred_check
      _
    $region10: #{forward.7} parent=5 // pred_check_branch
      %122 = sbr.rel (%p119) target = $region12
    $region11: #{forward.7} parent=5 // pred_region
      %s123 = ssub.s32 %s10, 1
      // Predicated region
      $region13: #{forward.7} parent=11 // pred_check
        %p124 = pneg %p57
      $region14: #{forward.7} parent=11 // pred_check_branch
        %126 = sbr.rel (%p124) target = $region16
      $region15: #{forward.7} parent=11 // pred_region
        _
      $region16: #{forward.7} parent=11 // pred_fallthru
        _
    $region12: #{forward.7} parent=5 // pred_fallthru
      _
    %p127 = scmp.lt.s32.totalorder %s10, 2
    // Predicated region
    $region17: #{forward.7} parent=5 // pred_check
      %p128 = pneg %p127
    $region18: #{forward.7} parent=5 // pred_check_branch
      %130 = sbr.rel (%p128) target = $region20
    $region19: #{forward.7} parent=5 // pred_region
      // Predicated region
      $region21: #{forward.7} parent=19 // pred_check
        %p131 = pneg %p30
      $region22: #{forward.7} parent=19 // pred_check_branch
        %133 = sbr.rel (%p131) target = $region24
      $region23: #{forward.7} parent=19 // pred_region
        %p134 = scmp.lt.s32.totalorder %s10, 1
        %s135 = scalar_select %p134, %s10, 1
        %s136 = smul.addr %s135, 2
        %s137 = smul.addr %s136, 8
        %s138 = scalar_lea.vmem %s0, %s137
      $region24: #{forward.7} parent=19 // pred_fallthru
        _
    $region20: #{forward.7} parent=5 // pred_fallthru
      _
    %p139 = scmp.le.s32.totalorder 1, %s10
    %p140 = scmp.lt.s32.totalorder %s10, 3
    %p141 = pnand %p139, %p140
    %p142 = pneg %p141
    // Predicated region
    $region25: #{forward.7} parent=5 // pred_check
      _
    $region26: #{forward.7} parent=5 // pred_check_branch
      %144 = sbr.rel (%p141) target = $region28
    $region27: #{forward.7} parent=5 // pred_region
      %s145 = ssub.s32 %s10, 1
      %p146 = scmp.lt.s32.totalorder %s15, 1
      %s147 = scalar_select %p146, %s15, 1
      %s148 = smul.addr %s147, 2
      %s149 = smul.addr %s148, 8
      %s150 = scalar_lea.vmem %s0, %s149
      %p151 = pneg %p36
      %p152 = pneg %p33
      %p153 = pneg %p57
      %p154 = pneg %p54
      %p155 = pneg %p83
      %p156 = pneg %p80
      %p157 = scmp.lt.s32.totalorder %s15, 1
      %s158 = scalar_select %p157, %s15, 1
      %s159 = smul.addr %s158, 2
      %s160 = smul.addr %s159, 8
      %s161 = scalar_lea.vmem %s2, %s160
      %p162 = pneg %p109
      %p163 = pneg %p106
      %p164 = scmp.lt.s32.totalorder %s15, 1
      %s165 = scalar_select %p164, %s15, 1
      %s166 = smul.addr %s165, 2
      %s167 = smul.addr %s166, 8
      %s168 = scalar_lea.vmem %s3, %s167
      %p169 = scmp.lt.s32.totalorder %s15, 1
      %s170 = scalar_select %p169, %s15, 1
      %s171 = smul.addr %s170, 2
      %s172 = smul.addr %s171, 8
      %s173 = scalar_lea.vmem %s0, %s172
      %p174 = scmp.lt.s32.totalorder %s15, 1
      %s175 = scalar_select %p174, %s15, 1
      %s176 = smul.addr %s175, 2
      %s177 = smul.addr %s176, 8
      %s178 = scalar_lea.vmem %s2, %s177
      %p179 = scmp.lt.s32.totalorder %s15, 1
      %s180 = scalar_select %p179, %s15, 1
      %s181 = smul.addr %s180, 2
      %s182 = smul.addr %s181, 8
      %s183 = scalar_lea.vmem %s3, %s182
      %v184 = vld [vmem:[%s173] sm:$0xff]
      %v185 = vld [vmem:[%s173 + $0x8] sm:$0xff]
      %v186 = vld [vmem:[%s1] sm:$0xff]
      %v187 = vld [vmem:[%s1 + $0x8] sm:$0xff]
      %vm188 = vcmask 130048
      %v190 = vsel %vm188, %v186, 0
      %v193 = vsel %vm188, %v187, 0
      %195 = vmatprep.subr.mxu0 0.0
      %196 = vmatpush1.msra.mxu0 0.0
      %197 = vmatprep.subr.mxu0 0.0
      %198 = vmatpush1.msra.mxu0 0.0
      %199 = vmatprep.subr.mxu0 0.0
      %200 = vmatpush1.msra.mxu0 0.0
      %201 = vmatprep.subr.mxu0 0.0
      %202 = vmatpush1.msra.mxu0 0.0
      %203 = vmatprep.subr.mxu0 0.0
      %204 = vmatpush1.msra.mxu0 0.0
      %205 = vmatprep.subr.mxu0 0.0
      %206 = vmatpush1.msra.mxu0 0.0
      %207 = vmatprep.subr.mxu0 0.0
      %208 = vmatpush1.msra.mxu0 0.0
      %209 = vmatprep.subr.mxu0 0.0
      %210 = vmatpush1.msra.mxu0 0.0
      %211 = vmatprep.subr.mxu0 0.0
      %212 = vmatpush1.msra.mxu0 0.0
      %213 = vmatprep.subr.mxu0 0.0
      %214 = vmatpush1.msra.mxu0 0.0
      %215 = vmatprep.subr.mxu0 0.0
      %216 = vmatpush1.msra.mxu0 0.0
      %217 = vmatprep.subr.mxu0 0.0
      %218 = vmatpush1.msra.mxu0 0.0
      %219 = vmatprep.subr.mxu0 0.0
      %220 = vmatpush1.msra.mxu0 0.0
      %221 = vmatprep.subr.mxu0 0.0
      %222 = vmatpush1.msra.mxu0 0.0
      %223 = vmatprep.subr.mxu0 0.0
      %224 = vmatpush1.msra.mxu0 %v185
      %225 = vmatprep.subr.mxu0 0.0
      %226 = vmatpush1.msra.mxu0 %v184
      %227 = vmatprep.subr.mxu0 0.0
      %228 = vmatpush2.msra.mxu0 0.0
      %229 = vmatprep.subr.mxu0 0.0
      %230 = vmatpush2.msra.mxu0 0.0
      %231 = vmatprep.subr.mxu0 0.0
      %232 = vmatpush2.msra.mxu0 0.0
      %233 = vmatprep.subr.mxu0 0.0
      %234 = vmatpush2.msra.mxu0 0.0
      %235 = vmatprep.subr.mxu0 0.0
      %236 = vmatpush2.msra.mxu0 0.0
      %237 = vmatprep.subr.mxu0 0.0
      %238 = vmatpush2.msra.mxu0 0.0
      %239 = vmatprep.subr.mxu0 0.0
      %240 = vmatpush2.msra.mxu0 0.0
      %241 = vmatprep.subr.mxu0 0.0
      %242 = vmatpush2.msra.mxu0 0.0
      %243 = vmatprep.subr.mxu0 0.0
      %244 = vmatpush2.msra.mxu0 0.0
      %245 = vmatprep.subr.mxu0 0.0
      %246 = vmatpush2.msra.mxu0 0.0
      %247 = vmatprep.subr.mxu0 0.0
      %248 = vmatpush2.msra.mxu0 0.0
      %249 = vmatprep.subr.mxu0 0.0
      %250 = vmatpush2.msra.mxu0 0.0
      %251 = vmatprep.subr.mxu0 0.0
      %252 = vmatpush2.msra.mxu0 0.0
      %253 = vmatprep.subr.mxu0 0.0
      %254 = vmatpush2.msra.mxu0 0.0
      %255 = vmatprep.subr.mxu0 0.0
      %256 = vmatpush2.msra.mxu0 0.0
      %257 = vmatprep.subr.mxu0 0.0
      %258 = vmatpush2.msra.mxu0 0.0
      %259 = vmatprep.mubr.f32.mxu0 0.0
      %260 = vmatmul.mubr.f32.gmra.mxu0 %v190
      %v261 = vpop.f32.mrf.mxu0
      %v262 = vadd.f32 0.0, %v261
      %v263 = vpop.f32.mrf.mxu0
      %264 = vmatprep.mubr.f32.mxu0 0.0
      %265 = vmatmul.mubr.f32.gmra.mxu0 %v193
      %v266 = vpop.f32.mrf.mxu0
      %v267 = vadd.f32 0.0, %v266
      %v268 = vpop.f32.mrf.mxu0
      %269 = vdwg.mxu0
      %v270 = vsub.f32 %v184, %v262
      %v271 = vsub.f32 %v185, %v267
      %vm272 = vcmask 31744
      %273 = vst.msk [vmem:[%s178] sm:$0xff] %vm272, %v270
      %274 = vst.msk [vmem:[%s178 + $0x8] sm:$0xff] %vm272, %v271
      %275 = vst.msk [vmem:[%s183] sm:$0xff] %vm272, %v262
      %276 = vst.msk [vmem:[%s183 + $0x8] sm:$0xff] %vm272, %v267
      %p277 = scmp.lt.s32.totalorder %s15, 1
      %s278 = scalar_select %p277, %s15, 1
      %s279 = smul.addr %s278, 2
      %s280 = smul.addr %s279, 8
      %s281 = scalar_lea.vmem %s2, %s280
      %p282 = scmp.lt.s32.totalorder %s15, 1
      %s283 = scalar_select %p282, %s15, 1
      %s284 = smul.addr %s283, 2
      %s285 = smul.addr %s284, 8
      %s286 = scalar_lea.vmem %s3, %s285
      // Predicated region
      $region29: #{forward.7} parent=27 // pred_check
        %p287 = pneg %p80
      $region30: #{forward.7} parent=27 // pred_check_branch
        %289 = sbr.rel (%p287) target = $region32
      $region31: #{forward.7} parent=27 // pred_region
        _
      $region32: #{forward.7} parent=27 // pred_fallthru
        _
      // Predicated region
      $region33: #{forward.7} parent=27 // pred_check
        %p290 = pneg %p106
      $region34: #{forward.7} parent=27 // pred_check_branch
        %292 = sbr.rel (%p290) target = $region36
      $region35: #{forward.7} parent=27 // pred_region
        _
      $region36: #{forward.7} parent=27 // pred_fallthru
        _
    $region28: #{forward.7} parent=5 // pred_fallthru
      _
    %p293 = scmp.le.s32.totalorder 2, %s10
    // Predicated region
    $region37: #{forward.7} parent=5 // pred_check
      %p294 = pneg %p293
    $region38: #{forward.7} parent=5 // pred_check_branch
      %296 = sbr.rel (%p294) target = $region40
    $region39: #{forward.7} parent=5 // pred_region
      %s297 = ssub.s32 %s10, 2
      // Predicated region
      $region41: #{forward.7} parent=39 // pred_check
        %p298 = pneg %p86
      $region42: #{forward.7} parent=39 // pred_check_branch
        %300 = sbr.rel (%p298) target = $region44
      $region43: #{forward.7} parent=39 // pred_region
        %p301 = scmp.lt.s32.totalorder %s16, 1
        %s302 = scalar_select %p301, %s16, 1
        %s303 = smul.addr %s302, 2
        %s304 = smul.addr %s303, 8
        %s305 = scalar_lea.vmem %s2, %s304
      $region44: #{forward.7} parent=39 // pred_fallthru
        _
      // Predicated region
      $region45: #{forward.7} parent=39 // pred_check
        %p306 = pneg %p112
      $region46: #{forward.7} parent=39 // pred_check_branch
        %308 = sbr.rel (%p306) target = $region48
      $region47: #{forward.7} parent=39 // pred_region
        %p309 = scmp.lt.s32.totalorder %s16, 1
        %s310 = scalar_select %p309, %s16, 1
        %s311 = smul.addr %s310, 2
        %s312 = smul.addr %s311, 8
        %s313 = scalar_lea.vmem %s3, %s312
      $region48: #{forward.7} parent=39 // pred_fallthru
        _
    $region40: #{forward.7} parent=5 // pred_fallthru
      _
  $region6: #{forward.7} parent=0 // loop_footer
    %s14 = sadd.s32 1, %s10
  $region7: #{forward.7} parent=0 // loop_footer_branch
    %9 = sbr.rel target = $region3
  $region8: #{forward.7} parent=0 // loop_exit
    _

// kernel: forward.10
$region0: #{forward.10}
  #allocation0 [shape = 'u32[]', space=smem, size = 0x4, offset = 0x4, fixed_abs, tag = 'smem constant byte address 0x4 - core index']
  #allocation1 [shape = 'u32[144,128]{1,0:T(1,128)}', space=vmem, size = 0x12000, scoped, tag = 'internal scratch']
  %s0 = inlined_call_operand.vmem [shape: f32[2,16,32], index: 0, kind: input, shape index: {}]
  %s1 = inlined_call_operand.vmem [shape: f32[1,32], index: 1, kind: input, shape index: {}]
  %s2 = inlined_call_operand.vmem [shape: f32[1,32], index: 2, kind: input, shape index: {}]
  %s3 = inlined_call_operand.vmem [shape: f32[2,16,32], index: 3, kind: output, shape index: {}]
  %s4 = sld [smem:[#allocation0]]
  $region45: #{forward.10} parent=0
    _
  %s6 = ssub.s32 1, %s4
  %s7 = scalar_select 0, %s6, %s4
  loop: start=0, step=1, limit=4
  $region2: #{forward.10} parent=0 // loop_pre_header
    _
  $region3: #{forward.10} parent=0 // loop_header
    %s9 = sphi 0, %s13
    %p10 = scmp.ge.s32.totalorder %s9, 4
    %s19 = sphi 0, %s21
    %s22 = sphi 0, %s19
    %s23 = sphi 0, %s22
    %s39 = sphi 0, %s23
    %s43 = sphi 0, %s43
    %s45 = sphi 0, %s43
    %s46 = sphi 0, %s45
    %s60 = sphi 0, %s46
    %s64 = sphi 0, %s64
    %s66 = sphi 0, %s64
    %s67 = sphi 0, %s66
    %s81 = sphi 0, %s67
    %s87 = sphi 0, %s89
    %s90 = sphi 0, %s87
    %s91 = sphi 0, %s90
    %s107 = sphi 0, %s91
  $region4: #{forward.10} parent=0 // loop_header_branch
    %12 = sbr.rel (%p10) target = $region8
  $region5: #{forward.10} parent=0 // loop_body
    %s14 = ssub.s32 %s9, 1
    %s15 = ssub.s32 %s9, 2
    %s16 = sadd.s32 %s9, 1
    %s17 = ssub.s32 %s9, %s16
    %p18 = scmp.eq.s32.totalorder %s17, 0
    %s20 = sadd.s32 %s19, 1
    %s21 = scalar_select %p18, %s19, %s20
    %p24 = pneg %p18
    %p25 = scmp.eq.s32.totalorder %s9, 1
    %p26 = por %p24, %p25
    %p27 = scmp.ne.s32.totalorder %s19, %s22
    %p28 = scmp.eq.s32.totalorder %s9, 0
    %p29 = por %p27, %p28
    %p30 = scmp.ne.s32.totalorder %s19, %s22
    %p31 = scmp.eq.s32.totalorder %s14, 1
    %p32 = por %p30, %p31
    %p33 = scmp.ne.s32.totalorder %s22, %s23
    %p34 = scmp.eq.s32.totalorder %s14, 0
    %p35 = por %p33, %p34
    %p36 = scmp.ne.s32.totalorder %s22, %s23
    %p37 = scmp.eq.s32.totalorder %s15, 1
    %p38 = por %p36, %p37
    %p40 = scmp.ne.s32.totalorder %s23, %s39
    %p41 = scmp.eq.s32.totalorder %s15, 0
    %p42 = por %p40, %p41
    %s44 = sadd.s32 %s43, 1
    %p47 = scmp.eq.s32.totalorder %s9, 1
    %p48 = scmp.ne.s32.totalorder %s43, %s45
    %p49 = scmp.eq.s32.totalorder %s9, 0
    %p50 = por %p48, %p49
    %p51 = scmp.ne.s32.totalorder %s43, %s45
    %p52 = scmp.eq.s32.totalorder %s14, 1
    %p53 = por %p51, %p52
    %p54 = scmp.ne.s32.totalorder %s45, %s46
    %p55 = scmp.eq.s32.totalorder %s14, 0
    %p56 = por %p54, %p55
    %p57 = scmp.ne.s32.totalorder %s45, %s46
    %p58 = scmp.eq.s32.totalorder %s15, 1
    %p59 = por %p57, %p58
    %p61 = scmp.ne.s32.totalorder %s46, %s60
    %p62 = scmp.eq.s32.totalorder %s15, 0
    %p63 = por %p61, %p62
    %s65 = sadd.s32 %s64, 1
    %p68 = scmp.eq.s32.totalorder %s9, 1
    %p69 = scmp.ne.s32.totalorder %s64, %s66
    %p70 = scmp.eq.s32.totalorder %s9, 0
    %p71 = por %p69, %p70
    %p72 = scmp.ne.s32.totalorder %s64, %s66
    %p73 = scmp.eq.s32.totalorder %s14, 1
    %p74 = por %p72, %p73
    %p75 = scmp.ne.s32.totalorder %s66, %s67
    %p76 = scmp.eq.s32.totalorder %s14, 0
    %p77 = por %p75, %p76
    %p78 = scmp.ne.s32.totalorder %s66, %s67
    %p79 = scmp.eq.s32.totalorder %s15, 1
    %p80 = por %p78, %p79
    %p82 = scmp.ne.s32.totalorder %s67, %s81
    %p83 = scmp.eq.s32.totalorder %s15, 0
    %p84 = por %p82, %p83
    %s85 = ssub.s32 %s9, %s16
    %p86 = scmp.eq.s32.totalorder %s85, 0
    %s88 = sadd.s32 %s87, 1
    %s89 = scalar_select %p86, %s87, %s88
    %p92 = pneg %p86
    %p93 = scmp.eq.s32.totalorder %s9, 1
    %p94 = por %p92, %p93
    %p95 = scmp.ne.s32.totalorder %s87, %s90
    %p96 = scmp.eq.s32.totalorder %s9, 0
    %p97 = por %p95, %p96
    %p98 = scmp.ne.s32.totalorder %s87, %s90
    %p99 = scmp.eq.s32.totalorder %s14, 1
    %p100 = por %p98, %p99
    %p101 = scmp.ne.s32.totalorder %s90, %s91
    %p102 = scmp.eq.s32.totalorder %s14, 0
    %p103 = por %p101, %p102
    %p104 = scmp.ne.s32.totalorder %s90, %s91
    %p105 = scmp.eq.s32.totalorder %s15, 1
    %p106 = por %p104, %p105
    %p108 = scmp.ne.s32.totalorder %s91, %s107
    %p109 = scmp.eq.s32.totalorder %s15, 0
    %p110 = por %p108, %p109
    %p111 = scmp.le.s32.totalorder 1, %s9
    %p112 = scmp.lt.s32.totalorder %s9, 3
    %p113 = pnand %p111, %p112
    %p114 = pneg %p113
    // Predicated region
    $region9: #{forward.10} parent=5 // pred_check
      _
    $region10: #{forward.10} parent=5 // pred_check_branch
      %116 = sbr.rel (%p113) target = $region12
    $region11: #{forward.10} parent=5 // pred_region
      %s117 = ssub.s32 %s9, 1
      // Predicated region
      $region13: #{forward.10} parent=11 // pred_check
        %p118 = pneg %p56
      $region14: #{forward.10} parent=11 // pred_check_branch
        %120 = sbr.rel (%p118) target = $region16
      $region15: #{forward.10} parent=11 // pred_region
        _
      $region16: #{forward.10} parent=11 // pred_fallthru
        _
      // Predicated region
      $region17: #{forward.10} parent=11 // pred_check
        %p121 = pneg %p77
      $region18: #{forward.10} parent=11 // pred_check_branch
        %123 = sbr.rel (%p121) target = $region20
      $region19: #{forward.10} parent=11 // pred_region
        _
      $region20: #{forward.10} parent=11 // pred_fallthru
        _
    $region12: #{forward.10} parent=5 // pred_fallthru
      _
    %p124 = scmp.lt.s32.totalorder %s9, 2
    // Predicated region
    $region21: #{forward.10} parent=5 // pred_check
      %p125 = pneg %p124
    $region22: #{forward.10} parent=5 // pred_check_branch
      %127 = sbr.rel (%p125) target = $region24
    $region23: #{forward.10} parent=5 // pred_region
      // Predicated region
      $region25: #{forward.10} parent=23 // pred_check
        %p128 = pneg %p29
      $region26: #{forward.10} parent=23 // pred_check_branch
        %130 = sbr.rel (%p128) target = $region28
      $region27: #{forward.10} parent=23 // pred_region
        %p131 = scmp.lt.s32.totalorder %s9, 1
        %s132 = scalar_select %p131, %s9, 1
        %s133 = smul.addr %s132, 2
        %s134 = smul.addr %s133, 8
        %s135 = scalar_lea.vmem %s0, %s134
      $region28: #{forward.10} parent=23 // pred_fallthru
        _
    $region24: #{forward.10} parent=5 // pred_fallthru
      _
    %p136 = scmp.le.s32.totalorder 1, %s9
    %p137 = scmp.lt.s32.totalorder %s9, 3
    %p138 = pnand %p136, %p137
    %p139 = pneg %p138
    // Predicated region
    $region29: #{forward.10} parent=5 // pred_check
      _
    $region30: #{forward.10} parent=5 // pred_check_branch
      %141 = sbr.rel (%p138) target = $region32
    $region31: #{forward.10} parent=5 // pred_region
      %s142 = ssub.s32 %s9, 1
      %p143 = scmp.lt.s32.totalorder %s14, 1
      %s144 = scalar_select %p143, %s14, 1
      %s145 = smul.addr %s144, 2
      %s146 = smul.addr %s145, 8
      %s147 = scalar_lea.vmem %s0, %s146
      %p148 = pneg %p35
      %p149 = pneg %p32
      %p150 = pneg %p56
      %p151 = pneg %p53
      %p152 = pneg %p77
      %p153 = pneg %p74
      %p154 = pneg %p103
      %p155 = pneg %p100
      %p156 = scmp.lt.s32.totalorder %s14, 1
      %s157 = scalar_select %p156, %s14, 1
      %s158 = smul.addr %s157, 2
      %s159 = smul.addr %s158, 8
      %s160 = scalar_lea.vmem %s3, %s159
      %p161 = scmp.lt.s32.totalorder %s14, 1
      %s162 = scalar_select %p161, %s14, 1
      %s163 = smul.addr %s162, 2
      %s164 = smul.addr %s163, 8
      %s165 = scalar_lea.vmem %s0, %s164
      %p166 = scmp.lt.s32.totalorder %s14, 1
      %s167 = scalar_select %p166, %s14, 1
      %s168 = smul.addr %s167, 2
      %s169 = smul.addr %s168, 8
      %s170 = scalar_lea.vmem %s3, %s169
      %v171 = vld [vmem:[%s165] sm:$0xff]
      %v172 = vld [vmem:[%s165 + $0x8] sm:$0xff]
      %v173 = vld [vmem:[%s1] sm:$0x1]
      %v174 = vld [vmem:[%s2] sm:$0x1]
      %vm175 = vcmask 261120
      %v176 = vsel %vm175, %v171, 0.0
      %177 = vadd.xlane.f32.xlu0 %v176
      %v178 = vpop.xlane.xlu0 %177
      %v179 = vsel %vm175, %v172, 0.0
      %180 = vadd.xlane.f32.xlu0 %v179
      %v181 = vpop.xlane.xlu0 %180
      %v182 = vrcp.pop 32.0
      %v183 = vmul.f32 %v178, %v182
      %v184 = vmul.f32 %v181, %v182
      %v185 = vsub.f32 %v171, %v183
      %v186 = vsub.f32 %v172, %v184
      %v187 = vmul.f32 %v185, %v185
      %v188 = vmul.f32 %v186, %v186
      %v189 = vsel %vm175, %v187, 0.0
      %190 = vadd.xlane.f32.xlu0 %v189
      %v191 = vpop.xlane.xlu0 %190
      %v192 = vsel %vm175, %v188, 0.0
      %193 = vadd.xlane.f32.xlu0 %v192
      %v194 = vpop.xlane.xlu0 %193
      %v195 = vmul.f32 %v191, %v182
      %v196 = vmul.f32 %v194, %v182
      %v197 = vadd.f32 %v195, 1e-05
      %v198 = vadd.f32 %v196, 1e-05
      %v199 = vrsqrt.pop %v197
      %v200 = vrsqrt.pop %v198
      %v201 = vmul.f32 %v185, %v199
      %v202 = vmul.f32 %v186, %v200
      %v204 = vlaneseq
      %v205 = vshrl.u32 %v204, 7
      %v206 = vsub.s32 0, %v205
      %v207 = vrot.slane %v173, %v206
      %v209 = vmul.f32 %v201, %v207
      %v210 = vmul.f32 %v202, %v207
      %v212 = vlaneseq
      %v213 = vshrl.u32 %v212, 7
      %v214 = vsub.s32 0, %v213
      %v215 = vrot.slane %v174, %v214
      %v217 = vadd.f32 %v209, %v215
      %v218 = vadd.f32 %v210, %v215
      %v219 = vsel %vm175, %v217, 0.0
      %v220 = vsel %vm175, %v218, 0.0
      %v221 = vadd.f32 %v219, %v220
      %v222 = vrot.slane %v221, 4
      %v223 = vadd.f32 %v221, %v222
      %v224 = vrot.slane %v223, 2
      %v225 = vadd.f32 %v223, %v224
      %v226 = vrot.slane %v225, 1
      %v227 = vadd.f32 %v225, %v226
      %v228 = vrcp.pop 16.0
      %v229 = vmul.f32 %v227, %v228
      %v230 = vsub.f32 %v217, %v229
      %v231 = vsub.f32 %v218, %v229
      %232 = vst.msk [vmem:[%s170] sm:$0xff] %vm175, %v230
      %233 = vst.msk [vmem:[%s170 + $0x8] sm:$0xff] %vm175, %v231
      %p234 = scmp.lt.s32.totalorder %s14, 1
      %s235 = scalar_select %p234, %s14, 1
      %s236 = smul.addr %s235, 2
      %s237 = smul.addr %s236, 8
      %s238 = scalar_lea.vmem %s3, %s237
      // Predicated region
      $region33: #{forward.10} parent=31 // pred_check
        %p239 = pneg %p100
      $region34: #{forward.10} parent=31 // pred_check_branch
        %241 = sbr.rel (%p239) target = $region36
      $region35: #{forward.10} parent=31 // pred_region
        _
      $region36: #{forward.10} parent=31 // pred_fallthru
        _
    $region32: #{forward.10} parent=5 // pred_fallthru
      _
    %p242 = scmp.le.s32.totalorder 2, %s9
    // Predicated region
    $region37: #{forward.10} parent=5 // pred_check
      %p243 = pneg %p242
    $region38: #{forward.10} parent=5 // pred_check_branch
      %245 = sbr.rel (%p243) target = $region40
    $region39: #{forward.10} parent=5 // pred_region
      %s246 = ssub.s32 %s9, 2
      // Predicated region
      $region41: #{forward.10} parent=39 // pred_check
        %p247 = pneg %p106
      $region42: #{forward.10} parent=39 // pred_check_branch
        %249 = sbr.rel (%p247) target = $region44
      $region43: #{forward.10} parent=39 // pred_region
        %p250 = scmp.lt.s32.totalorder %s15, 1
        %s251 = scalar_select %p250, %s15, 1
        %s252 = smul.addr %s251, 2
        %s253 = smul.addr %s252, 8
        %s254 = scalar_lea.vmem %s3, %s253
      $region44: #{forward.10} parent=39 // pred_fallthru
        _
    $region40: #{forward.10} parent=5 // pred_fallthru
      _
  $region6: #{forward.10} parent=0 // loop_footer
    %s13 = sadd.s32 1, %s9
  $region7: #{forward.10} parent=0 // loop_footer_branch
    %8 = sbr.rel target = $region3
  $region8: #{forward.10} parent=0 // loop_exit
    _

// kernel: forward.11
$region0: #{forward.11}
  #allocation0 [shape = 'u32[]', space=smem, size = 0x4, offset = 0x4, fixed_abs, tag = 'smem constant byte address 0x4 - core index']
  #allocation1 [shape = 'u32[144,128]{1,0:T(1,128)}', space=vmem, size = 0x12000, scoped, tag = 'internal scratch']
  %s0 = inlined_call_operand.vmem [shape: f32[2,16,4], index: 0, kind: input, shape index: {}]
  %s1 = inlined_call_operand.vmem [shape: f32[2,16,4], index: 1, kind: input, shape index: {}]
  %s2 = inlined_call_operand.vmem [shape: f32[2,16,8], index: 2, kind: input, shape index: {}]
  %s3 = inlined_call_operand.vmem [shape: f32[16,16], index: 3, kind: input, shape index: {}]
  %s4 = inlined_call_operand.vmem [shape: f32[16,16], index: 4, kind: input, shape index: {}]
  %s5 = inlined_call_operand.vmem [shape: f32[4,32], index: 5, kind: input, shape index: {}]
  %s6 = inlined_call_operand.vmem [shape: f32[4,32], index: 6, kind: input, shape index: {}]
  %s7 = inlined_call_operand.vmem [shape: f32[4,32], index: 7, kind: input, shape index: {}]
  %s8 = inlined_call_operand.vmem [shape: f32[4,32], index: 8, kind: input, shape index: {}]
  %s9 = inlined_call_operand.vmem [shape: f32[1,32], index: 9, kind: input, shape index: {}]
  %s10 = inlined_call_operand.vmem [shape: f32[8,32], index: 10, kind: input, shape index: {}]
  %s11 = inlined_call_operand.vmem [shape: f32[1,32], index: 11, kind: input, shape index: {}]
  %s12 = inlined_call_operand.vmem [shape: f32[2,16,32], index: 12, kind: output, shape index: {0}]
  %s13 = inlined_call_operand.vmem [shape: f32[2,16,32], index: 13, kind: output, shape index: {1}]
  %14 = xla_tuple %s12, %s13
  %s15 = sld [smem:[#allocation0]]
  $region89: #{forward.11} parent=0
    _
  %s17 = ssub.s32 1, %s15
  %s18 = scalar_select 0, %s17, %s15
  loop: start=0, step=1, limit=4
  $region2: #{forward.11} parent=0 // loop_pre_header
    _
  $region3: #{forward.11} parent=0 // loop_header
    %s20 = sphi 0, %s24
    %p21 = scmp.ge.s32.totalorder %s20, 4
    %s30 = sphi 0, %s32
    %s33 = sphi 0, %s30
    %s34 = sphi 0, %s33
    %s50 = sphi 0, %s34
    %s56 = sphi 0, %s58
    %s59 = sphi 0, %s56
    %s60 = sphi 0, %s59
    %s76 = sphi 0, %s60
    %s82 = sphi 0, %s84
    %s85 = sphi 0, %s82
    %s86 = sphi 0, %s85
    %s102 = sphi 0, %s86
    %s106 = sphi 0, %s106
    %s108 = sphi 0, %s106
    %s109 = sphi 0, %s108
    %s123 = sphi 0, %s109
    %s127 = sphi 0, %s127
    %s129 = sphi 0, %s127
    %s130 = sphi 0, %s129
    %s144 = sphi 0, %s130
    %s148 = sphi 0, %s148
    %s150 = sphi 0, %s148
    %s151 = sphi 0, %s150
    %s165 = sphi 0, %s151
    %s169 = sphi 0, %s169
    %s171 = sphi 0, %s169
    %s172 = sphi 0, %s171
    %s186 = sphi 0, %s172
    %s190 = sphi 0, %s190
    %s192 = sphi 0, %s190
    %s193 = sphi 0, %s192
    %s207 = sphi 0, %s193
    %s211 = sphi 0, %s211
    %s213 = sphi 0, %s211
    %s214 = sphi 0, %s213
    %s228 = sphi 0, %s214
    %s232 = sphi 0, %s232
    %s234 = sphi 0, %s232
    %s235 = sphi 0, %s234
    %s249 = sphi 0, %s235
    %s253 = sphi 0, %s253
    %s255 = sphi 0, %s253
    %s256 = sphi 0, %s255
    %s270 = sphi 0, %s256
    %s274 = sphi 0, %s274
    %s276 = sphi 0, %s274
    %s277 = sphi 0, %s276
    %s291 = sphi 0, %s277
    %s297 = sphi 0, %s299
    %s300 = sphi 0, %s297
    %s301 = sphi 0, %s300
    %s317 = sphi 0, %s301
    %s323 = sphi 0, %s325
    %s326 = sphi 0, %s323
    %s327 = sphi 0, %s326
    %s343 = sphi 0, %s327
  $region4: #{forward.11} parent=0 // loop_header_branch
    %23 = sbr.rel (%p21) target = $region8
  $region5: #{forward.11} parent=0 // loop_body
    %s25 = ssub.s32 %s20, 1
    %s26 = ssub.s32 %s20, 2
    %s27 = sadd.s32 %s20, 1
    %s28 = ssub.s32 %s20, %s27
    %p29 = scmp.eq.s32.totalorder %s28, 0
    %s31 = sadd.s32 %s30, 1
    %s32 = scalar_select %p29, %s30, %s31
    %p35 = pneg %p29
    %p36 = scmp.eq.s32.totalorder %s20, 1
    %p37 = por %p35, %p36
    %p38 = scmp.ne.s32.totalorder %s30, %s33
    %p39 = scmp.eq.s32.totalorder %s20, 0
    %p40 = por %p38, %p39
    %p41 = scmp.ne.s32.totalorder %s30, %s33
    %p42 = scmp.eq.s32.totalorder %s25, 1
    %p43 = por %p41, %p42
    %p44 = scmp.ne.s32.totalorder %s33, %s34
    %p45 = scmp.eq.s32.totalorder %s25, 0
    %p46 = por %p44, %p45
    %p47 = scmp.ne.s32.totalorder %s33, %s34
    %p48 = scmp.eq.s32.totalorder %s26, 1
    %p49 = por %p47, %p48
    %p51 = scmp.ne.s32.totalorder %s34, %s50
    %p52 = scmp.eq.s32.totalorder %s26, 0
    %p53 = por %p51, %p52
    %s54 = ssub.s32 %s20, %s27
    %p55 = scmp.eq.s32.totalorder %s54, 0
    %s57 = sadd.s32 %s56, 1
    %s58 = scalar_select %p55, %s56, %s57
    %p61 = pneg %p55
    %p62 = scmp.eq.s32.totalorder %s20, 1
    %p63 = por %p61, %p62
    %p64 = scmp.ne.s32.totalorder %s56, %s59
    %p65 = scmp.eq.s32.totalorder %s20, 0
    %p66 = por %p64, %p65
    %p67 = scmp.ne.s32.totalorder %s56, %s59
    %p68 = scmp.eq.s32.totalorder %s25, 1
    %p69 = por %p67, %p68
    %p70 = scmp.ne.s32.totalorder %s59, %s60
    %p71 = scmp.eq.s32.totalorder %s25, 0
    %p72 = por %p70, %p71
    %p73 = scmp.ne.s32.totalorder %s59, %s60
    %p74 = scmp.eq.s32.totalorder %s26, 1
    %p75 = por %p73, %p74
    %p77 = scmp.ne.s32.totalorder %s60, %s76
    %p78 = scmp.eq.s32.totalorder %s26, 0
    %p79 = por %p77, %p78
    %s80 = ssub.s32 %s20, %s27
    %p81 = scmp.eq.s32.totalorder %s80, 0
    %s83 = sadd.s32 %s82, 1
    %s84 = scalar_select %p81, %s82, %s83
    %p87 = pneg %p81
    %p88 = scmp.eq.s32.totalorder %s20, 1
    %p89 = por %p87, %p88
    %p90 = scmp.ne.s32.totalorder %s82, %s85
    %p91 = scmp.eq.s32.totalorder %s20, 0
    %p92 = por %p90, %p91
    %p93 = scmp.ne.s32.totalorder %s82, %s85
    %p94 = scmp.eq.s32.totalorder %s25, 1
    %p95 = por %p93, %p94
    %p96 = scmp.ne.s32.totalorder %s85, %s86
    %p97 = scmp.eq.s32.totalorder %s25, 0
    %p98 = por %p96, %p97
    %p99 = scmp.ne.s32.totalorder %s85, %s86
    %p100 = scmp.eq.s32.totalorder %s26, 1
    %p101 = por %p99, %p100
    %p103 = scmp.ne.s32.totalorder %s86, %s102
    %p104 = scmp.eq.s32.totalorder %s26, 0
    %p105 = por %p103, %p104
    %s107 = sadd.s32 %s106, 1
    %p110 = scmp.eq.s32.totalorder %s20, 1
    %p111 = scmp.ne.s32.totalorder %s106, %s108
    %p112 = scmp.eq.s32.totalorder %s20, 0
    %p113 = por %p111, %p112
    %p114 = scmp.ne.s32.totalorder %s106, %s108
    %p115 = scmp.eq.s32.totalorder %s25, 1
    %p116 = por %p114, %p115
    %p117 = scmp.ne.s32.totalorder %s108, %s109
    %p118 = scmp.eq.s32.totalorder %s25, 0
    %p119 = por %p117, %p118
    %p120 = scmp.ne.s32.totalorder %s108, %s109
    %p121 = scmp.eq.s32.totalorder %s26, 1
    %p122 = por %p120, %p121
    %p124 = scmp.ne.s32.totalorder %s109, %s123
    %p125 = scmp.eq.s32.totalorder %s26, 0
    %p126 = por %p124, %p125
    %s128 = sadd.s32 %s127, 1
    %p131 = scmp.eq.s32.totalorder %s20, 1
    %p132 = scmp.ne.s32.totalorder %s127, %s129
    %p133 = scmp.eq.s32.totalorder %s20, 0
    %p134 = por %p132, %p133
    %p135 = scmp.ne.s32.totalorder %s127, %s129
    %p136 = scmp.eq.s32.totalorder %s25, 1
    %p137 = por %p135, %p136
    %p138 = scmp.ne.s32.totalorder %s129, %s130
    %p139 = scmp.eq.s32.totalorder %s25, 0
    %p140 = por %p138, %p139
    %p141 = scmp.ne.s32.totalorder %s129, %s130
    %p142 = scmp.eq.s32.totalorder %s26, 1
    %p143 = por %p141, %p142
    %p145 = scmp.ne.s32.totalorder %s130, %s144
    %p146 = scmp.eq.s32.totalorder %s26, 0
    %p147 = por %p145, %p146
    %s149 = sadd.s32 %s148, 1
    %p152 = scmp.eq.s32.totalorder %s20, 1
    %p153 = scmp.ne.s32.totalorder %s148, %s150
    %p154 = scmp.eq.s32.totalorder %s20, 0
    %p155 = por %p153, %p154
    %p156 = scmp.ne.s32.totalorder %s148, %s150
    %p157 = scmp.eq.s32.totalorder %s25, 1
    %p158 = por %p156, %p157
    %p159 = scmp.ne.s32.totalorder %s150, %s151
    %p160 = scmp.eq.s32.totalorder %s25, 0
    %p161 = por %p159, %p160
    %p162 = scmp.ne.s32.totalorder %s150, %s151
    %p163 = scmp.eq.s32.totalorder %s26, 1
    %p164 = por %p162, %p163
    %p166 = scmp.ne.s32.totalorder %s151, %s165
    %p167 = scmp.eq.s32.totalorder %s26, 0
    %p168 = por %p166, %p167
    %s170 = sadd.s32 %s169, 1
    %p173 = scmp.eq.s32.totalorder %s20, 1
    %p174 = scmp.ne.s32.totalorder %s169, %s171
    %p175 = scmp.eq.s32.totalorder %s20, 0
    %p176 = por %p174, %p175
    %p177 = scmp.ne.s32.totalorder %s169, %s171
    %p178 = scmp.eq.s32.totalorder %s25, 1
    %p179 = por %p177, %p178
    %p180 = scmp.ne.s32.totalorder %s171, %s172
    %p181 = scmp.eq.s32.totalorder %s25, 0
    %p182 = por %p180, %p181
    %p183 = scmp.ne.s32.totalorder %s171, %s172
    %p184 = scmp.eq.s32.totalorder %s26, 1
    %p185 = por %p183, %p184
    %p187 = scmp.ne.s32.totalorder %s172, %s186
    %p188 = scmp.eq.s32.totalorder %s26, 0
    %p189 = por %p187, %p188
    %s191 = sadd.s32 %s190, 1
    %p194 = scmp.eq.s32.totalorder %s20, 1
    %p195 = scmp.ne.s32.totalorder %s190, %s192
    %p196 = scmp.eq.s32.totalorder %s20, 0
    %p197 = por %p195, %p196
    %p198 = scmp.ne.s32.totalorder %s190, %s192
    %p199 = scmp.eq.s32.totalorder %s25, 1
    %p200 = por %p198, %p199
    %p201 = scmp.ne.s32.totalorder %s192, %s193
    %p202 = scmp.eq.s32.totalorder %s25, 0
    %p203 = por %p201, %p202
    %p204 = scmp.ne.s32.totalorder %s192, %s193
    %p205 = scmp.eq.s32.totalorder %s26, 1
    %p206 = por %p204, %p205
    %p208 = scmp.ne.s32.totalorder %s193, %s207
    %p209 = scmp.eq.s32.totalorder %s26, 0
    %p210 = por %p208, %p209
    %s212 = sadd.s32 %s211, 1
    %p215 = scmp.eq.s32.totalorder %s20, 1
    %p216 = scmp.ne.s32.totalorder %s211, %s213
    %p217 = scmp.eq.s32.totalorder %s20, 0
    %p218 = por %p216, %p217
    %p219 = scmp.ne.s32.totalorder %s211, %s213
    %p220 = scmp.eq.s32.totalorder %s25, 1
    %p221 = por %p219, %p220
    %p222 = scmp.ne.s32.totalorder %s213, %s214
    %p223 = scmp.eq.s32.totalorder %s25, 0
    %p224 = por %p222, %p223
    %p225 = scmp.ne.s32.totalorder %s213, %s214
    %p226 = scmp.eq.s32.totalorder %s26, 1
    %p227 = por %p225, %p226
    %p229 = scmp.ne.s32.totalorder %s214, %s228
    %p230 = scmp.eq.s32.totalorder %s26, 0
    %p231 = por %p229, %p230
    %s233 = sadd.s32 %s232, 1
    %p236 = scmp.eq.s32.totalorder %s20, 1
    %p237 = scmp.ne.s32.totalorder %s232, %s234
    %p238 = scmp.eq.s32.totalorder %s20, 0
    %p239 = por %p237, %p238
    %p240 = scmp.ne.s32.totalorder %s232, %s234
    %p241 = scmp.eq.s32.totalorder %s25, 1
    %p242 = por %p240, %p241
    %p243 = scmp.ne.s32.totalorder %s234, %s235
    %p244 = scmp.eq.s32.totalorder %s25, 0
    %p245 = por %p243, %p244
    %p246 = scmp.ne.s32.totalorder %s234, %s235
    %p247 = scmp.eq.s32.totalorder %s26, 1
    %p248 = por %p246, %p247
    %p250 = scmp.ne.s32.totalorder %s235, %s249
    %p251 = scmp.eq.s32.totalorder %s26, 0
    %p252 = por %p250, %p251
    %s254 = sadd.s32 %s253, 1
    %p257 = scmp.eq.s32.totalorder %s20, 1
    %p258 = scmp.ne.s32.totalorder %s253, %s255
    %p259 = scmp.eq.s32.totalorder %s20, 0
    %p260 = por %p258, %p259
    %p261 = scmp.ne.s32.totalorder %s253, %s255
    %p262 = scmp.eq.s32.totalorder %s25, 1
    %p263 = por %p261, %p262
    %p264 = scmp.ne.s32.totalorder %s255, %s256
    %p265 = scmp.eq.s32.totalorder %s25, 0
    %p266 = por %p264, %p265
    %p267 = scmp.ne.s32.totalorder %s255, %s256
    %p268 = scmp.eq.s32.totalorder %s26, 1
    %p269 = por %p267, %p268
    %p271 = scmp.ne.s32.totalorder %s256, %s270
    %p272 = scmp.eq.s32.totalorder %s26, 0
    %p273 = por %p271, %p272
    %s275 = sadd.s32 %s274, 1
    %p278 = scmp.eq.s32.totalorder %s20, 1
    %p279 = scmp.ne.s32.totalorder %s274, %s276
    %p280 = scmp.eq.s32.totalorder %s20, 0
    %p281 = por %p279, %p280
    %p282 = scmp.ne.s32.totalorder %s274, %s276
    %p283 = scmp.eq.s32.totalorder %s25, 1
    %p284 = por %p282, %p283
    %p285 = scmp.ne.s32.totalorder %s276, %s277
    %p286 = scmp.eq.s32.totalorder %s25, 0
    %p287 = por %p285, %p286
    %p288 = scmp.ne.s32.totalorder %s276, %s277
    %p289 = scmp.eq.s32.totalorder %s26, 1
    %p290 = por %p288, %p289
    %p292 = scmp.ne.s32.totalorder %s277, %s291
    %p293 = scmp.eq.s32.totalorder %s26, 0
    %p294 = por %p292, %p293
    %s295 = ssub.s32 %s20, %s27
    %p296 = scmp.eq.s32.totalorder %s295, 0
    %s298 = sadd.s32 %s297, 1
    %s299 = scalar_select %p296, %s297, %s298
    %p302 = pneg %p296
    %p303 = scmp.eq.s32.totalorder %s20, 1
    %p304 = por %p302, %p303
    %p305 = scmp.ne.s32.totalorder %s297, %s300
    %p306 = scmp.eq.s32.totalorder %s20, 0
    %p307 = por %p305, %p306
    %p308 = scmp.ne.s32.totalorder %s297, %s300
    %p309 = scmp.eq.s32.totalorder %s25, 1
    %p310 = por %p308, %p309
    %p311 = scmp.ne.s32.totalorder %s300, %s301
    %p312 = scmp.eq.s32.totalorder %s25, 0
    %p313 = por %p311, %p312
    %p314 = scmp.ne.s32.totalorder %s300, %s301
    %p315 = scmp.eq.s32.totalorder %s26, 1
    %p316 = por %p314, %p315
    %p318 = scmp.ne.s32.totalorder %s301, %s317
    %p319 = scmp.eq.s32.totalorder %s26, 0
    %p320 = por %p318, %p319
    %s321 = ssub.s32 %s20, %s27
    %p322 = scmp.eq.s32.totalorder %s321, 0
    %s324 = sadd.s32 %s323, 1
    %s325 = scalar_select %p322, %s323, %s324
    %p328 = pneg %p322
    %p329 = scmp.eq.s32.totalorder %s20, 1
    %p330 = por %p328, %p329
    %p331 = scmp.ne.s32.totalorder %s323, %s326
    %p332 = scmp.eq.s32.totalorder %s20, 0
    %p333 = por %p331, %p332
    %p334 = scmp.ne.s32.totalorder %s323, %s326
    %p335 = scmp.eq.s32.totalorder %s25, 1
    %p336 = por %p334, %p335
    %p337 = scmp.ne.s32.totalorder %s326, %s327
    %p338 = scmp.eq.s32.totalorder %s25, 0
    %p339 = por %p337, %p338
    %p340 = scmp.ne.s32.totalorder %s326, %s327
    %p341 = scmp.eq.s32.totalorder %s26, 1
    %p342 = por %p340, %p341
    %p344 = scmp.ne.s32.totalorder %s327, %s343
    %p345 = scmp.eq.s32.totalorder %s26, 0
    %p346 = por %p344, %p345
    %p347 = scmp.le.s32.totalorder 1, %s20
    %p348 = scmp.lt.s32.totalorder %s20, 3
    %p349 = pnand %p347, %p348
    %p350 = pneg %p349
    // Predicated region
    $region9: #{forward.11} parent=5 // pred_check
      _
    $region10: #{forward.11} parent=5 // pred_check_branch
      %352 = sbr.rel (%p349) target = $region12
    $region11: #{forward.11} parent=5 // pred_region
      %s353 = ssub.s32 %s20, 1
      // Predicated region
      $region13: #{forward.11} parent=11 // pred_check
        %p354 = pneg %p119
      $region14: #{forward.11} parent=11 // pred_check_branch
        %356 = sbr.rel (%p354) target = $region16
      $region15: #{forward.11} parent=11 // pred_region
        _
      $region16: #{forward.11} parent=11 // pred_fallthru
        _
      // Predicated region
      $region17: #{forward.11} parent=11 // pred_check
        %p357 = pneg %p140
      $region18: #{forward.11} parent=11 // pred_check_branch
        %359 = sbr.rel (%p357) target = $region20
      $region19: #{forward.11} parent=11 // pred_region
        _
      $region20: #{forward.11} parent=11 // pred_fallthru
        _
      // Predicated region
      $region21: #{forward.11} parent=11 // pred_check
        %p360 = pneg %p161
      $region22: #{forward.11} parent=11 // pred_check_branch
        %362 = sbr.rel (%p360) target = $region24
      $region23: #{forward.11} parent=11 // pred_region
        _
      $region24: #{forward.11} parent=11 // pred_fallthru
        _
      // Predicated region
      $region25: #{forward.11} parent=11 // pred_check
        %p363 = pneg %p182
      $region26: #{forward.11} parent=11 // pred_check_branch
        %365 = sbr.rel (%p363) target = $region28
      $region27: #{forward.11} parent=11 // pred_region
        _
      $region28: #{forward.11} parent=11 // pred_fallthru
        _
      // Predicated region
      $region29: #{forward.11} parent=11 // pred_check
        %p366 = pneg %p203
      $region30: #{forward.11} parent=11 // pred_check_branch
        %368 = sbr.rel (%p366) target = $region32
      $region31: #{forward.11} parent=11 // pred_region
        _
      $region32: #{forward.11} parent=11 // pred_fallthru
        _
      // Predicated region
      $region33: #{forward.11} parent=11 // pred_check
        %p369 = pneg %p224
      $region34: #{forward.11} parent=11 // pred_check_branch
        %371 = sbr.rel (%p369) target = $region36
      $region35: #{forward.11} parent=11 // pred_region
        _
      $region36: #{forward.11} parent=11 // pred_fallthru
        _
      // Predicated region
      $region37: #{forward.11} parent=11 // pred_check
        %p372 = pneg %p245
      $region38: #{forward.11} parent=11 // pred_check_branch
        %374 = sbr.rel (%p372) target = $region40
      $region39: #{forward.11} parent=11 // pred_region
        _
      $region40: #{forward.11} parent=11 // pred_fallthru
        _
      // Predicated region
      $region41: #{forward.11} parent=11 // pred_check
        %p375 = pneg %p266
      $region42: #{forward.11} parent=11 // pred_check_branch
        %377 = sbr.rel (%p375) target = $region44
      $region43: #{forward.11} parent=11 // pred_region
        _
      $region44: #{forward.11} parent=11 // pred_fallthru
        _
      // Predicated region
      $region45: #{forward.11} parent=11 // pred_check
        %p378 = pneg %p287
      $region46: #{forward.11} parent=11 // pred_check_branch
        %380 = sbr.rel (%p378) target = $region48
      $region47: #{forward.11} parent=11 // pred_region
        _
      $region48: #{forward.11} parent=11 // pred_fallthru
        _
    $region12: #{forward.11} parent=5 // pred_fallthru
      _
    %p381 = scmp.lt.s32.totalorder %s20, 2
    // Predicated region
    $region49: #{forward.11} parent=5 // pred_check
      %p382 = pneg %p381
    $region50: #{forward.11} parent=5 // pred_check_branch
      %384 = sbr.rel (%p382) target = $region52
    $region51: #{forward.11} parent=5 // pred_region
      // Predicated region
      $region53: #{forward.11} parent=51 // pred_check
        %p385 = pneg %p40
      $region54: #{forward.11} parent=51 // pred_check_branch
        %387 = sbr.rel (%p385) target = $region56
      $region55: #{forward.11} parent=51 // pred_region
        %p388 = scmp.lt.s32.totalorder %s20, 1
        %s389 = scalar_select %p388, %s20, 1
        %s390 = smul.addr %s389, 2
        %s391 = smul.addr %s390, 8
        %s392 = scalar_lea.vmem %s0, %s391
      $region56: #{forward.11} parent=51 // pred_fallthru
        _
      // Predicated region
      $region57: #{forward.11} parent=51 // pred_check
        %p393 = pneg %p66
      $region58: #{forward.11} parent=51 // pred_check_branch
        %395 = sbr.rel (%p393) target = $region60
      $region59: #{forward.11} parent=51 // pred_region
        %p396 = scmp.lt.s32.totalorder %s20, 1
        %s397 = scalar_select %p396, %s20, 1
        %s398 = smul.addr %s397, 2
        %s399 = smul.addr %s398, 8
        %s400 = scalar_lea.vmem %s1, %s399
      $region60: #{forward.11} parent=51 // pred_fallthru
        _
      // Predicated region
      $region61: #{forward.11} parent=51 // pred_check
        %p401 = pneg %p92
      $region62: #{forward.11} parent=51 // pred_check_branch
        %403 = sbr.rel (%p401) target = $region64
      $region63: #{forward.11} parent=51 // pred_region
        %p404 = scmp.lt.s32.totalorder %s20, 1
        %s405 = scalar_select %p404, %s20, 1
        %s406 = smul.addr %s405, 2
        %s407 = smul.addr %s406, 8
        %s408 = scalar_lea.vmem %s2, %s407
      $region64: #{forward.11} parent=51 // pred_fallthru
        _
    $region52: #{forward.11} parent=5 // pred_fallthru
      _
    %p409 = scmp.le.s32.totalorder 1, %s20
    %p410 = scmp.lt.s32.totalorder %s20, 3
    %p411 = pnand %p409, %p410
    %p412 = pneg %p411
    // Predicated region
    $region65: #{forward.11} parent=5 // pred_check
      _
    $region66: #{forward.11} parent=5 // pred_check_branch
      %414 = sbr.rel (%p411) target = $region68
    $region67: #{forward.11} parent=5 // pred_region
      %s415 = ssub.s32 %s20, 1
      %p416 = scmp.lt.s32.totalorder %s25, 1
      %s417 = scalar_select %p416, %s25, 1
      %s418 = smul.addr %s417, 2
      %s419 = smul.addr %s418, 8
      %s420 = scalar_lea.vmem %s0, %s419
      %p421 = pneg %p46
      %p422 = pneg %p43
      %p423 = scmp.lt.s32.totalorder %s25, 1
      %s424 = scalar_select %p423, %s25, 1
      %s425 = smul.addr %s424, 2
      %s426 = smul.addr %s425, 8
      %s427 = scalar_lea.vmem %s1, %s426
      %p428 = pneg %p72
      %p429 = pneg %p69
      %p430 = scmp.lt.s32.totalorder %s25, 1
      %s431 = scalar_select %p430, %s25, 1
      %s432 = smul.addr %s431, 2
      %s433 = smul.addr %s432, 8
      %s434 = scalar_lea.vmem %s2, %s433
      %p435 = pneg %p98
      %p436 = pneg %p95
      %p437 = pneg %p119
      %p438 = pneg %p116
      %p439 = pneg %p140
      %p440 = pneg %p137
      %p441 = pneg %p161
      %p442 = pneg %p158
      %p443 = pneg %p182
      %p444 = pneg %p179
      %p445 = pneg %p203
      %p446 = pneg %p200
      %p447 = pneg %p224
      %p448 = pneg %p221
      %p449 = pneg %p245
      %p450 = pneg %p242
      %p451 = pneg %p266
      %p452 = pneg %p263
      %p453 = pneg %p287
      %p454 = pneg %p284
      %p455 = pneg %p313
      %p456 = pneg %p310
      %p457 = scmp.lt.s32.totalorder %s25, 1
      %s458 = scalar_select %p457, %s25, 1
      %s459 = smul.addr %s458, 2
      %s460 = smul.addr %s459, 8
      %s461 = scalar_lea.vmem %s12, %s460
      %p462 = pneg %p339
      %p463 = pneg %p336
      %p464 = scmp.lt.s32.totalorder %s25, 1
      %s465 = scalar_select %p464, %s25, 1
      %s466 = smul.addr %s465, 2
      %s467 = smul.addr %s466, 8
      %s468 = scalar_lea.vmem %s13, %s467
      %p469 = scmp.lt.s32.totalorder %s25, 1
      %s470 = scalar_select %p469, %s25, 1
      %s471 = smul.addr %s470, 2
      %s472 = smul.addr %s471, 8
      %s473 = scalar_lea.vmem %s0, %s472
      %p474 = scmp.lt.s32.totalorder %s25, 1
      %s475 = scalar_select %p474, %s25, 1
      %s476 = smul.addr %s475, 2
      %s477 = smul.addr %s476, 8
      %s478 = scalar_lea.vmem %s1, %s477
      %p479 = scmp.lt.s32.totalorder %s25, 1
      %s480 = scalar_select %p479, %s25, 1
      %s481 = smul.addr %s480, 2
      %s482 = smul.addr %s481, 8
      %s483 = scalar_lea.vmem %s2, %s482
      %p484 = scmp.lt.s32.totalorder %s25, 1
      %s485 = scalar_select %p484, %s25, 1
      %s486 = smul.addr %s485, 2
      %s487 = smul.addr %s486, 8
      %s488 = scalar_lea.vmem %s12, %s487
      %p489 = scmp.lt.s32.totalorder %s25, 1
      %s490 = scalar_select %p489, %s25, 1
      %s491 = smul.addr %s490, 2
      %s492 = smul.addr %s491, 8
      %s493 = scalar_lea.vmem %s13, %s492
      %v494 = vld [vmem:[%s473] sm:$0xff]
      %v495 = vld [vmem:[%s473 + $0x8] sm:$0xff]
      %v496 = vld [vmem:[%s478] sm:$0xff]
      %v497 = vld [vmem:[%s478 + $0x8] sm:$0xff]
      %v498 = vld [vmem:[%s483] sm:$0xff]
      %v499 = vld [vmem:[%s483 + $0x8] sm:$0xff]
      %v500 = vld [vmem:[%s3] sm:$0xff]
      %v501 = vld [vmem:[%s3 + $0x8] sm:$0xff]
      %vm502 = vcmask 130048
      %v504 = vsel %vm502, %v500, 0
      %v507 = vsel %vm502, %v501, 0
      %509 = vmatprep.subr.mxu0 0.0
      %510 = vmatpush1.msra.mxu0 0.0
      %511 = vmatprep.subr.mxu0 0.0
      %512 = vmatpush1.msra.mxu0 0.0
      %513 = vmatprep.subr.mxu0 0.0
      %514 = vmatpush1.msra.mxu0 0.0
      %515 = vmatprep.subr.mxu0 0.0
      %516 = vmatpush1.msra.mxu0 0.0
      %517 = vmatprep.subr.mxu0 0.0
      %518 = vmatpush1.msra.mxu0 0.0
      %519 = vmatprep.subr.mxu0 0.0
      %520 = vmatpush1.msra.mxu0 0.0
      %521 = vmatprep.subr.mxu0 0.0
      %522 = vmatpush1.msra.mxu0 0.0
      %523 = vmatprep.subr.mxu0 0.0
      %524 = vmatpush1.msra.mxu0 0.0
      %525 = vmatprep.subr.mxu0 0.0
      %526 = vmatpush1.msra.mxu0 0.0
      %527 = vmatprep.subr.mxu0 0.0
      %528 = vmatpush1.msra.mxu0 0.0
      %529 = vmatprep.subr.mxu0 0.0
      %530 = vmatpush1.msra.mxu0 0.0
      %531 = vmatprep.subr.mxu0 0.0
      %532 = vmatpush1.msra.mxu0 0.0
      %533 = vmatprep.subr.mxu0 0.0
      %534 = vmatpush1.msra.mxu0 0.0
      %535 = vmatprep.subr.mxu0 0.0
      %536 = vmatpush1.msra.mxu0 0.0
      %537 = vmatprep.subr.mxu0 0.0
      %538 = vmatpush1.msra.mxu0 %v495
      %539 = vmatprep.subr.mxu0 0.0
      %540 = vmatpush1.msra.mxu0 %v494
      %541 = vmatprep.subr.mxu0 0.0
      %542 = vmatpush2.msra.mxu0 0.0
      %543 = vmatprep.subr.mxu0 0.0
      %544 = vmatpush2.msra.mxu0 0.0
      %545 = vmatprep.subr.mxu0 0.0
      %546 = vmatpush2.msra.mxu0 0.0
      %547 = vmatprep.subr.mxu0 0.0
      %548 = vmatpush2.msra.mxu0 0.0
      %549 = vmatprep.subr.mxu0 0.0
      %550 = vmatpush2.msra.mxu0 0.0
      %551 = vmatprep.subr.mxu0 0.0
      %552 = vmatpush2.msra.mxu0 0.0
      %553 = vmatprep.subr.mxu0 0.0
      %554 = vmatpush2.msra.mxu0 0.0
      %555 = vmatprep.subr.mxu0 0.0
      %556 = vmatpush2.msra.mxu0 0.0
      %557 = vmatprep.subr.mxu0 0.0
      %558 = vmatpush2.msra.mxu0 0.0
      %559 = vmatprep.subr.mxu0 0.0
      %560 = vmatpush2.msra.mxu0 0.0
      %561 = vmatprep.subr.mxu0 0.0
      %562 = vmatpush2.msra.mxu0 0.0
      %563 = vmatprep.subr.mxu0 0.0
      %564 = vmatpush2.msra.mxu0 0.0
      %565 = vmatprep.subr.mxu0 0.0
      %566 = vmatpush2.msra.mxu0 0.0
      %567 = vmatprep.subr.mxu0 0.0
      %568 = vmatpush2.msra.mxu0 0.0
      %569 = vmatprep.subr.mxu0 0.0
      %570 = vmatpush2.msra.mxu0 0.0
      %571 = vmatprep.subr.mxu0 0.0
      %572 = vmatpush2.msra.mxu0 0.0
      %573 = vmatprep.mubr.f32.mxu0 0.0
      %574 = vmatmul.mubr.f32.gmra.mxu0 %v504
      %v575 = vpop.f32.mrf.mxu0
      %v576 = vadd.f32 0.0, %v575
      %v577 = vpop.f32.mrf.mxu0
      %578 = vmatprep.mubr.f32.mxu0 0.0
      %579 = vmatmul.mubr.f32.gmra.mxu0 %v507
      %v580 = vpop.f32.mrf.mxu0
      %v581 = vadd.f32 0.0, %v580
      %v582 = vpop.f32.mrf.mxu0
      %583 = vdwg.mxu0
      %v584 = vld [vmem:[%s4] sm:$0xff]
      %v585 = vld [vmem:[%s4 + $0x8] sm:$0xff]
      %v587 = vsel %vm502, %v584, 0
      %v590 = vsel %vm502, %v585, 0
      %592 = vmatprep.subr.mxu0 0.0
      %593 = vmatpush1.msra.mxu0 0.0
      %594 = vmatprep.subr.mxu0 0.0
      %595 = vmatpush1.msra.mxu0 0.0
      %596 = vmatprep.subr.mxu0 0.0
      %597 = vmatpush1.msra.mxu0 0.0
      %598 = vmatprep.subr.mxu0 0.0
      %599 = vmatpush1.msra.mxu0 0.0
      %600 = vmatprep.subr.mxu0 0.0
      %601 = vmatpush1.msra.mxu0 0.0
      %602 = vmatprep.subr.mxu0 0.0
      %603 = vmatpush1.msra.mxu0 0.0
      %604 = vmatprep.subr.mxu0 0.0
      %605 = vmatpush1.msra.mxu0 0.0
      %606 = vmatprep.subr.mxu0 0.0
      %607 = vmatpush1.msra.mxu0 0.0
      %608 = vmatprep.subr.mxu0 0.0
      %609 = vmatpush1.msra.mxu0 0.0
      %610 = vmatprep.subr.mxu0 0.0
      %611 = vmatpush1.msra.mxu0 0.0
      %612 = vmatprep.subr.mxu0 0.0
      %613 = vmatpush1.msra.mxu0 0.0
      %614 = vmatprep.subr.mxu0 0.0
      %615 = vmatpush1.msra.mxu0 0.0
      %616 = vmatprep.subr.mxu0 0.0
      %617 = vmatpush1.msra.mxu0 0.0
      %618 = vmatprep.subr.mxu0 0.0
      %619 = vmatpush1.msra.mxu0 0.0
      %620 = vmatprep.subr.mxu0 0.0
      %621 = vmatpush1.msra.mxu0 %v495
      %622 = vmatprep.subr.mxu0 0.0
      %623 = vmatpush1.msra.mxu0 %v494
      %624 = vmatprep.subr.mxu0 0.0
      %625 = vmatpush2.msra.mxu0 0.0
      %626 = vmatprep.subr.mxu0 0.0
      %627 = vmatpush2.msra.mxu0 0.0
      %628 = vmatprep.subr.mxu0 0.0
      %629 = vmatpush2.msra.mxu0 0.0
      %630 = vmatprep.subr.mxu0 0.0
      %631 = vmatpush2.msra.mxu0 0.0
      %632 = vmatprep.subr.mxu0 0.0
      %633 = vmatpush2.msra.mxu0 0.0
      %634 = vmatprep.subr.mxu0 0.0
      %635 = vmatpush2.msra.mxu0 0.0
      %636 = vmatprep.subr.mxu0 0.0
      %637 = vmatpush2.msra.mxu0 0.0
      %638 = vmatprep.subr.mxu0 0.0
      %639 = vmatpush2.msra.mxu0 0.0
      %640 = vmatprep.subr.mxu0 0.0
      %641 = vmatpush2.msra.mxu0 0.0
      %642 = vmatprep.subr.mxu0 0.0
      %643 = vmatpush2.msra.mxu0 0.0
      %644 = vmatprep.subr.mxu0 0.0
      %645 = vmatpush2.msra.mxu0 0.0
      %646 = vmatprep.subr.mxu0 0.0
      %647 = vmatpush2.msra.mxu0 0.0
      %648 = vmatprep.subr.mxu0 0.0
      %649 = vmatpush2.msra.mxu0 0.0
      %650 = vmatprep.subr.mxu0 0.0
      %651 = vmatpush2.msra.mxu0 0.0
      %652 = vmatprep.subr.mxu0 0.0
      %653 = vmatpush2.msra.mxu0 0.0
      %654 = vmatprep.subr.mxu0 0.0
      %655 = vmatpush2.msra.mxu0 0.0
      %656 = vmatprep.mubr.f32.mxu0 0.0
      %657 = vmatmul.mubr.f32.gmra.mxu0 %v587
      %v658 = vpop.f32.mrf.mxu0
      %v659 = vadd.f32 0.0, %v658
      %v660 = vpop.f32.mrf.mxu0
      %661 = vmatprep.mubr.f32.mxu0 0.0
      %662 = vmatmul.mubr.f32.gmra.mxu0 %v590
      %v663 = vpop.f32.mrf.mxu0
      %v664 = vadd.f32 0.0, %v663
      %v665 = vpop.f32.mrf.mxu0
      %666 = vdwg.mxu0
      %v667 = vld [vmem:[%s5] sm:$0xf]
      %v668 = vld [vmem:[%s6] sm:$0xf]
      %vm669 = vcmask 31744
      %v671 = vsel %vm669, %v494, 0
      %v674 = vsel %vm669, %v495, 0
      %vm676 = vcmask 1043456
      %v678 = vsel %vm676, %v668, 0
      %680 = vmatprep.subr.mxu0 0.0
      %681 = vmatpush1.msra.mxu0 0.0
      %682 = vmatprep.subr.mxu0 0.0
      %683 = vmatpush1.msra.mxu0 0.0
      %684 = vmatprep.subr.mxu0 0.0
      %685 = vmatpush1.msra.mxu0 0.0
      %686 = vmatprep.subr.mxu0 0.0
      %687 = vmatpush1.msra.mxu0 0.0
      %688 = vmatprep.subr.mxu0 0.0
      %689 = vmatpush1.msra.mxu0 0.0
      %690 = vmatprep.subr.mxu0 0.0
      %691 = vmatpush1.msra.mxu0 0.0
      %692 = vmatprep.subr.mxu0 0.0
      %693 = vmatpush1.msra.mxu0 0.0
      %694 = vmatprep.subr.mxu0 0.0
      %695 = vmatpush1.msra.mxu0 0.0
      %696 = vmatprep.subr.mxu0 0.0
      %697 = vmatpush1.msra.mxu0 0.0
      %698 = vmatprep.subr.mxu0 0.0
      %699 = vmatpush1.msra.mxu0 0.0
      %700 = vmatprep.subr.mxu0 0.0
      %701 = vmatpush1.msra.mxu0 0.0
      %702 = vmatprep.subr.mxu0 0.0
      %703 = vmatpush1.msra.mxu0 0.0
      %704 = vmatprep.subr.mxu0 0.0
      %705 = vmatpush1.msra.mxu0 0.0
      %706 = vmatprep.subr.mxu0 0.0
      %707 = vmatpush1.msra.mxu0 0.0
      %708 = vmatprep.subr.mxu0 0.0
      %709 = vmatpush1.msra.mxu0 0.0
      %710 = vmatprep.subr.mxu0 0.0
      %711 = vmatpush1.msra.mxu0 %v678
      %712 = vmatprep.subr.mxu0 0.0
      %713 = vmatpush2.msra.mxu0 0.0
      %714 = vmatprep.subr.mxu0 0.0
      %715 = vmatpush2.msra.mxu0 0.0
      %716 = vmatprep.subr.mxu0 0.0
      %717 = vmatpush2.msra.mxu0 0.0
      %718 = vmatprep.subr.mxu0 0.0
      %719 = vmatpush2.msra.mxu0 0.0
      %720 = vmatprep.subr.mxu0 0.0
      %721 = vmatpush2.msra.mxu0 0.0
      %722 = vmatprep.subr.mxu0 0.0
      %723 = vmatpush2.msra.mxu0 0.0
      %724 = vmatprep.subr.mxu0 0.0
      %725 = vmatpush2.msra.mxu0 0.0
      %726 = vmatprep.subr.mxu0 0.0
      %727 = vmatpush2.msra.mxu0 0.0
      %728 = vmatprep.subr.mxu0 0.0
      %729 = vmatpush2.msra.mxu0 0.0
      %730 = vmatprep.subr.mxu0 0.0
      %731 = vmatpush2.msra.mxu0 0.0
      %732 = vmatprep.subr.mxu0 0.0
      %733 = vmatpush2.msra.mxu0 0.0
      %734 = vmatprep.subr.mxu0 0.0
      %735 = vmatpush2.msra.mxu0 0.0
      %736 = vmatprep.subr.mxu0 0.0
      %737 = vmatpush2.msra.mxu0 0.0
      %738 = vmatprep.subr.mxu0 0.0
      %739 = vmatpush2.msra.mxu0 0.0
      %740 = vmatprep.subr.mxu0 0.0
      %741 = vmatpush2.msra.mxu0 0.0
      %742 = vmatprep.subr.mxu0 0.0
      %743 = vmatpush2.msra.mxu0 0.0
      %744 = vmatprep.mubr.f32.mxu0 0.0
      %745 = vmatmul.mubr.f32.gmra.mxu0 %v671
      %v746 = vpop.f32.mrf.mxu0
      %v747 = vadd.f32 0.0, %v746
      %v748 = vpop.f32.mrf.mxu0
      %749 = vmatprep.mubr.f32.mxu0 0.0
      %750 = vmatmul.mubr.f32.gmra.mxu0 %v674
      %v751 = vpop.f32.mrf.mxu0
      %v752 = vadd.f32 0.0, %v751
      %v753 = vpop.f32.mrf.mxu0
      %754 = vdwg.mxu0
      %v756 = vsel %vm669, %v576, 0
      %v759 = vsel %vm669, %v581, 0
      %v762 = vsel %vm676, %v667, 0
      %764 = vmatprep.subr.mxu0 0.0
      %765 = vmatpush1.msra.mxu0 0.0
      %766 = vmatprep.subr.mxu0 0.0
      %767 = vmatpush1.msra.mxu0 0.0
      %768 = vmatprep.subr.mxu0 0.0
      %769 = vmatpush1.msra.mxu0 0.0
      %770 = vmatprep.subr.mxu0 0.0
      %771 = vmatpush1.msra.mxu0 0.0
      %772 = vmatprep.subr.mxu0 0.0
      %773 = vmatpush1.msra.mxu0 0.0
      %774 = vmatprep.subr.mxu0 0.0
      %775 = vmatpush1.msra.mxu0 0.0
      %776 = vmatprep.subr.mxu0 0.0
      %777 = vmatpush1.msra.mxu0 0.0
      %778 = vmatprep.subr.mxu0 0.0
      %779 = vmatpush1.msra.mxu0 0.0
      %780 = vmatprep.subr.mxu0 0.0
      %781 = vmatpush1.msra.mxu0 0.0
      %782 = vmatprep.subr.mxu0 0.0
      %783 = vmatpush1.msra.mxu0 0.0
      %784 = vmatprep.subr.mxu0 0.0
      %785 = vmatpush1.msra.mxu0 0.0
      %786 = vmatprep.subr.mxu0 0.0
      %787 = vmatpush1.msra.mxu0 0.0
      %788 = vmatprep.subr.mxu0 0.0
      %789 = vmatpush1.msra.mxu0 0.0
      %790 = vmatprep.subr.mxu0 0.0
      %791 = vmatpush1.msra.mxu0 0.0
      %792 = vmatprep.subr.mxu0 0.0
      %793 = vmatpush1.msra.mxu0 0.0
      %794 = vmatprep.subr.mxu0 0.0
      %795 = vmatpush1.msra.mxu0 %v762
      %796 = vmatprep.subr.mxu0 0.0
      %797 = vmatpush2.msra.mxu0 0.0
      %798 = vmatprep.subr.mxu0 0.0
      %799 = vmatpush2.msra.mxu0 0.0
      %800 = vmatprep.subr.mxu0 0.0
      %801 = vmatpush2.msra.mxu0 0.0
      %802 = vmatprep.subr.mxu0 0.0
      %803 = vmatpush2.msra.mxu0 0.0
      %804 = vmatprep.subr.mxu0 0.0
      %805 = vmatpush2.msra.mxu0 0.0
      %806 = vmatprep.subr.mxu0 0.0
      %807 = vmatpush2.msra.mxu0 0.0
      %808 = vmatprep.subr.mxu0 0.0
      %809 = vmatpush2.msra.mxu0 0.0
      %810 = vmatprep.subr.mxu0 0.0
      %811 = vmatpush2.msra.mxu0 0.0
      %812 = vmatprep.subr.mxu0 0.0
      %813 = vmatpush2.msra.mxu0 0.0
      %814 = vmatprep.subr.mxu0 0.0
      %815 = vmatpush2.msra.mxu0 0.0
      %816 = vmatprep.subr.mxu0 0.0
      %817 = vmatpush2.msra.mxu0 0.0
      %818 = vmatprep.subr.mxu0 0.0
      %819 = vmatpush2.msra.mxu0 0.0
      %820 = vmatprep.subr.mxu0 0.0
      %821 = vmatpush2.msra.mxu0 0.0
      %822 = vmatprep.subr.mxu0 0.0
      %823 = vmatpush2.msra.mxu0 0.0
      %824 = vmatprep.subr.mxu0 0.0
      %825 = vmatpush2.msra.mxu0 0.0
      %826 = vmatprep.subr.mxu0 0.0
      %827 = vmatpush2.msra.mxu0 0.0
      %828 = vmatprep.mubr.f32.mxu0 0.0
      %829 = vmatmul.mubr.f32.gmra.mxu0 %v756
      %v830 = vpop.f32.mrf.mxu0
      %v831 = vadd.f32 %v747, %v830
      %v832 = vpop.f32.mrf.mxu0
      %833 = vmatprep.mubr.f32.mxu0 0.0
      %834 = vmatmul.mubr.f32.gmra.mxu0 %v759
      %v835 = vpop.f32.mrf.mxu0
      %v836 = vadd.f32 %v752, %v835
      %v837 = vpop.f32.mrf.mxu0
      %838 = vdwg.mxu0
      %v839 = vld [vmem:[%s7] sm:$0xf]
      %v841 = vsel %vm669, %v659, 0
      %v844 = vsel %vm669, %v664, 0
      %v847 = vsel %vm676, %v839, 0
      %849 = vmatprep.subr.mxu0 0.0
      %850 = vmatpush1.msra.mxu0 0.0
      %851 = vmatprep.subr.mxu0 0.0
      %852 = vmatpush1.msra.mxu0 0.0
      %853 = vmatprep.subr.mxu0 0.0
      %854 = vmatpush1.msra.mxu0 0.0
      %855 = vmatprep.subr.mxu0 0.0
      %856 = vmatpush1.msra.mxu0 0.0
      %857 = vmatprep.subr.mxu0 0.0
      %858 = vmatpush1.msra.mxu0 0.0
      %859 = vmatprep.subr.mxu0 0.0
      %860 = vmatpush1.msra.mxu0 0.0
      %861 = vmatprep.subr.mxu0 0.0
      %862 = vmatpush1.msra.mxu0 0.0
      %863 = vmatprep.subr.mxu0 0.0
      %864 = vmatpush1.msra.mxu0 0.0
      %865 = vmatprep.subr.mxu0 0.0
      %866 = vmatpush1.msra.mxu0 0.0
      %867 = vmatprep.subr.mxu0 0.0
      %868 = vmatpush1.msra.mxu0 0.0
      %869 = vmatprep.subr.mxu0 0.0
      %870 = vmatpush1.msra.mxu0 0.0
      %871 = vmatprep.subr.mxu0 0.0
      %872 = vmatpush1.msra.mxu0 0.0
      %873 = vmatprep.subr.mxu0 0.0
      %874 = vmatpush1.msra.mxu0 0.0
      %875 = vmatprep.subr.mxu0 0.0
      %876 = vmatpush1.msra.mxu0 0.0
      %877 = vmatprep.subr.mxu0 0.0
      %878 = vmatpush1.msra.mxu0 0.0
      %879 = vmatprep.subr.mxu0 0.0
      %880 = vmatpush1.msra.mxu0 %v847
      %881 = vmatprep.subr.mxu0 0.0
      %882 = vmatpush2.msra.mxu0 0.0
      %883 = vmatprep.subr.mxu0 0.0
      %884 = vmatpush2.msra.mxu0 0.0
      %885 = vmatprep.subr.mxu0 0.0
      %886 = vmatpush2.msra.mxu0 0.0
      %887 = vmatprep.subr.mxu0 0.0
      %888 = vmatpush2.msra.mxu0 0.0
      %889 = vmatprep.subr.mxu0 0.0
      %890 = vmatpush2.msra.mxu0 0.0
      %891 = vmatprep.subr.mxu0 0.0
      %892 = vmatpush2.msra.mxu0 0.0
      %893 = vmatprep.subr.mxu0 0.0
      %894 = vmatpush2.msra.mxu0 0.0
      %895 = vmatprep.subr.mxu0 0.0
      %896 = vmatpush2.msra.mxu0 0.0
      %897 = vmatprep.subr.mxu0 0.0
      %898 = vmatpush2.msra.mxu0 0.0
      %899 = vmatprep.subr.mxu0 0.0
      %900 = vmatpush2.msra.mxu0 0.0
      %901 = vmatprep.subr.mxu0 0.0
      %902 = vmatpush2.msra.mxu0 0.0
      %903 = vmatprep.subr.mxu0 0.0
      %904 = vmatpush2.msra.mxu0 0.0
      %905 = vmatprep.subr.mxu0 0.0
      %906 = vmatpush2.msra.mxu0 0.0
      %907 = vmatprep.subr.mxu0 0.0
      %908 = vmatpush2.msra.mxu0 0.0
      %909 = vmatprep.subr.mxu0 0.0
      %910 = vmatpush2.msra.mxu0 0.0
      %911 = vmatprep.subr.mxu0 0.0
      %912 = vmatpush2.msra.mxu0 0.0
      %913 = vmatprep.mubr.f32.mxu0 0.0
      %914 = vmatmul.mubr.f32.gmra.mxu0 %v841
      %v915 = vpop.f32.mrf.mxu0
      %v916 = vadd.f32 0.0, %v915
      %v917 = vpop.f32.mrf.mxu0
      %918 = vmatprep.mubr.f32.mxu0 0.0
      %919 = vmatmul.mubr.f32.gmra.mxu0 %v844
      %v920 = vpop.f32.mrf.mxu0
      %v921 = vadd.f32 0.0, %v920
      %v922 = vpop.f32.mrf.mxu0
      %923 = vdwg.mxu0
      %v924 = vadd.f32 %v831, %v916
      %v925 = vadd.f32 %v836, %v921
      %v926 = vld [vmem:[%s8] sm:$0xf]
      %v927 = vld [vmem:[%s9] sm:$0x1]
      %v929 = vlaneseq
      %v930 = vshrl.u32 %v929, 7
      %v931 = vsub.s32 0, %v930
      %v932 = vrot.slane %v927, %v931
      %v935 = vsel %vm669, %v496, 0
      %v938 = vsel %vm669, %v497, 0
      %v941 = vsel %vm676, %v926, 0
      %943 = vmatprep.subr.mxu0 0.0
      %944 = vmatpush1.msra.mxu0 0.0
      %945 = vmatprep.subr.mxu0 0.0
      %946 = vmatpush1.msra.mxu0 0.0
      %947 = vmatprep.subr.mxu0 0.0
      %948 = vmatpush1.msra.mxu0 0.0
      %949 = vmatprep.subr.mxu0 0.0
      %950 = vmatpush1.msra.mxu0 0.0
      %951 = vmatprep.subr.mxu0 0.0
      %952 = vmatpush1.msra.mxu0 0.0
      %953 = vmatprep.subr.mxu0 0.0
      %954 = vmatpush1.msra.mxu0 0.0
      %955 = vmatprep.subr.mxu0 0.0
      %956 = vmatpush1.msra.mxu0 0.0
      %957 = vmatprep.subr.mxu0 0.0
      %958 = vmatpush1.msra.mxu0 0.0
      %959 = vmatprep.subr.mxu0 0.0
      %960 = vmatpush1.msra.mxu0 0.0
      %961 = vmatprep.subr.mxu0 0.0
      %962 = vmatpush1.msra.mxu0 0.0
      %963 = vmatprep.subr.mxu0 0.0
      %964 = vmatpush1.msra.mxu0 0.0
      %965 = vmatprep.subr.mxu0 0.0
      %966 = vmatpush1.msra.mxu0 0.0
      %967 = vmatprep.subr.mxu0 0.0
      %968 = vmatpush1.msra.mxu0 0.0
      %969 = vmatprep.subr.mxu0 0.0
      %970 = vmatpush1.msra.mxu0 0.0
      %971 = vmatprep.subr.mxu0 0.0
      %972 = vmatpush1.msra.mxu0 0.0
      %973 = vmatprep.subr.mxu0 0.0
      %974 = vmatpush1.msra.mxu0 %v941
      %975 = vmatprep.subr.mxu0 0.0
      %976 = vmatpush2.msra.mxu0 0.0
      %977 = vmatprep.subr.mxu0 0.0
      %978 = vmatpush2.msra.mxu0 0.0
      %979 = vmatprep.subr.mxu0 0.0
      %980 = vmatpush2.msra.mxu0 0.0
      %981 = vmatprep.subr.mxu0 0.0
      %982 = vmatpush2.msra.mxu0 0.0
      %983 = vmatprep.subr.mxu0 0.0
      %984 = vmatpush2.msra.mxu0 0.0
      %985 = vmatprep.subr.mxu0 0.0
      %986 = vmatpush2.msra.mxu0 0.0
      %987 = vmatprep.subr.mxu0 0.0
      %988 = vmatpush2.msra.mxu0 0.0
      %989 = vmatprep.subr.mxu0 0.0
      %990 = vmatpush2.msra.mxu0 0.0
      %991 = vmatprep.subr.mxu0 0.0
      %992 = vmatpush2.msra.mxu0 0.0
      %993 = vmatprep.subr.mxu0 0.0
      %994 = vmatpush2.msra.mxu0 0.0
      %995 = vmatprep.subr.mxu0 0.0
      %996 = vmatpush2.msra.mxu0 0.0
      %997 = vmatprep.subr.mxu0 0.0
      %998 = vmatpush2.msra.mxu0 0.0
      %999 = vmatprep.subr.mxu0 0.0
      %1000 = vmatpush2.msra.mxu0 0.0
      %1001 = vmatprep.subr.mxu0 0.0
      %1002 = vmatpush2.msra.mxu0 0.0
      %1003 = vmatprep.subr.mxu0 0.0
      %1004 = vmatpush2.msra.mxu0 0.0
      %1005 = vmatprep.subr.mxu0 0.0
      %1006 = vmatpush2.msra.mxu0 0.0
      %1007 = vmatprep.mubr.f32.mxu0 0.0
      %1008 = vmatmul.mubr.f32.gmra.mxu0 %v935
      %v1009 = vpop.f32.mrf.mxu0
      %v1010 = vadd.f32 %v932, %v1009
      %v1011 = vpop.f32.mrf.mxu0
      %1012 = vmatprep.mubr.f32.mxu0 0.0
      %1013 = vmatmul.mubr.f32.gmra.mxu0 %v938
      %v1014 = vpop.f32.mrf.mxu0
      %v1015 = vadd.f32 %v932, %v1014
      %v1016 = vpop.f32.mrf.mxu0
      %1017 = vdwg.mxu0
      %v1018 = vld [vmem:[%s10] sm:$0xff]
      %v1019 = vld [vmem:[%s11] sm:$0x1]
      %v1021 = vlaneseq
      %v1022 = vshrl.u32 %v1021, 7
      %v1023 = vsub.s32 0, %v1022
      %v1024 = vrot.slane %v1019, %v1023
      %vm1026 = vcmask 64512
      %v1028 = vsel %vm1026, %v498, 0
      %v1031 = vsel %vm1026, %v499, 0
      %1033 = vmatprep.subr.mxu0 0.0
      %1034 = vmatpush1.msra.mxu0 0.0
      %1035 = vmatprep.subr.mxu0 0.0
      %1036 = vmatpush1.msra.mxu0 0.0
      %1037 = vmatprep.subr.mxu0 0.0
      %1038 = vmatpush1.msra.mxu0 0.0
      %1039 = vmatprep.subr.mxu0 0.0
      %1040 = vmatpush1.msra.mxu0 0.0
      %1041 = vmatprep.subr.mxu0 0.0
      %1042 = vmatpush1.msra.mxu0 0.0
      %1043 = vmatprep.subr.mxu0 0.0
      %1044 = vmatpush1.msra.mxu0 0.0
      %1045 = vmatprep.subr.mxu0 0.0
      %1046 = vmatpush1.msra.mxu0 0.0
      %1047 = vmatprep.subr.mxu0 0.0
      %1048 = vmatpush1.msra.mxu0 0.0
      %1049 = vmatprep.subr.mxu0 0.0
      %1050 = vmatpush1.msra.mxu0 0.0
      %1051 = vmatprep.subr.mxu0 0.0
      %1052 = vmatpush1.msra.mxu0 0.0
      %1053 = vmatprep.subr.mxu0 0.0
      %1054 = vmatpush1.msra.mxu0 0.0
      %1055 = vmatprep.subr.mxu0 0.0
      %1056 = vmatpush1.msra.mxu0 0.0
      %1057 = vmatprep.subr.mxu0 0.0
      %1058 = vmatpush1.msra.mxu0 0.0
      %1059 = vmatprep.subr.mxu0 0.0
      %1060 = vmatpush1.msra.mxu0 0.0
      %1061 = vmatprep.subr.mxu0 0.0
      %1062 = vmatpush1.msra.mxu0 0.0
      %1063 = vmatprep.subr.mxu0 0.0
      %1064 = vmatpush1.msra.mxu0 %v1018
      %1065 = vmatprep.subr.mxu0 0.0
      %1066 = vmatpush2.msra.mxu0 0.0
      %1067 = vmatprep.subr.mxu0 0.0
      %1068 = vmatpush2.msra.mxu0 0.0
      %1069 = vmatprep.subr.mxu0 0.0
      %1070 = vmatpush2.msra.mxu0 0.0
      %1071 = vmatprep.subr.mxu0 0.0
      %1072 = vmatpush2.msra.mxu0 0.0
      %1073 = vmatprep.subr.mxu0 0.0
      %1074 = vmatpush2.msra.mxu0 0.0
      %1075 = vmatprep.subr.mxu0 0.0
      %1076 = vmatpush2.msra.mxu0 0.0
      %1077 = vmatprep.subr.mxu0 0.0
      %1078 = vmatpush2.msra.mxu0 0.0
      %1079 = vmatprep.subr.mxu0 0.0
      %1080 = vmatpush2.msra.mxu0 0.0
      %1081 = vmatprep.subr.mxu0 0.0
      %1082 = vmatpush2.msra.mxu0 0.0
      %1083 = vmatprep.subr.mxu0 0.0
      %1084 = vmatpush2.msra.mxu0 0.0
      %1085 = vmatprep.subr.mxu0 0.0
      %1086 = vmatpush2.msra.mxu0 0.0
      %1087 = vmatprep.subr.mxu0 0.0
      %1088 = vmatpush2.msra.mxu0 0.0
      %1089 = vmatprep.subr.mxu0 0.0
      %1090 = vmatpush2.msra.mxu0 0.0
      %1091 = vmatprep.subr.mxu0 0.0
      %1092 = vmatpush2.msra.mxu0 0.0
      %1093 = vmatprep.subr.mxu0 0.0
      %1094 = vmatpush2.msra.mxu0 0.0
      %1095 = vmatprep.subr.mxu0 0.0
      %1096 = vmatpush2.msra.mxu0 0.0
      %1097 = vmatprep.mubr.f32.mxu0 0.0
      %1098 = vmatmul.mubr.f32.gmra.mxu0 %v1028
      %v1099 = vpop.f32.mrf.mxu0
      %v1100 = vadd.f32 %v1024, %v1099
      %v1101 = vpop.f32.mrf.mxu0
      %1102 = vmatprep.mubr.f32.mxu0 0.0
      %1103 = vmatmul.mubr.f32.gmra.mxu0 %v1031
      %v1104 = vpop.f32.mrf.mxu0
      %v1105 = vadd.f32 %v1024, %v1104
      %v1106 = vpop.f32.mrf.mxu0
      %1107 = vdwg.mxu0
      %v1108 = vadd.f32 %v924, %v1010
      %v1109 = vadd.f32 %v925, %v1015
      %vm1110 = vcmask 261120
      %1111 = vst.msk [vmem:[%s488] sm:$0xff] %vm1110, %v1108
      %1112 = vst.msk [vmem:[%s488 + $0x8] sm:$0xff] %vm1110, %v1109
      %v1113 = vadd.f32 %v1100, %v1010
      %v1114 = vadd.f32 %v1105, %v1015
      %1115 = vst.msk [vmem:[%s493] sm:$0xff] %vm1110, %v1113
      %1116 = vst.msk [vmem:[%s493 + $0x8] sm:$0xff] %vm1110, %v1114
      %p1117 = scmp.lt.s32.totalorder %s25, 1
      %s1118 = scalar_select %p1117, %s25, 1
      %s1119 = smul.addr %s1118, 2
      %s1120 = smul.addr %s1119, 8
      %s1121 = scalar_lea.vmem %s12, %s1120
      %p1122 = scmp.lt.s32.totalorder %s25, 1
      %s1123 = scalar_select %p1122, %s25, 1
      %s1124 = smul.addr %s1123, 2
      %s1125 = smul.addr %s1124, 8
      %s1126 = scalar_lea.vmem %s13, %s1125
      // Predicated region
      $region69: #{forward.11} parent=67 // pred_check
        %p1127 = pneg %p310
      $region70: #{forward.11} parent=67 // pred_check_branch
        %1129 = sbr.rel (%p1127) target = $region72
      $region71: #{forward.11} parent=67 // pred_region
        _
      $region72: #{forward.11} parent=67 // pred_fallthru
        _
      // Predicated region
      $region73: #{forward.11} parent=67 // pred_check
        %p1130 = pneg %p336
      $region74: #{forward.11} parent=67 // pred_check_branch
        %1132 = sbr.rel (%p1130) target = $region76
      $region75: #{forward.11} parent=67 // pred_region
        _
      $region76: #{forward.11} parent=67 // pred_fallthru
        _
    $region68: #{forward.11} parent=5 // pred_fallthru
      _
    %p1133 = scmp.le.s32.totalorder 2, %s20
    // Predicated region
    $region77: #{forward.11} parent=5 // pred_check
      %p1134 = pneg %p1133
    $region78: #{forward.11} parent=5 // pred_check_branch
      %1136 = sbr.rel (%p1134) target = $region80
    $region79: #{forward.11} parent=5 // pred_region
      %s1137 = ssub.s32 %s20, 2
      // Predicated region
      $region81: #{forward.11} parent=79 // pred_check
        %p1138 = pneg %p316
      $region82: #{forward.11} parent=79 // pred_check_branch
        %1140 = sbr.rel (%p1138) target = $region84
      $region83: #{forward.11} parent=79 // pred_region
        %p1141 = scmp.lt.s32.totalorder %s26, 1
        %s1142 = scalar_select %p1141, %s26, 1
        %s1143 = smul.addr %s1142, 2
        %s1144 = smul.addr %s1143, 8
        %s1145 = scalar_lea.vmem %s12, %s1144
      $region84: #{forward.11} parent=79 // pred_fallthru
        _
      // Predicated region
      $region85: #{forward.11} parent=79 // pred_check
        %p1146 = pneg %p342
      $region86: #{forward.11} parent=79 // pred_check_branch
        %1148 = sbr.rel (%p1146) target = $region88
      $region87: #{forward.11} parent=79 // pred_region
        %p1149 = scmp.lt.s32.totalorder %s26, 1
        %s1150 = scalar_select %p1149, %s26, 1
        %s1151 = smul.addr %s1150, 2
        %s1152 = smul.addr %s1151, 8
        %s1153 = scalar_lea.vmem %s13, %s1152
      $region88: #{forward.11} parent=79 // pred_fallthru
        _
    $region80: #{forward.11} parent=5 // pred_fallthru
      _
  $region6: #{forward.11} parent=0 // loop_footer
    %s24 = sadd.s32 1, %s20
  $region7: #{forward.11} parent=0 // loop_footer_branch
    %19 = sbr.rel target = $region3
  $region8: #{forward.11} parent=0 // loop_exit
    _

// kernel: forward.13
$region0: #{forward.13}
  #allocation0 [shape = 'u32[]', space=smem, size = 0x4, offset = 0x4, fixed_abs, tag = 'smem constant byte address 0x4 - core index']
  #allocation1 [shape = 'u32[144,128]{1,0:T(1,128)}', space=vmem, size = 0x12000, scoped, tag = 'internal scratch']
  %s0 = inlined_call_operand.vmem [shape: f32[2,16,32], index: 0, kind: input, shape index: {}]
  %s1 = inlined_call_operand.vmem [shape: f32[1,32], index: 1, kind: input, shape index: {}]
  %s2 = inlined_call_operand.vmem [shape: f32[1,32], index: 2, kind: input, shape index: {}]
  %s3 = inlined_call_operand.vmem [shape: f32[32,128], index: 3, kind: input, shape index: {}]
  %s4 = inlined_call_operand.vmem [shape: f32[1,128], index: 4, kind: input, shape index: {}]
  %s5 = inlined_call_operand.vmem [shape: f32[2,16,128], index: 5, kind: output, shape index: {}]
  %s6 = sld [smem:[#allocation0]]
  $region53: #{forward.13} parent=0
    _
  %s8 = ssub.s32 1, %s6
  %s9 = scalar_select 0, %s8, %s6
  loop: start=0, step=1, limit=4
  $region2: #{forward.13} parent=0 // loop_pre_header
    _
  $region3: #{forward.13} parent=0 // loop_header
    %s11 = sphi 0, %s15
    %p12 = scmp.ge.s32.totalorder %s11, 4
    %s21 = sphi 0, %s23
    %s24 = sphi 0, %s21
    %s25 = sphi 0, %s24
    %s41 = sphi 0, %s25
    %s45 = sphi 0, %s45
    %s47 = sphi 0, %s45
    %s48 = sphi 0, %s47
    %s62 = sphi 0, %s48
    %s66 = sphi 0, %s66
    %s68 = sphi 0, %s66
    %s69 = sphi 0, %s68
    %s83 = sphi 0, %s69
    %s87 = sphi 0, %s87
    %s89 = sphi 0, %s87
    %s90 = sphi 0, %s89
    %s104 = sphi 0, %s90
    %s108 = sphi 0, %s108
    %s110 = sphi 0, %s108
    %s111 = sphi 0, %s110
    %s125 = sphi 0, %s111
    %s131 = sphi 0, %s133
    %s134 = sphi 0, %s131
    %s135 = sphi 0, %s134
    %s151 = sphi 0, %s135
  $region4: #{forward.13} parent=0 // loop_header_branch
    %14 = sbr.rel (%p12) target = $region8
  $region5: #{forward.13} parent=0 // loop_body
    %s16 = ssub.s32 %s11, 1
    %s17 = ssub.s32 %s11, 2
    %s18 = sadd.s32 %s11, 1
    %s19 = ssub.s32 %s11, %s18
    %p20 = scmp.eq.s32.totalorder %s19, 0
    %s22 = sadd.s32 %s21, 1
    %s23 = scalar_select %p20, %s21, %s22
    %p26 = pneg %p20
    %p27 = scmp.eq.s32.totalorder %s11, 1
    %p28 = por %p26, %p27
    %p29 = scmp.ne.s32.totalorder %s21, %s24
    %p30 = scmp.eq.s32.totalorder %s11, 0
    %p31 = por %p29, %p30
    %p32 = scmp.ne.s32.totalorder %s21, %s24
    %p33 = scmp.eq.s32.totalorder %s16, 1
    %p34 = por %p32, %p33
    %p35 = scmp.ne.s32.totalorder %s24, %s25
    %p36 = scmp.eq.s32.totalorder %s16, 0
    %p37 = por %p35, %p36
    %p38 = scmp.ne.s32.totalorder %s24, %s25
    %p39 = scmp.eq.s32.totalorder %s17, 1
    %p40 = por %p38, %p39
    %p42 = scmp.ne.s32.totalorder %s25, %s41
    %p43 = scmp.eq.s32.totalorder %s17, 0
    %p44 = por %p42, %p43
    %s46 = sadd.s32 %s45, 1
    %p49 = scmp.eq.s32.totalorder %s11, 1
    %p50 = scmp.ne.s32.totalorder %s45, %s47
    %p51 = scmp.eq.s32.totalorder %s11, 0
    %p52 = por %p50, %p51
    %p53 = scmp.ne.s32.totalorder %s45, %s47
    %p54 = scmp.eq.s32.totalorder %s16, 1
    %p55 = por %p53, %p54
    %p56 = scmp.ne.s32.totalorder %s47, %s48
    %p57 = scmp.eq.s32.totalorder %s16, 0
    %p58 = por %p56, %p57
    %p59 = scmp.ne.s32.totalorder %s47, %s48
    %p60 = scmp.eq.s32.totalorder %s17, 1
    %p61 = por %p59, %p60
    %p63 = scmp.ne.s32.totalorder %s48, %s62
    %p64 = scmp.eq.s32.totalorder %s17, 0
    %p65 = por %p63, %p64
    %s67 = sadd.s32 %s66, 1
    %p70 = scmp.eq.s32.totalorder %s11, 1
    %p71 = scmp.ne.s32.totalorder %s66, %s68
    %p72 = scmp.eq.s32.totalorder %s11, 0
    %p73 = por %p71, %p72
    %p74 = scmp.ne.s32.totalorder %s66, %s68
    %p75 = scmp.eq.s32.totalorder %s16, 1
    %p76 = por %p74, %p75
    %p77 = scmp.ne.s32.totalorder %s68, %s69
    %p78 = scmp.eq.s32.totalorder %s16, 0
    %p79 = por %p77, %p78
    %p80 = scmp.ne.s32.totalorder %s68, %s69
    %p81 = scmp.eq.s32.totalorder %s17, 1
    %p82 = por %p80, %p81
    %p84 = scmp.ne.s32.totalorder %s69, %s83
    %p85 = scmp.eq.s32.totalorder %s17, 0
    %p86 = por %p84, %p85
    %s88 = sadd.s32 %s87, 1
    %p91 = scmp.eq.s32.totalorder %s11, 1
    %p92 = scmp.ne.s32.totalorder %s87, %s89
    %p93 = scmp.eq.s32.totalorder %s11, 0
    %p94 = por %p92, %p93
    %p95 = scmp.ne.s32.totalorder %s87, %s89
    %p96 = scmp.eq.s32.totalorder %s16, 1
    %p97 = por %p95, %p96
    %p98 = scmp.ne.s32.totalorder %s89, %s90
    %p99 = scmp.eq.s32.totalorder %s16, 0
    %p100 = por %p98, %p99
    %p101 = scmp.ne.s32.totalorder %s89, %s90
    %p102 = scmp.eq.s32.totalorder %s17, 1
    %p103 = por %p101, %p102
    %p105 = scmp.ne.s32.totalorder %s90, %s104
    %p106 = scmp.eq.s32.totalorder %s17, 0
    %p107 = por %p105, %p106
    %s109 = sadd.s32 %s108, 1
    %p112 = scmp.eq.s32.totalorder %s11, 1
    %p113 = scmp.ne.s32.totalorder %s108, %s110
    %p114 = scmp.eq.s32.totalorder %s11, 0
    %p115 = por %p113, %p114
    %p116 = scmp.ne.s32.totalorder %s108, %s110
    %p117 = scmp.eq.s32.totalorder %s16, 1
    %p118 = por %p116, %p117
    %p119 = scmp.ne.s32.totalorder %s110, %s111
    %p120 = scmp.eq.s32.totalorder %s16, 0
    %p121 = por %p119, %p120
    %p122 = scmp.ne.s32.totalorder %s110, %s111
    %p123 = scmp.eq.s32.totalorder %s17, 1
    %p124 = por %p122, %p123
    %p126 = scmp.ne.s32.totalorder %s111, %s125
    %p127 = scmp.eq.s32.totalorder %s17, 0
    %p128 = por %p126, %p127
    %s129 = ssub.s32 %s11, %s18
    %p130 = scmp.eq.s32.totalorder %s129, 0
    %s132 = sadd.s32 %s131, 1
    %s133 = scalar_select %p130, %s131, %s132
    %p136 = pneg %p130
    %p137 = scmp.eq.s32.totalorder %s11, 1
    %p138 = por %p136, %p137
    %p139 = scmp.ne.s32.totalorder %s131, %s134
    %p140 = scmp.eq.s32.totalorder %s11, 0
    %p141 = por %p139, %p140
    %p142 = scmp.ne.s32.totalorder %s131, %s134
    %p143 = scmp.eq.s32.totalorder %s16, 1
    %p144 = por %p142, %p143
    %p145 = scmp.ne.s32.totalorder %s134, %s135
    %p146 = scmp.eq.s32.totalorder %s16, 0
    %p147 = por %p145, %p146
    %p148 = scmp.ne.s32.totalorder %s134, %s135
    %p149 = scmp.eq.s32.totalorder %s17, 1
    %p150 = por %p148, %p149
    %p152 = scmp.ne.s32.totalorder %s135, %s151
    %p153 = scmp.eq.s32.totalorder %s17, 0
    %p154 = por %p152, %p153
    %p155 = scmp.le.s32.totalorder 1, %s11
    %p156 = scmp.lt.s32.totalorder %s11, 3
    %p157 = pnand %p155, %p156
    %p158 = pneg %p157
    // Predicated region
    $region9: #{forward.13} parent=5 // pred_check
      _
    $region10: #{forward.13} parent=5 // pred_check_branch
      %160 = sbr.rel (%p157) target = $region12
    $region11: #{forward.13} parent=5 // pred_region
      %s161 = ssub.s32 %s11, 1
      // Predicated region
      $region13: #{forward.13} parent=11 // pred_check
        %p162 = pneg %p58
      $region14: #{forward.13} parent=11 // pred_check_branch
        %164 = sbr.rel (%p162) target = $region16
      $region15: #{forward.13} parent=11 // pred_region
        _
      $region16: #{forward.13} parent=11 // pred_fallthru
        _
      // Predicated region
      $region17: #{forward.13} parent=11 // pred_check
        %p165 = pneg %p79
      $region18: #{forward.13} parent=11 // pred_check_branch
        %167 = sbr.rel (%p165) target = $region20
      $region19: #{forward.13} parent=11 // pred_region
        _
      $region20: #{forward.13} parent=11 // pred_fallthru
        _
      // Predicated region
      $region21: #{forward.13} parent=11 // pred_check
        %p168 = pneg %p100
      $region22: #{forward.13} parent=11 // pred_check_branch
        %170 = sbr.rel (%p168) target = $region24
      $region23: #{forward.13} parent=11 // pred_region
        _
      $region24: #{forward.13} parent=11 // pred_fallthru
        _
      // Predicated region
      $region25: #{forward.13} parent=11 // pred_check
        %p171 = pneg %p121
      $region26: #{forward.13} parent=11 // pred_check_branch
        %173 = sbr.rel (%p171) target = $region28
      $region27: #{forward.13} parent=11 // pred_region
        _
      $region28: #{forward.13} parent=11 // pred_fallthru
        _
    $region12: #{forward.13} parent=5 // pred_fallthru
      _
    %p174 = scmp.lt.s32.totalorder %s11, 2
    // Predicated region
    $region29: #{forward.13} parent=5 // pred_check
      %p175 = pneg %p174
    $region30: #{forward.13} parent=5 // pred_check_branch
      %177 = sbr.rel (%p175) target = $region32
    $region31: #{forward.13} parent=5 // pred_region
      // Predicated region
      $region33: #{forward.13} parent=31 // pred_check
        %p178 = pneg %p31
      $region34: #{forward.13} parent=31 // pred_check_branch
        %180 = sbr.rel (%p178) target = $region36
      $region35: #{forward.13} parent=31 // pred_region
        %p181 = scmp.lt.s32.totalorder %s11, 1
        %s182 = scalar_select %p181, %s11, 1
        %s183 = smul.addr %s182, 2
        %s184 = smul.addr %s183, 8
        %s185 = scalar_lea.vmem %s0, %s184
      $region36: #{forward.13} parent=31 // pred_fallthru
        _
    $region32: #{forward.13} parent=5 // pred_fallthru
      _
    %p186 = scmp.le.s32.totalorder 1, %s11
    %p187 = scmp.lt.s32.totalorder %s11, 3
    %p188 = pnand %p186, %p187
    %p189 = pneg %p188
    // Predicated region
    $region37: #{forward.13} parent=5 // pred_check
      _
    $region38: #{forward.13} parent=5 // pred_check_branch
      %191 = sbr.rel (%p188) target = $region40
    $region39: #{forward.13} parent=5 // pred_region
      %s192 = ssub.s32 %s11, 1
      %p193 = scmp.lt.s32.totalorder %s16, 1
      %s194 = scalar_select %p193, %s16, 1
      %s195 = smul.addr %s194, 2
      %s196 = smul.addr %s195, 8
      %s197 = scalar_lea.vmem %s0, %s196
      %p198 = pneg %p37
      %p199 = pneg %p34
      %p200 = pneg %p58
      %p201 = pneg %p55
      %p202 = pneg %p79
      %p203 = pneg %p76
      %p204 = pneg %p100
      %p205 = pneg %p97
      %p206 = pneg %p121
      %p207 = pneg %p118
      %p208 = pneg %p147
      %p209 = pneg %p144
      %p210 = scmp.lt.s32.totalorder %s16, 1
      %s211 = scalar_select %p210, %s16, 1
      %s212 = smul.addr %s211, 2
      %s213 = smul.addr %s212, 8
      %s214 = scalar_lea.vmem %s5, %s213
      %p215 = scmp.lt.s32.totalorder %s16, 1
      %s216 = scalar_select %p215, %s16, 1
      %s217 = smul.addr %s216, 2
      %s218 = smul.addr %s217, 8
      %s219 = scalar_lea.vmem %s0, %s218
      %p220 = scmp.lt.s32.totalorder %s16, 1
      %s221 = scalar_select %p220, %s16, 1
      %s222 = smul.addr %s221, 2
      %s223 = smul.addr %s222, 8
      %s224 = scalar_lea.vmem %s5, %s223
      %v225 = vld [vmem:[%s219] sm:$0xff]
      %v226 = vld [vmem:[%s219 + $0x8] sm:$0xff]
      %v227 = vld [vmem:[%s1] sm:$0x1]
      %v228 = vld [vmem:[%s2] sm:$0x1]
      %vm229 = vcmask 261120
      %v230 = vsel %vm229, %v225, 0.0
      %231 = vadd.xlane.f32.xlu0 %v230
      %v232 = vpop.xlane.xlu0 %231
      %v233 = vsel %vm229, %v226, 0.0
      %234 = vadd.xlane.f32.xlu0 %v233
      %v235 = vpop.xlane.xlu0 %234
      %v236 = vrcp.pop 32.0
      %v237 = vmul.f32 %v232, %v236
      %v238 = vmul.f32 %v235, %v236
      %v239 = vsub.f32 %v225, %v237
      %v240 = vsub.f32 %v226, %v238
      %v241 = vmul.f32 %v239, %v239
      %v242 = vmul.f32 %v240, %v240
      %v243 = vsel %vm229, %v241, 0.0
      %244 = vadd.xlane.f32.xlu0 %v243
      %v245 = vpop.xlane.xlu0 %244
      %v246 = vsel %vm229, %v242, 0.0
      %247 = vadd.xlane.f32.xlu0 %v246
      %v248 = vpop.xlane.xlu0 %247
      %v249 = vmul.f32 %v245, %v236
      %v250 = vmul.f32 %v248, %v236
      %v251 = vadd.f32 %v249, 1e-05
      %v252 = vadd.f32 %v250, 1e-05
      %v253 = vrsqrt.pop %v251
      %v254 = vrsqrt.pop %v252
      %v255 = vmul.f32 %v239, %v253
      %v256 = vmul.f32 %v240, %v254
      %v258 = vlaneseq
      %v259 = vshrl.u32 %v258, 7
      %v260 = vsub.s32 0, %v259
      %v261 = vrot.slane %v227, %v260
      %v263 = vmul.f32 %v255, %v261
      %v264 = vmul.f32 %v256, %v261
      %v266 = vlaneseq
      %v267 = vshrl.u32 %v266, 7
      %v268 = vsub.s32 0, %v267
      %v269 = vrot.slane %v228, %v268
      %v271 = vadd.f32 %v263, %v269
      %v272 = vadd.f32 %v264, %v269
      %v273 = vsel %vm229, %v271, 0.0
      %v274 = vsel %vm229, %v272, 0.0
      %v275 = vadd.f32 %v273, %v274
      %v276 = vrot.slane %v275, 4
      %v277 = vadd.f32 %v275, %v276
      %v278 = vrot.slane %v277, 2
      %v279 = vadd.f32 %v277, %v278
      %v280 = vrot.slane %v279, 1
      %v281 = vadd.f32 %v279, %v280
      %v282 = vrcp.pop 16.0
      %v283 = vmul.f32 %v281, %v282
      %v284 = vsub.f32 %v271, %v283
      %v285 = vsub.f32 %v272, %v283
      %v286 = vld [vmem:[%s3] sm:$0xff]
      %v287 = vld [vmem:[%s3 + $0x8] sm:$0xff]
      %v288 = vld [vmem:[%s3 + $0x10] sm:$0xff]
      %v289 = vld [vmem:[%s3 + $0x18] sm:$0xff]
      %v290 = vld [vmem:[%s4] sm:$0x1]
      %v292 = vlaneseq
      %v293 = vshrl.u32 %v292, 7
      %v294 = vsub.s32 0, %v293
      %v295 = vrot.slane %v290, %v294
      %v298 = vsel %vm229, %v284, 0
      %v301 = vsel %vm229, %v285, 0
      %303 = vmatprep.subr.mxu0 0.0
      %304 = vmatpush1.msra.mxu0 0.0
      %305 = vmatprep.subr.mxu0 0.0
      %306 = vmatpush1.msra.mxu0 0.0
      %307 = vmatprep.subr.mxu0 0.0
      %308 = vmatpush1.msra.mxu0 0.0
      %309 = vmatprep.subr.mxu0 0.0
      %310 = vmatpush1.msra.mxu0 0.0
      %311 = vmatprep.subr.mxu0 0.0
      %312 = vmatpush1.msra.mxu0 0.0
      %313 = vmatprep.subr.mxu0 0.0
      %314 = vmatpush1.msra.mxu0 0.0
      %315 = vmatprep.subr.mxu0 0.0
      %316 = vmatpush1.msra.mxu0 0.0
      %317 = vmatprep.subr.mxu0 0.0
      %318 = vmatpush1.msra.mxu0 0.0
      %319 = vmatprep.subr.mxu0 0.0
      %320 = vmatpush1.msra.mxu0 0.0
      %321 = vmatprep.subr.mxu0 0.0
      %322 = vmatpush1.msra.mxu0 0.0
      %323 = vmatprep.subr.mxu0 0.0
      %324 = vmatpush1.msra.mxu0 0.0
      %325 = vmatprep.subr.mxu0 0.0
      %326 = vmatpush1.msra.mxu0 0.0
      %327 = vmatprep.subr.mxu0 0.0
      %328 = vmatpush1.msra.mxu0 %v289
      %329 = vmatprep.subr.mxu0 0.0
      %330 = vmatpush1.msra.mxu0 %v288
      %331 = vmatprep.subr.mxu0 0.0
      %332 = vmatpush1.msra.mxu0 %v287
      %333 = vmatprep.subr.mxu0 0.0
      %334 = vmatpush1.msra.mxu0 %v286
      %335 = vmatprep.subr.mxu0 0.0
      %336 = vmatpush2.msra.mxu0 0.0
      %337 = vmatprep.subr.mxu0 0.0
      %338 = vmatpush2.msra.mxu0 0.0
      %339 = vmatprep.subr.mxu0 0.0
      %340 = vmatpush2.msra.mxu0 0.0
      %341 = vmatprep.subr.mxu0 0.0
      %342 = vmatpush2.msra.mxu0 0.0
      %343 = vmatprep.subr.mxu0 0.0
      %344 = vmatpush2.msra.mxu0 0.0
      %345 = vmatprep.subr.mxu0 0.0
      %346 = vmatpush2.msra.mxu0 0.0
      %347 = vmatprep.subr.mxu0 0.0
      %348 = vmatpush2.msra.mxu0 0.0
      %349 = vmatprep.subr.mxu0 0.0
      %350 = vmatpush2.msra.mxu0 0.0
      %351 = vmatprep.subr.mxu0 0.0
      %352 = vmatpush2.msra.mxu0 0.0
      %353 = vmatprep.subr.mxu0 0.0
      %354 = vmatpush2.msra.mxu0 0.0
      %355 = vmatprep.subr.mxu0 0.0
      %356 = vmatpush2.msra.mxu0 0.0
      %357 = vmatprep.subr.mxu0 0.0
      %358 = vmatpush2.msra.mxu0 0.0
      %359 = vmatprep.subr.mxu0 0.0
      %360 = vmatpush2.msra.mxu0 0.0
      %361 = vmatprep.subr.mxu0 0.0
      %362 = vmatpush2.msra.mxu0 0.0
      %363 = vmatprep.subr.mxu0 0.0
      %364 = vmatpush2.msra.mxu0 0.0
      %365 = vmatprep.subr.mxu0 0.0
      %366 = vmatpush2.msra.mxu0 0.0
      %367 = vmatprep.mubr.f32.mxu0 0.0
      %368 = vmatmul.mubr.f32.gmra.mxu0 %v298
      %v369 = vpop.f32.mrf.mxu0
      %v370 = vadd.f32 %v295, %v369
      %v371 = vpop.f32.mrf.mxu0
      %372 = vmatprep.mubr.f32.mxu0 0.0
      %373 = vmatmul.mubr.f32.gmra.mxu0 %v301
      %v374 = vpop.f32.mrf.mxu0
      %v375 = vadd.f32 %v295, %v374
      %v376 = vpop.f32.mrf.mxu0
      %377 = vdwg.mxu0
      %378 = vst [vmem:[%s224] sm:$0xff] %v370
      %379 = vst [vmem:[%s224 + $0x8] sm:$0xff] %v375
      %p380 = scmp.lt.s32.totalorder %s16, 1
      %s381 = scalar_select %p380, %s16, 1
      %s382 = smul.addr %s381, 2
      %s383 = smul.addr %s382, 8
      %s384 = scalar_lea.vmem %s5, %s383
      // Predicated region
      $region41: #{forward.13} parent=39 // pred_check
        %p385 = pneg %p144
      $region42: #{forward.13} parent=39 // pred_check_branch
        %387 = sbr.rel (%p385) target = $region44
      $region43: #{forward.13} parent=39 // pred_region
        _
      $region44: #{forward.13} parent=39 // pred_fallthru
        _
    $region40: #{forward.13} parent=5 // pred_fallthru
      _
    %p388 = scmp.le.s32.totalorder 2, %s11
    // Predicated region
    $region45: #{forward.13} parent=5 // pred_check
      %p389 = pneg %p388
    $region46: #{forward.13} parent=5 // pred_check_branch
      %391 = sbr.rel (%p389) target = $region48
    $region47: #{forward.13} parent=5 // pred_region
      %s392 = ssub.s32 %s11, 2
      // Predicated region
      $region49: #{forward.13} parent=47 // pred_check
        %p393 = pneg %p150
      $region50: #{forward.13} parent=47 // pred_check_branch
        %395 = sbr.rel (%p393) target = $region52
      $region51: #{forward.13} parent=47 // pred_region
        %p396 = scmp.lt.s32.totalorder %s17, 1
        %s397 = scalar_select %p396, %s17, 1
        %s398 = smul.addr %s397, 2
        %s399 = smul.addr %s398, 8
        %s400 = scalar_lea.vmem %s5, %s399
      $region52: #{forward.13} parent=47 // pred_fallthru
        _
    $region48: #{forward.13} parent=5 // pred_fallthru
      _
  $region6: #{forward.13} parent=0 // loop_footer
    %s15 = sadd.s32 1, %s11
  $region7: #{forward.13} parent=0 // loop_footer_branch
    %10 = sbr.rel target = $region3
  $region8: #{forward.13} parent=0 // loop_exit
    _

// kernel: forward.9
$region0: #{forward.9}
  #allocation0 [shape = 'u32[]', space=smem, size = 0x4, offset = 0x4, fixed_abs, tag = 'smem constant byte address 0x4 - core index']
  #allocation1 [shape = 'u32[144,128]{1,0:T(1,128)}', space=vmem, size = 0x12000, scoped, tag = 'internal scratch']
  %s0 = inlined_call_operand.vmem [shape: f32[2,16,32], index: 0, kind: input, shape index: {}]
  %s1 = inlined_call_operand.vmem [shape: f32[2,16,32], index: 1, kind: input, shape index: {}]
  %s2 = inlined_call_operand.vmem [shape: f32[16,16], index: 2, kind: input, shape index: {}]
  %s3 = inlined_call_operand.vmem [shape: f32[32,96], index: 3, kind: input, shape index: {}]
  %s4 = inlined_call_operand.vmem [shape: f32[1,96], index: 4, kind: input, shape index: {}]
  %s5 = inlined_call_operand.vmem [shape: f32[32,32], index: 5, kind: input, shape index: {}]
  %s6 = inlined_call_operand.vmem [shape: f32[1,32], index: 6, kind: input, shape index: {}]
  %s7 = inlined_call_operand.vmem [shape: f32[32,64], index: 7, kind: input, shape index: {}]
  %s8 = inlined_call_operand.vmem [shape: f32[1,64], index: 8, kind: input, shape index: {}]
  %s9 = inlined_call_operand.vmem [shape: f32[64,32], index: 9, kind: input, shape index: {}]
  %s10 = inlined_call_operand.vmem [shape: f32[1,32], index: 10, kind: input, shape index: {}]
  %s11 = inlined_call_operand.vmem [shape: f32[2,16,32], index: 11, kind: output, shape index: {}]
  %s12 = sld [smem:[#allocation0]]
  $region77: #{forward.9} parent=0
    _
  %s14 = ssub.s32 1, %s12
  %s15 = scalar_select 0, %s14, %s12
  loop: start=0, step=1, limit=4
  $region2: #{forward.9} parent=0 // loop_pre_header
    _
  $region3: #{forward.9} parent=0 // loop_header
    %s17 = sphi 0, %s21
    %p18 = scmp.ge.s32.totalorder %s17, 4
    %s27 = sphi 0, %s29
    %s30 = sphi 0, %s27
    %s31 = sphi 0, %s30
    %s47 = sphi 0, %s31
    %s53 = sphi 0, %s55
    %s56 = sphi 0, %s53
    %s57 = sphi 0, %s56
    %s73 = sphi 0, %s57
    %s77 = sphi 0, %s77
    %s79 = sphi 0, %s77
    %s80 = sphi 0, %s79
    %s94 = sphi 0, %s80
    %s98 = sphi 0, %s98
    %s100 = sphi 0, %s98
    %s101 = sphi 0, %s100
    %s115 = sphi 0, %s101
    %s119 = sphi 0, %s119
    %s121 = sphi 0, %s119
    %s122 = sphi 0, %s121
    %s136 = sphi 0, %s122
    %s140 = sphi 0, %s140
    %s142 = sphi 0, %s140
    %s143 = sphi 0, %s142
    %s157 = sphi 0, %s143
    %s161 = sphi 0, %s161
    %s163 = sphi 0, %s161
    %s164 = sphi 0, %s163
    %s178 = sphi 0, %s164
    %s182 = sphi 0, %s182
    %s184 = sphi 0, %s182
    %s185 = sphi 0, %s184
    %s199 = sphi 0, %s185
    %s203 = sphi 0, %s203
    %s205 = sphi 0, %s203
    %s206 = sphi 0, %s205
    %s220 = sphi 0, %s206
    %s224 = sphi 0, %s224
    %s226 = sphi 0, %s224
    %s227 = sphi 0, %s226
    %s241 = sphi 0, %s227
    %s245 = sphi 0, %s245
    %s247 = sphi 0, %s245
    %s248 = sphi 0, %s247
    %s262 = sphi 0, %s248
    %s268 = sphi 0, %s270
    %s271 = sphi 0, %s268
    %s272 = sphi 0, %s271
    %s288 = sphi 0, %s272
  $region4: #{forward.9} parent=0 // loop_header_branch
    %20 = sbr.rel (%p18) target = $region8
  $region5: #{forward.9} parent=0 // loop_body
    %s22 = ssub.s32 %s17, 1
    %s23 = ssub.s32 %s17, 2
    %s24 = sadd.s32 %s17, 1
    %s25 = ssub.s32 %s17, %s24
    %p26 = scmp.eq.s32.totalorder %s25, 0
    %s28 = sadd.s32 %s27, 1
    %s29 = scalar_select %p26, %s27, %s28
    %p32 = pneg %p26
    %p33 = scmp.eq.s32.totalorder %s17, 1
    %p34 = por %p32, %p33
    %p35 = scmp.ne.s32.totalorder %s27, %s30
    %p36 = scmp.eq.s32.totalorder %s17, 0
    %p37 = por %p35, %p36
    %p38 = scmp.ne.s32.totalorder %s27, %s30
    %p39 = scmp.eq.s32.totalorder %s22, 1
    %p40 = por %p38, %p39
    %p41 = scmp.ne.s32.totalorder %s30, %s31
    %p42 = scmp.eq.s32.totalorder %s22, 0
    %p43 = por %p41, %p42
    %p44 = scmp.ne.s32.totalorder %s30, %s31
    %p45 = scmp.eq.s32.totalorder %s23, 1
    %p46 = por %p44, %p45
    %p48 = scmp.ne.s32.totalorder %s31, %s47
    %p49 = scmp.eq.s32.totalorder %s23, 0
    %p50 = por %p48, %p49
    %s51 = ssub.s32 %s17, %s24
    %p52 = scmp.eq.s32.totalorder %s51, 0
    %s54 = sadd.s32 %s53, 1
    %s55 = scalar_select %p52, %s53, %s54
    %p58 = pneg %p52
    %p59 = scmp.eq.s32.totalorder %s17, 1
    %p60 = por %p58, %p59
    %p61 = scmp.ne.s32.totalorder %s53, %s56
    %p62 = scmp.eq.s32.totalorder %s17, 0
    %p63 = por %p61, %p62
    %p64 = scmp.ne.s32.totalorder %s53, %s56
    %p65 = scmp.eq.s32.totalorder %s22, 1
    %p66 = por %p64, %p65
    %p67 = scmp.ne.s32.totalorder %s56, %s57
    %p68 = scmp.eq.s32.totalorder %s22, 0
    %p69 = por %p67, %p68
    %p70 = scmp.ne.s32.totalorder %s56, %s57
    %p71 = scmp.eq.s32.totalorder %s23, 1
    %p72 = por %p70, %p71
    %p74 = scmp.ne.s32.totalorder %s57, %s73
    %p75 = scmp.eq.s32.totalorder %s23, 0
    %p76 = por %p74, %p75
    %s78 = sadd.s32 %s77, 1
    %p81 = scmp.eq.s32.totalorder %s17, 1
    %p82 = scmp.ne.s32.totalorder %s77, %s79
    %p83 = scmp.eq.s32.totalorder %s17, 0
    %p84 = por %p82, %p83
    %p85 = scmp.ne.s32.totalorder %s77, %s79
    %p86 = scmp.eq.s32.totalorder %s22, 1
    %p87 = por %p85, %p86
    %p88 = scmp.ne.s32.totalorder %s79, %s80
    %p89 = scmp.eq.s32.totalorder %s22, 0
    %p90 = por %p88, %p89
    %p91 = scmp.ne.s32.totalorder %s79, %s80
    %p92 = scmp.eq.s32.totalorder %s23, 1
    %p93 = por %p91, %p92
    %p95 = scmp.ne.s32.totalorder %s80, %s94
    %p96 = scmp.eq.s32.totalorder %s23, 0
    %p97 = por %p95, %p96
    %s99 = sadd.s32 %s98, 1
    %p102 = scmp.eq.s32.totalorder %s17, 1
    %p103 = scmp.ne.s32.totalorder %s98, %s100
    %p104 = scmp.eq.s32.totalorder %s17, 0
    %p105 = por %p103, %p104
    %p106 = scmp.ne.s32.totalorder %s98, %s100
    %p107 = scmp.eq.s32.totalorder %s22, 1
    %p108 = por %p106, %p107
    %p109 = scmp.ne.s32.totalorder %s100, %s101
    %p110 = scmp.eq.s32.totalorder %s22, 0
    %p111 = por %p109, %p110
    %p112 = scmp.ne.s32.totalorder %s100, %s101
    %p113 = scmp.eq.s32.totalorder %s23, 1
    %p114 = por %p112, %p113
    %p116 = scmp.ne.s32.totalorder %s101, %s115
    %p117 = scmp.eq.s32.totalorder %s23, 0
    %p118 = por %p116, %p117
    %s120 = sadd.s32 %s119, 1
    %p123 = scmp.eq.s32.totalorder %s17, 1
    %p124 = scmp.ne.s32.totalorder %s119, %s121
    %p125 = scmp.eq.s32.totalorder %s17, 0
    %p126 = por %p124, %p125
    %p127 = scmp.ne.s32.totalorder %s119, %s121
    %p128 = scmp.eq.s32.totalorder %s22, 1
    %p129 = por %p127, %p128
    %p130 = scmp.ne.s32.totalorder %s121, %s122
    %p131 = scmp.eq.s32.totalorder %s22, 0
    %p132 = por %p130, %p131
    %p133 = scmp.ne.s32.totalorder %s121, %s122
    %p134 = scmp.eq.s32.totalorder %s23, 1
    %p135 = por %p133, %p134
    %p137 = scmp.ne.s32.totalorder %s122, %s136
    %p138 = scmp.eq.s32.totalorder %s23, 0
    %p139 = por %p137, %p138
    %s141 = sadd.s32 %s140, 1
    %p144 = scmp.eq.s32.totalorder %s17, 1
    %p145 = scmp.ne.s32.totalorder %s140, %s142
    %p146 = scmp.eq.s32.totalorder %s17, 0
    %p147 = por %p145, %p146
    %p148 = scmp.ne.s32.totalorder %s140, %s142
    %p149 = scmp.eq.s32.totalorder %s22, 1
    %p150 = por %p148, %p149
    %p151 = scmp.ne.s32.totalorder %s142, %s143
    %p152 = scmp.eq.s32.totalorder %s22, 0
    %p153 = por %p151, %p152
    %p154 = scmp.ne.s32.totalorder %s142, %s143
    %p155 = scmp.eq.s32.totalorder %s23, 1
    %p156 = por %p154, %p155
    %p158 = scmp.ne.s32.totalorder %s143, %s157
    %p159 = scmp.eq.s32.totalorder %s23, 0
    %p160 = por %p158, %p159
    %s162 = sadd.s32 %s161, 1
    %p165 = scmp.eq.s32.totalorder %s17, 1
    %p166 = scmp.ne.s32.totalorder %s161, %s163
    %p167 = scmp.eq.s32.totalorder %s17, 0
    %p168 = por %p166, %p167
    %p169 = scmp.ne.s32.totalorder %s161, %s163
    %p170 = scmp.eq.s32.totalorder %s22, 1
    %p171 = por %p169, %p170
    %p172 = scmp.ne.s32.totalorder %s163, %s164
    %p173 = scmp.eq.s32.totalorder %s22, 0
    %p174 = por %p172, %p173
    %p175 = scmp.ne.s32.totalorder %s163, %s164
    %p176 = scmp.eq.s32.totalorder %s23, 1
    %p177 = por %p175, %p176
    %p179 = scmp.ne.s32.totalorder %s164, %s178
    %p180 = scmp.eq.s32.totalorder %s23, 0
    %p181 = por %p179, %p180
    %s183 = sadd.s32 %s182, 1
    %p186 = scmp.eq.s32.totalorder %s17, 1
    %p187 = scmp.ne.s32.totalorder %s182, %s184
    %p188 = scmp.eq.s32.totalorder %s17, 0
    %p189 = por %p187, %p188
    %p190 = scmp.ne.s32.totalorder %s182, %s184
    %p191 = scmp.eq.s32.totalorder %s22, 1
    %p192 = por %p190, %p191
    %p193 = scmp.ne.s32.totalorder %s184, %s185
    %p194 = scmp.eq.s32.totalorder %s22, 0
    %p195 = por %p193, %p194
    %p196 = scmp.ne.s32.totalorder %s184, %s185
    %p197 = scmp.eq.s32.totalorder %s23, 1
    %p198 = por %p196, %p197
    %p200 = scmp.ne.s32.totalorder %s185, %s199
    %p201 = scmp.eq.s32.totalorder %s23, 0
    %p202 = por %p200, %p201
    %s204 = sadd.s32 %s203, 1
    %p207 = scmp.eq.s32.totalorder %s17, 1
    %p208 = scmp.ne.s32.totalorder %s203, %s205
    %p209 = scmp.eq.s32.totalorder %s17, 0
    %p210 = por %p208, %p209
    %p211 = scmp.ne.s32.totalorder %s203, %s205
    %p212 = scmp.eq.s32.totalorder %s22, 1
    %p213 = por %p211, %p212
    %p214 = scmp.ne.s32.totalorder %s205, %s206
    %p215 = scmp.eq.s32.totalorder %s22, 0
    %p216 = por %p214, %p215
    %p217 = scmp.ne.s32.totalorder %s205, %s206
    %p218 = scmp.eq.s32.totalorder %s23, 1
    %p219 = por %p217, %p218
    %p221 = scmp.ne.s32.totalorder %s206, %s220
    %p222 = scmp.eq.s32.totalorder %s23, 0
    %p223 = por %p221, %p222
    %s225 = sadd.s32 %s224, 1
    %p228 = scmp.eq.s32.totalorder %s17, 1
    %p229 = scmp.ne.s32.totalorder %s224, %s226
    %p230 = scmp.eq.s32.totalorder %s17, 0
    %p231 = por %p229, %p230
    %p232 = scmp.ne.s32.totalorder %s224, %s226
    %p233 = scmp.eq.s32.totalorder %s22, 1
    %p234 = por %p232, %p233
    %p235 = scmp.ne.s32.totalorder %s226, %s227
    %p236 = scmp.eq.s32.totalorder %s22, 0
    %p237 = por %p235, %p236
    %p238 = scmp.ne.s32.totalorder %s226, %s227
    %p239 = scmp.eq.s32.totalorder %s23, 1
    %p240 = por %p238, %p239
    %p242 = scmp.ne.s32.totalorder %s227, %s241
    %p243 = scmp.eq.s32.totalorder %s23, 0
    %p244 = por %p242, %p243
    %s246 = sadd.s32 %s245, 1
    %p249 = scmp.eq.s32.totalorder %s17, 1
    %p250 = scmp.ne.s32.totalorder %s245, %s247
    %p251 = scmp.eq.s32.totalorder %s17, 0
    %p252 = por %p250, %p251
    %p253 = scmp.ne.s32.totalorder %s245, %s247
    %p254 = scmp.eq.s32.totalorder %s22, 1
    %p255 = por %p253, %p254
    %p256 = scmp.ne.s32.totalorder %s247, %s248
    %p257 = scmp.eq.s32.totalorder %s22, 0
    %p258 = por %p256, %p257
    %p259 = scmp.ne.s32.totalorder %s247, %s248
    %p260 = scmp.eq.s32.totalorder %s23, 1
    %p261 = por %p259, %p260
    %p263 = scmp.ne.s32.totalorder %s248, %s262
    %p264 = scmp.eq.s32.totalorder %s23, 0
    %p265 = por %p263, %p264
    %s266 = ssub.s32 %s17, %s24
    %p267 = scmp.eq.s32.totalorder %s266, 0
    %s269 = sadd.s32 %s268, 1
    %s270 = scalar_select %p267, %s268, %s269
    %p273 = pneg %p267
    %p274 = scmp.eq.s32.totalorder %s17, 1
    %p275 = por %p273, %p274
    %p276 = scmp.ne.s32.totalorder %s268, %s271
    %p277 = scmp.eq.s32.totalorder %s17, 0
    %p278 = por %p276, %p277
    %p279 = scmp.ne.s32.totalorder %s268, %s271
    %p280 = scmp.eq.s32.totalorder %s22, 1
    %p281 = por %p279, %p280
    %p282 = scmp.ne.s32.totalorder %s271, %s272
    %p283 = scmp.eq.s32.totalorder %s22, 0
    %p284 = por %p282, %p283
    %p285 = scmp.ne.s32.totalorder %s271, %s272
    %p286 = scmp.eq.s32.totalorder %s23, 1
    %p287 = por %p285, %p286
    %p289 = scmp.ne.s32.totalorder %s272, %s288
    %p290 = scmp.eq.s32.totalorder %s23, 0
    %p291 = por %p289, %p290
    %p292 = scmp.le.s32.totalorder 1, %s17
    %p293 = scmp.lt.s32.totalorder %s17, 3
    %p294 = pnand %p292, %p293
    %p295 = pneg %p294
    // Predicated region
    $region9: #{forward.9} parent=5 // pred_check
      _
    $region10: #{forward.9} parent=5 // pred_check_branch
      %297 = sbr.rel (%p294) target = $region12
    $region11: #{forward.9} parent=5 // pred_region
      %s298 = ssub.s32 %s17, 1
      // Predicated region
      $region13: #{forward.9} parent=11 // pred_check
        %p299 = pneg %p90
      $region14: #{forward.9} parent=11 // pred_check_branch
        %301 = sbr.rel (%p299) target = $region16
      $region15: #{forward.9} parent=11 // pred_region
        _
      $region16: #{forward.9} parent=11 // pred_fallthru
        _
      // Predicated region
      $region17: #{forward.9} parent=11 // pred_check
        %p302 = pneg %p111
      $region18: #{forward.9} parent=11 // pred_check_branch
        %304 = sbr.rel (%p302) target = $region20
      $region19: #{forward.9} parent=11 // pred_region
        _
      $region20: #{forward.9} parent=11 // pred_fallthru
        _
      // Predicated region
      $region21: #{forward.9} parent=11 // pred_check
        %p305 = pneg %p132
      $region22: #{forward.9} parent=11 // pred_check_branch
        %307 = sbr.rel (%p305) target = $region24
      $region23: #{forward.9} parent=11 // pred_region
        _
      $region24: #{forward.9} parent=11 // pred_fallthru
        _
      // Predicated region
      $region25: #{forward.9} parent=11 // pred_check
        %p308 = pneg %p153
      $region26: #{forward.9} parent=11 // pred_check_branch
        %310 = sbr.rel (%p308) target = $region28
      $region27: #{forward.9} parent=11 // pred_region
        _
      $region28: #{forward.9} parent=11 // pred_fallthru
        _
      // Predicated region
      $region29: #{forward.9} parent=11 // pred_check
        %p311 = pneg %p174
      $region30: #{forward.9} parent=11 // pred_check_branch
        %313 = sbr.rel (%p311) target = $region32
      $region31: #{forward.9} parent=11 // pred_region
        _
      $region32: #{forward.9} parent=11 // pred_fallthru
        _
      // Predicated region
      $region33: #{forward.9} parent=11 // pred_check
        %p314 = pneg %p195
      $region34: #{forward.9} parent=11 // pred_check_branch
        %316 = sbr.rel (%p314) target = $region36
      $region35: #{forward.9} parent=11 // pred_region
        _
      $region36: #{forward.9} parent=11 // pred_fallthru
        _
      // Predicated region
      $region37: #{forward.9} parent=11 // pred_check
        %p317 = pneg %p216
      $region38: #{forward.9} parent=11 // pred_check_branch
        %319 = sbr.rel (%p317) target = $region40
      $region39: #{forward.9} parent=11 // pred_region
        _
      $region40: #{forward.9} parent=11 // pred_fallthru
        _
      // Predicated region
      $region41: #{forward.9} parent=11 // pred_check
        %p320 = pneg %p237
      $region42: #{forward.9} parent=11 // pred_check_branch
        %322 = sbr.rel (%p320) target = $region44
      $region43: #{forward.9} parent=11 // pred_region
        _
      $region44: #{forward.9} parent=11 // pred_fallthru
        _
      // Predicated region
      $region45: #{forward.9} parent=11 // pred_check
        %p323 = pneg %p258
      $region46: #{forward.9} parent=11 // pred_check_branch
        %325 = sbr.rel (%p323) target = $region48
      $region47: #{forward.9} parent=11 // pred_region
        _
      $region48: #{forward.9} parent=11 // pred_fallthru
        _
    $region12: #{forward.9} parent=5 // pred_fallthru
      _
    %p326 = scmp.lt.s32.totalorder %s17, 2
    // Predicated region
    $region49: #{forward.9} parent=5 // pred_check
      %p327 = pneg %p326
    $region50: #{forward.9} parent=5 // pred_check_branch
      %329 = sbr.rel (%p327) target = $region52
    $region51: #{forward.9} parent=5 // pred_region
      // Predicated region
      $region53: #{forward.9} parent=51 // pred_check
        %p330 = pneg %p37
      $region54: #{forward.9} parent=51 // pred_check_branch
        %332 = sbr.rel (%p330) target = $region56
      $region55: #{forward.9} parent=51 // pred_region
        %p333 = scmp.lt.s32.totalorder %s17, 1
        %s334 = scalar_select %p333, %s17, 1
        %s335 = smul.addr %s334, 2
        %s336 = smul.addr %s335, 8
        %s337 = scalar_lea.vmem %s0, %s336
      $region56: #{forward.9} parent=51 // pred_fallthru
        _
      // Predicated region
      $region57: #{forward.9} parent=51 // pred_check
        %p338 = pneg %p63
      $region58: #{forward.9} parent=51 // pred_check_branch
        %340 = sbr.rel (%p338) target = $region60
      $region59: #{forward.9} parent=51 // pred_region
        %p341 = scmp.lt.s32.totalorder %s17, 1
        %s342 = scalar_select %p341, %s17, 1
        %s343 = smul.addr %s342, 2
        %s344 = smul.addr %s343, 8
        %s345 = scalar_lea.vmem %s1, %s344
      $region60: #{forward.9} parent=51 // pred_fallthru
        _
    $region52: #{forward.9} parent=5 // pred_fallthru
      _
    %p346 = scmp.le.s32.totalorder 1, %s17
    %p347 = scmp.lt.s32.totalorder %s17, 3
    %p348 = pnand %p346, %p347
    %p349 = pneg %p348
    // Predicated region
    $region61: #{forward.9} parent=5 // pred_check
      _
    $region62: #{forward.9} parent=5 // pred_check_branch
      %351 = sbr.rel (%p348) target = $region64
    $region63: #{forward.9} parent=5 // pred_region
      %s352 = ssub.s32 %s17, 1
      %p353 = scmp.lt.s32.totalorder %s22, 1
      %s354 = scalar_select %p353, %s22, 1
      %s355 = smul.addr %s354, 2
      %s356 = smul.addr %s355, 8
      %s357 = scalar_lea.vmem %s0, %s356
      %p358 = pneg %p43
      %p359 = pneg %p40
      %p360 = scmp.lt.s32.totalorder %s22, 1
      %s361 = scalar_select %p360, %s22, 1
      %s362 = smul.addr %s361, 2
      %s363 = smul.addr %s362, 8
      %s364 = scalar_lea.vmem %s1, %s363
      %p365 = pneg %p69
      %p366 = pneg %p66
      %p367 = pneg %p90
      %p368 = pneg %p87
      %p369 = pneg %p111
      %p370 = pneg %p108
      %p371 = pneg %p132
      %p372 = pneg %p129
      %p373 = pneg %p153
      %p374 = pneg %p150
      %p375 = pneg %p174
      %p376 = pneg %p171
      %p377 = pneg %p195
      %p378 = pneg %p192
      %p379 = pneg %p216
      %p380 = pneg %p213
      %p381 = pneg %p237
      %p382 = pneg %p234
      %p383 = pneg %p258
      %p384 = pneg %p255
      %p385 = pneg %p284
      %p386 = pneg %p281
      %p387 = scmp.lt.s32.totalorder %s22, 1
      %s388 = scalar_select %p387, %s22, 1
      %s389 = smul.addr %s388, 2
      %s390 = smul.addr %s389, 8
      %s391 = scalar_lea.vmem %s11, %s390
      %p392 = scmp.lt.s32.totalorder %s22, 1
      %s393 = scalar_select %p392, %s22, 1
      %s394 = smul.addr %s393, 2
      %s395 = smul.addr %s394, 8
      %s396 = scalar_lea.vmem %s0, %s395
      %p397 = scmp.lt.s32.totalorder %s22, 1
      %s398 = scalar_select %p397, %s22, 1
      %s399 = smul.addr %s398, 2
      %s400 = smul.addr %s399, 8
      %s401 = scalar_lea.vmem %s1, %s400
      %p402 = scmp.lt.s32.totalorder %s22, 1
      %s403 = scalar_select %p402, %s22, 1
      %s404 = smul.addr %s403, 2
      %s405 = smul.addr %s404, 8
      %s406 = scalar_lea.vmem %s11, %s405
      %v407 = vld [vmem:[%s396] sm:$0xff]
      %v408 = vld [vmem:[%s396 + $0x8] sm:$0xff]
      %v409 = vld [vmem:[%s2] sm:$0xff]
      %v410 = vld [vmem:[%s2 + $0x8] sm:$0xff]
      %v411 = vld [vmem:[%s401] sm:$0xff]
      %v412 = vld [vmem:[%s401 + $0x8] sm:$0xff]
      %v413 = vadd.f32 %v407, %v411
      %v414 = vadd.f32 %v408, %v412
      %v415 = vld [vmem:[%s3] sm:$0xff]
      %v416 = vld [vmem:[%s3 + $0x8] sm:$0xff]
      %v417 = vld [vmem:[%s3 + $0x10] sm:$0xff]
      %v418 = vld [vmem:[%s3 + $0x18] sm:$0xff]
      %v419 = vld [vmem:[%s4] sm:$0x1]
      %v421 = vlaneseq
      %v422 = vshrl.u32 %v421, 7
      %v423 = vsub.s32 0, %v422
      %v424 = vrot.slane %v419, %v423
      %vm426 = vcmask 261120
      %v428 = vsel %vm426, %v413, 0
      %v431 = vsel %vm426, %v414, 0
      %433 = vmatprep.subr.mxu0 0.0
      %434 = vmatpush1.msra.mxu0 0.0
      %435 = vmatprep.subr.mxu0 0.0
      %436 = vmatpush1.msra.mxu0 0.0
      %437 = vmatprep.subr.mxu0 0.0
      %438 = vmatpush1.msra.mxu0 0.0
      %439 = vmatprep.subr.mxu0 0.0
      %440 = vmatpush1.msra.mxu0 0.0
      %441 = vmatprep.subr.mxu0 0.0
      %442 = vmatpush1.msra.mxu0 0.0
      %443 = vmatprep.subr.mxu0 0.0
      %444 = vmatpush1.msra.mxu0 0.0
      %445 = vmatprep.subr.mxu0 0.0
      %446 = vmatpush1.msra.mxu0 0.0
      %447 = vmatprep.subr.mxu0 0.0
      %448 = vmatpush1.msra.mxu0 0.0
      %449 = vmatprep.subr.mxu0 0.0
      %450 = vmatpush1.msra.mxu0 0.0
      %451 = vmatprep.subr.mxu0 0.0
      %452 = vmatpush1.msra.mxu0 0.0
      %453 = vmatprep.subr.mxu0 0.0
      %454 = vmatpush1.msra.mxu0 0.0
      %455 = vmatprep.subr.mxu0 0.0
      %456 = vmatpush1.msra.mxu0 0.0
      %457 = vmatprep.subr.mxu0 0.0
      %458 = vmatpush1.msra.mxu0 %v418
      %459 = vmatprep.subr.mxu0 0.0
      %460 = vmatpush1.msra.mxu0 %v417
      %461 = vmatprep.subr.mxu0 0.0
      %462 = vmatpush1.msra.mxu0 %v416
      %463 = vmatprep.subr.mxu0 0.0
      %464 = vmatpush1.msra.mxu0 %v415
      %465 = vmatprep.subr.mxu0 0.0
      %466 = vmatpush2.msra.mxu0 0.0
      %467 = vmatprep.subr.mxu0 0.0
      %468 = vmatpush2.msra.mxu0 0.0
      %469 = vmatprep.subr.mxu0 0.0
      %470 = vmatpush2.msra.mxu0 0.0
      %471 = vmatprep.subr.mxu0 0.0
      %472 = vmatpush2.msra.mxu0 0.0
      %473 = vmatprep.subr.mxu0 0.0
      %474 = vmatpush2.msra.mxu0 0.0
      %475 = vmatprep.subr.mxu0 0.0
      %476 = vmatpush2.msra.mxu0 0.0
      %477 = vmatprep.subr.mxu0 0.0
      %478 = vmatpush2.msra.mxu0 0.0
      %479 = vmatprep.subr.mxu0 0.0
      %480 = vmatpush2.msra.mxu0 0.0
      %481 = vmatprep.subr.mxu0 0.0
      %482 = vmatpush2.msra.mxu0 0.0
      %483 = vmatprep.subr.mxu0 0.0
      %484 = vmatpush2.msra.mxu0 0.0
      %485 = vmatprep.subr.mxu0 0.0
      %486 = vmatpush2.msra.mxu0 0.0
      %487 = vmatprep.subr.mxu0 0.0
      %488 = vmatpush2.msra.mxu0 0.0
      %489 = vmatprep.subr.mxu0 0.0
      %490 = vmatpush2.msra.mxu0 0.0
      %491 = vmatprep.subr.mxu0 0.0
      %492 = vmatpush2.msra.mxu0 0.0
      %493 = vmatprep.subr.mxu0 0.0
      %494 = vmatpush2.msra.mxu0 0.0
      %495 = vmatprep.subr.mxu0 0.0
      %496 = vmatpush2.msra.mxu0 0.0
      %497 = vmatprep.mubr.f32.mxu0 0.0
      %498 = vmatmul.mubr.f32.gmra.mxu0 %v428
      %v499 = vpop.f32.mrf.mxu0
      %v500 = vadd.f32 %v424, %v499
      %v501 = vpop.f32.mrf.mxu0
      %502 = vmatprep.mubr.f32.mxu0 0.0
      %503 = vmatmul.mubr.f32.gmra.mxu0 %v431
      %v504 = vpop.f32.mrf.mxu0
      %v505 = vadd.f32 %v424, %v504
      %v506 = vpop.f32.mrf.mxu0
      %507 = vdwg.mxu0
      %v508 = vld [vmem:[%s5] sm:$0xff]
      %v509 = vld [vmem:[%s5 + $0x8] sm:$0xff]
      %v510 = vld [vmem:[%s5 + $0x10] sm:$0xff]
      %v511 = vld [vmem:[%s5 + $0x18] sm:$0xff]
      %v512 = vld [vmem:[%s6] sm:$0x1]
      %515 = vrot.lane.b32.xlu0 %v500, 96
      %v516 = vpop.permute.xlu0 %515
      %517 = vrot.lane.b32.xlu0 %v505, 96
      %v518 = vpop.permute.xlu0 %517
      %vm519 = vcmask 64512
      %v520 = vsel %vm519, %v500, 0
      %v522 = vsel %vm519, %v505, 0
      %v524 = vsel %vm519, %v516, 0
      %v526 = vsel %vm519, %v518, 0
      %528 = vmatprep.subr.mxu0 0.0
      %529 = vmatpush1.xpose.msra.mxu0 0.0
      %530 = vmatprep.subr.mxu0 0.0
      %531 = vmatpush1.xpose.msra.mxu0 0.0
      %532 = vmatprep.subr.mxu0 0.0
      %533 = vmatpush1.xpose.msra.mxu0 0.0
      %534 = vmatprep.subr.mxu0 0.0
      %535 = vmatpush1.xpose.msra.mxu0 0.0
      %536 = vmatprep.subr.mxu0 0.0
      %537 = vmatpush1.xpose.msra.mxu0 0.0
      %538 = vmatprep.subr.mxu0 0.0
      %539 = vmatpush1.xpose.msra.mxu0 0.0
      %540 = vmatprep.subr.mxu0 0.0
      %541 = vmatpush1.xpose.msra.mxu0 0.0
      %542 = vmatprep.subr.mxu0 0.0
      %543 = vmatpush1.xpose.msra.mxu0 0.0
      %544 = vmatprep.subr.mxu0 0.0
      %545 = vmatpush1.xpose.msra.mxu0 0.0
      %546 = vmatprep.subr.mxu0 0.0
      %547 = vmatpush1.xpose.msra.mxu0 0.0
      %548 = vmatprep.subr.mxu0 0.0
      %549 = vmatpush1.xpose.msra.mxu0 0.0
      %550 = vmatprep.subr.mxu0 0.0
      %551 = vmatpush1.xpose.msra.mxu0 0.0
      %552 = vmatprep.subr.mxu0 0.0
      %553 = vmatpush1.xpose.msra.mxu0 0.0
      %554 = vmatprep.subr.mxu0 0.0
      %555 = vmatpush1.xpose.msra.mxu0 0.0
      %556 = vmatprep.subr.mxu0 0.0
      %557 = vmatpush1.xpose.msra.mxu0 %v526
      %558 = vmatprep.subr.mxu0 0.0
      %559 = vmatpush1.xpose.msra.mxu0 %v524
      %560 = vmatprep.subr.mxu0 0.0
      %561 = vmatpush2.xpose.msra.mxu0 0.0
      %562 = vmatprep.subr.mxu0 0.0
      %563 = vmatpush2.xpose.msra.mxu0 0.0
      %564 = vmatprep.subr.mxu0 0.0
      %565 = vmatpush2.xpose.msra.mxu0 0.0
      %566 = vmatprep.subr.mxu0 0.0
      %567 = vmatpush2.xpose.msra.mxu0 0.0
      %568 = vmatprep.subr.mxu0 0.0
      %569 = vmatpush2.xpose.msra.mxu0 0.0
      %570 = vmatprep.subr.mxu0 0.0
      %571 = vmatpush2.xpose.msra.mxu0 0.0
      %572 = vmatprep.subr.mxu0 0.0
      %573 = vmatpush2.xpose.msra.mxu0 0.0
      %574 = vmatprep.subr.mxu0 0.0
      %575 = vmatpush2.xpose.msra.mxu0 0.0
      %576 = vmatprep.subr.mxu0 0.0
      %577 = vmatpush2.xpose.msra.mxu0 0.0
      %578 = vmatprep.subr.mxu0 0.0
      %579 = vmatpush2.xpose.msra.mxu0 0.0
      %580 = vmatprep.subr.mxu0 0.0
      %581 = vmatpush2.xpose.msra.mxu0 0.0
      %582 = vmatprep.subr.mxu0 0.0
      %583 = vmatpush2.xpose.msra.mxu0 0.0
      %584 = vmatprep.subr.mxu0 0.0
      %585 = vmatpush2.xpose.msra.mxu0 0.0
      %586 = vmatprep.subr.mxu0 0.0
      %587 = vmatpush2.xpose.msra.mxu0 0.0
      %588 = vmatprep.subr.mxu0 0.0
      %589 = vmatpush2.xpose.msra.mxu0 0.0
      %590 = vmatprep.subr.mxu0 0.0
      %591 = vmatpush2.xpose.msra.mxu0 0.0
      %592 = vmatprep.mubr.f32.mxu0 0.0
      %593 = vmatmul.mubr.f32.gmra.mxu0 %v520
      %v594 = vpop.f32.mrf.mxu0
      %v595 = vadd.f32 0.0, %v594
      %v596 = vpop.f32.mrf.mxu0
      %597 = vmatprep.mubr.f32.mxu0 0.0
      %598 = vmatmul.mubr.f32.gmra.mxu0 %v522
      %v599 = vpop.f32.mrf.mxu0
      %v600 = vadd.f32 0.0, %v599
      %v601 = vpop.f32.mrf.mxu0
      %602 = vdwg.mxu0
      %vm603 = vcmask 130048
      %v604 = vsel %vm603, %v595, -inf
      %605 = vmax.xlane.f32.xlu0 %v604
      %v606 = vpop.xlane.xlu0 %605
      %v607 = vsel %vm603, %v600, -inf
      %608 = vmax.xlane.f32.xlu0 %v607
      %v609 = vpop.xlane.xlu0 %608
      %v610 = vsub.f32 %v595, %v606
      %v611 = vsub.f32 %v600, %v609
      %v612 = vmul.f32 %v610, 1.442695
      %v613 = vpow.pop %v612
      %v614 = vmul.f32 %v611, 1.442695
      %v615 = vpow.pop %v614
      %v616 = vsel %vm603, %v613, 0.0
      %617 = vadd.xlane.f32.xlu0 %v616
      %v618 = vpop.xlane.xlu0 %617
      %v619 = vsel %vm603, %v615, 0.0
      %620 = vadd.xlane.f32.xlu0 %v619
      %v621 = vpop.xlane.xlu0 %620
      %v622 = vrcp.pop %v618
      %v623 = vrcp.pop %v621
      %v624 = vmul.f32 %v613, %v622
      %v625 = vmul.f32 %v615, %v623
      %626 = vrot.lane.b32.xlu0 %v500, 64
      %v627 = vpop.permute.xlu0 %626
      %628 = vrot.lane.b32.xlu0 %v505, 64
      %v629 = vpop.permute.xlu0 %628
      %v633 = vsel %vm603, %v624, 0
      %v636 = vsel %vm603, %v625, 0
      %638 = vmatprep.subr.mxu0 0.0
      %639 = vmatpush1.msra.mxu0 0.0
      %640 = vmatprep.subr.mxu0 0.0
      %641 = vmatpush1.msra.mxu0 0.0
      %642 = vmatprep.subr.mxu0 0.0
      %643 = vmatpush1.msra.mxu0 0.0
      %644 = vmatprep.subr.mxu0 0.0
      %645 = vmatpush1.msra.mxu0 0.0
      %646 = vmatprep.subr.mxu0 0.0
      %647 = vmatpush1.msra.mxu0 0.0
      %648 = vmatprep.subr.mxu0 0.0
      %649 = vmatpush1.msra.mxu0 0.0
      %650 = vmatprep.subr.mxu0 0.0
      %651 = vmatpush1.msra.mxu0 0.0
      %652 = vmatprep.subr.mxu0 0.0
      %653 = vmatpush1.msra.mxu0 0.0
      %654 = vmatprep.subr.mxu0 0.0
      %655 = vmatpush1.msra.mxu0 0.0
      %656 = vmatprep.subr.mxu0 0.0
      %657 = vmatpush1.msra.mxu0 0.0
      %658 = vmatprep.subr.mxu0 0.0
      %659 = vmatpush1.msra.mxu0 0.0
      %660 = vmatprep.subr.mxu0 0.0
      %661 = vmatpush1.msra.mxu0 0.0
      %662 = vmatprep.subr.mxu0 0.0
      %663 = vmatpush1.msra.mxu0 0.0
      %664 = vmatprep.subr.mxu0 0.0
      %665 = vmatpush1.msra.mxu0 0.0
      %666 = vmatprep.subr.mxu0 0.0
      %667 = vmatpush1.msra.mxu0 %v629
      %668 = vmatprep.subr.mxu0 0.0
      %669 = vmatpush1.msra.mxu0 %v627
      %670 = vmatprep.subr.mxu0 0.0
      %671 = vmatpush2.msra.mxu0 0.0
      %672 = vmatprep.subr.mxu0 0.0
      %673 = vmatpush2.msra.mxu0 0.0
      %674 = vmatprep.subr.mxu0 0.0
      %675 = vmatpush2.msra.mxu0 0.0
      %676 = vmatprep.subr.mxu0 0.0
      %677 = vmatpush2.msra.mxu0 0.0
      %678 = vmatprep.subr.mxu0 0.0
      %679 = vmatpush2.msra.mxu0 0.0
      %680 = vmatprep.subr.mxu0 0.0
      %681 = vmatpush2.msra.mxu0 0.0
      %682 = vmatprep.subr.mxu0 0.0
      %683 = vmatpush2.msra.mxu0 0.0
      %684 = vmatprep.subr.mxu0 0.0
      %685 = vmatpush2.msra.mxu0 0.0
      %686 = vmatprep.subr.mxu0 0.0
      %687 = vmatpush2.msra.mxu0 0.0
      %688 = vmatprep.subr.mxu0 0.0
      %689 = vmatpush2.msra.mxu0 0.0
      %690 = vmatprep.subr.mxu0 0.0
      %691 = vmatpush2.msra.mxu0 0.0
      %692 = vmatprep.subr.mxu0 0.0
      %693 = vmatpush2.msra.mxu0 0.0
      %694 = vmatprep.subr.mxu0 0.0
      %695 = vmatpush2.msra.mxu0 0.0
      %696 = vmatprep.subr.mxu0 0.0
      %697 = vmatpush2.msra.mxu0 0.0
      %698 = vmatprep.subr.mxu0 0.0
      %699 = vmatpush2.msra.mxu0 0.0
      %700 = vmatprep.subr.mxu0 0.0
      %701 = vmatpush2.msra.mxu0 0.0
      %702 = vmatprep.mubr.f32.mxu0 0.0
      %703 = vmatmul.mubr.f32.gmra.mxu0 %v633
      %v704 = vpop.f32.mrf.mxu0
      %v705 = vadd.f32 0.0, %v704
      %v706 = vpop.f32.mrf.mxu0
      %707 = vmatprep.mubr.f32.mxu0 0.0
      %708 = vmatmul.mubr.f32.gmra.mxu0 %v636
      %v709 = vpop.f32.mrf.mxu0
      %v710 = vadd.f32 0.0, %v709
      %v711 = vpop.f32.mrf.mxu0
      %712 = vdwg.mxu0
      %713 = vrot.lane.b32.xlu0 %v500, 120
      %v714 = vpop.permute.xlu0 %713
      %715 = vrot.lane.b32.xlu0 %v505, 120
      %v716 = vpop.permute.xlu0 %715
      %717 = vrot.lane.b32.xlu0 %v500, 88
      %v718 = vpop.permute.xlu0 %717
      %719 = vrot.lane.b32.xlu0 %v505, 88
      %v720 = vpop.permute.xlu0 %719
      %v721 = vsel %vm519, %v714, 0
      %v723 = vsel %vm519, %v716, 0
      %v725 = vsel %vm519, %v718, 0
      %v727 = vsel %vm519, %v720, 0
      %729 = vmatprep.subr.mxu0 0.0
      %730 = vmatpush1.xpose.msra.mxu0 0.0
      %731 = vmatprep.subr.mxu0 0.0
      %732 = vmatpush1.xpose.msra.mxu0 0.0
      %733 = vmatprep.subr.mxu0 0.0
      %734 = vmatpush1.xpose.msra.mxu0 0.0
      %735 = vmatprep.subr.mxu0 0.0
      %736 = vmatpush1.xpose.msra.mxu0 0.0
      %737 = vmatprep.subr.mxu0 0.0
      %738 = vmatpush1.xpose.msra.mxu0 0.0
      %739 = vmatprep.subr.mxu0 0.0
      %740 = vmatpush1.xpose.msra.mxu0 0.0
      %741 = vmatprep.subr.mxu0 0.0
      %742 = vmatpush1.xpose.msra.mxu0 0.0
      %743 = vmatprep.subr.mxu0 0.0
      %744 = vmatpush1.xpose.msra.mxu0 0.0
      %745 = vmatprep.subr.mxu0 0.0
      %746 = vmatpush1.xpose.msra.mxu0 0.0
      %747 = vmatprep.subr.mxu0 0.0
      %748 = vmatpush1.xpose.msra.mxu0 0.0
      %749 = vmatprep.subr.mxu0 0.0
      %750 = vmatpush1.xpose.msra.mxu0 0.0
      %751 = vmatprep.subr.mxu0 0.0
      %752 = vmatpush1.xpose.msra.mxu0 0.0
      %753 = vmatprep.subr.mxu0 0.0
      %754 = vmatpush1.xpose.msra.mxu0 0.0
      %755 = vmatprep.subr.mxu0 0.0
      %756 = vmatpush1.xpose.msra.mxu0 0.0
      %757 = vmatprep.subr.mxu0 0.0
      %758 = vmatpush1.xpose.msra.mxu0 %v727
      %759 = vmatprep.subr.mxu0 0.0
      %760 = vmatpush1.xpose.msra.mxu0 %v725
      %761 = vmatprep.subr.mxu0 0.0
      %762 = vmatpush2.xpose.msra.mxu0 0.0
      %763 = vmatprep.subr.mxu0 0.0
      %764 = vmatpush2.xpose.msra.mxu0 0.0
      %765 = vmatprep.subr.mxu0 0.0
      %766 = vmatpush2.xpose.msra.mxu0 0.0
      %767 = vmatprep.subr.mxu0 0.0
      %768 = vmatpush2.xpose.msra.mxu0 0.0
      %769 = vmatprep.subr.mxu0 0.0
      %770 = vmatpush2.xpose.msra.mxu0 0.0
      %771 = vmatprep.subr.mxu0 0.0
      %772 = vmatpush2.xpose.msra.mxu0 0.0
      %773 = vmatprep.subr.mxu0 0.0
      %774 = vmatpush2.xpose.msra.mxu0 0.0
      %775 = vmatprep.subr.mxu0 0.0
      %776 = vmatpush2.xpose.msra.mxu0 0.0
      %777 = vmatprep.subr.mxu0 0.0
      %778 = vmatpush2.xpose.msra.mxu0 0.0
      %779 = vmatprep.subr.mxu0 0.0
      %780 = vmatpush2.xpose.msra.mxu0 0.0
      %781 = vmatprep.subr.mxu0 0.0
      %782 = vmatpush2.xpose.msra.mxu0 0.0
      %783 = vmatprep.subr.mxu0 0.0
      %784 = vmatpush2.xpose.msra.mxu0 0.0
      %785 = vmatprep.subr.mxu0 0.0
      %786 = vmatpush2.xpose.msra.mxu0 0.0
      %787 = vmatprep.subr.mxu0 0.0
      %788 = vmatpush2.xpose.msra.mxu0 0.0
      %789 = vmatprep.subr.mxu0 0.0
      %790 = vmatpush2.xpose.msra.mxu0 0.0
      %791 = vmatprep.subr.mxu0 0.0
      %792 = vmatpush2.xpose.msra.mxu0 0.0
      %793 = vmatprep.mubr.f32.mxu0 0.0
      %794 = vmatmul.mubr.f32.gmra.mxu0 %v721
      %v795 = vpop.f32.mrf.mxu0
      %v796 = vadd.f32 0.0, %v795
      %v797 = vpop.f32.mrf.mxu0
      %798 = vmatprep.mubr.f32.mxu0 0.0
      %799 = vmatmul.mubr.f32.gmra.mxu0 %v723
      %v800 = vpop.f32.mrf.mxu0
      %v801 = vadd.f32 0.0, %v800
      %v802 = vpop.f32.mrf.mxu0
      %803 = vdwg.mxu0
      %v804 = vsel %vm603, %v796, -inf
      %805 = vmax.xlane.f32.xlu0 %v804
      %v806 = vpop.xlane.xlu0 %805
      %v807 = vsel %vm603, %v801, -inf
      %808 = vmax.xlane.f32.xlu0 %v807
      %v809 = vpop.xlane.xlu0 %808
      %v810 = vsub.f32 %v796, %v806
      %v811 = vsub.f32 %v801, %v809
      %v812 = vmul.f32 %v810, 1.442695
      %v813 = vpow.pop %v812
      %v814 = vmul.f32 %v811, 1.442695
      %v815 = vpow.pop %v814
      %v816 = vsel %vm603, %v813, 0.0
      %817 = vadd.xlane.f32.xlu0 %v816
      %v818 = vpop.xlane.xlu0 %817
      %v819 = vsel %vm603, %v815, 0.0
      %820 = vadd.xlane.f32.xlu0 %v819
      %v821 = vpop.xlane.xlu0 %820
      %v822 = vrcp.pop %v818
      %v823 = vrcp.pop %v821
      %v824 = vmul.f32 %v813, %v822
      %v825 = vmul.f32 %v815, %v823
      %826 = vrot.lane.b32.xlu0 %v500, 56
      %v827 = vpop.permute.xlu0 %826
      %828 = vrot.lane.b32.xlu0 %v505, 56
      %v829 = vpop.permute.xlu0 %828
      %v833 = vsel %vm603, %v824, 0
      %v836 = vsel %vm603, %v825, 0
      %838 = vmatprep.subr.mxu0 0.0
      %839 = vmatpush1.msra.mxu0 0.0
      %840 = vmatprep.subr.mxu0 0.0
      %841 = vmatpush1.msra.mxu0 0.0
      %842 = vmatprep.subr.mxu0 0.0
      %843 = vmatpush1.msra.mxu0 0.0
      %844 = vmatprep.subr.mxu0 0.0
      %845 = vmatpush1.msra.mxu0 0.0
      %846 = vmatprep.subr.mxu0 0.0
      %847 = vmatpush1.msra.mxu0 0.0
      %848 = vmatprep.subr.mxu0 0.0
      %849 = vmatpush1.msra.mxu0 0.0
      %850 = vmatprep.subr.mxu0 0.0
      %851 = vmatpush1.msra.mxu0 0.0
      %852 = vmatprep.subr.mxu0 0.0
      %853 = vmatpush1.msra.mxu0 0.0
      %854 = vmatprep.subr.mxu0 0.0
      %855 = vmatpush1.msra.mxu0 0.0
      %856 = vmatprep.subr.mxu0 0.0
      %857 = vmatpush1.msra.mxu0 0.0
      %858 = vmatprep.subr.mxu0 0.0
      %859 = vmatpush1.msra.mxu0 0.0
      %860 = vmatprep.subr.mxu0 0.0
      %861 = vmatpush1.msra.mxu0 0.0
      %862 = vmatprep.subr.mxu0 0.0
      %863 = vmatpush1.msra.mxu0 0.0
      %864 = vmatprep.subr.mxu0 0.0
      %865 = vmatpush1.msra.mxu0 0.0
      %866 = vmatprep.subr.mxu0 0.0
      %867 = vmatpush1.msra.mxu0 %v829
      %868 = vmatprep.subr.mxu0 0.0
      %869 = vmatpush1.msra.mxu0 %v827
      %870 = vmatprep.subr.mxu0 0.0
      %871 = vmatpush2.msra.mxu0 0.0
      %872 = vmatprep.subr.mxu0 0.0
      %873 = vmatpush2.msra.mxu0 0.0
      %874 = vmatprep.subr.mxu0 0.0
      %875 = vmatpush2.msra.mxu0 0.0
      %876 = vmatprep.subr.mxu0 0.0
      %877 = vmatpush2.msra.mxu0 0.0
      %878 = vmatprep.subr.mxu0 0.0
      %879 = vmatpush2.msra.mxu0 0.0
      %880 = vmatprep.subr.mxu0 0.0
      %881 = vmatpush2.msra.mxu0 0.0
      %882 = vmatprep.subr.mxu0 0.0
      %883 = vmatpush2.msra.mxu0 0.0
      %884 = vmatprep.subr.mxu0 0.0
      %885 = vmatpush2.msra.mxu0 0.0
      %886 = vmatprep.subr.mxu0 0.0
      %887 = vmatpush2.msra.mxu0 0.0
      %888 = vmatprep.subr.mxu0 0.0
      %889 = vmatpush2.msra.mxu0 0.0
      %890 = vmatprep.subr.mxu0 0.0
      %891 = vmatpush2.msra.mxu0 0.0
      %892 = vmatprep.subr.mxu0 0.0
      %893 = vmatpush2.msra.mxu0 0.0
      %894 = vmatprep.subr.mxu0 0.0
      %895 = vmatpush2.msra.mxu0 0.0
      %896 = vmatprep.subr.mxu0 0.0
      %897 = vmatpush2.msra.mxu0 0.0
      %898 = vmatprep.subr.mxu0 0.0
      %899 = vmatpush2.msra.mxu0 0.0
      %900 = vmatprep.subr.mxu0 0.0
      %901 = vmatpush2.msra.mxu0 0.0
      %902 = vmatprep.mubr.f32.mxu0 0.0
      %903 = vmatmul.mubr.f32.gmra.mxu0 %v833
      %v904 = vpop.f32.mrf.mxu0
      %v905 = vadd.f32 0.0, %v904
      %v906 = vpop.f32.mrf.mxu0
      %907 = vmatprep.mubr.f32.mxu0 0.0
      %908 = vmatmul.mubr.f32.gmra.mxu0 %v836
      %v909 = vpop.f32.mrf.mxu0
      %v910 = vadd.f32 0.0, %v909
      %v911 = vpop.f32.mrf.mxu0
      %912 = vdwg.mxu0
      %v914 = vsel %vm519, %v905, 0
      %v917 = vsel %vm519, %v910, 0
      %919 = vmatprep.subr.mxu0 0.0
      %920 = vmatpush1.msra.mxu0 0.0
      %921 = vmatprep.subr.mxu0 0.0
      %922 = vmatpush1.msra.mxu0 0.0
      %923 = vmatprep.subr.mxu0 0.0
      %924 = vmatpush1.msra.mxu0 0.0
      %925 = vmatprep.subr.mxu0 0.0
      %926 = vmatpush1.msra.mxu0 0.0
      %927 = vmatprep.subr.mxu0 0.0
      %928 = vmatpush1.msra.mxu0 0.0
      %929 = vmatprep.subr.mxu0 0.0
      %930 = vmatpush1.msra.mxu0 0.0
      %931 = vmatprep.subr.mxu0 0.0
      %932 = vmatpush1.msra.mxu0 0.0
      %933 = vmatprep.subr.mxu0 0.0
      %934 = vmatpush1.msra.mxu0 0.0
      %935 = vmatprep.subr.mxu0 0.0
      %936 = vmatpush1.msra.mxu0 0.0
      %937 = vmatprep.subr.mxu0 0.0
      %938 = vmatpush1.msra.mxu0 0.0
      %939 = vmatprep.subr.mxu0 0.0
      %940 = vmatpush1.msra.mxu0 0.0
      %941 = vmatprep.subr.mxu0 0.0
      %942 = vmatpush1.msra.mxu0 0.0
      %943 = vmatprep.subr.mxu0 0.0
      %944 = vmatpush1.msra.mxu0 0.0
      %945 = vmatprep.subr.mxu0 0.0
      %946 = vmatpush1.msra.mxu0 0.0
      %947 = vmatprep.subr.mxu0 0.0
      %948 = vmatpush1.msra.mxu0 0.0
      %949 = vmatprep.subr.mxu0 0.0
      %950 = vmatpush1.msra.mxu0 %v509
      %951 = vmatprep.subr.mxu0 0.0
      %952 = vmatpush2.msra.mxu0 0.0
      %953 = vmatprep.subr.mxu0 0.0
      %954 = vmatpush2.msra.mxu0 0.0
      %955 = vmatprep.subr.mxu0 0.0
      %956 = vmatpush2.msra.mxu0 0.0
      %957 = vmatprep.subr.mxu0 0.0
      %958 = vmatpush2.msra.mxu0 0.0
      %959 = vmatprep.subr.mxu0 0.0
      %960 = vmatpush2.msra.mxu0 0.0
      %961 = vmatprep.subr.mxu0 0.0
      %962 = vmatpush2.msra.mxu0 0.0
      %963 = vmatprep.subr.mxu0 0.0
      %964 = vmatpush2.msra.mxu0 0.0
      %965 = vmatprep.subr.mxu0 0.0
      %966 = vmatpush2.msra.mxu0 0.0
      %967 = vmatprep.subr.mxu0 0.0
      %968 = vmatpush2.msra.mxu0 0.0
      %969 = vmatprep.subr.mxu0 0.0
      %970 = vmatpush2.msra.mxu0 0.0
      %971 = vmatprep.subr.mxu0 0.0
      %972 = vmatpush2.msra.mxu0 0.0
      %973 = vmatprep.subr.mxu0 0.0
      %974 = vmatpush2.msra.mxu0 0.0
      %975 = vmatprep.subr.mxu0 0.0
      %976 = vmatpush2.msra.mxu0 0.0
      %977 = vmatprep.subr.mxu0 0.0
      %978 = vmatpush2.msra.mxu0 0.0
      %979 = vmatprep.subr.mxu0 0.0
      %980 = vmatpush2.msra.mxu0 0.0
      %981 = vmatprep.subr.mxu0 0.0
      %982 = vmatpush2.msra.mxu0 0.0
      %983 = vmatprep.mubr.f32.mxu0 0.0
      %984 = vmatmul.mubr.f32.gmra.mxu0 %v914
      %v985 = vpop.f32.mrf.mxu0
      %v986 = vadd.f32 0.0, %v985
      %v987 = vpop.f32.mrf.mxu0
      %988 = vmatprep.mubr.f32.mxu0 0.0
      %989 = vmatmul.mubr.f32.gmra.mxu0 %v917
      %v990 = vpop.f32.mrf.mxu0
      %v991 = vadd.f32 0.0, %v990
      %v992 = vpop.f32.mrf.mxu0
      %993 = vdwg.mxu0
      %v995 = vsel %vm519, %v705, 0
      %v998 = vsel %vm519, %v710, 0
      %1000 = vmatprep.subr.mxu0 0.0
      %1001 = vmatpush1.msra.mxu0 0.0
      %1002 = vmatprep.subr.mxu0 0.0
      %1003 = vmatpush1.msra.mxu0 0.0
      %1004 = vmatprep.subr.mxu0 0.0
      %1005 = vmatpush1.msra.mxu0 0.0
      %1006 = vmatprep.subr.mxu0 0.0
      %1007 = vmatpush1.msra.mxu0 0.0
      %1008 = vmatprep.subr.mxu0 0.0
      %1009 = vmatpush1.msra.mxu0 0.0
      %1010 = vmatprep.subr.mxu0 0.0
      %1011 = vmatpush1.msra.mxu0 0.0
      %1012 = vmatprep.subr.mxu0 0.0
      %1013 = vmatpush1.msra.mxu0 0.0
      %1014 = vmatprep.subr.mxu0 0.0
      %1015 = vmatpush1.msra.mxu0 0.0
      %1016 = vmatprep.subr.mxu0 0.0
      %1017 = vmatpush1.msra.mxu0 0.0
      %1018 = vmatprep.subr.mxu0 0.0
      %1019 = vmatpush1.msra.mxu0 0.0
      %1020 = vmatprep.subr.mxu0 0.0
      %1021 = vmatpush1.msra.mxu0 0.0
      %1022 = vmatprep.subr.mxu0 0.0
      %1023 = vmatpush1.msra.mxu0 0.0
      %1024 = vmatprep.subr.mxu0 0.0
      %1025 = vmatpush1.msra.mxu0 0.0
      %1026 = vmatprep.subr.mxu0 0.0
      %1027 = vmatpush1.msra.mxu0 0.0
      %1028 = vmatprep.subr.mxu0 0.0
      %1029 = vmatpush1.msra.mxu0 0.0
      %1030 = vmatprep.subr.mxu0 0.0
      %1031 = vmatpush1.msra.mxu0 %v508
      %1032 = vmatprep.subr.mxu0 0.0
      %1033 = vmatpush2.msra.mxu0 0.0
      %1034 = vmatprep.subr.mxu0 0.0
      %1035 = vmatpush2.msra.mxu0 0.0
      %1036 = vmatprep.subr.mxu0 0.0
      %1037 = vmatpush2.msra.mxu0 0.0
      %1038 = vmatprep.subr.mxu0 0.0
      %1039 = vmatpush2.msra.mxu0 0.0
      %1040 = vmatprep.subr.mxu0 0.0
      %1041 = vmatpush2.msra.mxu0 0.0
      %1042 = vmatprep.subr.mxu0 0.0
      %1043 = vmatpush2.msra.mxu0 0.0
      %1044 = vmatprep.subr.mxu0 0.0
      %1045 = vmatpush2.msra.mxu0 0.0
      %1046 = vmatprep.subr.mxu0 0.0
      %1047 = vmatpush2.msra.mxu0 0.0
      %1048 = vmatprep.subr.mxu0 0.0
      %1049 = vmatpush2.msra.mxu0 0.0
      %1050 = vmatprep.subr.mxu0 0.0
      %1051 = vmatpush2.msra.mxu0 0.0
      %1052 = vmatprep.subr.mxu0 0.0
      %1053 = vmatpush2.msra.mxu0 0.0
      %1054 = vmatprep.subr.mxu0 0.0
      %1055 = vmatpush2.msra.mxu0 0.0
      %1056 = vmatprep.subr.mxu0 0.0
      %1057 = vmatpush2.msra.mxu0 0.0
      %1058 = vmatprep.subr.mxu0 0.0
      %1059 = vmatpush2.msra.mxu0 0.0
      %1060 = vmatprep.subr.mxu0 0.0
      %1061 = vmatpush2.msra.mxu0 0.0
      %1062 = vmatprep.subr.mxu0 0.0
      %1063 = vmatpush2.msra.mxu0 0.0
      %1064 = vmatprep.mubr.f32.mxu0 0.0
      %1065 = vmatmul.mubr.f32.gmra.mxu0 %v995
      %v1066 = vpop.f32.mrf.mxu0
      %v1067 = vadd.f32 %v986, %v1066
      %v1068 = vpop.f32.mrf.mxu0
      %1069 = vmatprep.mubr.f32.mxu0 0.0
      %1070 = vmatmul.mubr.f32.gmra.mxu0 %v998
      %v1071 = vpop.f32.mrf.mxu0
      %v1072 = vadd.f32 %v991, %v1071
      %v1073 = vpop.f32.mrf.mxu0
      %1074 = vdwg.mxu0
      %1075 = vrot.lane.b32.xlu0 %v500, 112
      %v1076 = vpop.permute.xlu0 %1075
      %1077 = vrot.lane.b32.xlu0 %v505, 112
      %v1078 = vpop.permute.xlu0 %1077
      %1079 = vrot.lane.b32.xlu0 %v500, 80
      %v1080 = vpop.permute.xlu0 %1079
      %1081 = vrot.lane.b32.xlu0 %v505, 80
      %v1082 = vpop.permute.xlu0 %1081
      %v1083 = vsel %vm519, %v1076, 0
      %v1085 = vsel %vm519, %v1078, 0
      %v1087 = vsel %vm519, %v1080, 0
      %v1089 = vsel %vm519, %v1082, 0
      %1091 = vmatprep.subr.mxu0 0.0
      %1092 = vmatpush1.xpose.msra.mxu0 0.0
      %1093 = vmatprep.subr.mxu0 0.0
      %1094 = vmatpush1.xpose.msra.mxu0 0.0
      %1095 = vmatprep.subr.mxu0 0.0
      %1096 = vmatpush1.xpose.msra.mxu0 0.0
      %1097 = vmatprep.subr.mxu0 0.0
      %1098 = vmatpush1.xpose.msra.mxu0 0.0
      %1099 = vmatprep.subr.mxu0 0.0
      %1100 = vmatpush1.xpose.msra.mxu0 0.0
      %1101 = vmatprep.subr.mxu0 0.0
      %1102 = vmatpush1.xpose.msra.mxu0 0.0
      %1103 = vmatprep.subr.mxu0 0.0
      %1104 = vmatpush1.xpose.msra.mxu0 0.0
      %1105 = vmatprep.subr.mxu0 0.0
      %1106 = vmatpush1.xpose.msra.mxu0 0.0
      %1107 = vmatprep.subr.mxu0 0.0
      %1108 = vmatpush1.xpose.msra.mxu0 0.0
      %1109 = vmatprep.subr.mxu0 0.0
      %1110 = vmatpush1.xpose.msra.mxu0 0.0
      %1111 = vmatprep.subr.mxu0 0.0
      %1112 = vmatpush1.xpose.msra.mxu0 0.0
      %1113 = vmatprep.subr.mxu0 0.0
      %1114 = vmatpush1.xpose.msra.mxu0 0.0
      %1115 = vmatprep.subr.mxu0 0.0
      %1116 = vmatpush1.xpose.msra.mxu0 0.0
      %1117 = vmatprep.subr.mxu0 0.0
      %1118 = vmatpush1.xpose.msra.mxu0 0.0
      %1119 = vmatprep.subr.mxu0 0.0
      %1120 = vmatpush1.xpose.msra.mxu0 %v1089
      %1121 = vmatprep.subr.mxu0 0.0
      %1122 = vmatpush1.xpose.msra.mxu0 %v1087
      %1123 = vmatprep.subr.mxu0 0.0
      %1124 = vmatpush2.xpose.msra.mxu0 0.0
      %1125 = vmatprep.subr.mxu0 0.0
      %1126 = vmatpush2.xpose.msra.mxu0 0.0
      %1127 = vmatprep.subr.mxu0 0.0
      %1128 = vmatpush2.xpose.msra.mxu0 0.0
      %1129 = vmatprep.subr.mxu0 0.0
      %1130 = vmatpush2.xpose.msra.mxu0 0.0
      %1131 = vmatprep.subr.mxu0 0.0
      %1132 = vmatpush2.xpose.msra.mxu0 0.0
      %1133 = vmatprep.subr.mxu0 0.0
      %1134 = vmatpush2.xpose.msra.mxu0 0.0
      %1135 = vmatprep.subr.mxu0 0.0
      %1136 = vmatpush2.xpose.msra.mxu0 0.0
      %1137 = vmatprep.subr.mxu0 0.0
      %1138 = vmatpush2.xpose.msra.mxu0 0.0
      %1139 = vmatprep.subr.mxu0 0.0
      %1140 = vmatpush2.xpose.msra.mxu0 0.0
      %1141 = vmatprep.subr.mxu0 0.0
      %1142 = vmatpush2.xpose.msra.mxu0 0.0
      %1143 = vmatprep.subr.mxu0 0.0
      %1144 = vmatpush2.xpose.msra.mxu0 0.0
      %1145 = vmatprep.subr.mxu0 0.0
      %1146 = vmatpush2.xpose.msra.mxu0 0.0
      %1147 = vmatprep.subr.mxu0 0.0
      %1148 = vmatpush2.xpose.msra.mxu0 0.0
      %1149 = vmatprep.subr.mxu0 0.0
      %1150 = vmatpush2.xpose.msra.mxu0 0.0
      %1151 = vmatprep.subr.mxu0 0.0
      %1152 = vmatpush2.xpose.msra.mxu0 0.0
      %1153 = vmatprep.subr.mxu0 0.0
      %1154 = vmatpush2.xpose.msra.mxu0 0.0
      %1155 = vmatprep.mubr.f32.mxu0 0.0
      %1156 = vmatmul.mubr.f32.gmra.mxu0 %v1083
      %v1157 = vpop.f32.mrf.mxu0
      %v1158 = vadd.f32 0.0, %v1157
      %v1159 = vpop.f32.mrf.mxu0
      %1160 = vmatprep.mubr.f32.mxu0 0.0
      %1161 = vmatmul.mubr.f32.gmra.mxu0 %v1085
      %v1162 = vpop.f32.mrf.mxu0
      %v1163 = vadd.f32 0.0, %v1162
      %v1164 = vpop.f32.mrf.mxu0
      %1165 = vdwg.mxu0
      %v1166 = vsel %vm603, %v1158, -inf
      %1167 = vmax.xlane.f32.xlu0 %v1166
      %v1168 = vpop.xlane.xlu0 %1167
      %v1169 = vsel %vm603, %v1163, -inf
      %1170 = vmax.xlane.f32.xlu0 %v1169
      %v1171 = vpop.xlane.xlu0 %1170
      %v1172 = vsub.f32 %v1158, %v1168
      %v1173 = vsub.f32 %v1163, %v1171
      %v1174 = vmul.f32 %v1172, 1.442695
      %v1175 = vpow.pop %v1174
      %v1176 = vmul.f32 %v1173, 1.442695
      %v1177 = vpow.pop %v1176
      %v1178 = vsel %vm603, %v1175, 0.0
      %1179 = vadd.xlane.f32.xlu0 %v1178
      %v1180 = vpop.xlane.xlu0 %1179
      %v1181 = vsel %vm603, %v1177, 0.0
      %1182 = vadd.xlane.f32.xlu0 %v1181
      %v1183 = vpop.xlane.xlu0 %1182
      %v1184 = vrcp.pop %v1180
      %v1185 = vrcp.pop %v1183
      %v1186 = vmul.f32 %v1175, %v1184
      %v1187 = vmul.f32 %v1177, %v1185
      %1188 = vrot.lane.b32.xlu0 %v500, 48
      %v1189 = vpop.permute.xlu0 %1188
      %1190 = vrot.lane.b32.xlu0 %v505, 48
      %v1191 = vpop.permute.xlu0 %1190
      %v1195 = vsel %vm603, %v1186, 0
      %v1198 = vsel %vm603, %v1187, 0
      %1200 = vmatprep.subr.mxu0 0.0
      %1201 = vmatpush1.msra.mxu0 0.0
      %1202 = vmatprep.subr.mxu0 0.0
      %1203 = vmatpush1.msra.mxu0 0.0
      %1204 = vmatprep.subr.mxu0 0.0
      %1205 = vmatpush1.msra.mxu0 0.0
      %1206 = vmatprep.subr.mxu0 0.0
      %1207 = vmatpush1.msra.mxu0 0.0
      %1208 = vmatprep.subr.mxu0 0.0
      %1209 = vmatpush1.msra.mxu0 0.0
      %1210 = vmatprep.subr.mxu0 0.0
      %1211 = vmatpush1.msra.mxu0 0.0
      %1212 = vmatprep.subr.mxu0 0.0
      %1213 = vmatpush1.msra.mxu0 0.0
      %1214 = vmatprep.subr.mxu0 0.0
      %1215 = vmatpush1.msra.mxu0 0.0
      %1216 = vmatprep.subr.mxu0 0.0
      %1217 = vmatpush1.msra.mxu0 0.0
      %1218 = vmatprep.subr.mxu0 0.0
      %1219 = vmatpush1.msra.mxu0 0.0
      %1220 = vmatprep.subr.mxu0 0.0
      %1221 = vmatpush1.msra.mxu0 0.0
      %1222 = vmatprep.subr.mxu0 0.0
      %1223 = vmatpush1.msra.mxu0 0.0
      %1224 = vmatprep.subr.mxu0 0.0
      %1225 = vmatpush1.msra.mxu0 0.0
      %1226 = vmatprep.subr.mxu0 0.0
      %1227 = vmatpush1.msra.mxu0 0.0
      %1228 = vmatprep.subr.mxu0 0.0
      %1229 = vmatpush1.msra.mxu0 %v1191
      %1230 = vmatprep.subr.mxu0 0.0
      %1231 = vmatpush1.msra.mxu0 %v1189
      %1232 = vmatprep.subr.mxu0 0.0
      %1233 = vmatpush2.msra.mxu0 0.0
      %1234 = vmatprep.subr.mxu0 0.0
      %1235 = vmatpush2.msra.mxu0 0.0
      %1236 = vmatprep.subr.mxu0 0.0
      %1237 = vmatpush2.msra.mxu0 0.0
      %1238 = vmatprep.subr.mxu0 0.0
      %1239 = vmatpush2.msra.mxu0 0.0
      %1240 = vmatprep.subr.mxu0 0.0
      %1241 = vmatpush2.msra.mxu0 0.0
      %1242 = vmatprep.subr.mxu0 0.0
      %1243 = vmatpush2.msra.mxu0 0.0
      %1244 = vmatprep.subr.mxu0 0.0
      %1245 = vmatpush2.msra.mxu0 0.0
      %1246 = vmatprep.subr.mxu0 0.0
      %1247 = vmatpush2.msra.mxu0 0.0
      %1248 = vmatprep.subr.mxu0 0.0
      %1249 = vmatpush2.msra.mxu0 0.0
      %1250 = vmatprep.subr.mxu0 0.0
      %1251 = vmatpush2.msra.mxu0 0.0
      %1252 = vmatprep.subr.mxu0 0.0
      %1253 = vmatpush2.msra.mxu0 0.0
      %1254 = vmatprep.subr.mxu0 0.0
      %1255 = vmatpush2.msra.mxu0 0.0
      %1256 = vmatprep.subr.mxu0 0.0
      %1257 = vmatpush2.msra.mxu0 0.0
      %1258 = vmatprep.subr.mxu0 0.0
      %1259 = vmatpush2.msra.mxu0 0.0
      %1260 = vmatprep.subr.mxu0 0.0
      %1261 = vmatpush2.msra.mxu0 0.0
      %1262 = vmatprep.subr.mxu0 0.0
      %1263 = vmatpush2.msra.mxu0 0.0
      %1264 = vmatprep.mubr.f32.mxu0 0.0
      %1265 = vmatmul.mubr.f32.gmra.mxu0 %v1195
      %v1266 = vpop.f32.mrf.mxu0
      %v1267 = vadd.f32 0.0, %v1266
      %v1268 = vpop.f32.mrf.mxu0
      %1269 = vmatprep.mubr.f32.mxu0 0.0
      %1270 = vmatmul.mubr.f32.gmra.mxu0 %v1198
      %v1271 = vpop.f32.mrf.mxu0
      %v1272 = vadd.f32 0.0, %v1271
      %v1273 = vpop.f32.mrf.mxu0
      %1274 = vdwg.mxu0
      %v1276 = vsel %vm519, %v1267, 0
      %v1279 = vsel %vm519, %v1272, 0
      %1281 = vmatprep.subr.mxu0 0.0
      %1282 = vmatpush1.msra.mxu0 0.0
      %1283 = vmatprep.subr.mxu0 0.0
      %1284 = vmatpush1.msra.mxu0 0.0
      %1285 = vmatprep.subr.mxu0 0.0
      %1286 = vmatpush1.msra.mxu0 0.0
      %1287 = vmatprep.subr.mxu0 0.0
      %1288 = vmatpush1.msra.mxu0 0.0
      %1289 = vmatprep.subr.mxu0 0.0
      %1290 = vmatpush1.msra.mxu0 0.0
      %1291 = vmatprep.subr.mxu0 0.0
      %1292 = vmatpush1.msra.mxu0 0.0
      %1293 = vmatprep.subr.mxu0 0.0
      %1294 = vmatpush1.msra.mxu0 0.0
      %1295 = vmatprep.subr.mxu0 0.0
      %1296 = vmatpush1.msra.mxu0 0.0
      %1297 = vmatprep.subr.mxu0 0.0
      %1298 = vmatpush1.msra.mxu0 0.0
      %1299 = vmatprep.subr.mxu0 0.0
      %1300 = vmatpush1.msra.mxu0 0.0
      %1301 = vmatprep.subr.mxu0 0.0
      %1302 = vmatpush1.msra.mxu0 0.0
      %1303 = vmatprep.subr.mxu0 0.0
      %1304 = vmatpush1.msra.mxu0 0.0
      %1305 = vmatprep.subr.mxu0 0.0
      %1306 = vmatpush1.msra.mxu0 0.0
      %1307 = vmatprep.subr.mxu0 0.0
      %1308 = vmatpush1.msra.mxu0 0.0
      %1309 = vmatprep.subr.mxu0 0.0
      %1310 = vmatpush1.msra.mxu0 0.0
      %1311 = vmatprep.subr.mxu0 0.0
      %1312 = vmatpush1.msra.mxu0 %v510
      %1313 = vmatprep.subr.mxu0 0.0
      %1314 = vmatpush2.msra.mxu0 0.0
      %1315 = vmatprep.subr.mxu0 0.0
      %1316 = vmatpush2.msra.mxu0 0.0
      %1317 = vmatprep.subr.mxu0 0.0
      %1318 = vmatpush2.msra.mxu0 0.0
      %1319 = vmatprep.subr.mxu0 0.0
      %1320 = vmatpush2.msra.mxu0 0.0
      %1321 = vmatprep.subr.mxu0 0.0
      %1322 = vmatpush2.msra.mxu0 0.0
      %1323 = vmatprep.subr.mxu0 0.0
      %1324 = vmatpush2.msra.mxu0 0.0
      %1325 = vmatprep.subr.mxu0 0.0
      %1326 = vmatpush2.msra.mxu0 0.0
      %1327 = vmatprep.subr.mxu0 0.0
      %1328 = vmatpush2.msra.mxu0 0.0
      %1329 = vmatprep.subr.mxu0 0.0
      %1330 = vmatpush2.msra.mxu0 0.0
      %1331 = vmatprep.subr.mxu0 0.0
      %1332 = vmatpush2.msra.mxu0 0.0
      %1333 = vmatprep.subr.mxu0 0.0
      %1334 = vmatpush2.msra.mxu0 0.0
      %1335 = vmatprep.subr.mxu0 0.0
      %1336 = vmatpush2.msra.mxu0 0.0
      %1337 = vmatprep.subr.mxu0 0.0
      %1338 = vmatpush2.msra.mxu0 0.0
      %1339 = vmatprep.subr.mxu0 0.0
      %1340 = vmatpush2.msra.mxu0 0.0
      %1341 = vmatprep.subr.mxu0 0.0
      %1342 = vmatpush2.msra.mxu0 0.0
      %1343 = vmatprep.subr.mxu0 0.0
      %1344 = vmatpush2.msra.mxu0 0.0
      %1345 = vmatprep.mubr.f32.mxu0 0.0
      %1346 = vmatmul.mubr.f32.gmra.mxu0 %v1276
      %v1347 = vpop.f32.mrf.mxu0
      %v1348 = vadd.f32 0.0, %v1347
      %v1349 = vpop.f32.mrf.mxu0
      %1350 = vmatprep.mubr.f32.mxu0 0.0
      %1351 = vmatmul.mubr.f32.gmra.mxu0 %v1279
      %v1352 = vpop.f32.mrf.mxu0
      %v1353 = vadd.f32 0.0, %v1352
      %v1354 = vpop.f32.mrf.mxu0
      %1355 = vdwg.mxu0
      %v1356 = vadd.f32 %v1067, %v1348
      %v1357 = vadd.f32 %v1072, %v1353
      %1358 = vrot.lane.b32.xlu0 %v500, 104
      %v1359 = vpop.permute.xlu0 %1358
      %1360 = vrot.lane.b32.xlu0 %v505, 104
      %v1361 = vpop.permute.xlu0 %1360
      %1362 = vrot.lane.b32.xlu0 %v500, 72
      %v1363 = vpop.permute.xlu0 %1362
      %1364 = vrot.lane.b32.xlu0 %v505, 72
      %v1365 = vpop.permute.xlu0 %1364
      %v1366 = vsel %vm519, %v1359, 0
      %v1368 = vsel %vm519, %v1361, 0
      %v1370 = vsel %vm519, %v1363, 0
      %v1372 = vsel %vm519, %v1365, 0
      %1374 = vmatprep.subr.mxu0 0.0
      %1375 = vmatpush1.xpose.msra.mxu0 0.0
      %1376 = vmatprep.subr.mxu0 0.0
      %1377 = vmatpush1.xpose.msra.mxu0 0.0
      %1378 = vmatprep.subr.mxu0 0.0
      %1379 = vmatpush1.xpose.msra.mxu0 0.0
      %1380 = vmatprep.subr.mxu0 0.0
      %1381 = vmatpush1.xpose.msra.mxu0 0.0
      %1382 = vmatprep.subr.mxu0 0.0
      %1383 = vmatpush1.xpose.msra.mxu0 0.0
      %1384 = vmatprep.subr.mxu0 0.0
      %1385 = vmatpush1.xpose.msra.mxu0 0.0
      %1386 = vmatprep.subr.mxu0 0.0
      %1387 = vmatpush1.xpose.msra.mxu0 0.0
      %1388 = vmatprep.subr.mxu0 0.0
      %1389 = vmatpush1.xpose.msra.mxu0 0.0
      %1390 = vmatprep.subr.mxu0 0.0
      %1391 = vmatpush1.xpose.msra.mxu0 0.0
      %1392 = vmatprep.subr.mxu0 0.0
      %1393 = vmatpush1.xpose.msra.mxu0 0.0
      %1394 = vmatprep.subr.mxu0 0.0
      %1395 = vmatpush1.xpose.msra.mxu0 0.0
      %1396 = vmatprep.subr.mxu0 0.0
      %1397 = vmatpush1.xpose.msra.mxu0 0.0
      %1398 = vmatprep.subr.mxu0 0.0
      %1399 = vmatpush1.xpose.msra.mxu0 0.0
      %1400 = vmatprep.subr.mxu0 0.0
      %1401 = vmatpush1.xpose.msra.mxu0 0.0
      %1402 = vmatprep.subr.mxu0 0.0
      %1403 = vmatpush1.xpose.msra.mxu0 %v1372
      %1404 = vmatprep.subr.mxu0 0.0
      %1405 = vmatpush1.xpose.msra.mxu0 %v1370
      %1406 = vmatprep.subr.mxu0 0.0
      %1407 = vmatpush2.xpose.msra.mxu0 0.0
      %1408 = vmatprep.subr.mxu0 0.0
      %1409 = vmatpush2.xpose.msra.mxu0 0.0
      %1410 = vmatprep.subr.mxu0 0.0
      %1411 = vmatpush2.xpose.msra.mxu0 0.0
      %1412 = vmatprep.subr.mxu0 0.0
      %1413 = vmatpush2.xpose.msra.mxu0 0.0
      %1414 = vmatprep.subr.mxu0 0.0
      %1415 = vmatpush2.xpose.msra.mxu0 0.0
      %1416 = vmatprep.subr.mxu0 0.0
      %1417 = vmatpush2.xpose.msra.mxu0 0.0
      %1418 = vmatprep.subr.mxu0 0.0
      %1419 = vmatpush2.xpose.msra.mxu0 0.0
      %1420 = vmatprep.subr.mxu0 0.0
      %1421 = vmatpush2.xpose.msra.mxu0 0.0
      %1422 = vmatprep.subr.mxu0 0.0
      %1423 = vmatpush2.xpose.msra.mxu0 0.0
      %1424 = vmatprep.subr.mxu0 0.0
      %1425 = vmatpush2.xpose.msra.mxu0 0.0
      %1426 = vmatprep.subr.mxu0 0.0
      %1427 = vmatpush2.xpose.msra.mxu0 0.0
      %1428 = vmatprep.subr.mxu0 0.0
      %1429 = vmatpush2.xpose.msra.mxu0 0.0
      %1430 = vmatprep.subr.mxu0 0.0
      %1431 = vmatpush2.xpose.msra.mxu0 0.0
      %1432 = vmatprep.subr.mxu0 0.0
      %1433 = vmatpush2.xpose.msra.mxu0 0.0
      %1434 = vmatprep.subr.mxu0 0.0
      %1435 = vmatpush2.xpose.msra.mxu0 0.0
      %1436 = vmatprep.subr.mxu0 0.0
      %1437 = vmatpush2.xpose.msra.mxu0 0.0
      %1438 = vmatprep.mubr.f32.mxu0 0.0
      %1439 = vmatmul.mubr.f32.gmra.mxu0 %v1366
      %v1440 = vpop.f32.mrf.mxu0
      %v1441 = vadd.f32 0.0, %v1440
      %v1442 = vpop.f32.mrf.mxu0
      %1443 = vmatprep.mubr.f32.mxu0 0.0
      %1444 = vmatmul.mubr.f32.gmra.mxu0 %v1368
      %v1445 = vpop.f32.mrf.mxu0
      %v1446 = vadd.f32 0.0, %v1445
      %v1447 = vpop.f32.mrf.mxu0
      %1448 = vdwg.mxu0
      %v1449 = vsel %vm603, %v1441, -inf
      %1450 = vmax.xlane.f32.xlu0 %v1449
      %v1451 = vpop.xlane.xlu0 %1450
      %v1452 = vsel %vm603, %v1446, -inf
      %1453 = vmax.xlane.f32.xlu0 %v1452
      %v1454 = vpop.xlane.xlu0 %1453
      %v1455 = vsub.f32 %v1441, %v1451
      %v1456 = vsub.f32 %v1446, %v1454
      %v1457 = vmul.f32 %v1455, 1.442695
      %v1458 = vpow.pop %v1457
      %v1459 = vmul.f32 %v1456, 1.442695
      %v1460 = vpow.pop %v1459
      %v1461 = vsel %vm603, %v1458, 0.0
      %1462 = vadd.xlane.f32.xlu0 %v1461
      %v1463 = vpop.xlane.xlu0 %1462
      %v1464 = vsel %vm603, %v1460, 0.0
      %1465 = vadd.xlane.f32.xlu0 %v1464
      %v1466 = vpop.xlane.xlu0 %1465
      %v1467 = vrcp.pop %v1463
      %v1468 = vrcp.pop %v1466
      %v1469 = vmul.f32 %v1458, %v1467
      %v1470 = vmul.f32 %v1460, %v1468
      %1471 = vrot.lane.b32.xlu0 %v500, 40
      %v1472 = vpop.permute.xlu0 %1471
      %1473 = vrot.lane.b32.xlu0 %v505, 40
      %v1474 = vpop.permute.xlu0 %1473
      %v1478 = vsel %vm603, %v1469, 0
      %v1481 = vsel %vm603, %v1470, 0
      %1483 = vmatprep.subr.mxu0 0.0
      %1484 = vmatpush1.msra.mxu0 0.0
      %1485 = vmatprep.subr.mxu0 0.0
      %1486 = vmatpush1.msra.mxu0 0.0
      %1487 = vmatprep.subr.mxu0 0.0
      %1488 = vmatpush1.msra.mxu0 0.0
      %1489 = vmatprep.subr.mxu0 0.0
      %1490 = vmatpush1.msra.mxu0 0.0
      %1491 = vmatprep.subr.mxu0 0.0
      %1492 = vmatpush1.msra.mxu0 0.0
      %1493 = vmatprep.subr.mxu0 0.0
      %1494 = vmatpush1.msra.mxu0 0.0
      %1495 = vmatprep.subr.mxu0 0.0
      %1496 = vmatpush1.msra.mxu0 0.0
      %1497 = vmatprep.subr.mxu0 0.0
      %1498 = vmatpush1.msra.mxu0 0.0
      %1499 = vmatprep.subr.mxu0 0.0
      %1500 = vmatpush1.msra.mxu0 0.0
      %1501 = vmatprep.subr.mxu0 0.0
      %1502 = vmatpush1.msra.mxu0 0.0
      %1503 = vmatprep.subr.mxu0 0.0
      %1504 = vmatpush1.msra.mxu0 0.0
      %1505 = vmatprep.subr.mxu0 0.0
      %1506 = vmatpush1.msra.mxu0 0.0
      %1507 = vmatprep.subr.mxu0 0.0
      %1508 = vmatpush1.msra.mxu0 0.0
      %1509 = vmatprep.subr.mxu0 0.0
      %1510 = vmatpush1.msra.mxu0 0.0
      %1511 = vmatprep.subr.mxu0 0.0
      %1512 = vmatpush1.msra.mxu0 %v1474
      %1513 = vmatprep.subr.mxu0 0.0
      %1514 = vmatpush1.msra.mxu0 %v1472
      %1515 = vmatprep.subr.mxu0 0.0
      %1516 = vmatpush2.msra.mxu0 0.0
      %1517 = vmatprep.subr.mxu0 0.0
      %1518 = vmatpush2.msra.mxu0 0.0
      %1519 = vmatprep.subr.mxu0 0.0
      %1520 = vmatpush2.msra.mxu0 0.0
      %1521 = vmatprep.subr.mxu0 0.0
      %1522 = vmatpush2.msra.mxu0 0.0
      %1523 = vmatprep.subr.mxu0 0.0
      %1524 = vmatpush2.msra.mxu0 0.0
      %1525 = vmatprep.subr.mxu0 0.0
      %1526 = vmatpush2.msra.mxu0 0.0
      %1527 = vmatprep.subr.mxu0 0.0
      %1528 = vmatpush2.msra.mxu0 0.0
      %1529 = vmatprep.subr.mxu0 0.0
      %1530 = vmatpush2.msra.mxu0 0.0
      %1531 = vmatprep.subr.mxu0 0.0
      %1532 = vmatpush2.msra.mxu0 0.0
      %1533 = vmatprep.subr.mxu0 0.0
      %1534 = vmatpush2.msra.mxu0 0.0
      %1535 = vmatprep.subr.mxu0 0.0
      %1536 = vmatpush2.msra.mxu0 0.0
      %1537 = vmatprep.subr.mxu0 0.0
      %1538 = vmatpush2.msra.mxu0 0.0
      %1539 = vmatprep.subr.mxu0 0.0
      %1540 = vmatpush2.msra.mxu0 0.0
      %1541 = vmatprep.subr.mxu0 0.0
      %1542 = vmatpush2.msra.mxu0 0.0
      %1543 = vmatprep.subr.mxu0 0.0
      %1544 = vmatpush2.msra.mxu0 0.0
      %1545 = vmatprep.subr.mxu0 0.0
      %1546 = vmatpush2.msra.mxu0 0.0
      %1547 = vmatprep.mubr.f32.mxu0 0.0
      %1548 = vmatmul.mubr.f32.gmra.mxu0 %v1478
      %v1549 = vpop.f32.mrf.mxu0
      %v1550 = vadd.f32 0.0, %v1549
      %v1551 = vpop.f32.mrf.mxu0
      %1552 = vmatprep.mubr.f32.mxu0 0.0
      %1553 = vmatmul.mubr.f32.gmra.mxu0 %v1481
      %v1554 = vpop.f32.mrf.mxu0
      %v1555 = vadd.f32 0.0, %v1554
      %v1556 = vpop.f32.mrf.mxu0
      %1557 = vdwg.mxu0
      %v1559 = vsel %vm519, %v1550, 0
      %v1562 = vsel %vm519, %v1555, 0
      %1564 = vmatprep.subr.mxu0 0.0
      %1565 = vmatpush1.msra.mxu0 0.0
      %1566 = vmatprep.subr.mxu0 0.0
      %1567 = vmatpush1.msra.mxu0 0.0
      %1568 = vmatprep.subr.mxu0 0.0
      %1569 = vmatpush1.msra.mxu0 0.0
      %1570 = vmatprep.subr.mxu0 0.0
      %1571 = vmatpush1.msra.mxu0 0.0
      %1572 = vmatprep.subr.mxu0 0.0
      %1573 = vmatpush1.msra.mxu0 0.0
      %1574 = vmatprep.subr.mxu0 0.0
      %1575 = vmatpush1.msra.mxu0 0.0
      %1576 = vmatprep.subr.mxu0 0.0
      %1577 = vmatpush1.msra.mxu0 0.0
      %1578 = vmatprep.subr.mxu0 0.0
      %1579 = vmatpush1.msra.mxu0 0.0
      %1580 = vmatprep.subr.mxu0 0.0
      %1581 = vmatpush1.msra.mxu0 0.0
      %1582 = vmatprep.subr.mxu0 0.0
      %1583 = vmatpush1.msra.mxu0 0.0
      %1584 = vmatprep.subr.mxu0 0.0
      %1585 = vmatpush1.msra.mxu0 0.0
      %1586 = vmatprep.subr.mxu0 0.0
      %1587 = vmatpush1.msra.mxu0 0.0
      %1588 = vmatprep.subr.mxu0 0.0
      %1589 = vmatpush1.msra.mxu0 0.0
      %1590 = vmatprep.subr.mxu0 0.0
      %1591 = vmatpush1.msra.mxu0 0.0
      %1592 = vmatprep.subr.mxu0 0.0
      %1593 = vmatpush1.msra.mxu0 0.0
      %1594 = vmatprep.subr.mxu0 0.0
      %1595 = vmatpush1.msra.mxu0 %v511
      %1596 = vmatprep.subr.mxu0 0.0
      %1597 = vmatpush2.msra.mxu0 0.0
      %1598 = vmatprep.subr.mxu0 0.0
      %1599 = vmatpush2.msra.mxu0 0.0
      %1600 = vmatprep.subr.mxu0 0.0
      %1601 = vmatpush2.msra.mxu0 0.0
      %1602 = vmatprep.subr.mxu0 0.0
      %1603 = vmatpush2.msra.mxu0 0.0
      %1604 = vmatprep.subr.mxu0 0.0
      %1605 = vmatpush2.msra.mxu0 0.0
      %1606 = vmatprep.subr.mxu0 0.0
      %1607 = vmatpush2.msra.mxu0 0.0
      %1608 = vmatprep.subr.mxu0 0.0
      %1609 = vmatpush2.msra.mxu0 0.0
      %1610 = vmatprep.subr.mxu0 0.0
      %1611 = vmatpush2.msra.mxu0 0.0
      %1612 = vmatprep.subr.mxu0 0.0
      %1613 = vmatpush2.msra.mxu0 0.0
      %1614 = vmatprep.subr.mxu0 0.0
      %1615 = vmatpush2.msra.mxu0 0.0
      %1616 = vmatprep.subr.mxu0 0.0
      %1617 = vmatpush2.msra.mxu0 0.0
      %1618 = vmatprep.subr.mxu0 0.0
      %1619 = vmatpush2.msra.mxu0 0.0
      %1620 = vmatprep.subr.mxu0 0.0
      %1621 = vmatpush2.msra.mxu0 0.0
      %1622 = vmatprep.subr.mxu0 0.0
      %1623 = vmatpush2.msra.mxu0 0.0
      %1624 = vmatprep.subr.mxu0 0.0
      %1625 = vmatpush2.msra.mxu0 0.0
      %1626 = vmatprep.subr.mxu0 0.0
      %1627 = vmatpush2.msra.mxu0 0.0
      %1628 = vmatprep.mubr.f32.mxu0 0.0
      %1629 = vmatmul.mubr.f32.gmra.mxu0 %v1559
      %v1630 = vpop.f32.mrf.mxu0
      %v1631 = vadd.f32 0.0, %v1630
      %v1632 = vpop.f32.mrf.mxu0
      %1633 = vmatprep.mubr.f32.mxu0 0.0
      %1634 = vmatmul.mubr.f32.gmra.mxu0 %v1562
      %v1635 = vpop.f32.mrf.mxu0
      %v1636 = vadd.f32 0.0, %v1635
      %v1637 = vpop.f32.mrf.mxu0
      %1638 = vdwg.mxu0
      %v1639 = vadd.f32 %v1356, %v1631
      %v1640 = vadd.f32 %v1357, %v1636
      %v1642 = vlaneseq
      %v1643 = vshrl.u32 %v1642, 7
      %v1644 = vsub.s32 0, %v1643
      %v1645 = vrot.slane %v512, %v1644
      %v1647 = vadd.f32 %v1639, %v1645
      %v1648 = vadd.f32 %v1640, %v1645
      %v1649 = vadd.f32 %v407, %v1647
      %v1650 = vadd.f32 %v408, %v1648
      %v1652 = vsel %vm603, %v409, 0
      %v1655 = vsel %vm603, %v410, 0
      %1657 = vmatprep.subr.mxu0 0.0
      %1658 = vmatpush1.msra.mxu0 0.0
      %1659 = vmatprep.subr.mxu0 0.0
      %1660 = vmatpush1.msra.mxu0 0.0
      %1661 = vmatprep.subr.mxu0 0.0
      %1662 = vmatpush1.msra.mxu0 0.0
      %1663 = vmatprep.subr.mxu0 0.0
      %1664 = vmatpush1.msra.mxu0 0.0
      %1665 = vmatprep.subr.mxu0 0.0
      %1666 = vmatpush1.msra.mxu0 0.0
      %1667 = vmatprep.subr.mxu0 0.0
      %1668 = vmatpush1.msra.mxu0 0.0
      %1669 = vmatprep.subr.mxu0 0.0
      %1670 = vmatpush1.msra.mxu0 0.0
      %1671 = vmatprep.subr.mxu0 0.0
      %1672 = vmatpush1.msra.mxu0 0.0
      %1673 = vmatprep.subr.mxu0 0.0
      %1674 = vmatpush1.msra.mxu0 0.0
      %1675 = vmatprep.subr.mxu0 0.0
      %1676 = vmatpush1.msra.mxu0 0.0
      %1677 = vmatprep.subr.mxu0 0.0
      %1678 = vmatpush1.msra.mxu0 0.0
      %1679 = vmatprep.subr.mxu0 0.0
      %1680 = vmatpush1.msra.mxu0 0.0
      %1681 = vmatprep.subr.mxu0 0.0
      %1682 = vmatpush1.msra.mxu0 0.0
      %1683 = vmatprep.subr.mxu0 0.0
      %1684 = vmatpush1.msra.mxu0 0.0
      %1685 = vmatprep.subr.mxu0 0.0
      %1686 = vmatpush1.msra.mxu0 %v1650
      %1687 = vmatprep.subr.mxu0 0.0
      %1688 = vmatpush1.msra.mxu0 %v1649
      %1689 = vmatprep.subr.mxu0 0.0
      %1690 = vmatpush2.msra.mxu0 0.0
      %1691 = vmatprep.subr.mxu0 0.0
      %1692 = vmatpush2.msra.mxu0 0.0
      %1693 = vmatprep.subr.mxu0 0.0
      %1694 = vmatpush2.msra.mxu0 0.0
      %1695 = vmatprep.subr.mxu0 0.0
      %1696 = vmatpush2.msra.mxu0 0.0
      %1697 = vmatprep.subr.mxu0 0.0
      %1698 = vmatpush2.msra.mxu0 0.0
      %1699 = vmatprep.subr.mxu0 0.0
      %1700 = vmatpush2.msra.mxu0 0.0
      %1701 = vmatprep.subr.mxu0 0.0
      %1702 = vmatpush2.msra.mxu0 0.0
      %1703 = vmatprep.subr.mxu0 0.0
      %1704 = vmatpush2.msra.mxu0 0.0
      %1705 = vmatprep.subr.mxu0 0.0
      %1706 = vmatpush2.msra.mxu0 0.0
      %1707 = vmatprep.subr.mxu0 0.0
      %1708 = vmatpush2.msra.mxu0 0.0
      %1709 = vmatprep.subr.mxu0 0.0
      %1710 = vmatpush2.msra.mxu0 0.0
      %1711 = vmatprep.subr.mxu0 0.0
      %1712 = vmatpush2.msra.mxu0 0.0
      %1713 = vmatprep.subr.mxu0 0.0
      %1714 = vmatpush2.msra.mxu0 0.0
      %1715 = vmatprep.subr.mxu0 0.0
      %1716 = vmatpush2.msra.mxu0 0.0
      %1717 = vmatprep.subr.mxu0 0.0
      %1718 = vmatpush2.msra.mxu0 0.0
      %1719 = vmatprep.subr.mxu0 0.0
      %1720 = vmatpush2.msra.mxu0 0.0
      %1721 = vmatprep.mubr.f32.mxu0 0.0
      %1722 = vmatmul.mubr.f32.gmra.mxu0 %v1652
      %v1723 = vpop.f32.mrf.mxu0
      %v1724 = vadd.f32 0.0, %v1723
      %v1725 = vpop.f32.mrf.mxu0
      %1726 = vmatprep.mubr.f32.mxu0 0.0
      %1727 = vmatmul.mubr.f32.gmra.mxu0 %v1655
      %v1728 = vpop.f32.mrf.mxu0
      %v1729 = vadd.f32 0.0, %v1728
      %v1730 = vpop.f32.mrf.mxu0
      %1731 = vdwg.mxu0
      %v1732 = vsub.f32 %v1649, %v1724
      %v1733 = vsub.f32 %v1650, %v1729
      %v1734 = vld [vmem:[%s7] sm:$0xff]
      %v1735 = vld [vmem:[%s7 + $0x8] sm:$0xff]
      %v1736 = vld [vmem:[%s7 + $0x10] sm:$0xff]
      %v1737 = vld [vmem:[%s7 + $0x18] sm:$0xff]
      %v1738 = vld [vmem:[%s8] sm:$0x1]
      %v1739 = vld [vmem:[%s9] sm:$0xff]
      %v1740 = vld [vmem:[%s9 + $0x8] sm:$0xff]
      %v1741 = vld [vmem:[%s9 + $0x10] sm:$0xff]
      %v1742 = vld [vmem:[%s9 + $0x18] sm:$0xff]
      %v1743 = vld [vmem:[%s9 + $0x20] sm:$0xff]
      %v1744 = vld [vmem:[%s9 + $0x28] sm:$0xff]
      %v1745 = vld [vmem:[%s9 + $0x30] sm:$0xff]
      %v1746 = vld [vmem:[%s9 + $0x38] sm:$0xff]
      %v1747 = vld [vmem:[%s10] sm:$0x1]
      %v1749 = vlaneseq
      %v1750 = vshrl.u32 %v1749, 7
      %v1751 = vsub.s32 0, %v1750
      %v1752 = vrot.slane %v1738, %v1751
      %v1755 = vsel %vm426, %v1732, 0
      %v1758 = vsel %vm426, %v1733, 0
      %1760 = vmatprep.subr.mxu0 0.0
      %1761 = vmatpush1.msra.mxu0 0.0
      %1762 = vmatprep.subr.mxu0 0.0
      %1763 = vmatpush1.msra.mxu0 0.0
      %1764 = vmatprep.subr.mxu0 0.0
      %1765 = vmatpush1.msra.mxu0 0.0
      %1766 = vmatprep.subr.mxu0 0.0
      %1767 = vmatpush1.msra.mxu0 0.0
      %1768 = vmatprep.subr.mxu0 0.0
      %1769 = vmatpush1.msra.mxu0 0.0
      %1770 = vmatprep.subr.mxu0 0.0
      %1771 = vmatpush1.msra.mxu0 0.0
      %1772 = vmatprep.subr.mxu0 0.0
      %1773 = vmatpush1.msra.mxu0 0.0
      %1774 = vmatprep.subr.mxu0 0.0
      %1775 = vmatpush1.msra.mxu0 0.0
      %1776 = vmatprep.subr.mxu0 0.0
      %1777 = vmatpush1.msra.mxu0 0.0
      %1778 = vmatprep.subr.mxu0 0.0
      %1779 = vmatpush1.msra.mxu0 0.0
      %1780 = vmatprep.subr.mxu0 0.0
      %1781 = vmatpush1.msra.mxu0 0.0
      %1782 = vmatprep.subr.mxu0 0.0
      %1783 = vmatpush1.msra.mxu0 0.0
      %1784 = vmatprep.subr.mxu0 0.0
      %1785 = vmatpush1.msra.mxu0 %v1737
      %1786 = vmatprep.subr.mxu0 0.0
      %1787 = vmatpush1.msra.mxu0 %v1736
      %1788 = vmatprep.subr.mxu0 0.0
      %1789 = vmatpush1.msra.mxu0 %v1735
      %1790 = vmatprep.subr.mxu0 0.0
      %1791 = vmatpush1.msra.mxu0 %v1734
      %1792 = vmatprep.subr.mxu0 0.0
      %1793 = vmatpush2.msra.mxu0 0.0
      %1794 = vmatprep.subr.mxu0 0.0
      %1795 = vmatpush2.msra.mxu0 0.0
      %1796 = vmatprep.subr.mxu0 0.0
      %1797 = vmatpush2.msra.mxu0 0.0
      %1798 = vmatprep.subr.mxu0 0.0
      %1799 = vmatpush2.msra.mxu0 0.0
      %1800 = vmatprep.subr.mxu0 0.0
      %1801 = vmatpush2.msra.mxu0 0.0
      %1802 = vmatprep.subr.mxu0 0.0
      %1803 = vmatpush2.msra.mxu0 0.0
      %1804 = vmatprep.subr.mxu0 0.0
      %1805 = vmatpush2.msra.mxu0 0.0
      %1806 = vmatprep.subr.mxu0 0.0
      %1807 = vmatpush2.msra.mxu0 0.0
      %1808 = vmatprep.subr.mxu0 0.0
      %1809 = vmatpush2.msra.mxu0 0.0
      %1810 = vmatprep.subr.mxu0 0.0
      %1811 = vmatpush2.msra.mxu0 0.0
      %1812 = vmatprep.subr.mxu0 0.0
      %1813 = vmatpush2.msra.mxu0 0.0
      %1814 = vmatprep.subr.mxu0 0.0
      %1815 = vmatpush2.msra.mxu0 0.0
      %1816 = vmatprep.subr.mxu0 0.0
      %1817 = vmatpush2.msra.mxu0 0.0
      %1818 = vmatprep.subr.mxu0 0.0
      %1819 = vmatpush2.msra.mxu0 0.0
      %1820 = vmatprep.subr.mxu0 0.0
      %1821 = vmatpush2.msra.mxu0 0.0
      %1822 = vmatprep.subr.mxu0 0.0
      %1823 = vmatpush2.msra.mxu0 0.0
      %1824 = vmatprep.mubr.f32.mxu0 0.0
      %1825 = vmatmul.mubr.f32.gmra.mxu0 %v1755
      %v1826 = vpop.f32.mrf.mxu0
      %v1827 = vadd.f32 %v1752, %v1826
      %v1828 = vpop.f32.mrf.mxu0
      %1829 = vmatprep.mubr.f32.mxu0 0.0
      %1830 = vmatmul.mubr.f32.gmra.mxu0 %v1758
      %v1831 = vpop.f32.mrf.mxu0
      %v1832 = vadd.f32 %v1752, %v1831
      %v1833 = vpop.f32.mrf.mxu0
      %1834 = vdwg.mxu0
      %v1835 = vmul.f32 %v1827, %v1827
      %v1836 = vmul.f32 %v1832, %v1832
      %v1837 = vmul.f32 %v1827, %v1835
      %v1838 = vmul.f32 %v1832, %v1836
      %v1839 = vmul.f32 %v1837, 0.044715
      %v1840 = vmul.f32 %v1838, 0.044715
      %v1841 = vadd.f32 %v1827, %v1839
      %v1842 = vadd.f32 %v1832, %v1840
      %v1843 = vmul.f32 %v1841, 0.7978846
      %v1844 = vmul.f32 %v1842, 0.7978846
      %v1845 = vtanh.pop %v1843
      %v1846 = vtanh.pop %v1844
      %v1847 = vadd.f32 %v1845, 1.0
      %v1848 = vadd.f32 %v1846, 1.0
      %v1849 = vmul.f32 %v1847, 0.5
      %v1850 = vmul.f32 %v1848, 0.5
      %v1851 = vmul.f32 %v1827, %v1849
      %v1852 = vmul.f32 %v1832, %v1850
      %v1854 = vlaneseq
      %v1855 = vshrl.u32 %v1854, 7
      %v1856 = vsub.s32 0, %v1855
      %v1857 = vrot.slane %v1747, %v1856
      %vm1859 = vcmask 523264
      %v1861 = vsel %vm1859, %v1851, 0
      %v1864 = vsel %vm1859, %v1852, 0
      %1866 = vmatprep.subr.mxu0 0.0
      %1867 = vmatpush1.msra.mxu0 0.0
      %1868 = vmatprep.subr.mxu0 0.0
      %1869 = vmatpush1.msra.mxu0 0.0
      %1870 = vmatprep.subr.mxu0 0.0
      %1871 = vmatpush1.msra.mxu0 0.0
      %1872 = vmatprep.subr.mxu0 0.0
      %1873 = vmatpush1.msra.mxu0 0.0
      %1874 = vmatprep.subr.mxu0 0.0
      %1875 = vmatpush1.msra.mxu0 0.0
      %1876 = vmatprep.subr.mxu0 0.0
      %1877 = vmatpush1.msra.mxu0 0.0
      %1878 = vmatprep.subr.mxu0 0.0
      %1879 = vmatpush1.msra.mxu0 0.0
      %1880 = vmatprep.subr.mxu0 0.0
      %1881 = vmatpush1.msra.mxu0 0.0
      %1882 = vmatprep.subr.mxu0 0.0
      %1883 = vmatpush1.msra.mxu0 %v1746
      %1884 = vmatprep.subr.mxu0 0.0
      %1885 = vmatpush1.msra.mxu0 %v1745
      %1886 = vmatprep.subr.mxu0 0.0
      %1887 = vmatpush1.msra.mxu0 %v1744
      %1888 = vmatprep.subr.mxu0 0.0
      %1889 = vmatpush1.msra.mxu0 %v1743
      %1890 = vmatprep.subr.mxu0 0.0
      %1891 = vmatpush1.msra.mxu0 %v1742
      %1892 = vmatprep.subr.mxu0 0.0
      %1893 = vmatpush1.msra.mxu0 %v1741
      %1894 = vmatprep.subr.mxu0 0.0
      %1895 = vmatpush1.msra.mxu0 %v1740
      %1896 = vmatprep.subr.mxu0 0.0
      %1897 = vmatpush1.msra.mxu0 %v1739
      %1898 = vmatprep.subr.mxu0 0.0
      %1899 = vmatpush2.msra.mxu0 0.0
      %1900 = vmatprep.subr.mxu0 0.0
      %1901 = vmatpush2.msra.mxu0 0.0
      %1902 = vmatprep.subr.mxu0 0.0
      %1903 = vmatpush2.msra.mxu0 0.0
      %1904 = vmatprep.subr.mxu0 0.0
      %1905 = vmatpush2.msra.mxu0 0.0
      %1906 = vmatprep.subr.mxu0 0.0
      %1907 = vmatpush2.msra.mxu0 0.0
      %1908 = vmatprep.subr.mxu0 0.0
      %1909 = vmatpush2.msra.mxu0 0.0
      %1910 = vmatprep.subr.mxu0 0.0
      %1911 = vmatpush2.msra.mxu0 0.0
      %1912 = vmatprep.subr.mxu0 0.0
      %1913 = vmatpush2.msra.mxu0 0.0
      %1914 = vmatprep.subr.mxu0 0.0
      %1915 = vmatpush2.msra.mxu0 0.0
      %1916 = vmatprep.subr.mxu0 0.0
      %1917 = vmatpush2.msra.mxu0 0.0
      %1918 = vmatprep.subr.mxu0 0.0
      %1919 = vmatpush2.msra.mxu0 0.0
      %1920 = vmatprep.subr.mxu0 0.0
      %1921 = vmatpush2.msra.mxu0 0.0
      %1922 = vmatprep.subr.mxu0 0.0
      %1923 = vmatpush2.msra.mxu0 0.0
      %1924 = vmatprep.subr.mxu0 0.0
      %1925 = vmatpush2.msra.mxu0 0.0
      %1926 = vmatprep.subr.mxu0 0.0
      %1927 = vmatpush2.msra.mxu0 0.0
      %1928 = vmatprep.subr.mxu0 0.0
      %1929 = vmatpush2.msra.mxu0 0.0
      %1930 = vmatprep.mubr.f32.mxu0 0.0
      %1931 = vmatmul.mubr.f32.gmra.mxu0 %v1861
      %v1932 = vpop.f32.mrf.mxu0
      %v1933 = vadd.f32 %v1857, %v1932
      %v1934 = vpop.f32.mrf.mxu0
      %1935 = vmatprep.mubr.f32.mxu0 0.0
      %1936 = vmatmul.mubr.f32.gmra.mxu0 %v1864
      %v1937 = vpop.f32.mrf.mxu0
      %v1938 = vadd.f32 %v1857, %v1937
      %v1939 = vpop.f32.mrf.mxu0
      %1940 = vdwg.mxu0
      %v1941 = vadd.f32 %v1732, %v1933
      %v1942 = vadd.f32 %v1733, %v1938
      %1943 = vmatprep.subr.mxu0 0.0
      %1944 = vmatpush1.msra.mxu0 0.0
      %1945 = vmatprep.subr.mxu0 0.0
      %1946 = vmatpush1.msra.mxu0 0.0
      %1947 = vmatprep.subr.mxu0 0.0
      %1948 = vmatpush1.msra.mxu0 0.0
      %1949 = vmatprep.subr.mxu0 0.0
      %1950 = vmatpush1.msra.mxu0 0.0
      %1951 = vmatprep.subr.mxu0 0.0
      %1952 = vmatpush1.msra.mxu0 0.0
      %1953 = vmatprep.subr.mxu0 0.0
      %1954 = vmatpush1.msra.mxu0 0.0
      %1955 = vmatprep.subr.mxu0 0.0
      %1956 = vmatpush1.msra.mxu0 0.0
      %1957 = vmatprep.subr.mxu0 0.0
      %1958 = vmatpush1.msra.mxu0 0.0
      %1959 = vmatprep.subr.mxu0 0.0
      %1960 = vmatpush1.msra.mxu0 0.0
      %1961 = vmatprep.subr.mxu0 0.0
      %1962 = vmatpush1.msra.mxu0 0.0
      %1963 = vmatprep.subr.mxu0 0.0
      %1964 = vmatpush1.msra.mxu0 0.0
      %1965 = vmatprep.subr.mxu0 0.0
      %1966 = vmatpush1.msra.mxu0 0.0
      %1967 = vmatprep.subr.mxu0 0.0
      %1968 = vmatpush1.msra.mxu0 0.0
      %1969 = vmatprep.subr.mxu0 0.0
      %1970 = vmatpush1.msra.mxu0 0.0
      %1971 = vmatprep.subr.mxu0 0.0
      %1972 = vmatpush1.msra.mxu0 %v1942
      %1973 = vmatprep.subr.mxu0 0.0
      %1974 = vmatpush1.msra.mxu0 %v1941
      %1975 = vmatprep.subr.mxu0 0.0
      %1976 = vmatpush2.msra.mxu0 0.0
      %1977 = vmatprep.subr.mxu0 0.0
      %1978 = vmatpush2.msra.mxu0 0.0
      %1979 = vmatprep.subr.mxu0 0.0
      %1980 = vmatpush2.msra.mxu0 0.0
      %1981 = vmatprep.subr.mxu0 0.0
      %1982 = vmatpush2.msra.mxu0 0.0
      %1983 = vmatprep.subr.mxu0 0.0
      %1984 = vmatpush2.msra.mxu0 0.0
      %1985 = vmatprep.subr.mxu0 0.0
      %1986 = vmatpush2.msra.mxu0 0.0
      %1987 = vmatprep.subr.mxu0 0.0
      %1988 = vmatpush2.msra.mxu0 0.0
      %1989 = vmatprep.subr.mxu0 0.0
      %1990 = vmatpush2.msra.mxu0 0.0
      %1991 = vmatprep.subr.mxu0 0.0
      %1992 = vmatpush2.msra.mxu0 0.0
      %1993 = vmatprep.subr.mxu0 0.0
      %1994 = vmatpush2.msra.mxu0 0.0
      %1995 = vmatprep.subr.mxu0 0.0
      %1996 = vmatpush2.msra.mxu0 0.0
      %1997 = vmatprep.subr.mxu0 0.0
      %1998 = vmatpush2.msra.mxu0 0.0
      %1999 = vmatprep.subr.mxu0 0.0
      %2000 = vmatpush2.msra.mxu0 0.0
      %2001 = vmatprep.subr.mxu0 0.0
      %2002 = vmatpush2.msra.mxu0 0.0
      %2003 = vmatprep.subr.mxu0 0.0
      %2004 = vmatpush2.msra.mxu0 0.0
      %2005 = vmatprep.subr.mxu0 0.0
      %2006 = vmatpush2.msra.mxu0 0.0
      %2007 = vmatprep.mubr.f32.mxu0 0.0
      %2008 = vmatmul.mubr.f32.gmra.mxu0 %v1652
      %v2009 = vpop.f32.mrf.mxu0
      %v2010 = vadd.f32 0.0, %v2009
      %v2011 = vpop.f32.mrf.mxu0
      %2012 = vmatprep.mubr.f32.mxu0 0.0
      %2013 = vmatmul.mubr.f32.gmra.mxu0 %v1655
      %v2014 = vpop.f32.mrf.mxu0
      %v2015 = vadd.f32 0.0, %v2014
      %v2016 = vpop.f32.mrf.mxu0
      %2017 = vdwg.mxu0
      %v2018 = vsub.f32 %v1941, %v2010
      %v2019 = vsub.f32 %v1942, %v2015
      %2020 = vst.msk [vmem:[%s406] sm:$0xff] %vm426, %v2018
      %2021 = vst.msk [vmem:[%s406 + $0x8] sm:$0xff] %vm426, %v2019
      %p2022 = scmp.lt.s32.totalorder %s22, 1
      %s2023 = scalar_select %p2022, %s22, 1
      %s2024 = smul.addr %s2023, 2
      %s2025 = smul.addr %s2024, 8
      %s2026 = scalar_lea.vmem %s11, %s2025
      // Predicated region
      $region65: #{forward.9} parent=63 // pred_check
        %p2027 = pneg %p281
      $region66: #{forward.9} parent=63 // pred_check_branch
        %2029 = sbr.rel (%p2027) target = $region68
      $region67: #{forward.9} parent=63 // pred_region
        _
      $region68: #{forward.9} parent=63 // pred_fallthru
        _
    $region64: #{forward.9} parent=5 // pred_fallthru
      _
    %p2030 = scmp.le.s32.totalorder 2, %s17
    // Predicated region
    $region69: #{forward.9} parent=5 // pred_check
      %p2031 = pneg %p2030
    $region70: #{forward.9} parent=5 // pred_check_branch
      %2033 = sbr.rel (%p2031) target = $region72
    $region71: #{forward.9} parent=5 // pred_region
      %s2034 = ssub.s32 %s17, 2
      // Predicated region
      $region73: #{forward.9} parent=71 // pred_check
        %p2035 = pneg %p287
      $region74: #{forward.9} parent=71 // pred_check_branch
        %2037 = sbr.rel (%p2035) target = $region76
      $region75: #{forward.9} parent=71 // pred_region
        %p2038 = scmp.lt.s32.totalorder %s23, 1
        %s2039 = scalar_select %p2038, %s23, 1
        %s2040 = smul.addr %s2039, 2
        %s2041 = smul.addr %s2040, 8
        %s2042 = scalar_lea.vmem %s11, %s2041
      $region76: #{forward.9} parent=71 // pred_fallthru
        _
    $region72: #{forward.9} parent=5 // pred_fallthru
      _
  $region6: #{forward.9} parent=0 // loop_footer
    %s21 = sadd.s32 1, %s17
  $region7: #{forward.9} parent=0 // loop_footer_branch
    %16 = sbr.rel target = $region3
  $region8: #{forward.9} parent=0 // loop_exit
    _

// kernel: forward.12
$region0: #{forward.12}
  #allocation0 [shape = 'u32[]', space=smem, size = 0x4, offset = 0x4, fixed_abs, tag = 'smem constant byte address 0x4 - core index']
  #allocation1 [shape = 'u32[144,128]{1,0:T(1,128)}', space=vmem, size = 0x12000, scoped, tag = 'internal scratch']
  %s0 = inlined_call_operand.vmem [shape: f32[2,16,32], index: 0, kind: input, shape index: {}]
  %s1 = inlined_call_operand.vmem [shape: f32[2,16,32], index: 1, kind: input, shape index: {}]
  %s2 = inlined_call_operand.vmem [shape: f32[2,16,32], index: 2, kind: input, shape index: {}]
  %s3 = inlined_call_operand.vmem [shape: f32[16,16], index: 3, kind: input, shape index: {}]
  %s4 = inlined_call_operand.vmem [shape: f32[16,16], index: 4, kind: input, shape index: {}]
  %s5 = inlined_call_operand.vmem [shape: f32[16,16], index: 5, kind: input, shape index: {}]
  %s6 = inlined_call_operand.vmem [shape: f32[32,96], index: 6, kind: input, shape index: {}]
  %s7 = inlined_call_operand.vmem [shape: f32[1,96], index: 7, kind: input, shape index: {}]
  %s8 = inlined_call_operand.vmem [shape: f32[32,32], index: 8, kind: input, shape index: {}]
  %s9 = inlined_call_operand.vmem [shape: f32[1,32], index: 9, kind: input, shape index: {}]
  %s10 = inlined_call_operand.vmem [shape: f32[32,32], index: 10, kind: input, shape index: {}]
  %s11 = inlined_call_operand.vmem [shape: f32[1,32], index: 11, kind: input, shape index: {}]
  %s12 = inlined_call_operand.vmem [shape: f32[32,64], index: 12, kind: input, shape index: {}]
  %s13 = inlined_call_operand.vmem [shape: f32[1,64], index: 13, kind: input, shape index: {}]
  %s14 = inlined_call_operand.vmem [shape: f32[32,32], index: 14, kind: input, shape index: {}]
  %s15 = inlined_call_operand.vmem [shape: f32[1,32], index: 15, kind: input, shape index: {}]
  %s16 = inlined_call_operand.vmem [shape: f32[32,64], index: 16, kind: input, shape index: {}]
  %s17 = inlined_call_operand.vmem [shape: f32[1,64], index: 17, kind: input, shape index: {}]
  %s18 = inlined_call_operand.vmem [shape: f32[64,32], index: 18, kind: input, shape index: {}]
  %s19 = inlined_call_operand.vmem [shape: f32[1,32], index: 19, kind: input, shape index: {}]
  %s20 = inlined_call_operand.vmem [shape: f32[32,128], index: 20, kind: input, shape index: {}]
  %s21 = inlined_call_operand.vmem [shape: f32[32,128], index: 21, kind: input, shape index: {}]
  %s22 = inlined_call_operand.vmem [shape: f32[32,128], index: 22, kind: input, shape index: {}]
  %s23 = inlined_call_operand.vmem [shape: f32[2,16,32], index: 23, kind: output, shape index: {0}]
  %s24 = inlined_call_operand.vmem [shape: f32[2,16,128], index: 24, kind: output, shape index: {1}]
  %25 = xla_tuple %s23, %s24
  %s26 = sld [smem:[#allocation0]]
  $region133: #{forward.12} parent=0
    _
  %s28 = ssub.s32 1, %s26
  %s29 = scalar_select 0, %s28, %s26
  loop: start=0, step=1, limit=4
  $region2: #{forward.12} parent=0 // loop_pre_header
    _
  $region3: #{forward.12} parent=0 // loop_header
    %s31 = sphi 0, %s35
    %p32 = scmp.ge.s32.totalorder %s31, 4
    %s41 = sphi 0, %s43
    %s44 = sphi 0, %s41
    %s45 = sphi 0, %s44
    %s61 = sphi 0, %s45
    %s67 = sphi 0, %s69
    %s70 = sphi 0, %s67
    %s71 = sphi 0, %s70
    %s87 = sphi 0, %s71
    %s93 = sphi 0, %s95
    %s96 = sphi 0, %s93
    %s97 = sphi 0, %s96
    %s113 = sphi 0, %s97
    %s117 = sphi 0, %s117
    %s119 = sphi 0, %s117
    %s120 = sphi 0, %s119
    %s134 = sphi 0, %s120
    %s138 = sphi 0, %s138
    %s140 = sphi 0, %s138
    %s141 = sphi 0, %s140
    %s155 = sphi 0, %s141
    %s159 = sphi 0, %s159
    %s161 = sphi 0, %s159
    %s162 = sphi 0, %s161
    %s176 = sphi 0, %s162
    %s180 = sphi 0, %s180
    %s182 = sphi 0, %s180
    %s183 = sphi 0, %s182
    %s197 = sphi 0, %s183
    %s201 = sphi 0, %s201
    %s203 = sphi 0, %s201
    %s204 = sphi 0, %s203
    %s218 = sphi 0, %s204
    %s222 = sphi 0, %s222
    %s224 = sphi 0, %s222
    %s225 = sphi 0, %s224
    %s239 = sphi 0, %s225
    %s243 = sphi 0, %s243
    %s245 = sphi 0, %s243
    %s246 = sphi 0, %s245
    %s260 = sphi 0, %s246
    %s264 = sphi 0, %s264
    %s266 = sphi 0, %s264
    %s267 = sphi 0, %s266
    %s281 = sphi 0, %s267
    %s285 = sphi 0, %s285
    %s287 = sphi 0, %s285
    %s288 = sphi 0, %s287
    %s302 = sphi 0, %s288
    %s306 = sphi 0, %s306
    %s308 = sphi 0, %s306
    %s309 = sphi 0, %s308
    %s323 = sphi 0, %s309
    %s327 = sphi 0, %s327
    %s329 = sphi 0, %s327
    %s330 = sphi 0, %s329
    %s344 = sphi 0, %s330
    %s348 = sphi 0, %s348
    %s350 = sphi 0, %s348
    %s351 = sphi 0, %s350
    %s365 = sphi 0, %s351
    %s369 = sphi 0, %s369
    %s371 = sphi 0, %s369
    %s372 = sphi 0, %s371
    %s386 = sphi 0, %s372
    %s390 = sphi 0, %s390
    %s392 = sphi 0, %s390
    %s393 = sphi 0, %s392
    %s407 = sphi 0, %s393
    %s411 = sphi 0, %s411
    %s413 = sphi 0, %s411
    %s414 = sphi 0, %s413
    %s428 = sphi 0, %s414
    %s432 = sphi 0, %s432
    %s434 = sphi 0, %s432
    %s435 = sphi 0, %s434
    %s449 = sphi 0, %s435
    %s453 = sphi 0, %s453
    %s455 = sphi 0, %s453
    %s456 = sphi 0, %s455
    %s470 = sphi 0, %s456
    %s474 = sphi 0, %s474
    %s476 = sphi 0, %s474
    %s477 = sphi 0, %s476
    %s491 = sphi 0, %s477
    %s495 = sphi 0, %s495
    %s497 = sphi 0, %s495
    %s498 = sphi 0, %s497
    %s512 = sphi 0, %s498
    %s516 = sphi 0, %s516
    %s518 = sphi 0, %s516
    %s519 = sphi 0, %s518
    %s533 = sphi 0, %s519
    %s539 = sphi 0, %s541
    %s542 = sphi 0, %s539
    %s543 = sphi 0, %s542
    %s559 = sphi 0, %s543
    %s565 = sphi 0, %s567
    %s568 = sphi 0, %s565
    %s569 = sphi 0, %s568
    %s585 = sphi 0, %s569
  $region4: #{forward.12} parent=0 // loop_header_branch
    %34 = sbr.rel (%p32) target = $region8
  $region5: #{forward.12} parent=0 // loop_body
    %s36 = ssub.s32 %s31, 1
    %s37 = ssub.s32 %s31, 2
    %s38 = sadd.s32 %s31, 1
    %s39 = ssub.s32 %s31, %s38
    %p40 = scmp.eq.s32.totalorder %s39, 0
    %s42 = sadd.s32 %s41, 1
    %s43 = scalar_select %p40, %s41, %s42
    %p46 = pneg %p40
    %p47 = scmp.eq.s32.totalorder %s31, 1
    %p48 = por %p46, %p47
    %p49 = scmp.ne.s32.totalorder %s41, %s44
    %p50 = scmp.eq.s32.totalorder %s31, 0
    %p51 = por %p49, %p50
    %p52 = scmp.ne.s32.totalorder %s41, %s44
    %p53 = scmp.eq.s32.totalorder %s36, 1
    %p54 = por %p52, %p53
    %p55 = scmp.ne.s32.totalorder %s44, %s45
    %p56 = scmp.eq.s32.totalorder %s36, 0
    %p57 = por %p55, %p56
    %p58 = scmp.ne.s32.totalorder %s44, %s45
    %p59 = scmp.eq.s32.totalorder %s37, 1
    %p60 = por %p58, %p59
    %p62 = scmp.ne.s32.totalorder %s45, %s61
    %p63 = scmp.eq.s32.totalorder %s37, 0
    %p64 = por %p62, %p63
    %s65 = ssub.s32 %s31, %s38
    %p66 = scmp.eq.s32.totalorder %s65, 0
    %s68 = sadd.s32 %s67, 1
    %s69 = scalar_select %p66, %s67, %s68
    %p72 = pneg %p66
    %p73 = scmp.eq.s32.totalorder %s31, 1
    %p74 = por %p72, %p73
    %p75 = scmp.ne.s32.totalorder %s67, %s70
    %p76 = scmp.eq.s32.totalorder %s31, 0
    %p77 = por %p75, %p76
    %p78 = scmp.ne.s32.totalorder %s67, %s70
    %p79 = scmp.eq.s32.totalorder %s36, 1
    %p80 = por %p78, %p79
    %p81 = scmp.ne.s32.totalorder %s70, %s71
    %p82 = scmp.eq.s32.totalorder %s36, 0
    %p83 = por %p81, %p82
    %p84 = scmp.ne.s32.totalorder %s70, %s71
    %p85 = scmp.eq.s32.totalorder %s37, 1
    %p86 = por %p84, %p85
    %p88 = scmp.ne.s32.totalorder %s71, %s87
    %p89 = scmp.eq.s32.totalorder %s37, 0
    %p90 = por %p88, %p89
    %s91 = ssub.s32 %s31, %s38
    %p92 = scmp.eq.s32.totalorder %s91, 0
    %s94 = sadd.s32 %s93, 1
    %s95 = scalar_select %p92, %s93, %s94
    %p98 = pneg %p92
    %p99 = scmp.eq.s32.totalorder %s31, 1
    %p100 = por %p98, %p99
    %p101 = scmp.ne.s32.totalorder %s93, %s96
    %p102 = scmp.eq.s32.totalorder %s31, 0
    %p103 = por %p101, %p102
    %p104 = scmp.ne.s32.totalorder %s93, %s96
    %p105 = scmp.eq.s32.totalorder %s36, 1
    %p106 = por %p104, %p105
    %p107 = scmp.ne.s32.totalorder %s96, %s97
    %p108 = scmp.eq.s32.totalorder %s36, 0
    %p109 = por %p107, %p108
    %p110 = scmp.ne.s32.totalorder %s96, %s97
    %p111 = scmp.eq.s32.totalorder %s37, 1
    %p112 = por %p110, %p111
    %p114 = scmp.ne.s32.totalorder %s97, %s113
    %p115 = scmp.eq.s32.totalorder %s37, 0
    %p116 = por %p114, %p115
    %s118 = sadd.s32 %s117, 1
    %p121 = scmp.eq.s32.totalorder %s31, 1
    %p122 = scmp.ne.s32.totalorder %s117, %s119
    %p123 = scmp.eq.s32.totalorder %s31, 0
    %p124 = por %p122, %p123
    %p125 = scmp.ne.s32.totalorder %s117, %s119
    %p126 = scmp.eq.s32.totalorder %s36, 1
    %p127 = por %p125, %p126
    %p128 = scmp.ne.s32.totalorder %s119, %s120
    %p129 = scmp.eq.s32.totalorder %s36, 0
    %p130 = por %p128, %p129
    %p131 = scmp.ne.s32.totalorder %s119, %s120
    %p132 = scmp.eq.s32.totalorder %s37, 1
    %p133 = por %p131, %p132
    %p135 = scmp.ne.s32.totalorder %s120, %s134
    %p136 = scmp.eq.s32.totalorder %s37, 0
    %p137 = por %p135, %p136
    %s139 = sadd.s32 %s138, 1
    %p142 = scmp.eq.s32.totalorder %s31, 1
    %p143 = scmp.ne.s32.totalorder %s138, %s140
    %p144 = scmp.eq.s32.totalorder %s31, 0
    %p145 = por %p143, %p144
    %p146 = scmp.ne.s32.totalorder %s138, %s140
    %p147 = scmp.eq.s32.totalorder %s36, 1
    %p148 = por %p146, %p147
    %p149 = scmp.ne.s32.totalorder %s140, %s141
    %p150 = scmp.eq.s32.totalorder %s36, 0
    %p151 = por %p149, %p150
    %p152 = scmp.ne.s32.totalorder %s140, %s141
    %p153 = scmp.eq.s32.totalorder %s37, 1
    %p154 = por %p152, %p153
    %p156 = scmp.ne.s32.totalorder %s141, %s155
    %p157 = scmp.eq.s32.totalorder %s37, 0
    %p158 = por %p156, %p157
    %s160 = sadd.s32 %s159, 1
    %p163 = scmp.eq.s32.totalorder %s31, 1
    %p164 = scmp.ne.s32.totalorder %s159, %s161
    %p165 = scmp.eq.s32.totalorder %s31, 0
    %p166 = por %p164, %p165
    %p167 = scmp.ne.s32.totalorder %s159, %s161
    %p168 = scmp.eq.s32.totalorder %s36, 1
    %p169 = por %p167, %p168
    %p170 = scmp.ne.s32.totalorder %s161, %s162
    %p171 = scmp.eq.s32.totalorder %s36, 0
    %p172 = por %p170, %p171
    %p173 = scmp.ne.s32.totalorder %s161, %s162
    %p174 = scmp.eq.s32.totalorder %s37, 1
    %p175 = por %p173, %p174
    %p177 = scmp.ne.s32.totalorder %s162, %s176
    %p178 = scmp.eq.s32.totalorder %s37, 0
    %p179 = por %p177, %p178
    %s181 = sadd.s32 %s180, 1
    %p184 = scmp.eq.s32.totalorder %s31, 1
    %p185 = scmp.ne.s32.totalorder %s180, %s182
    %p186 = scmp.eq.s32.totalorder %s31, 0
    %p187 = por %p185, %p186
    %p188 = scmp.ne.s32.totalorder %s180, %s182
    %p189 = scmp.eq.s32.totalorder %s36, 1
    %p190 = por %p188, %p189
    %p191 = scmp.ne.s32.totalorder %s182, %s183
    %p192 = scmp.eq.s32.totalorder %s36, 0
    %p193 = por %p191, %p192
    %p194 = scmp.ne.s32.totalorder %s182, %s183
    %p195 = scmp.eq.s32.totalorder %s37, 1
    %p196 = por %p194, %p195
    %p198 = scmp.ne.s32.totalorder %s183, %s197
    %p199 = scmp.eq.s32.totalorder %s37, 0
    %p200 = por %p198, %p199
    %s202 = sadd.s32 %s201, 1
    %p205 = scmp.eq.s32.totalorder %s31, 1
    %p206 = scmp.ne.s32.totalorder %s201, %s203
    %p207 = scmp.eq.s32.totalorder %s31, 0
    %p208 = por %p206, %p207
    %p209 = scmp.ne.s32.totalorder %s201, %s203
    %p210 = scmp.eq.s32.totalorder %s36, 1
    %p211 = por %p209, %p210
    %p212 = scmp.ne.s32.totalorder %s203, %s204
    %p213 = scmp.eq.s32.totalorder %s36, 0
    %p214 = por %p212, %p213
    %p215 = scmp.ne.s32.totalorder %s203, %s204
    %p216 = scmp.eq.s32.totalorder %s37, 1
    %p217 = por %p215, %p216
    %p219 = scmp.ne.s32.totalorder %s204, %s218
    %p220 = scmp.eq.s32.totalorder %s37, 0
    %p221 = por %p219, %p220
    %s223 = sadd.s32 %s222, 1
    %p226 = scmp.eq.s32.totalorder %s31, 1
    %p227 = scmp.ne.s32.totalorder %s222, %s224
    %p228 = scmp.eq.s32.totalorder %s31, 0
    %p229 = por %p227, %p228
    %p230 = scmp.ne.s32.totalorder %s222, %s224
    %p231 = scmp.eq.s32.totalorder %s36, 1
    %p232 = por %p230, %p231
    %p233 = scmp.ne.s32.totalorder %s224, %s225
    %p234 = scmp.eq.s32.totalorder %s36, 0
    %p235 = por %p233, %p234
    %p236 = scmp.ne.s32.totalorder %s224, %s225
    %p237 = scmp.eq.s32.totalorder %s37, 1
    %p238 = por %p236, %p237
    %p240 = scmp.ne.s32.totalorder %s225, %s239
    %p241 = scmp.eq.s32.totalorder %s37, 0
    %p242 = por %p240, %p241
    %s244 = sadd.s32 %s243, 1
    %p247 = scmp.eq.s32.totalorder %s31, 1
    %p248 = scmp.ne.s32.totalorder %s243, %s245
    %p249 = scmp.eq.s32.totalorder %s31, 0
    %p250 = por %p248, %p249
    %p251 = scmp.ne.s32.totalorder %s243, %s245
    %p252 = scmp.eq.s32.totalorder %s36, 1
    %p253 = por %p251, %p252
    %p254 = scmp.ne.s32.totalorder %s245, %s246
    %p255 = scmp.eq.s32.totalorder %s36, 0
    %p256 = por %p254, %p255
    %p257 = scmp.ne.s32.totalorder %s245, %s246
    %p258 = scmp.eq.s32.totalorder %s37, 1
    %p259 = por %p257, %p258
    %p261 = scmp.ne.s32.totalorder %s246, %s260
    %p262 = scmp.eq.s32.totalorder %s37, 0
    %p263 = por %p261, %p262
    %s265 = sadd.s32 %s264, 1
    %p268 = scmp.eq.s32.totalorder %s31, 1
    %p269 = scmp.ne.s32.totalorder %s264, %s266
    %p270 = scmp.eq.s32.totalorder %s31, 0
    %p271 = por %p269, %p270
    %p272 = scmp.ne.s32.totalorder %s264, %s266
    %p273 = scmp.eq.s32.totalorder %s36, 1
    %p274 = por %p272, %p273
    %p275 = scmp.ne.s32.totalorder %s266, %s267
    %p276 = scmp.eq.s32.totalorder %s36, 0
    %p277 = por %p275, %p276
    %p278 = scmp.ne.s32.totalorder %s266, %s267
    %p279 = scmp.eq.s32.totalorder %s37, 1
    %p280 = por %p278, %p279
    %p282 = scmp.ne.s32.totalorder %s267, %s281
    %p283 = scmp.eq.s32.totalorder %s37, 0
    %p284 = por %p282, %p283
    %s286 = sadd.s32 %s285, 1
    %p289 = scmp.eq.s32.totalorder %s31, 1
    %p290 = scmp.ne.s32.totalorder %s285, %s287
    %p291 = scmp.eq.s32.totalorder %s31, 0
    %p292 = por %p290, %p291
    %p293 = scmp.ne.s32.totalorder %s285, %s287
    %p294 = scmp.eq.s32.totalorder %s36, 1
    %p295 = por %p293, %p294
    %p296 = scmp.ne.s32.totalorder %s287, %s288
    %p297 = scmp.eq.s32.totalorder %s36, 0
    %p298 = por %p296, %p297
    %p299 = scmp.ne.s32.totalorder %s287, %s288
    %p300 = scmp.eq.s32.totalorder %s37, 1
    %p301 = por %p299, %p300
    %p303 = scmp.ne.s32.totalorder %s288, %s302
    %p304 = scmp.eq.s32.totalorder %s37, 0
    %p305 = por %p303, %p304
    %s307 = sadd.s32 %s306, 1
    %p310 = scmp.eq.s32.totalorder %s31, 1
    %p311 = scmp.ne.s32.totalorder %s306, %s308
    %p312 = scmp.eq.s32.totalorder %s31, 0
    %p313 = por %p311, %p312
    %p314 = scmp.ne.s32.totalorder %s306, %s308
    %p315 = scmp.eq.s32.totalorder %s36, 1
    %p316 = por %p314, %p315
    %p317 = scmp.ne.s32.totalorder %s308, %s309
    %p318 = scmp.eq.s32.totalorder %s36, 0
    %p319 = por %p317, %p318
    %p320 = scmp.ne.s32.totalorder %s308, %s309
    %p321 = scmp.eq.s32.totalorder %s37, 1
    %p322 = por %p320, %p321
    %p324 = scmp.ne.s32.totalorder %s309, %s323
    %p325 = scmp.eq.s32.totalorder %s37, 0
    %p326 = por %p324, %p325
    %s328 = sadd.s32 %s327, 1
    %p331 = scmp.eq.s32.totalorder %s31, 1
    %p332 = scmp.ne.s32.totalorder %s327, %s329
    %p333 = scmp.eq.s32.totalorder %s31, 0
    %p334 = por %p332, %p333
    %p335 = scmp.ne.s32.totalorder %s327, %s329
    %p336 = scmp.eq.s32.totalorder %s36, 1
    %p337 = por %p335, %p336
    %p338 = scmp.ne.s32.totalorder %s329, %s330
    %p339 = scmp.eq.s32.totalorder %s36, 0
    %p340 = por %p338, %p339
    %p341 = scmp.ne.s32.totalorder %s329, %s330
    %p342 = scmp.eq.s32.totalorder %s37, 1
    %p343 = por %p341, %p342
    %p345 = scmp.ne.s32.totalorder %s330, %s344
    %p346 = scmp.eq.s32.totalorder %s37, 0
    %p347 = por %p345, %p346
    %s349 = sadd.s32 %s348, 1
    %p352 = scmp.eq.s32.totalorder %s31, 1
    %p353 = scmp.ne.s32.totalorder %s348, %s350
    %p354 = scmp.eq.s32.totalorder %s31, 0
    %p355 = por %p353, %p354
    %p356 = scmp.ne.s32.totalorder %s348, %s350
    %p357 = scmp.eq.s32.totalorder %s36, 1
    %p358 = por %p356, %p357
    %p359 = scmp.ne.s32.totalorder %s350, %s351
    %p360 = scmp.eq.s32.totalorder %s36, 0
    %p361 = por %p359, %p360
    %p362 = scmp.ne.s32.totalorder %s350, %s351
    %p363 = scmp.eq.s32.totalorder %s37, 1
    %p364 = por %p362, %p363
    %p366 = scmp.ne.s32.totalorder %s351, %s365
    %p367 = scmp.eq.s32.totalorder %s37, 0
    %p368 = por %p366, %p367
    %s370 = sadd.s32 %s369, 1
    %p373 = scmp.eq.s32.totalorder %s31, 1
    %p374 = scmp.ne.s32.totalorder %s369, %s371
    %p375 = scmp.eq.s32.totalorder %s31, 0
    %p376 = por %p374, %p375
    %p377 = scmp.ne.s32.totalorder %s369, %s371
    %p378 = scmp.eq.s32.totalorder %s36, 1
    %p379 = por %p377, %p378
    %p380 = scmp.ne.s32.totalorder %s371, %s372
    %p381 = scmp.eq.s32.totalorder %s36, 0
    %p382 = por %p380, %p381
    %p383 = scmp.ne.s32.totalorder %s371, %s372
    %p384 = scmp.eq.s32.totalorder %s37, 1
    %p385 = por %p383, %p384
    %p387 = scmp.ne.s32.totalorder %s372, %s386
    %p388 = scmp.eq.s32.totalorder %s37, 0
    %p389 = por %p387, %p388
    %s391 = sadd.s32 %s390, 1
    %p394 = scmp.eq.s32.totalorder %s31, 1
    %p395 = scmp.ne.s32.totalorder %s390, %s392
    %p396 = scmp.eq.s32.totalorder %s31, 0
    %p397 = por %p395, %p396
    %p398 = scmp.ne.s32.totalorder %s390, %s392
    %p399 = scmp.eq.s32.totalorder %s36, 1
    %p400 = por %p398, %p399
    %p401 = scmp.ne.s32.totalorder %s392, %s393
    %p402 = scmp.eq.s32.totalorder %s36, 0
    %p403 = por %p401, %p402
    %p404 = scmp.ne.s32.totalorder %s392, %s393
    %p405 = scmp.eq.s32.totalorder %s37, 1
    %p406 = por %p404, %p405
    %p408 = scmp.ne.s32.totalorder %s393, %s407
    %p409 = scmp.eq.s32.totalorder %s37, 0
    %p410 = por %p408, %p409
    %s412 = sadd.s32 %s411, 1
    %p415 = scmp.eq.s32.totalorder %s31, 1
    %p416 = scmp.ne.s32.totalorder %s411, %s413
    %p417 = scmp.eq.s32.totalorder %s31, 0
    %p418 = por %p416, %p417
    %p419 = scmp.ne.s32.totalorder %s411, %s413
    %p420 = scmp.eq.s32.totalorder %s36, 1
    %p421 = por %p419, %p420
    %p422 = scmp.ne.s32.totalorder %s413, %s414
    %p423 = scmp.eq.s32.totalorder %s36, 0
    %p424 = por %p422, %p423
    %p425 = scmp.ne.s32.totalorder %s413, %s414
    %p426 = scmp.eq.s32.totalorder %s37, 1
    %p427 = por %p425, %p426
    %p429 = scmp.ne.s32.totalorder %s414, %s428
    %p430 = scmp.eq.s32.totalorder %s37, 0
    %p431 = por %p429, %p430
    %s433 = sadd.s32 %s432, 1
    %p436 = scmp.eq.s32.totalorder %s31, 1
    %p437 = scmp.ne.s32.totalorder %s432, %s434
    %p438 = scmp.eq.s32.totalorder %s31, 0
    %p439 = por %p437, %p438
    %p440 = scmp.ne.s32.totalorder %s432, %s434
    %p441 = scmp.eq.s32.totalorder %s36, 1
    %p442 = por %p440, %p441
    %p443 = scmp.ne.s32.totalorder %s434, %s435
    %p444 = scmp.eq.s32.totalorder %s36, 0
    %p445 = por %p443, %p444
    %p446 = scmp.ne.s32.totalorder %s434, %s435
    %p447 = scmp.eq.s32.totalorder %s37, 1
    %p448 = por %p446, %p447
    %p450 = scmp.ne.s32.totalorder %s435, %s449
    %p451 = scmp.eq.s32.totalorder %s37, 0
    %p452 = por %p450, %p451
    %s454 = sadd.s32 %s453, 1
    %p457 = scmp.eq.s32.totalorder %s31, 1
    %p458 = scmp.ne.s32.totalorder %s453, %s455
    %p459 = scmp.eq.s32.totalorder %s31, 0
    %p460 = por %p458, %p459
    %p461 = scmp.ne.s32.totalorder %s453, %s455
    %p462 = scmp.eq.s32.totalorder %s36, 1
    %p463 = por %p461, %p462
    %p464 = scmp.ne.s32.totalorder %s455, %s456
    %p465 = scmp.eq.s32.totalorder %s36, 0
    %p466 = por %p464, %p465
    %p467 = scmp.ne.s32.totalorder %s455, %s456
    %p468 = scmp.eq.s32.totalorder %s37, 1
    %p469 = por %p467, %p468
    %p471 = scmp.ne.s32.totalorder %s456, %s470
    %p472 = scmp.eq.s32.totalorder %s37, 0
    %p473 = por %p471, %p472
    %s475 = sadd.s32 %s474, 1
    %p478 = scmp.eq.s32.totalorder %s31, 1
    %p479 = scmp.ne.s32.totalorder %s474, %s476
    %p480 = scmp.eq.s32.totalorder %s31, 0
    %p481 = por %p479, %p480
    %p482 = scmp.ne.s32.totalorder %s474, %s476
    %p483 = scmp.eq.s32.totalorder %s36, 1
    %p484 = por %p482, %p483
    %p485 = scmp.ne.s32.totalorder %s476, %s477
    %p486 = scmp.eq.s32.totalorder %s36, 0
    %p487 = por %p485, %p486
    %p488 = scmp.ne.s32.totalorder %s476, %s477
    %p489 = scmp.eq.s32.totalorder %s37, 1
    %p490 = por %p488, %p489
    %p492 = scmp.ne.s32.totalorder %s477, %s491
    %p493 = scmp.eq.s32.totalorder %s37, 0
    %p494 = por %p492, %p493
    %s496 = sadd.s32 %s495, 1
    %p499 = scmp.eq.s32.totalorder %s31, 1
    %p500 = scmp.ne.s32.totalorder %s495, %s497
    %p501 = scmp.eq.s32.totalorder %s31, 0
    %p502 = por %p500, %p501
    %p503 = scmp.ne.s32.totalorder %s495, %s497
    %p504 = scmp.eq.s32.totalorder %s36, 1
    %p505 = por %p503, %p504
    %p506 = scmp.ne.s32.totalorder %s497, %s498
    %p507 = scmp.eq.s32.totalorder %s36, 0
    %p508 = por %p506, %p507
    %p509 = scmp.ne.s32.totalorder %s497, %s498
    %p510 = scmp.eq.s32.totalorder %s37, 1
    %p511 = por %p509, %p510
    %p513 = scmp.ne.s32.totalorder %s498, %s512
    %p514 = scmp.eq.s32.totalorder %s37, 0
    %p515 = por %p513, %p514
    %s517 = sadd.s32 %s516, 1
    %p520 = scmp.eq.s32.totalorder %s31, 1
    %p521 = scmp.ne.s32.totalorder %s516, %s518
    %p522 = scmp.eq.s32.totalorder %s31, 0
    %p523 = por %p521, %p522
    %p524 = scmp.ne.s32.totalorder %s516, %s518
    %p525 = scmp.eq.s32.totalorder %s36, 1
    %p526 = por %p524, %p525
    %p527 = scmp.ne.s32.totalorder %s518, %s519
    %p528 = scmp.eq.s32.totalorder %s36, 0
    %p529 = por %p527, %p528
    %p530 = scmp.ne.s32.totalorder %s518, %s519
    %p531 = scmp.eq.s32.totalorder %s37, 1
    %p532 = por %p530, %p531
    %p534 = scmp.ne.s32.totalorder %s519, %s533
    %p535 = scmp.eq.s32.totalorder %s37, 0
    %p536 = por %p534, %p535
    %s537 = ssub.s32 %s31, %s38
    %p538 = scmp.eq.s32.totalorder %s537, 0
    %s540 = sadd.s32 %s539, 1
    %s541 = scalar_select %p538, %s539, %s540
    %p544 = pneg %p538
    %p545 = scmp.eq.s32.totalorder %s31, 1
    %p546 = por %p544, %p545
    %p547 = scmp.ne.s32.totalorder %s539, %s542
    %p548 = scmp.eq.s32.totalorder %s31, 0
    %p549 = por %p547, %p548
    %p550 = scmp.ne.s32.totalorder %s539, %s542
    %p551 = scmp.eq.s32.totalorder %s36, 1
    %p552 = por %p550, %p551
    %p553 = scmp.ne.s32.totalorder %s542, %s543
    %p554 = scmp.eq.s32.totalorder %s36, 0
    %p555 = por %p553, %p554
    %p556 = scmp.ne.s32.totalorder %s542, %s543
    %p557 = scmp.eq.s32.totalorder %s37, 1
    %p558 = por %p556, %p557
    %p560 = scmp.ne.s32.totalorder %s543, %s559
    %p561 = scmp.eq.s32.totalorder %s37, 0
    %p562 = por %p560, %p561
    %s563 = ssub.s32 %s31, %s38
    %p564 = scmp.eq.s32.totalorder %s563, 0
    %s566 = sadd.s32 %s565, 1
    %s567 = scalar_select %p564, %s565, %s566
    %p570 = pneg %p564
    %p571 = scmp.eq.s32.totalorder %s31, 1
    %p572 = por %p570, %p571
    %p573 = scmp.ne.s32.totalorder %s565, %s568
    %p574 = scmp.eq.s32.totalorder %s31, 0
    %p575 = por %p573, %p574
    %p576 = scmp.ne.s32.totalorder %s565, %s568
    %p577 = scmp.eq.s32.totalorder %s36, 1
    %p578 = por %p576, %p577
    %p579 = scmp.ne.s32.totalorder %s568, %s569
    %p580 = scmp.eq.s32.totalorder %s36, 0
    %p581 = por %p579, %p580
    %p582 = scmp.ne.s32.totalorder %s568, %s569
    %p583 = scmp.eq.s32.totalorder %s37, 1
    %p584 = por %p582, %p583
    %p586 = scmp.ne.s32.totalorder %s569, %s585
    %p587 = scmp.eq.s32.totalorder %s37, 0
    %p588 = por %p586, %p587
    %p589 = scmp.le.s32.totalorder 1, %s31
    %p590 = scmp.lt.s32.totalorder %s31, 3
    %p591 = pnand %p589, %p590
    %p592 = pneg %p591
    // Predicated region
    $region9: #{forward.12} parent=5 // pred_check
      _
    $region10: #{forward.12} parent=5 // pred_check_branch
      %594 = sbr.rel (%p591) target = $region12
    $region11: #{forward.12} parent=5 // pred_region
      %s595 = ssub.s32 %s31, 1
      // Predicated region
      $region13: #{forward.12} parent=11 // pred_check
        %p596 = pneg %p130
      $region14: #{forward.12} parent=11 // pred_check_branch
        %598 = sbr.rel (%p596) target = $region16
      $region15: #{forward.12} parent=11 // pred_region
        _
      $region16: #{forward.12} parent=11 // pred_fallthru
        _
      // Predicated region
      $region17: #{forward.12} parent=11 // pred_check
        %p599 = pneg %p151
      $region18: #{forward.12} parent=11 // pred_check_branch
        %601 = sbr.rel (%p599) target = $region20
      $region19: #{forward.12} parent=11 // pred_region
        _
      $region20: #{forward.12} parent=11 // pred_fallthru
        _
      // Predicated region
      $region21: #{forward.12} parent=11 // pred_check
        %p602 = pneg %p172
      $region22: #{forward.12} parent=11 // pred_check_branch
        %604 = sbr.rel (%p602) target = $region24
      $region23: #{forward.12} parent=11 // pred_region
        _
      $region24: #{forward.12} parent=11 // pred_fallthru
        _
      // Predicated region
      $region25: #{forward.12} parent=11 // pred_check
        %p605 = pneg %p193
      $region26: #{forward.12} parent=11 // pred_check_branch
        %607 = sbr.rel (%p605) target = $region28
      $region27: #{forward.12} parent=11 // pred_region
        _
      $region28: #{forward.12} parent=11 // pred_fallthru
        _
      // Predicated region
      $region29: #{forward.12} parent=11 // pred_check
        %p608 = pneg %p214
      $region30: #{forward.12} parent=11 // pred_check_branch
        %610 = sbr.rel (%p608) target = $region32
      $region31: #{forward.12} parent=11 // pred_region
        _
      $region32: #{forward.12} parent=11 // pred_fallthru
        _
      // Predicated region
      $region33: #{forward.12} parent=11 // pred_check
        %p611 = pneg %p235
      $region34: #{forward.12} parent=11 // pred_check_branch
        %613 = sbr.rel (%p611) target = $region36
      $region35: #{forward.12} parent=11 // pred_region
        _
      $region36: #{forward.12} parent=11 // pred_fallthru
        _
      // Predicated region
      $region37: #{forward.12} parent=11 // pred_check
        %p614 = pneg %p256
      $region38: #{forward.12} parent=11 // pred_check_branch
        %616 = sbr.rel (%p614) target = $region40
      $region39: #{forward.12} parent=11 // pred_region
        _
      $region40: #{forward.12} parent=11 // pred_fallthru
        _
      // Predicated region
      $region41: #{forward.12} parent=11 // pred_check
        %p617 = pneg %p277
      $region42: #{forward.12} parent=11 // pred_check_branch
        %619 = sbr.rel (%p617) target = $region44
      $region43: #{forward.12} parent=11 // pred_region
        _
      $region44: #{forward.12} parent=11 // pred_fallthru
        _
      // Predicated region
      $region45: #{forward.12} parent=11 // pred_check
        %p620 = pneg %p298
      $region46: #{forward.12} parent=11 // pred_check_branch
        %622 = sbr.rel (%p620) target = $region48
      $region47: #{forward.12} parent=11 // pred_region
        _
      $region48: #{forward.12} parent=11 // pred_fallthru
        _
      // Predicated region
      $region49: #{forward.12} parent=11 // pred_check
        %p623 = pneg %p319
      $region50: #{forward.12} parent=11 // pred_check_branch
        %625 = sbr.rel (%p623) target = $region52
      $region51: #{forward.12} parent=11 // pred_region
        _
      $region52: #{forward.12} parent=11 // pred_fallthru
        _
      // Predicated region
      $region53: #{forward.12} parent=11 // pred_check
        %p626 = pneg %p340
      $region54: #{forward.12} parent=11 // pred_check_branch
        %628 = sbr.rel (%p626) target = $region56
      $region55: #{forward.12} parent=11 // pred_region
        _
      $region56: #{forward.12} parent=11 // pred_fallthru
        _
      // Predicated region
      $region57: #{forward.12} parent=11 // pred_check
        %p629 = pneg %p361
      $region58: #{forward.12} parent=11 // pred_check_branch
        %631 = sbr.rel (%p629) target = $region60
      $region59: #{forward.12} parent=11 // pred_region
        _
      $region60: #{forward.12} parent=11 // pred_fallthru
        _
      // Predicated region
      $region61: #{forward.12} parent=11 // pred_check
        %p632 = pneg %p382
      $region62: #{forward.12} parent=11 // pred_check_branch
        %634 = sbr.rel (%p632) target = $region64
      $region63: #{forward.12} parent=11 // pred_region
        _
      $region64: #{forward.12} parent=11 // pred_fallthru
        _
      // Predicated region
      $region65: #{forward.12} parent=11 // pred_check
        %p635 = pneg %p403
      $region66: #{forward.12} parent=11 // pred_check_branch
        %637 = sbr.rel (%p635) target = $region68
      $region67: #{forward.12} parent=11 // pred_region
        _
      $region68: #{forward.12} parent=11 // pred_fallthru
        _
      // Predicated region
      $region69: #{forward.12} parent=11 // pred_check
        %p638 = pneg %p424
      $region70: #{forward.12} parent=11 // pred_check_branch
        %640 = sbr.rel (%p638) target = $region72
      $region71: #{forward.12} parent=11 // pred_region
        _
      $region72: #{forward.12} parent=11 // pred_fallthru
        _
      // Predicated region
      $region73: #{forward.12} parent=11 // pred_check
        %p641 = pneg %p445
      $region74: #{forward.12} parent=11 // pred_check_branch
        %643 = sbr.rel (%p641) target = $region76
      $region75: #{forward.12} parent=11 // pred_region
        _
      $region76: #{forward.12} parent=11 // pred_fallthru
        _
      // Predicated region
      $region77: #{forward.12} parent=11 // pred_check
        %p644 = pneg %p466
      $region78: #{forward.12} parent=11 // pred_check_branch
        %646 = sbr.rel (%p644) target = $region80
      $region79: #{forward.12} parent=11 // pred_region
        _
      $region80: #{forward.12} parent=11 // pred_fallthru
        _
      // Predicated region
      $region81: #{forward.12} parent=11 // pred_check
        %p647 = pneg %p487
      $region82: #{forward.12} parent=11 // pred_check_branch
        %649 = sbr.rel (%p647) target = $region84
      $region83: #{forward.12} parent=11 // pred_region
        _
      $region84: #{forward.12} parent=11 // pred_fallthru
        _
      // Predicated region
      $region85: #{forward.12} parent=11 // pred_check
        %p650 = pneg %p508
      $region86: #{forward.12} parent=11 // pred_check_branch
        %652 = sbr.rel (%p650) target = $region88
      $region87: #{forward.12} parent=11 // pred_region
        _
      $region88: #{forward.12} parent=11 // pred_fallthru
        _
      // Predicated region
      $region89: #{forward.12} parent=11 // pred_check
        %p653 = pneg %p529
      $region90: #{forward.12} parent=11 // pred_check_branch
        %655 = sbr.rel (%p653) target = $region92
      $region91: #{forward.12} parent=11 // pred_region
        _
      $region92: #{forward.12} parent=11 // pred_fallthru
        _
    $region12: #{forward.12} parent=5 // pred_fallthru
      _
    %p656 = scmp.lt.s32.totalorder %s31, 2
    // Predicated region
    $region93: #{forward.12} parent=5 // pred_check
      %p657 = pneg %p656
    $region94: #{forward.12} parent=5 // pred_check_branch
      %659 = sbr.rel (%p657) target = $region96
    $region95: #{forward.12} parent=5 // pred_region
      // Predicated region
      $region97: #{forward.12} parent=95 // pred_check
        %p660 = pneg %p51
      $region98: #{forward.12} parent=95 // pred_check_branch
        %662 = sbr.rel (%p660) target = $region100
      $region99: #{forward.12} parent=95 // pred_region
        %p663 = scmp.lt.s32.totalorder %s31, 1
        %s664 = scalar_select %p663, %s31, 1
        %s665 = smul.addr %s664, 2
        %s666 = smul.addr %s665, 8
        %s667 = scalar_lea.vmem %s0, %s666
      $region100: #{forward.12} parent=95 // pred_fallthru
        _
      // Predicated region
      $region101: #{forward.12} parent=95 // pred_check
        %p668 = pneg %p77
      $region102: #{forward.12} parent=95 // pred_check_branch
        %670 = sbr.rel (%p668) target = $region104
      $region103: #{forward.12} parent=95 // pred_region
        %p671 = scmp.lt.s32.totalorder %s31, 1
        %s672 = scalar_select %p671, %s31, 1
        %s673 = smul.addr %s672, 2
        %s674 = smul.addr %s673, 8
        %s675 = scalar_lea.vmem %s1, %s674
      $region104: #{forward.12} parent=95 // pred_fallthru
        _
      // Predicated region
      $region105: #{forward.12} parent=95 // pred_check
        %p676 = pneg %p103
      $region106: #{forward.12} parent=95 // pred_check_branch
        %678 = sbr.rel (%p676) target = $region108
      $region107: #{forward.12} parent=95 // pred_region
        %p679 = scmp.lt.s32.totalorder %s31, 1
        %s680 = scalar_select %p679, %s31, 1
        %s681 = smul.addr %s680, 2
        %s682 = smul.addr %s681, 8
        %s683 = scalar_lea.vmem %s2, %s682
      $region108: #{forward.12} parent=95 // pred_fallthru
        _
    $region96: #{forward.12} parent=5 // pred_fallthru
      _
    %p684 = scmp.le.s32.totalorder 1, %s31
    %p685 = scmp.lt.s32.totalorder %s31, 3
    %p686 = pnand %p684, %p685
    %p687 = pneg %p686
    // Predicated region
    $region109: #{forward.12} parent=5 // pred_check
      _
    $region110: #{forward.12} parent=5 // pred_check_branch
      %689 = sbr.rel (%p686) target = $region112
    $region111: #{forward.12} parent=5 // pred_region
      %s690 = ssub.s32 %s31, 1
      %p691 = scmp.lt.s32.totalorder %s36, 1
      %s692 = scalar_select %p691, %s36, 1
      %s693 = smul.addr %s692, 2
      %s694 = smul.addr %s693, 8
      %s695 = scalar_lea.vmem %s0, %s694
      %p696 = pneg %p57
      %p697 = pneg %p54
      %p698 = scmp.lt.s32.totalorder %s36, 1
      %s699 = scalar_select %p698, %s36, 1
      %s700 = smul.addr %s699, 2
      %s701 = smul.addr %s700, 8
      %s702 = scalar_lea.vmem %s1, %s701
      %p703 = pneg %p83
      %p704 = pneg %p80
      %p705 = scmp.lt.s32.totalorder %s36, 1
      %s706 = scalar_select %p705, %s36, 1
      %s707 = smul.addr %s706, 2
      %s708 = smul.addr %s707, 8
      %s709 = scalar_lea.vmem %s2, %s708
      %p710 = pneg %p109
      %p711 = pneg %p106
      %p712 = pneg %p130
      %p713 = pneg %p127
      %p714 = pneg %p151
      %p715 = pneg %p148
      %p716 = pneg %p172
      %p717 = pneg %p169
      %p718 = pneg %p193
      %p719 = pneg %p190
      %p720 = pneg %p214
      %p721 = pneg %p211
      %p722 = pneg %p235
      %p723 = pneg %p232
      %p724 = pneg %p256
      %p725 = pneg %p253
      %p726 = pneg %p277
      %p727 = pneg %p274
      %p728 = pneg %p298
      %p729 = pneg %p295
      %p730 = pneg %p319
      %p731 = pneg %p316
      %p732 = pneg %p340
      %p733 = pneg %p337
      %p734 = pneg %p361
      %p735 = pneg %p358
      %p736 = pneg %p382
      %p737 = pneg %p379
      %p738 = pneg %p403
      %p739 = pneg %p400
      %p740 = pneg %p424
      %p741 = pneg %p421
      %p742 = pneg %p445
      %p743 = pneg %p442
      %p744 = pneg %p466
      %p745 = pneg %p463
      %p746 = pneg %p487
      %p747 = pneg %p484
      %p748 = pneg %p508
      %p749 = pneg %p505
      %p750 = pneg %p529
      %p751 = pneg %p526
      %p752 = pneg %p555
      %p753 = pneg %p552
      %p754 = scmp.lt.s32.totalorder %s36, 1
      %s755 = scalar_select %p754, %s36, 1
      %s756 = smul.addr %s755, 2
      %s757 = smul.addr %s756, 8
      %s758 = scalar_lea.vmem %s23, %s757
      %p759 = pneg %p581
      %p760 = pneg %p578
      %p761 = scmp.lt.s32.totalorder %s36, 1
      %s762 = scalar_select %p761, %s36, 1
      %s763 = smul.addr %s762, 2
      %s764 = smul.addr %s763, 8
      %s765 = scalar_lea.vmem %s24, %s764
      %p766 = scmp.lt.s32.totalorder %s36, 1
      %s767 = scalar_select %p766, %s36, 1
      %s768 = smul.addr %s767, 2
      %s769 = smul.addr %s768, 8
      %s770 = scalar_lea.vmem %s0, %s769
      %p771 = scmp.lt.s32.totalorder %s36, 1
      %s772 = scalar_select %p771, %s36, 1
      %s773 = smul.addr %s772, 2
      %s774 = smul.addr %s773, 8
      %s775 = scalar_lea.vmem %s1, %s774
      %p776 = scmp.lt.s32.totalorder %s36, 1
      %s777 = scalar_select %p776, %s36, 1
      %s778 = smul.addr %s777, 2
      %s779 = smul.addr %s778, 8
      %s780 = scalar_lea.vmem %s2, %s779
      %p781 = scmp.lt.s32.totalorder %s36, 1
      %s782 = scalar_select %p781, %s36, 1
      %s783 = smul.addr %s782, 2
      %s784 = smul.addr %s783, 8
      %s785 = scalar_lea.vmem %s23, %s784
      %p786 = scmp.lt.s32.totalorder %s36, 1
      %s787 = scalar_select %p786, %s36, 1
      %s788 = smul.addr %s787, 2
      %s789 = smul.addr %s788, 8
      %s790 = scalar_lea.vmem %s24, %s789
      %v791 = vld [vmem:[%s770] sm:$0xff]
      %v792 = vld [vmem:[%s770 + $0x8] sm:$0xff]
      %v793 = vld [vmem:[%s780] sm:$0xff]
      %v794 = vld [vmem:[%s780 + $0x8] sm:$0xff]
      %v795 = vld [vmem:[%s3] sm:$0xff]
      %v796 = vld [vmem:[%s3 + $0x8] sm:$0xff]
      %v797 = vld [vmem:[%s775] sm:$0xff]
      %v798 = vld [vmem:[%s775 + $0x8] sm:$0xff]
      %v799 = vadd.f32 %v791, %v797
      %v800 = vadd.f32 %v792, %v798
      %v801 = vld [vmem:[%s6] sm:$0xff]
      %v802 = vld [vmem:[%s6 + $0x8] sm:$0xff]
      %v803 = vld [vmem:[%s6 + $0x10] sm:$0xff]
      %v804 = vld [vmem:[%s6 + $0x18] sm:$0xff]
      %v805 = vld [vmem:[%s7] sm:$0x1]
      %v807 = vlaneseq
      %v808 = vshrl.u32 %v807, 7
      %v809 = vsub.s32 0, %v808
      %v810 = vrot.slane %v805, %v809
      %vm812 = vcmask 261120
      %v814 = vsel %vm812, %v799, 0
      %v817 = vsel %vm812, %v800, 0
      %819 = vmatprep.subr.mxu0 0.0
      %820 = vmatpush1.msra.mxu0 0.0
      %821 = vmatprep.subr.mxu0 0.0
      %822 = vmatpush1.msra.mxu0 0.0
      %823 = vmatprep.subr.mxu0 0.0
      %824 = vmatpush1.msra.mxu0 0.0
      %825 = vmatprep.subr.mxu0 0.0
      %826 = vmatpush1.msra.mxu0 0.0
      %827 = vmatprep.subr.mxu0 0.0
      %828 = vmatpush1.msra.mxu0 0.0
      %829 = vmatprep.subr.mxu0 0.0
      %830 = vmatpush1.msra.mxu0 0.0
      %831 = vmatprep.subr.mxu0 0.0
      %832 = vmatpush1.msra.mxu0 0.0
      %833 = vmatprep.subr.mxu0 0.0
      %834 = vmatpush1.msra.mxu0 0.0
      %835 = vmatprep.subr.mxu0 0.0
      %836 = vmatpush1.msra.mxu0 0.0
      %837 = vmatprep.subr.mxu0 0.0
      %838 = vmatpush1.msra.mxu0 0.0
      %839 = vmatprep.subr.mxu0 0.0
      %840 = vmatpush1.msra.mxu0 0.0
      %841 = vmatprep.subr.mxu0 0.0
      %842 = vmatpush1.msra.mxu0 0.0
      %843 = vmatprep.subr.mxu0 0.0
      %844 = vmatpush1.msra.mxu0 %v804
      %845 = vmatprep.subr.mxu0 0.0
      %846 = vmatpush1.msra.mxu0 %v803
      %847 = vmatprep.subr.mxu0 0.0
      %848 = vmatpush1.msra.mxu0 %v802
      %849 = vmatprep.subr.mxu0 0.0
      %850 = vmatpush1.msra.mxu0 %v801
      %851 = vmatprep.subr.mxu0 0.0
      %852 = vmatpush2.msra.mxu0 0.0
      %853 = vmatprep.subr.mxu0 0.0
      %854 = vmatpush2.msra.mxu0 0.0
      %855 = vmatprep.subr.mxu0 0.0
      %856 = vmatpush2.msra.mxu0 0.0
      %857 = vmatprep.subr.mxu0 0.0
      %858 = vmatpush2.msra.mxu0 0.0
      %859 = vmatprep.subr.mxu0 0.0
      %860 = vmatpush2.msra.mxu0 0.0
      %861 = vmatprep.subr.mxu0 0.0
      %862 = vmatpush2.msra.mxu0 0.0
      %863 = vmatprep.subr.mxu0 0.0
      %864 = vmatpush2.msra.mxu0 0.0
      %865 = vmatprep.subr.mxu0 0.0
      %866 = vmatpush2.msra.mxu0 0.0
      %867 = vmatprep.subr.mxu0 0.0
      %868 = vmatpush2.msra.mxu0 0.0
      %869 = vmatprep.subr.mxu0 0.0
      %870 = vmatpush2.msra.mxu0 0.0
      %871 = vmatprep.subr.mxu0 0.0
      %872 = vmatpush2.msra.mxu0 0.0
      %873 = vmatprep.subr.mxu0 0.0
      %874 = vmatpush2.msra.mxu0 0.0
      %875 = vmatprep.subr.mxu0 0.0
      %876 = vmatpush2.msra.mxu0 0.0
      %877 = vmatprep.subr.mxu0 0.0
      %878 = vmatpush2.msra.mxu0 0.0
      %879 = vmatprep.subr.mxu0 0.0
      %880 = vmatpush2.msra.mxu0 0.0
      %881 = vmatprep.subr.mxu0 0.0
      %882 = vmatpush2.msra.mxu0 0.0
      %883 = vmatprep.mubr.f32.mxu0 0.0
      %884 = vmatmul.mubr.f32.gmra.mxu0 %v814
      %v885 = vpop.f32.mrf.mxu0
      %v886 = vadd.f32 %v810, %v885
      %v887 = vpop.f32.mrf.mxu0
      %888 = vmatprep.mubr.f32.mxu0 0.0
      %889 = vmatmul.mubr.f32.gmra.mxu0 %v817
      %v890 = vpop.f32.mrf.mxu0
      %v891 = vadd.f32 %v810, %v890
      %v892 = vpop.f32.mrf.mxu0
      %893 = vdwg.mxu0
      %v894 = vld [vmem:[%s8] sm:$0xff]
      %v895 = vld [vmem:[%s8 + $0x8] sm:$0xff]
      %v896 = vld [vmem:[%s8 + $0x10] sm:$0xff]
      %v897 = vld [vmem:[%s8 + $0x18] sm:$0xff]
      %v898 = vld [vmem:[%s9] sm:$0x1]
      %901 = vrot.lane.b32.xlu0 %v886, 96
      %v902 = vpop.permute.xlu0 %901
      %903 = vrot.lane.b32.xlu0 %v891, 96
      %v904 = vpop.permute.xlu0 %903
      %vm905 = vcmask 64512
      %v906 = vsel %vm905, %v886, 0
      %v908 = vsel %vm905, %v891, 0
      %v910 = vsel %vm905, %v902, 0
      %v912 = vsel %vm905, %v904, 0
      %914 = vmatprep.subr.mxu0 0.0
      %915 = vmatpush1.xpose.msra.mxu0 0.0
      %916 = vmatprep.subr.mxu0 0.0
      %917 = vmatpush1.xpose.msra.mxu0 0.0
      %918 = vmatprep.subr.mxu0 0.0
      %919 = vmatpush1.xpose.msra.mxu0 0.0
      %920 = vmatprep.subr.mxu0 0.0
      %921 = vmatpush1.xpose.msra.mxu0 0.0
      %922 = vmatprep.subr.mxu0 0.0
      %923 = vmatpush1.xpose.msra.mxu0 0.0
      %924 = vmatprep.subr.mxu0 0.0
      %925 = vmatpush1.xpose.msra.mxu0 0.0
      %926 = vmatprep.subr.mxu0 0.0
      %927 = vmatpush1.xpose.msra.mxu0 0.0
      %928 = vmatprep.subr.mxu0 0.0
      %929 = vmatpush1.xpose.msra.mxu0 0.0
      %930 = vmatprep.subr.mxu0 0.0
      %931 = vmatpush1.xpose.msra.mxu0 0.0
      %932 = vmatprep.subr.mxu0 0.0
      %933 = vmatpush1.xpose.msra.mxu0 0.0
      %934 = vmatprep.subr.mxu0 0.0
      %935 = vmatpush1.xpose.msra.mxu0 0.0
      %936 = vmatprep.subr.mxu0 0.0
      %937 = vmatpush1.xpose.msra.mxu0 0.0
      %938 = vmatprep.subr.mxu0 0.0
      %939 = vmatpush1.xpose.msra.mxu0 0.0
      %940 = vmatprep.subr.mxu0 0.0
      %941 = vmatpush1.xpose.msra.mxu0 0.0
      %942 = vmatprep.subr.mxu0 0.0
      %943 = vmatpush1.xpose.msra.mxu0 %v912
      %944 = vmatprep.subr.mxu0 0.0
      %945 = vmatpush1.xpose.msra.mxu0 %v910
      %946 = vmatprep.subr.mxu0 0.0
      %947 = vmatpush2.xpose.msra.mxu0 0.0
      %948 = vmatprep.subr.mxu0 0.0
      %949 = vmatpush2.xpose.msra.mxu0 0.0
      %950 = vmatprep.subr.mxu0 0.0
      %951 = vmatpush2.xpose.msra.mxu0 0.0
      %952 = vmatprep.subr.mxu0 0.0
      %953 = vmatpush2.xpose.msra.mxu0 0.0
      %954 = vmatprep.subr.mxu0 0.0
      %955 = vmatpush2.xpose.msra.mxu0 0.0
      %956 = vmatprep.subr.mxu0 0.0
      %957 = vmatpush2.xpose.msra.mxu0 0.0
      %958 = vmatprep.subr.mxu0 0.0
      %959 = vmatpush2.xpose.msra.mxu0 0.0
      %960 = vmatprep.subr.mxu0 0.0
      %961 = vmatpush2.xpose.msra.mxu0 0.0
      %962 = vmatprep.subr.mxu0 0.0
      %963 = vmatpush2.xpose.msra.mxu0 0.0
      %964 = vmatprep.subr.mxu0 0.0
      %965 = vmatpush2.xpose.msra.mxu0 0.0
      %966 = vmatprep.subr.mxu0 0.0
      %967 = vmatpush2.xpose.msra.mxu0 0.0
      %968 = vmatprep.subr.mxu0 0.0
      %969 = vmatpush2.xpose.msra.mxu0 0.0
      %970 = vmatprep.subr.mxu0 0.0
      %971 = vmatpush2.xpose.msra.mxu0 0.0
      %972 = vmatprep.subr.mxu0 0.0
      %973 = vmatpush2.xpose.msra.mxu0 0.0
      %974 = vmatprep.subr.mxu0 0.0
      %975 = vmatpush2.xpose.msra.mxu0 0.0
      %976 = vmatprep.subr.mxu0 0.0
      %977 = vmatpush2.xpose.msra.mxu0 0.0
      %978 = vmatprep.mubr.f32.mxu0 0.0
      %979 = vmatmul.mubr.f32.gmra.mxu0 %v906
      %v980 = vpop.f32.mrf.mxu0
      %v981 = vadd.f32 0.0, %v980
      %v982 = vpop.f32.mrf.mxu0
      %983 = vmatprep.mubr.f32.mxu0 0.0
      %984 = vmatmul.mubr.f32.gmra.mxu0 %v908
      %v985 = vpop.f32.mrf.mxu0
      %v986 = vadd.f32 0.0, %v985
      %v987 = vpop.f32.mrf.mxu0
      %988 = vdwg.mxu0
      %vm989 = vcmask 130048
      %v990 = vsel %vm989, %v981, -inf
      %991 = vmax.xlane.f32.xlu0 %v990
      %v992 = vpop.xlane.xlu0 %991
      %v993 = vsel %vm989, %v986, -inf
      %994 = vmax.xlane.f32.xlu0 %v993
      %v995 = vpop.xlane.xlu0 %994
      %v996 = vsub.f32 %v981, %v992
      %v997 = vsub.f32 %v986, %v995
      %v998 = vmul.f32 %v996, 1.442695
      %v999 = vpow.pop %v998
      %v1000 = vmul.f32 %v997, 1.442695
      %v1001 = vpow.pop %v1000
      %v1002 = vsel %vm989, %v999, 0.0
      %1003 = vadd.xlane.f32.xlu0 %v1002
      %v1004 = vpop.xlane.xlu0 %1003
      %v1005 = vsel %vm989, %v1001, 0.0
      %1006 = vadd.xlane.f32.xlu0 %v1005
      %v1007 = vpop.xlane.xlu0 %1006
      %v1008 = vrcp.pop %v1004
      %v1009 = vrcp.pop %v1007
      %v1010 = vmul.f32 %v999, %v1008
      %v1011 = vmul.f32 %v1001, %v1009
      %1012 = vrot.lane.b32.xlu0 %v886, 64
      %v1013 = vpop.permute.xlu0 %1012
      %1014 = vrot.lane.b32.xlu0 %v891, 64
      %v1015 = vpop.permute.xlu0 %1014
      %v1019 = vsel %vm989, %v1010, 0
      %v1022 = vsel %vm989, %v1011, 0
      %1024 = vmatprep.subr.mxu0 0.0
      %1025 = vmatpush1.msra.mxu0 0.0
      %1026 = vmatprep.subr.mxu0 0.0
      %1027 = vmatpush1.msra.mxu0 0.0
      %1028 = vmatprep.subr.mxu0 0.0
      %1029 = vmatpush1.msra.mxu0 0.0
      %1030 = vmatprep.subr.mxu0 0.0
      %1031 = vmatpush1.msra.mxu0 0.0
      %1032 = vmatprep.subr.mxu0 0.0
      %1033 = vmatpush1.msra.mxu0 0.0
      %1034 = vmatprep.subr.mxu0 0.0
      %1035 = vmatpush1.msra.mxu0 0.0
      %1036 = vmatprep.subr.mxu0 0.0
      %1037 = vmatpush1.msra.mxu0 0.0
      %1038 = vmatprep.subr.mxu0 0.0
      %1039 = vmatpush1.msra.mxu0 0.0
      %1040 = vmatprep.subr.mxu0 0.0
      %1041 = vmatpush1.msra.mxu0 0.0
      %1042 = vmatprep.subr.mxu0 0.0
      %1043 = vmatpush1.msra.mxu0 0.0
      %1044 = vmatprep.subr.mxu0 0.0
      %1045 = vmatpush1.msra.mxu0 0.0
      %1046 = vmatprep.subr.mxu0 0.0
      %1047 = vmatpush1.msra.mxu0 0.0
      %1048 = vmatprep.subr.mxu0 0.0
      %1049 = vmatpush1.msra.mxu0 0.0
      %1050 = vmatprep.subr.mxu0 0.0
      %1051 = vmatpush1.msra.mxu0 0.0
      %1052 = vmatprep.subr.mxu0 0.0
      %1053 = vmatpush1.msra.mxu0 %v1015
      %1054 = vmatprep.subr.mxu0 0.0
      %1055 = vmatpush1.msra.mxu0 %v1013
      %1056 = vmatprep.subr.mxu0 0.0
      %1057 = vmatpush2.msra.mxu0 0.0
      %1058 = vmatprep.subr.mxu0 0.0
      %1059 = vmatpush2.msra.mxu0 0.0
      %1060 = vmatprep.subr.mxu0 0.0
      %1061 = vmatpush2.msra.mxu0 0.0
      %1062 = vmatprep.subr.mxu0 0.0
      %1063 = vmatpush2.msra.mxu0 0.0
      %1064 = vmatprep.subr.mxu0 0.0
      %1065 = vmatpush2.msra.mxu0 0.0
      %1066 = vmatprep.subr.mxu0 0.0
      %1067 = vmatpush2.msra.mxu0 0.0
      %1068 = vmatprep.subr.mxu0 0.0
      %1069 = vmatpush2.msra.mxu0 0.0
      %1070 = vmatprep.subr.mxu0 0.0
      %1071 = vmatpush2.msra.mxu0 0.0
      %1072 = vmatprep.subr.mxu0 0.0
      %1073 = vmatpush2.msra.mxu0 0.0
      %1074 = vmatprep.subr.mxu0 0.0
      %1075 = vmatpush2.msra.mxu0 0.0
      %1076 = vmatprep.subr.mxu0 0.0
      %1077 = vmatpush2.msra.mxu0 0.0
      %1078 = vmatprep.subr.mxu0 0.0
      %1079 = vmatpush2.msra.mxu0 0.0
      %1080 = vmatprep.subr.mxu0 0.0
      %1081 = vmatpush2.msra.mxu0 0.0
      %1082 = vmatprep.subr.mxu0 0.0
      %1083 = vmatpush2.msra.mxu0 0.0
      %1084 = vmatprep.subr.mxu0 0.0
      %1085 = vmatpush2.msra.mxu0 0.0
      %1086 = vmatprep.subr.mxu0 0.0
      %1087 = vmatpush2.msra.mxu0 0.0
      %1088 = vmatprep.mubr.f32.mxu0 0.0
      %1089 = vmatmul.mubr.f32.gmra.mxu0 %v1019
      %v1090 = vpop.f32.mrf.mxu0
      %v1091 = vadd.f32 0.0, %v1090
      %v1092 = vpop.f32.mrf.mxu0
      %1093 = vmatprep.mubr.f32.mxu0 0.0
      %1094 = vmatmul.mubr.f32.gmra.mxu0 %v1022
      %v1095 = vpop.f32.mrf.mxu0
      %v1096 = vadd.f32 0.0, %v1095
      %v1097 = vpop.f32.mrf.mxu0
      %1098 = vdwg.mxu0
      %1099 = vrot.lane.b32.xlu0 %v886, 120
      %v1100 = vpop.permute.xlu0 %1099
      %1101 = vrot.lane.b32.xlu0 %v891, 120
      %v1102 = vpop.permute.xlu0 %1101
      %1103 = vrot.lane.b32.xlu0 %v886, 88
      %v1104 = vpop.permute.xlu0 %1103
      %1105 = vrot.lane.b32.xlu0 %v891, 88
      %v1106 = vpop.permute.xlu0 %1105
      %v1107 = vsel %vm905, %v1100, 0
      %v1109 = vsel %vm905, %v1102, 0
      %v1111 = vsel %vm905, %v1104, 0
      %v1113 = vsel %vm905, %v1106, 0
      %1115 = vmatprep.subr.mxu0 0.0
      %1116 = vmatpush1.xpose.msra.mxu0 0.0
      %1117 = vmatprep.subr.mxu0 0.0
      %1118 = vmatpush1.xpose.msra.mxu0 0.0
      %1119 = vmatprep.subr.mxu0 0.0
      %1120 = vmatpush1.xpose.msra.mxu0 0.0
      %1121 = vmatprep.subr.mxu0 0.0
      %1122 = vmatpush1.xpose.msra.mxu0 0.0
      %1123 = vmatprep.subr.mxu0 0.0
      %1124 = vmatpush1.xpose.msra.mxu0 0.0
      %1125 = vmatprep.subr.mxu0 0.0
      %1126 = vmatpush1.xpose.msra.mxu0 0.0
      %1127 = vmatprep.subr.mxu0 0.0
      %1128 = vmatpush1.xpose.msra.mxu0 0.0
      %1129 = vmatprep.subr.mxu0 0.0
      %1130 = vmatpush1.xpose.msra.mxu0 0.0
      %1131 = vmatprep.subr.mxu0 0.0
      %1132 = vmatpush1.xpose.msra.mxu0 0.0
      %1133 = vmatprep.subr.mxu0 0.0
      %1134 = vmatpush1.xpose.msra.mxu0 0.0
      %1135 = vmatprep.subr.mxu0 0.0
      %1136 = vmatpush1.xpose.msra.mxu0 0.0
      %1137 = vmatprep.subr.mxu0 0.0
      %1138 = vmatpush1.xpose.msra.mxu0 0.0
      %1139 = vmatprep.subr.mxu0 0.0
      %1140 = vmatpush1.xpose.msra.mxu0 0.0
      %1141 = vmatprep.subr.mxu0 0.0
      %1142 = vmatpush1.xpose.msra.mxu0 0.0
      %1143 = vmatprep.subr.mxu0 0.0
      %1144 = vmatpush1.xpose.msra.mxu0 %v1113
      %1145 = vmatprep.subr.mxu0 0.0
      %1146 = vmatpush1.xpose.msra.mxu0 %v1111
      %1147 = vmatprep.subr.mxu0 0.0
      %1148 = vmatpush2.xpose.msra.mxu0 0.0
      %1149 = vmatprep.subr.mxu0 0.0
      %1150 = vmatpush2.xpose.msra.mxu0 0.0
      %1151 = vmatprep.subr.mxu0 0.0
      %1152 = vmatpush2.xpose.msra.mxu0 0.0
      %1153 = vmatprep.subr.mxu0 0.0
      %1154 = vmatpush2.xpose.msra.mxu0 0.0
      %1155 = vmatprep.subr.mxu0 0.0
      %1156 = vmatpush2.xpose.msra.mxu0 0.0
      %1157 = vmatprep.subr.mxu0 0.0
      %1158 = vmatpush2.xpose.msra.mxu0 0.0
      %1159 = vmatprep.subr.mxu0 0.0
      %1160 = vmatpush2.xpose.msra.mxu0 0.0
      %1161 = vmatprep.subr.mxu0 0.0
      %1162 = vmatpush2.xpose.msra.mxu0 0.0
      %1163 = vmatprep.subr.mxu0 0.0
      %1164 = vmatpush2.xpose.msra.mxu0 0.0
      %1165 = vmatprep.subr.mxu0 0.0
      %1166 = vmatpush2.xpose.msra.mxu0 0.0
      %1167 = vmatprep.subr.mxu0 0.0
      %1168 = vmatpush2.xpose.msra.mxu0 0.0
      %1169 = vmatprep.subr.mxu0 0.0
      %1170 = vmatpush2.xpose.msra.mxu0 0.0
      %1171 = vmatprep.subr.mxu0 0.0
      %1172 = vmatpush2.xpose.msra.mxu0 0.0
      %1173 = vmatprep.subr.mxu0 0.0
      %1174 = vmatpush2.xpose.msra.mxu0 0.0
      %1175 = vmatprep.subr.mxu0 0.0
      %1176 = vmatpush2.xpose.msra.mxu0 0.0
      %1177 = vmatprep.subr.mxu0 0.0
      %1178 = vmatpush2.xpose.msra.mxu0 0.0
      %1179 = vmatprep.mubr.f32.mxu0 0.0
      %1180 = vmatmul.mubr.f32.gmra.mxu0 %v1107
      %v1181 = vpop.f32.mrf.mxu0
      %v1182 = vadd.f32 0.0, %v1181
      %v1183 = vpop.f32.mrf.mxu0
      %1184 = vmatprep.mubr.f32.mxu0 0.0
      %1185 = vmatmul.mubr.f32.gmra.mxu0 %v1109
      %v1186 = vpop.f32.mrf.mxu0
      %v1187 = vadd.f32 0.0, %v1186
      %v1188 = vpop.f32.mrf.mxu0
      %1189 = vdwg.mxu0
      %v1190 = vsel %vm989, %v1182, -inf
      %1191 = vmax.xlane.f32.xlu0 %v1190
      %v1192 = vpop.xlane.xlu0 %1191
      %v1193 = vsel %vm989, %v1187, -inf
      %1194 = vmax.xlane.f32.xlu0 %v1193
      %v1195 = vpop.xlane.xlu0 %1194
      %v1196 = vsub.f32 %v1182, %v1192
      %v1197 = vsub.f32 %v1187, %v1195
      %v1198 = vmul.f32 %v1196, 1.442695
      %v1199 = vpow.pop %v1198
      %v1200 = vmul.f32 %v1197, 1.442695
      %v1201 = vpow.pop %v1200
      %v1202 = vsel %vm989, %v1199, 0.0
      %1203 = vadd.xlane.f32.xlu0 %v1202
      %v1204 = vpop.xlane.xlu0 %1203
      %v1205 = vsel %vm989, %v1201, 0.0
      %1206 = vadd.xlane.f32.xlu0 %v1205
      %v1207 = vpop.xlane.xlu0 %1206
      %v1208 = vrcp.pop %v1204
      %v1209 = vrcp.pop %v1207
      %v1210 = vmul.f32 %v1199, %v1208
      %v1211 = vmul.f32 %v1201, %v1209
      %1212 = vrot.lane.b32.xlu0 %v886, 56
      %v1213 = vpop.permute.xlu0 %1212
      %1214 = vrot.lane.b32.xlu0 %v891, 56
      %v1215 = vpop.permute.xlu0 %1214
      %v1219 = vsel %vm989, %v1210, 0
      %v1222 = vsel %vm989, %v1211, 0
      %1224 = vmatprep.subr.mxu0 0.0
      %1225 = vmatpush1.msra.mxu0 0.0
      %1226 = vmatprep.subr.mxu0 0.0
      %1227 = vmatpush1.msra.mxu0 0.0
      %1228 = vmatprep.subr.mxu0 0.0
      %1229 = vmatpush1.msra.mxu0 0.0
      %1230 = vmatprep.subr.mxu0 0.0
      %1231 = vmatpush1.msra.mxu0 0.0
      %1232 = vmatprep.subr.mxu0 0.0
      %1233 = vmatpush1.msra.mxu0 0.0
      %1234 = vmatprep.subr.mxu0 0.0
      %1235 = vmatpush1.msra.mxu0 0.0
      %1236 = vmatprep.subr.mxu0 0.0
      %1237 = vmatpush1.msra.mxu0 0.0
      %1238 = vmatprep.subr.mxu0 0.0
      %1239 = vmatpush1.msra.mxu0 0.0
      %1240 = vmatprep.subr.mxu0 0.0
      %1241 = vmatpush1.msra.mxu0 0.0
      %1242 = vmatprep.subr.mxu0 0.0
      %1243 = vmatpush1.msra.mxu0 0.0
      %1244 = vmatprep.subr.mxu0 0.0
      %1245 = vmatpush1.msra.mxu0 0.0
      %1246 = vmatprep.subr.mxu0 0.0
      %1247 = vmatpush1.msra.mxu0 0.0
      %1248 = vmatprep.subr.mxu0 0.0
      %1249 = vmatpush1.msra.mxu0 0.0
      %1250 = vmatprep.subr.mxu0 0.0
      %1251 = vmatpush1.msra.mxu0 0.0
      %1252 = vmatprep.subr.mxu0 0.0
      %1253 = vmatpush1.msra.mxu0 %v1215
      %1254 = vmatprep.subr.mxu0 0.0
      %1255 = vmatpush1.msra.mxu0 %v1213
      %1256 = vmatprep.subr.mxu0 0.0
      %1257 = vmatpush2.msra.mxu0 0.0
      %1258 = vmatprep.subr.mxu0 0.0
      %1259 = vmatpush2.msra.mxu0 0.0
      %1260 = vmatprep.subr.mxu0 0.0
      %1261 = vmatpush2.msra.mxu0 0.0
      %1262 = vmatprep.subr.mxu0 0.0
      %1263 = vmatpush2.msra.mxu0 0.0
      %1264 = vmatprep.subr.mxu0 0.0
      %1265 = vmatpush2.msra.mxu0 0.0
      %1266 = vmatprep.subr.mxu0 0.0
      %1267 = vmatpush2.msra.mxu0 0.0
      %1268 = vmatprep.subr.mxu0 0.0
      %1269 = vmatpush2.msra.mxu0 0.0
      %1270 = vmatprep.subr.mxu0 0.0
      %1271 = vmatpush2.msra.mxu0 0.0
      %1272 = vmatprep.subr.mxu0 0.0
      %1273 = vmatpush2.msra.mxu0 0.0
      %1274 = vmatprep.subr.mxu0 0.0
      %1275 = vmatpush2.msra.mxu0 0.0
      %1276 = vmatprep.subr.mxu0 0.0
      %1277 = vmatpush2.msra.mxu0 0.0
      %1278 = vmatprep.subr.mxu0 0.0
      %1279 = vmatpush2.msra.mxu0 0.0
      %1280 = vmatprep.subr.mxu0 0.0
      %1281 = vmatpush2.msra.mxu0 0.0
      %1282 = vmatprep.subr.mxu0 0.0
      %1283 = vmatpush2.msra.mxu0 0.0
      %1284 = vmatprep.subr.mxu0 0.0
      %1285 = vmatpush2.msra.mxu0 0.0
      %1286 = vmatprep.subr.mxu0 0.0
      %1287 = vmatpush2.msra.mxu0 0.0
      %1288 = vmatprep.mubr.f32.mxu0 0.0
      %1289 = vmatmul.mubr.f32.gmra.mxu0 %v1219
      %v1290 = vpop.f32.mrf.mxu0
      %v1291 = vadd.f32 0.0, %v1290
      %v1292 = vpop.f32.mrf.mxu0
      %1293 = vmatprep.mubr.f32.mxu0 0.0
      %1294 = vmatmul.mubr.f32.gmra.mxu0 %v1222
      %v1295 = vpop.f32.mrf.mxu0
      %v1296 = vadd.f32 0.0, %v1295
      %v1297 = vpop.f32.mrf.mxu0
      %1298 = vdwg.mxu0
      %v1300 = vsel %vm905, %v1291, 0
      %v1303 = vsel %vm905, %v1296, 0
      %1305 = vmatprep.subr.mxu0 0.0
      %1306 = vmatpush1.msra.mxu0 0.0
      %1307 = vmatprep.subr.mxu0 0.0
      %1308 = vmatpush1.msra.mxu0 0.0
      %1309 = vmatprep.subr.mxu0 0.0
      %1310 = vmatpush1.msra.mxu0 0.0
      %1311 = vmatprep.subr.mxu0 0.0
      %1312 = vmatpush1.msra.mxu0 0.0
      %1313 = vmatprep.subr.mxu0 0.0
      %1314 = vmatpush1.msra.mxu0 0.0
      %1315 = vmatprep.subr.mxu0 0.0
      %1316 = vmatpush1.msra.mxu0 0.0
      %1317 = vmatprep.subr.mxu0 0.0
      %1318 = vmatpush1.msra.mxu0 0.0
      %1319 = vmatprep.subr.mxu0 0.0
      %1320 = vmatpush1.msra.mxu0 0.0
      %1321 = vmatprep.subr.mxu0 0.0
      %1322 = vmatpush1.msra.mxu0 0.0
      %1323 = vmatprep.subr.mxu0 0.0
      %1324 = vmatpush1.msra.mxu0 0.0
      %1325 = vmatprep.subr.mxu0 0.0
      %1326 = vmatpush1.msra.mxu0 0.0
      %1327 = vmatprep.subr.mxu0 0.0
      %1328 = vmatpush1.msra.mxu0 0.0
      %1329 = vmatprep.subr.mxu0 0.0
      %1330 = vmatpush1.msra.mxu0 0.0
      %1331 = vmatprep.subr.mxu0 0.0
      %1332 = vmatpush1.msra.mxu0 0.0
      %1333 = vmatprep.subr.mxu0 0.0
      %1334 = vmatpush1.msra.mxu0 0.0
      %1335 = vmatprep.subr.mxu0 0.0
      %1336 = vmatpush1.msra.mxu0 %v895
      %1337 = vmatprep.subr.mxu0 0.0
      %1338 = vmatpush2.msra.mxu0 0.0
      %1339 = vmatprep.subr.mxu0 0.0
      %1340 = vmatpush2.msra.mxu0 0.0
      %1341 = vmatprep.subr.mxu0 0.0
      %1342 = vmatpush2.msra.mxu0 0.0
      %1343 = vmatprep.subr.mxu0 0.0
      %1344 = vmatpush2.msra.mxu0 0.0
      %1345 = vmatprep.subr.mxu0 0.0
      %1346 = vmatpush2.msra.mxu0 0.0
      %1347 = vmatprep.subr.mxu0 0.0
      %1348 = vmatpush2.msra.mxu0 0.0
      %1349 = vmatprep.subr.mxu0 0.0
      %1350 = vmatpush2.msra.mxu0 0.0
      %1351 = vmatprep.subr.mxu0 0.0
      %1352 = vmatpush2.msra.mxu0 0.0
      %1353 = vmatprep.subr.mxu0 0.0
      %1354 = vmatpush2.msra.mxu0 0.0
      %1355 = vmatprep.subr.mxu0 0.0
      %1356 = vmatpush2.msra.mxu0 0.0
      %1357 = vmatprep.subr.mxu0 0.0
      %1358 = vmatpush2.msra.mxu0 0.0
      %1359 = vmatprep.subr.mxu0 0.0
      %1360 = vmatpush2.msra.mxu0 0.0
      %1361 = vmatprep.subr.mxu0 0.0
      %1362 = vmatpush2.msra.mxu0 0.0
      %1363 = vmatprep.subr.mxu0 0.0
      %1364 = vmatpush2.msra.mxu0 0.0
      %1365 = vmatprep.subr.mxu0 0.0
      %1366 = vmatpush2.msra.mxu0 0.0
      %1367 = vmatprep.subr.mxu0 0.0
      %1368 = vmatpush2.msra.mxu0 0.0
      %1369 = vmatprep.mubr.f32.mxu0 0.0
      %1370 = vmatmul.mubr.f32.gmra.mxu0 %v1300
      %v1371 = vpop.f32.mrf.mxu0
      %v1372 = vadd.f32 0.0, %v1371
      %v1373 = vpop.f32.mrf.mxu0
      %1374 = vmatprep.mubr.f32.mxu0 0.0
      %1375 = vmatmul.mubr.f32.gmra.mxu0 %v1303
      %v1376 = vpop.f32.mrf.mxu0
      %v1377 = vadd.f32 0.0, %v1376
      %v1378 = vpop.f32.mrf.mxu0
      %1379 = vdwg.mxu0
      %v1381 = vsel %vm905, %v1091, 0
      %v1384 = vsel %vm905, %v1096, 0
      %1386 = vmatprep.subr.mxu0 0.0
      %1387 = vmatpush1.msra.mxu0 0.0
      %1388 = vmatprep.subr.mxu0 0.0
      %1389 = vmatpush1.msra.mxu0 0.0
      %1390 = vmatprep.subr.mxu0 0.0
      %1391 = vmatpush1.msra.mxu0 0.0
      %1392 = vmatprep.subr.mxu0 0.0
      %1393 = vmatpush1.msra.mxu0 0.0
      %1394 = vmatprep.subr.mxu0 0.0
      %1395 = vmatpush1.msra.mxu0 0.0
      %1396 = vmatprep.subr.mxu0 0.0
      %1397 = vmatpush1.msra.mxu0 0.0
      %1398 = vmatprep.subr.mxu0 0.0
      %1399 = vmatpush1.msra.mxu0 0.0
      %1400 = vmatprep.subr.mxu0 0.0
      %1401 = vmatpush1.msra.mxu0 0.0
      %1402 = vmatprep.subr.mxu0 0.0
      %1403 = vmatpush1.msra.mxu0 0.0
      %1404 = vmatprep.subr.mxu0 0.0
      %1405 = vmatpush1.msra.mxu0 0.0
      %1406 = vmatprep.subr.mxu0 0.0
      %1407 = vmatpush1.msra.mxu0 0.0
      %1408 = vmatprep.subr.mxu0 0.0
      %1409 = vmatpush1.msra.mxu0 0.0
      %1410 = vmatprep.subr.mxu0 0.0
      %1411 = vmatpush1.msra.mxu0 0.0
      %1412 = vmatprep.subr.mxu0 0.0
      %1413 = vmatpush1.msra.mxu0 0.0
      %1414 = vmatprep.subr.mxu0 0.0
      %1415 = vmatpush1.msra.mxu0 0.0
      %1416 = vmatprep.subr.mxu0 0.0
      %1417 = vmatpush1.msra.mxu0 %v894
      %1418 = vmatprep.subr.mxu0 0.0
      %1419 = vmatpush2.msra.mxu0 0.0
      %1420 = vmatprep.subr.mxu0 0.0
      %1421 = vmatpush2.msra.mxu0 0.0
      %1422 = vmatprep.subr.mxu0 0.0
      %1423 = vmatpush2.msra.mxu0 0.0
      %1424 = vmatprep.subr.mxu0 0.0
      %1425 = vmatpush2.msra.mxu0 0.0
      %1426 = vmatprep.subr.mxu0 0.0
      %1427 = vmatpush2.msra.mxu0 0.0
      %1428 = vmatprep.subr.mxu0 0.0
      %1429 = vmatpush2.msra.mxu0 0.0
      %1430 = vmatprep.subr.mxu0 0.0
      %1431 = vmatpush2.msra.mxu0 0.0
      %1432 = vmatprep.subr.mxu0 0.0
      %1433 = vmatpush2.msra.mxu0 0.0
      %1434 = vmatprep.subr.mxu0 0.0
      %1435 = vmatpush2.msra.mxu0 0.0
      %1436 = vmatprep.subr.mxu0 0.0
      %1437 = vmatpush2.msra.mxu0 0.0
      %1438 = vmatprep.subr.mxu0 0.0
      %1439 = vmatpush2.msra.mxu0 0.0
      %1440 = vmatprep.subr.mxu0 0.0
      %1441 = vmatpush2.msra.mxu0 0.0
      %1442 = vmatprep.subr.mxu0 0.0
      %1443 = vmatpush2.msra.mxu0 0.0
      %1444 = vmatprep.subr.mxu0 0.0
      %1445 = vmatpush2.msra.mxu0 0.0
      %1446 = vmatprep.subr.mxu0 0.0
      %1447 = vmatpush2.msra.mxu0 0.0
      %1448 = vmatprep.subr.mxu0 0.0
      %1449 = vmatpush2.msra.mxu0 0.0
      %1450 = vmatprep.mubr.f32.mxu0 0.0
      %1451 = vmatmul.mubr.f32.gmra.mxu0 %v1381
      %v1452 = vpop.f32.mrf.mxu0
      %v1453 = vadd.f32 %v1372, %v1452
      %v1454 = vpop.f32.mrf.mxu0
      %1455 = vmatprep.mubr.f32.mxu0 0.0
      %1456 = vmatmul.mubr.f32.gmra.mxu0 %v1384
      %v1457 = vpop.f32.mrf.mxu0
      %v1458 = vadd.f32 %v1377, %v1457
      %v1459 = vpop.f32.mrf.mxu0
      %1460 = vdwg.mxu0
      %1461 = vrot.lane.b32.xlu0 %v886, 112
      %v1462 = vpop.permute.xlu0 %1461
      %1463 = vrot.lane.b32.xlu0 %v891, 112
      %v1464 = vpop.permute.xlu0 %1463
      %1465 = vrot.lane.b32.xlu0 %v886, 80
      %v1466 = vpop.permute.xlu0 %1465
      %1467 = vrot.lane.b32.xlu0 %v891, 80
      %v1468 = vpop.permute.xlu0 %1467
      %v1469 = vsel %vm905, %v1462, 0
      %v1471 = vsel %vm905, %v1464, 0
      %v1473 = vsel %vm905, %v1466, 0
      %v1475 = vsel %vm905, %v1468, 0
      %1477 = vmatprep.subr.mxu0 0.0
      %1478 = vmatpush1.xpose.msra.mxu0 0.0
      %1479 = vmatprep.subr.mxu0 0.0
      %1480 = vmatpush1.xpose.msra.mxu0 0.0
      %1481 = vmatprep.subr.mxu0 0.0
      %1482 = vmatpush1.xpose.msra.mxu0 0.0
      %1483 = vmatprep.subr.mxu0 0.0
      %1484 = vmatpush1.xpose.msra.mxu0 0.0
      %1485 = vmatprep.subr.mxu0 0.0
      %1486 = vmatpush1.xpose.msra.mxu0 0.0
      %1487 = vmatprep.subr.mxu0 0.0
      %1488 = vmatpush1.xpose.msra.mxu0 0.0
      %1489 = vmatprep.subr.mxu0 0.0
      %1490 = vmatpush1.xpose.msra.mxu0 0.0
      %1491 = vmatprep.subr.mxu0 0.0
      %1492 = vmatpush1.xpose.msra.mxu0 0.0
      %1493 = vmatprep.subr.mxu0 0.0
      %1494 = vmatpush1.xpose.msra.mxu0 0.0
      %1495 = vmatprep.subr.mxu0 0.0
      %1496 = vmatpush1.xpose.msra.mxu0 0.0
      %1497 = vmatprep.subr.mxu0 0.0
      %1498 = vmatpush1.xpose.msra.mxu0 0.0
      %1499 = vmatprep.subr.mxu0 0.0
      %1500 = vmatpush1.xpose.msra.mxu0 0.0
      %1501 = vmatprep.subr.mxu0 0.0
      %1502 = vmatpush1.xpose.msra.mxu0 0.0
      %1503 = vmatprep.subr.mxu0 0.0
      %1504 = vmatpush1.xpose.msra.mxu0 0.0
      %1505 = vmatprep.subr.mxu0 0.0
      %1506 = vmatpush1.xpose.msra.mxu0 %v1475
      %1507 = vmatprep.subr.mxu0 0.0
      %1508 = vmatpush1.xpose.msra.mxu0 %v1473
      %1509 = vmatprep.subr.mxu0 0.0
      %1510 = vmatpush2.xpose.msra.mxu0 0.0
      %1511 = vmatprep.subr.mxu0 0.0
      %1512 = vmatpush2.xpose.msra.mxu0 0.0
      %1513 = vmatprep.subr.mxu0 0.0
      %1514 = vmatpush2.xpose.msra.mxu0 0.0
      %1515 = vmatprep.subr.mxu0 0.0
      %1516 = vmatpush2.xpose.msra.mxu0 0.0
      %1517 = vmatprep.subr.mxu0 0.0
      %1518 = vmatpush2.xpose.msra.mxu0 0.0
      %1519 = vmatprep.subr.mxu0 0.0
      %1520 = vmatpush2.xpose.msra.mxu0 0.0
      %1521 = vmatprep.subr.mxu0 0.0
      %1522 = vmatpush2.xpose.msra.mxu0 0.0
      %1523 = vmatprep.subr.mxu0 0.0
      %1524 = vmatpush2.xpose.msra.mxu0 0.0
      %1525 = vmatprep.subr.mxu0 0.0
      %1526 = vmatpush2.xpose.msra.mxu0 0.0
      %1527 = vmatprep.subr.mxu0 0.0
      %1528 = vmatpush2.xpose.msra.mxu0 0.0
      %1529 = vmatprep.subr.mxu0 0.0
      %1530 = vmatpush2.xpose.msra.mxu0 0.0
      %1531 = vmatprep.subr.mxu0 0.0
      %1532 = vmatpush2.xpose.msra.mxu0 0.0
      %1533 = vmatprep.subr.mxu0 0.0
      %1534 = vmatpush2.xpose.msra.mxu0 0.0
      %1535 = vmatprep.subr.mxu0 0.0
      %1536 = vmatpush2.xpose.msra.mxu0 0.0
      %1537 = vmatprep.subr.mxu0 0.0
      %1538 = vmatpush2.xpose.msra.mxu0 0.0
      %1539 = vmatprep.subr.mxu0 0.0
      %1540 = vmatpush2.xpose.msra.mxu0 0.0
      %1541 = vmatprep.mubr.f32.mxu0 0.0
      %1542 = vmatmul.mubr.f32.gmra.mxu0 %v1469
      %v1543 = vpop.f32.mrf.mxu0
      %v1544 = vadd.f32 0.0, %v1543
      %v1545 = vpop.f32.mrf.mxu0
      %1546 = vmatprep.mubr.f32.mxu0 0.0
      %1547 = vmatmul.mubr.f32.gmra.mxu0 %v1471
      %v1548 = vpop.f32.mrf.mxu0
      %v1549 = vadd.f32 0.0, %v1548
      %v1550 = vpop.f32.mrf.mxu0
      %1551 = vdwg.mxu0
      %v1552 = vsel %vm989, %v1544, -inf
      %1553 = vmax.xlane.f32.xlu0 %v1552
      %v1554 = vpop.xlane.xlu0 %1553
      %v1555 = vsel %vm989, %v1549, -inf
      %1556 = vmax.xlane.f32.xlu0 %v1555
      %v1557 = vpop.xlane.xlu0 %1556
      %v1558 = vsub.f32 %v1544, %v1554
      %v1559 = vsub.f32 %v1549, %v1557
      %v1560 = vmul.f32 %v1558, 1.442695
      %v1561 = vpow.pop %v1560
      %v1562 = vmul.f32 %v1559, 1.442695
      %v1563 = vpow.pop %v1562
      %v1564 = vsel %vm989, %v1561, 0.0
      %1565 = vadd.xlane.f32.xlu0 %v1564
      %v1566 = vpop.xlane.xlu0 %1565
      %v1567 = vsel %vm989, %v1563, 0.0
      %1568 = vadd.xlane.f32.xlu0 %v1567
      %v1569 = vpop.xlane.xlu0 %1568
      %v1570 = vrcp.pop %v1566
      %v1571 = vrcp.pop %v1569
      %v1572 = vmul.f32 %v1561, %v1570
      %v1573 = vmul.f32 %v1563, %v1571
      %1574 = vrot.lane.b32.xlu0 %v886, 48
      %v1575 = vpop.permute.xlu0 %1574
      %1576 = vrot.lane.b32.xlu0 %v891, 48
      %v1577 = vpop.permute.xlu0 %1576
      %v1581 = vsel %vm989, %v1572, 0
      %v1584 = vsel %vm989, %v1573, 0
      %1586 = vmatprep.subr.mxu0 0.0
      %1587 = vmatpush1.msra.mxu0 0.0
      %1588 = vmatprep.subr.mxu0 0.0
      %1589 = vmatpush1.msra.mxu0 0.0
      %1590 = vmatprep.subr.mxu0 0.0
      %1591 = vmatpush1.msra.mxu0 0.0
      %1592 = vmatprep.subr.mxu0 0.0
      %1593 = vmatpush1.msra.mxu0 0.0
      %1594 = vmatprep.subr.mxu0 0.0
      %1595 = vmatpush1.msra.mxu0 0.0
      %1596 = vmatprep.subr.mxu0 0.0
      %1597 = vmatpush1.msra.mxu0 0.0
      %1598 = vmatprep.subr.mxu0 0.0
      %1599 = vmatpush1.msra.mxu0 0.0
      %1600 = vmatprep.subr.mxu0 0.0
      %1601 = vmatpush1.msra.mxu0 0.0
      %1602 = vmatprep.subr.mxu0 0.0
      %1603 = vmatpush1.msra.mxu0 0.0
      %1604 = vmatprep.subr.mxu0 0.0
      %1605 = vmatpush1.msra.mxu0 0.0
      %1606 = vmatprep.subr.mxu0 0.0
      %1607 = vmatpush1.msra.mxu0 0.0
      %1608 = vmatprep.subr.mxu0 0.0
      %1609 = vmatpush1.msra.mxu0 0.0
      %1610 = vmatprep.subr.mxu0 0.0
      %1611 = vmatpush1.msra.mxu0 0.0
      %1612 = vmatprep.subr.mxu0 0.0
      %1613 = vmatpush1.msra.mxu0 0.0
      %1614 = vmatprep.subr.mxu0 0.0
      %1615 = vmatpush1.msra.mxu0 %v1577
      %1616 = vmatprep.subr.mxu0 0.0
      %1617 = vmatpush1.msra.mxu0 %v1575
      %1618 = vmatprep.subr.mxu0 0.0
      %1619 = vmatpush2.msra.mxu0 0.0
      %1620 = vmatprep.subr.mxu0 0.0
      %1621 = vmatpush2.msra.mxu0 0.0
      %1622 = vmatprep.subr.mxu0 0.0
      %1623 = vmatpush2.msra.mxu0 0.0
      %1624 = vmatprep.subr.mxu0 0.0
      %1625 = vmatpush2.msra.mxu0 0.0
      %1626 = vmatprep.subr.mxu0 0.0
      %1627 = vmatpush2.msra.mxu0 0.0
      %1628 = vmatprep.subr.mxu0 0.0
      %1629 = vmatpush2.msra.mxu0 0.0
      %1630 = vmatprep.subr.mxu0 0.0
      %1631 = vmatpush2.msra.mxu0 0.0
      %1632 = vmatprep.subr.mxu0 0.0
      %1633 = vmatpush2.msra.mxu0 0.0
      %1634 = vmatprep.subr.mxu0 0.0
      %1635 = vmatpush2.msra.mxu0 0.0
      %1636 = vmatprep.subr.mxu0 0.0
      %1637 = vmatpush2.msra.mxu0 0.0
      %1638 = vmatprep.subr.mxu0 0.0
      %1639 = vmatpush2.msra.mxu0 0.0
      %1640 = vmatprep.subr.mxu0 0.0
      %1641 = vmatpush2.msra.mxu0 0.0
      %1642 = vmatprep.subr.mxu0 0.0
      %1643 = vmatpush2.msra.mxu0 0.0
      %1644 = vmatprep.subr.mxu0 0.0
      %1645 = vmatpush2.msra.mxu0 0.0
      %1646 = vmatprep.subr.mxu0 0.0
      %1647 = vmatpush2.msra.mxu0 0.0
      %1648 = vmatprep.subr.mxu0 0.0
      %1649 = vmatpush2.msra.mxu0 0.0
      %1650 = vmatprep.mubr.f32.mxu0 0.0
      %1651 = vmatmul.mubr.f32.gmra.mxu0 %v1581
      %v1652 = vpop.f32.mrf.mxu0
      %v1653 = vadd.f32 0.0, %v1652
      %v1654 = vpop.f32.mrf.mxu0
      %1655 = vmatprep.mubr.f32.mxu0 0.0
      %1656 = vmatmul.mubr.f32.gmra.mxu0 %v1584
      %v1657 = vpop.f32.mrf.mxu0
      %v1658 = vadd.f32 0.0, %v1657
      %v1659 = vpop.f32.mrf.mxu0
      %1660 = vdwg.mxu0
      %v1662 = vsel %vm905, %v1653, 0
      %v1665 = vsel %vm905, %v1658, 0
      %1667 = vmatprep.subr.mxu0 0.0
      %1668 = vmatpush1.msra.mxu0 0.0
      %1669 = vmatprep.subr.mxu0 0.0
      %1670 = vmatpush1.msra.mxu0 0.0
      %1671 = vmatprep.subr.mxu0 0.0
      %1672 = vmatpush1.msra.mxu0 0.0
      %1673 = vmatprep.subr.mxu0 0.0
      %1674 = vmatpush1.msra.mxu0 0.0
      %1675 = vmatprep.subr.mxu0 0.0
      %1676 = vmatpush1.msra.mxu0 0.0
      %1677 = vmatprep.subr.mxu0 0.0
      %1678 = vmatpush1.msra.mxu0 0.0
      %1679 = vmatprep.subr.mxu0 0.0
      %1680 = vmatpush1.msra.mxu0 0.0
      %1681 = vmatprep.subr.mxu0 0.0
      %1682 = vmatpush1.msra.mxu0 0.0
      %1683 = vmatprep.subr.mxu0 0.0
      %1684 = vmatpush1.msra.mxu0 0.0
      %1685 = vmatprep.subr.mxu0 0.0
      %1686 = vmatpush1.msra.mxu0 0.0
      %1687 = vmatprep.subr.mxu0 0.0
      %1688 = vmatpush1.msra.mxu0 0.0
      %1689 = vmatprep.subr.mxu0 0.0
      %1690 = vmatpush1.msra.mxu0 0.0
      %1691 = vmatprep.subr.mxu0 0.0
      %1692 = vmatpush1.msra.mxu0 0.0
      %1693 = vmatprep.subr.mxu0 0.0
      %1694 = vmatpush1.msra.mxu0 0.0
      %1695 = vmatprep.subr.mxu0 0.0
      %1696 = vmatpush1.msra.mxu0 0.0
      %1697 = vmatprep.subr.mxu0 0.0
      %1698 = vmatpush1.msra.mxu0 %v896
      %1699 = vmatprep.subr.mxu0 0.0
      %1700 = vmatpush2.msra.mxu0 0.0
      %1701 = vmatprep.subr.mxu0 0.0
      %1702 = vmatpush2.msra.mxu0 0.0
      %1703 = vmatprep.subr.mxu0 0.0
      %1704 = vmatpush2.msra.mxu0 0.0
      %1705 = vmatprep.subr.mxu0 0.0
      %1706 = vmatpush2.msra.mxu0 0.0
      %1707 = vmatprep.subr.mxu0 0.0
      %1708 = vmatpush2.msra.mxu0 0.0
      %1709 = vmatprep.subr.mxu0 0.0
      %1710 = vmatpush2.msra.mxu0 0.0
      %1711 = vmatprep.subr.mxu0 0.0
      %1712 = vmatpush2.msra.mxu0 0.0
      %1713 = vmatprep.subr.mxu0 0.0
      %1714 = vmatpush2.msra.mxu0 0.0
      %1715 = vmatprep.subr.mxu0 0.0
      %1716 = vmatpush2.msra.mxu0 0.0
      %1717 = vmatprep.subr.mxu0 0.0
      %1718 = vmatpush2.msra.mxu0 0.0
      %1719 = vmatprep.subr.mxu0 0.0
      %1720 = vmatpush2.msra.mxu0 0.0
      %1721 = vmatprep.subr.mxu0 0.0
      %1722 = vmatpush2.msra.mxu0 0.0
      %1723 = vmatprep.subr.mxu0 0.0
      %1724 = vmatpush2.msra.mxu0 0.0
      %1725 = vmatprep.subr.mxu0 0.0
      %1726 = vmatpush2.msra.mxu0 0.0
      %1727 = vmatprep.subr.mxu0 0.0
      %1728 = vmatpush2.msra.mxu0 0.0
      %1729 = vmatprep.subr.mxu0 0.0
      %1730 = vmatpush2.msra.mxu0 0.0
      %1731 = vmatprep.mubr.f32.mxu0 0.0
      %1732 = vmatmul.mubr.f32.gmra.mxu0 %v1662
      %v1733 = vpop.f32.mrf.mxu0
      %v1734 = vadd.f32 0.0, %v1733
      %v1735 = vpop.f32.mrf.mxu0
      %1736 = vmatprep.mubr.f32.mxu0 0.0
      %1737 = vmatmul.mubr.f32.gmra.mxu0 %v1665
      %v1738 = vpop.f32.mrf.mxu0
      %v1739 = vadd.f32 0.0, %v1738
      %v1740 = vpop.f32.mrf.mxu0
      %1741 = vdwg.mxu0
      %v1742 = vadd.f32 %v1453, %v1734
      %v1743 = vadd.f32 %v1458, %v1739
      %1744 = vrot.lane.b32.xlu0 %v886, 104
      %v1745 = vpop.permute.xlu0 %1744
      %1746 = vrot.lane.b32.xlu0 %v891, 104
      %v1747 = vpop.permute.xlu0 %1746
      %1748 = vrot.lane.b32.xlu0 %v886, 72
      %v1749 = vpop.permute.xlu0 %1748
      %1750 = vrot.lane.b32.xlu0 %v891, 72
      %v1751 = vpop.permute.xlu0 %1750
      %v1752 = vsel %vm905, %v1745, 0
      %v1754 = vsel %vm905, %v1747, 0
      %v1756 = vsel %vm905, %v1749, 0
      %v1758 = vsel %vm905, %v1751, 0
      %1760 = vmatprep.subr.mxu0 0.0
      %1761 = vmatpush1.xpose.msra.mxu0 0.0
      %1762 = vmatprep.subr.mxu0 0.0
      %1763 = vmatpush1.xpose.msra.mxu0 0.0
      %1764 = vmatprep.subr.mxu0 0.0
      %1765 = vmatpush1.xpose.msra.mxu0 0.0
      %1766 = vmatprep.subr.mxu0 0.0
      %1767 = vmatpush1.xpose.msra.mxu0 0.0
      %1768 = vmatprep.subr.mxu0 0.0
      %1769 = vmatpush1.xpose.msra.mxu0 0.0
      %1770 = vmatprep.subr.mxu0 0.0
      %1771 = vmatpush1.xpose.msra.mxu0 0.0
      %1772 = vmatprep.subr.mxu0 0.0
      %1773 = vmatpush1.xpose.msra.mxu0 0.0
      %1774 = vmatprep.subr.mxu0 0.0
      %1775 = vmatpush1.xpose.msra.mxu0 0.0
      %1776 = vmatprep.subr.mxu0 0.0
      %1777 = vmatpush1.xpose.msra.mxu0 0.0
      %1778 = vmatprep.subr.mxu0 0.0
      %1779 = vmatpush1.xpose.msra.mxu0 0.0
      %1780 = vmatprep.subr.mxu0 0.0
      %1781 = vmatpush1.xpose.msra.mxu0 0.0
      %1782 = vmatprep.subr.mxu0 0.0
      %1783 = vmatpush1.xpose.msra.mxu0 0.0
      %1784 = vmatprep.subr.mxu0 0.0
      %1785 = vmatpush1.xpose.msra.mxu0 0.0
      %1786 = vmatprep.subr.mxu0 0.0
      %1787 = vmatpush1.xpose.msra.mxu0 0.0
      %1788 = vmatprep.subr.mxu0 0.0
      %1789 = vmatpush1.xpose.msra.mxu0 %v1758
      %1790 = vmatprep.subr.mxu0 0.0
      %1791 = vmatpush1.xpose.msra.mxu0 %v1756
      %1792 = vmatprep.subr.mxu0 0.0
      %1793 = vmatpush2.xpose.msra.mxu0 0.0
      %1794 = vmatprep.subr.mxu0 0.0
      %1795 = vmatpush2.xpose.msra.mxu0 0.0
      %1796 = vmatprep.subr.mxu0 0.0
      %1797 = vmatpush2.xpose.msra.mxu0 0.0
      %1798 = vmatprep.subr.mxu0 0.0
      %1799 = vmatpush2.xpose.msra.mxu0 0.0
      %1800 = vmatprep.subr.mxu0 0.0
      %1801 = vmatpush2.xpose.msra.mxu0 0.0
      %1802 = vmatprep.subr.mxu0 0.0
      %1803 = vmatpush2.xpose.msra.mxu0 0.0
      %1804 = vmatprep.subr.mxu0 0.0
      %1805 = vmatpush2.xpose.msra.mxu0 0.0
      %1806 = vmatprep.subr.mxu0 0.0
      %1807 = vmatpush2.xpose.msra.mxu0 0.0
      %1808 = vmatprep.subr.mxu0 0.0
      %1809 = vmatpush2.xpose.msra.mxu0 0.0
      %1810 = vmatprep.subr.mxu0 0.0
      %1811 = vmatpush2.xpose.msra.mxu0 0.0
      %1812 = vmatprep.subr.mxu0 0.0
      %1813 = vmatpush2.xpose.msra.mxu0 0.0
      %1814 = vmatprep.subr.mxu0 0.0
      %1815 = vmatpush2.xpose.msra.mxu0 0.0
      %1816 = vmatprep.subr.mxu0 0.0
      %1817 = vmatpush2.xpose.msra.mxu0 0.0
      %1818 = vmatprep.subr.mxu0 0.0
      %1819 = vmatpush2.xpose.msra.mxu0 0.0
      %1820 = vmatprep.subr.mxu0 0.0
      %1821 = vmatpush2.xpose.msra.mxu0 0.0
      %1822 = vmatprep.subr.mxu0 0.0
      %1823 = vmatpush2.xpose.msra.mxu0 0.0
      %1824 = vmatprep.mubr.f32.mxu0 0.0
      %1825 = vmatmul.mubr.f32.gmra.mxu0 %v1752
      %v1826 = vpop.f32.mrf.mxu0
      %v1827 = vadd.f32 0.0, %v1826
      %v1828 = vpop.f32.mrf.mxu0
      %1829 = vmatprep.mubr.f32.mxu0 0.0
      %1830 = vmatmul.mubr.f32.gmra.mxu0 %v1754
      %v1831 = vpop.f32.mrf.mxu0
      %v1832 = vadd.f32 0.0, %v1831
      %v1833 = vpop.f32.mrf.mxu0
      %1834 = vdwg.mxu0
      %v1835 = vsel %vm989, %v1827, -inf
      %1836 = vmax.xlane.f32.xlu0 %v1835
      %v1837 = vpop.xlane.xlu0 %1836
      %v1838 = vsel %vm989, %v1832, -inf
      %1839 = vmax.xlane.f32.xlu0 %v1838
      %v1840 = vpop.xlane.xlu0 %1839
      %v1841 = vsub.f32 %v1827, %v1837
      %v1842 = vsub.f32 %v1832, %v1840
      %v1843 = vmul.f32 %v1841, 1.442695
      %v1844 = vpow.pop %v1843
      %v1845 = vmul.f32 %v1842, 1.442695
      %v1846 = vpow.pop %v1845
      %v1847 = vsel %vm989, %v1844, 0.0
      %1848 = vadd.xlane.f32.xlu0 %v1847
      %v1849 = vpop.xlane.xlu0 %1848
      %v1850 = vsel %vm989, %v1846, 0.0
      %1851 = vadd.xlane.f32.xlu0 %v1850
      %v1852 = vpop.xlane.xlu0 %1851
      %v1853 = vrcp.pop %v1849
      %v1854 = vrcp.pop %v1852
      %v1855 = vmul.f32 %v1844, %v1853
      %v1856 = vmul.f32 %v1846, %v1854
      %1857 = vrot.lane.b32.xlu0 %v886, 40
      %v1858 = vpop.permute.xlu0 %1857
      %1859 = vrot.lane.b32.xlu0 %v891, 40
      %v1860 = vpop.permute.xlu0 %1859
      %v1864 = vsel %vm989, %v1855, 0
      %v1867 = vsel %vm989, %v1856, 0
      %1869 = vmatprep.subr.mxu0 0.0
      %1870 = vmatpush1.msra.mxu0 0.0
      %1871 = vmatprep.subr.mxu0 0.0
      %1872 = vmatpush1.msra.mxu0 0.0
      %1873 = vmatprep.subr.mxu0 0.0
      %1874 = vmatpush1.msra.mxu0 0.0
      %1875 = vmatprep.subr.mxu0 0.0
      %1876 = vmatpush1.msra.mxu0 0.0
      %1877 = vmatprep.subr.mxu0 0.0
      %1878 = vmatpush1.msra.mxu0 0.0
      %1879 = vmatprep.subr.mxu0 0.0
      %1880 = vmatpush1.msra.mxu0 0.0
      %1881 = vmatprep.subr.mxu0 0.0
      %1882 = vmatpush1.msra.mxu0 0.0
      %1883 = vmatprep.subr.mxu0 0.0
      %1884 = vmatpush1.msra.mxu0 0.0
      %1885 = vmatprep.subr.mxu0 0.0
      %1886 = vmatpush1.msra.mxu0 0.0
      %1887 = vmatprep.subr.mxu0 0.0
      %1888 = vmatpush1.msra.mxu0 0.0
      %1889 = vmatprep.subr.mxu0 0.0
      %1890 = vmatpush1.msra.mxu0 0.0
      %1891 = vmatprep.subr.mxu0 0.0
      %1892 = vmatpush1.msra.mxu0 0.0
      %1893 = vmatprep.subr.mxu0 0.0
      %1894 = vmatpush1.msra.mxu0 0.0
      %1895 = vmatprep.subr.mxu0 0.0
      %1896 = vmatpush1.msra.mxu0 0.0
      %1897 = vmatprep.subr.mxu0 0.0
      %1898 = vmatpush1.msra.mxu0 %v1860
      %1899 = vmatprep.subr.mxu0 0.0
      %1900 = vmatpush1.msra.mxu0 %v1858
      %1901 = vmatprep.subr.mxu0 0.0
      %1902 = vmatpush2.msra.mxu0 0.0
      %1903 = vmatprep.subr.mxu0 0.0
      %1904 = vmatpush2.msra.mxu0 0.0
      %1905 = vmatprep.subr.mxu0 0.0
      %1906 = vmatpush2.msra.mxu0 0.0
      %1907 = vmatprep.subr.mxu0 0.0
      %1908 = vmatpush2.msra.mxu0 0.0
      %1909 = vmatprep.subr.mxu0 0.0
      %1910 = vmatpush2.msra.mxu0 0.0
      %1911 = vmatprep.subr.mxu0 0.0
      %1912 = vmatpush2.msra.mxu0 0.0
      %1913 = vmatprep.subr.mxu0 0.0
      %1914 = vmatpush2.msra.mxu0 0.0
      %1915 = vmatprep.subr.mxu0 0.0
      %1916 = vmatpush2.msra.mxu0 0.0
      %1917 = vmatprep.subr.mxu0 0.0
      %1918 = vmatpush2.msra.mxu0 0.0
      %1919 = vmatprep.subr.mxu0 0.0
      %1920 = vmatpush2.msra.mxu0 0.0
      %1921 = vmatprep.subr.mxu0 0.0
      %1922 = vmatpush2.msra.mxu0 0.0
      %1923 = vmatprep.subr.mxu0 0.0
      %1924 = vmatpush2.msra.mxu0 0.0
      %1925 = vmatprep.subr.mxu0 0.0
      %1926 = vmatpush2.msra.mxu0 0.0
      %1927 = vmatprep.subr.mxu0 0.0
      %1928 = vmatpush2.msra.mxu0 0.0
      %1929 = vmatprep.subr.mxu0 0.0
      %1930 = vmatpush2.msra.mxu0 0.0
      %1931 = vmatprep.subr.mxu0 0.0
      %1932 = vmatpush2.msra.mxu0 0.0
      %1933 = vmatprep.mubr.f32.mxu0 0.0
      %1934 = vmatmul.mubr.f32.gmra.mxu0 %v1864
      %v1935 = vpop.f32.mrf.mxu0
      %v1936 = vadd.f32 0.0, %v1935
      %v1937 = vpop.f32.mrf.mxu0
      %1938 = vmatprep.mubr.f32.mxu0 0.0
      %1939 = vmatmul.mubr.f32.gmra.mxu0 %v1867
      %v1940 = vpop.f32.mrf.mxu0
      %v1941 = vadd.f32 0.0, %v1940
      %v1942 = vpop.f32.mrf.mxu0
      %1943 = vdwg.mxu0
      %v1945 = vsel %vm905, %v1936, 0
      %v1948 = vsel %vm905, %v1941, 0
      %1950 = vmatprep.subr.mxu0 0.0
      %1951 = vmatpush1.msra.mxu0 0.0
      %1952 = vmatprep.subr.mxu0 0.0
      %1953 = vmatpush1.msra.mxu0 0.0
      %1954 = vmatprep.subr.mxu0 0.0
      %1955 = vmatpush1.msra.mxu0 0.0
      %1956 = vmatprep.subr.mxu0 0.0
      %1957 = vmatpush1.msra.mxu0 0.0
      %1958 = vmatprep.subr.mxu0 0.0
      %1959 = vmatpush1.msra.mxu0 0.0
      %1960 = vmatprep.subr.mxu0 0.0
      %1961 = vmatpush1.msra.mxu0 0.0
      %1962 = vmatprep.subr.mxu0 0.0
      %1963 = vmatpush1.msra.mxu0 0.0
      %1964 = vmatprep.subr.mxu0 0.0
      %1965 = vmatpush1.msra.mxu0 0.0
      %1966 = vmatprep.subr.mxu0 0.0
      %1967 = vmatpush1.msra.mxu0 0.0
      %1968 = vmatprep.subr.mxu0 0.0
      %1969 = vmatpush1.msra.mxu0 0.0
      %1970 = vmatprep.subr.mxu0 0.0
      %1971 = vmatpush1.msra.mxu0 0.0
      %1972 = vmatprep.subr.mxu0 0.0
      %1973 = vmatpush1.msra.mxu0 0.0
      %1974 = vmatprep.subr.mxu0 0.0
      %1975 = vmatpush1.msra.mxu0 0.0
      %1976 = vmatprep.subr.mxu0 0.0
      %1977 = vmatpush1.msra.mxu0 0.0
      %1978 = vmatprep.subr.mxu0 0.0
      %1979 = vmatpush1.msra.mxu0 0.0
      %1980 = vmatprep.subr.mxu0 0.0
      %1981 = vmatpush1.msra.mxu0 %v897
      %1982 = vmatprep.subr.mxu0 0.0
      %1983 = vmatpush2.msra.mxu0 0.0
      %1984 = vmatprep.subr.mxu0 0.0
      %1985 = vmatpush2.msra.mxu0 0.0
      %1986 = vmatprep.subr.mxu0 0.0
      %1987 = vmatpush2.msra.mxu0 0.0
      %1988 = vmatprep.subr.mxu0 0.0
      %1989 = vmatpush2.msra.mxu0 0.0
      %1990 = vmatprep.subr.mxu0 0.0
      %1991 = vmatpush2.msra.mxu0 0.0
      %1992 = vmatprep.subr.mxu0 0.0
      %1993 = vmatpush2.msra.mxu0 0.0
      %1994 = vmatprep.subr.mxu0 0.0
      %1995 = vmatpush2.msra.mxu0 0.0
      %1996 = vmatprep.subr.mxu0 0.0
      %1997 = vmatpush2.msra.mxu0 0.0
      %1998 = vmatprep.subr.mxu0 0.0
      %1999 = vmatpush2.msra.mxu0 0.0
      %2000 = vmatprep.subr.mxu0 0.0
      %2001 = vmatpush2.msra.mxu0 0.0
      %2002 = vmatprep.subr.mxu0 0.0
      %2003 = vmatpush2.msra.mxu0 0.0
      %2004 = vmatprep.subr.mxu0 0.0
      %2005 = vmatpush2.msra.mxu0 0.0
      %2006 = vmatprep.subr.mxu0 0.0
      %2007 = vmatpush2.msra.mxu0 0.0
      %2008 = vmatprep.subr.mxu0 0.0
      %2009 = vmatpush2.msra.mxu0 0.0
      %2010 = vmatprep.subr.mxu0 0.0
      %2011 = vmatpush2.msra.mxu0 0.0
      %2012 = vmatprep.subr.mxu0 0.0
      %2013 = vmatpush2.msra.mxu0 0.0
      %2014 = vmatprep.mubr.f32.mxu0 0.0
      %2015 = vmatmul.mubr.f32.gmra.mxu0 %v1945
      %v2016 = vpop.f32.mrf.mxu0
      %v2017 = vadd.f32 0.0, %v2016
      %v2018 = vpop.f32.mrf.mxu0
      %2019 = vmatprep.mubr.f32.mxu0 0.0
      %2020 = vmatmul.mubr.f32.gmra.mxu0 %v1948
      %v2021 = vpop.f32.mrf.mxu0
      %v2022 = vadd.f32 0.0, %v2021
      %v2023 = vpop.f32.mrf.mxu0
      %2024 = vdwg.mxu0
      %v2025 = vadd.f32 %v1742, %v2017
      %v2026 = vadd.f32 %v1743, %v2022
      %v2028 = vlaneseq
      %v2029 = vshrl.u32 %v2028, 7
      %v2030 = vsub.s32 0, %v2029
      %v2031 = vrot.slane %v898, %v2030
      %v2033 = vadd.f32 %v2025, %v2031
      %v2034 = vadd.f32 %v2026, %v2031
      %v2035 = vadd.f32 %v791, %v2033
      %v2036 = vadd.f32 %v792, %v2034
      %v2038 = vsel %vm989, %v795, 0
      %v2041 = vsel %vm989, %v796, 0
      %2043 = vmatprep.subr.mxu0 0.0
      %2044 = vmatpush1.msra.mxu0 0.0
      %2045 = vmatprep.subr.mxu0 0.0
      %2046 = vmatpush1.msra.mxu0 0.0
      %2047 = vmatprep.subr.mxu0 0.0
      %2048 = vmatpush1.msra.mxu0 0.0
      %2049 = vmatprep.subr.mxu0 0.0
      %2050 = vmatpush1.msra.mxu0 0.0
      %2051 = vmatprep.subr.mxu0 0.0
      %2052 = vmatpush1.msra.mxu0 0.0
      %2053 = vmatprep.subr.mxu0 0.0
      %2054 = vmatpush1.msra.mxu0 0.0
      %2055 = vmatprep.subr.mxu0 0.0
      %2056 = vmatpush1.msra.mxu0 0.0
      %2057 = vmatprep.subr.mxu0 0.0
      %2058 = vmatpush1.msra.mxu0 0.0
      %2059 = vmatprep.subr.mxu0 0.0
      %2060 = vmatpush1.msra.mxu0 0.0
      %2061 = vmatprep.subr.mxu0 0.0
      %2062 = vmatpush1.msra.mxu0 0.0
      %2063 = vmatprep.subr.mxu0 0.0
      %2064 = vmatpush1.msra.mxu0 0.0
      %2065 = vmatprep.subr.mxu0 0.0
      %2066 = vmatpush1.msra.mxu0 0.0
      %2067 = vmatprep.subr.mxu0 0.0
      %2068 = vmatpush1.msra.mxu0 0.0
      %2069 = vmatprep.subr.mxu0 0.0
      %2070 = vmatpush1.msra.mxu0 0.0
      %2071 = vmatprep.subr.mxu0 0.0
      %2072 = vmatpush1.msra.mxu0 %v2036
      %2073 = vmatprep.subr.mxu0 0.0
      %2074 = vmatpush1.msra.mxu0 %v2035
      %2075 = vmatprep.subr.mxu0 0.0
      %2076 = vmatpush2.msra.mxu0 0.0
      %2077 = vmatprep.subr.mxu0 0.0
      %2078 = vmatpush2.msra.mxu0 0.0
      %2079 = vmatprep.subr.mxu0 0.0
      %2080 = vmatpush2.msra.mxu0 0.0
      %2081 = vmatprep.subr.mxu0 0.0
      %2082 = vmatpush2.msra.mxu0 0.0
      %2083 = vmatprep.subr.mxu0 0.0
      %2084 = vmatpush2.msra.mxu0 0.0
      %2085 = vmatprep.subr.mxu0 0.0
      %2086 = vmatpush2.msra.mxu0 0.0
      %2087 = vmatprep.subr.mxu0 0.0
      %2088 = vmatpush2.msra.mxu0 0.0
      %2089 = vmatprep.subr.mxu0 0.0
      %2090 = vmatpush2.msra.mxu0 0.0
      %2091 = vmatprep.subr.mxu0 0.0
      %2092 = vmatpush2.msra.mxu0 0.0
      %2093 = vmatprep.subr.mxu0 0.0
      %2094 = vmatpush2.msra.mxu0 0.0
      %2095 = vmatprep.subr.mxu0 0.0
      %2096 = vmatpush2.msra.mxu0 0.0
      %2097 = vmatprep.subr.mxu0 0.0
      %2098 = vmatpush2.msra.mxu0 0.0
      %2099 = vmatprep.subr.mxu0 0.0
      %2100 = vmatpush2.msra.mxu0 0.0
      %2101 = vmatprep.subr.mxu0 0.0
      %2102 = vmatpush2.msra.mxu0 0.0
      %2103 = vmatprep.subr.mxu0 0.0
      %2104 = vmatpush2.msra.mxu0 0.0
      %2105 = vmatprep.subr.mxu0 0.0
      %2106 = vmatpush2.msra.mxu0 0.0
      %2107 = vmatprep.mubr.f32.mxu0 0.0
      %2108 = vmatmul.mubr.f32.gmra.mxu0 %v2038
      %v2109 = vpop.f32.mrf.mxu0
      %v2110 = vadd.f32 0.0, %v2109
      %v2111 = vpop.f32.mrf.mxu0
      %2112 = vmatprep.mubr.f32.mxu0 0.0
      %2113 = vmatmul.mubr.f32.gmra.mxu0 %v2041
      %v2114 = vpop.f32.mrf.mxu0
      %v2115 = vadd.f32 0.0, %v2114
      %v2116 = vpop.f32.mrf.mxu0
      %2117 = vdwg.mxu0
      %v2118 = vsub.f32 %v2035, %v2110
      %v2119 = vsub.f32 %v2036, %v2115
      %v2120 = vld [vmem:[%s10] sm:$0xff]
      %v2121 = vld [vmem:[%s10 + $0x8] sm:$0xff]
      %v2122 = vld [vmem:[%s10 + $0x10] sm:$0xff]
      %v2123 = vld [vmem:[%s10 + $0x18] sm:$0xff]
      %v2124 = vld [vmem:[%s11] sm:$0x1]
      %v2126 = vlaneseq
      %v2127 = vshrl.u32 %v2126, 7
      %v2128 = vsub.s32 0, %v2127
      %v2129 = vrot.slane %v2124, %v2128
      %v2132 = vsel %vm812, %v2118, 0
      %v2135 = vsel %vm812, %v2119, 0
      %2137 = vmatprep.subr.mxu0 0.0
      %2138 = vmatpush1.msra.mxu0 0.0
      %2139 = vmatprep.subr.mxu0 0.0
      %2140 = vmatpush1.msra.mxu0 0.0
      %2141 = vmatprep.subr.mxu0 0.0
      %2142 = vmatpush1.msra.mxu0 0.0
      %2143 = vmatprep.subr.mxu0 0.0
      %2144 = vmatpush1.msra.mxu0 0.0
      %2145 = vmatprep.subr.mxu0 0.0
      %2146 = vmatpush1.msra.mxu0 0.0
      %2147 = vmatprep.subr.mxu0 0.0
      %2148 = vmatpush1.msra.mxu0 0.0
      %2149 = vmatprep.subr.mxu0 0.0
      %2150 = vmatpush1.msra.mxu0 0.0
      %2151 = vmatprep.subr.mxu0 0.0
      %2152 = vmatpush1.msra.mxu0 0.0
      %2153 = vmatprep.subr.mxu0 0.0
      %2154 = vmatpush1.msra.mxu0 0.0
      %2155 = vmatprep.subr.mxu0 0.0
      %2156 = vmatpush1.msra.mxu0 0.0
      %2157 = vmatprep.subr.mxu0 0.0
      %2158 = vmatpush1.msra.mxu0 0.0
      %2159 = vmatprep.subr.mxu0 0.0
      %2160 = vmatpush1.msra.mxu0 0.0
      %2161 = vmatprep.subr.mxu0 0.0
      %2162 = vmatpush1.msra.mxu0 %v2123
      %2163 = vmatprep.subr.mxu0 0.0
      %2164 = vmatpush1.msra.mxu0 %v2122
      %2165 = vmatprep.subr.mxu0 0.0
      %2166 = vmatpush1.msra.mxu0 %v2121
      %2167 = vmatprep.subr.mxu0 0.0
      %2168 = vmatpush1.msra.mxu0 %v2120
      %2169 = vmatprep.subr.mxu0 0.0
      %2170 = vmatpush2.msra.mxu0 0.0
      %2171 = vmatprep.subr.mxu0 0.0
      %2172 = vmatpush2.msra.mxu0 0.0
      %2173 = vmatprep.subr.mxu0 0.0
      %2174 = vmatpush2.msra.mxu0 0.0
      %2175 = vmatprep.subr.mxu0 0.0
      %2176 = vmatpush2.msra.mxu0 0.0
      %2177 = vmatprep.subr.mxu0 0.0
      %2178 = vmatpush2.msra.mxu0 0.0
      %2179 = vmatprep.subr.mxu0 0.0
      %2180 = vmatpush2.msra.mxu0 0.0
      %2181 = vmatprep.subr.mxu0 0.0
      %2182 = vmatpush2.msra.mxu0 0.0
      %2183 = vmatprep.subr.mxu0 0.0
      %2184 = vmatpush2.msra.mxu0 0.0
      %2185 = vmatprep.subr.mxu0 0.0
      %2186 = vmatpush2.msra.mxu0 0.0
      %2187 = vmatprep.subr.mxu0 0.0
      %2188 = vmatpush2.msra.mxu0 0.0
      %2189 = vmatprep.subr.mxu0 0.0
      %2190 = vmatpush2.msra.mxu0 0.0
      %2191 = vmatprep.subr.mxu0 0.0
      %2192 = vmatpush2.msra.mxu0 0.0
      %2193 = vmatprep.subr.mxu0 0.0
      %2194 = vmatpush2.msra.mxu0 0.0
      %2195 = vmatprep.subr.mxu0 0.0
      %2196 = vmatpush2.msra.mxu0 0.0
      %2197 = vmatprep.subr.mxu0 0.0
      %2198 = vmatpush2.msra.mxu0 0.0
      %2199 = vmatprep.subr.mxu0 0.0
      %2200 = vmatpush2.msra.mxu0 0.0
      %2201 = vmatprep.mubr.f32.mxu0 0.0
      %2202 = vmatmul.mubr.f32.gmra.mxu0 %v2132
      %v2203 = vpop.f32.mrf.mxu0
      %v2204 = vadd.f32 %v2129, %v2203
      %v2205 = vpop.f32.mrf.mxu0
      %2206 = vmatprep.mubr.f32.mxu0 0.0
      %2207 = vmatmul.mubr.f32.gmra.mxu0 %v2135
      %v2208 = vpop.f32.mrf.mxu0
      %v2209 = vadd.f32 %v2129, %v2208
      %v2210 = vpop.f32.mrf.mxu0
      %2211 = vdwg.mxu0
      %v2212 = vld [vmem:[%s12] sm:$0xff]
      %v2213 = vld [vmem:[%s12 + $0x8] sm:$0xff]
      %v2214 = vld [vmem:[%s12 + $0x10] sm:$0xff]
      %v2215 = vld [vmem:[%s12 + $0x18] sm:$0xff]
      %v2216 = vld [vmem:[%s13] sm:$0x1]
      %v2218 = vlaneseq
      %v2219 = vshrl.u32 %v2218, 7
      %v2220 = vsub.s32 0, %v2219
      %v2221 = vrot.slane %v2216, %v2220
      %v2224 = vsel %vm812, %v793, 0
      %v2227 = vsel %vm812, %v794, 0
      %2229 = vmatprep.subr.mxu0 0.0
      %2230 = vmatpush1.msra.mxu0 0.0
      %2231 = vmatprep.subr.mxu0 0.0
      %2232 = vmatpush1.msra.mxu0 0.0
      %2233 = vmatprep.subr.mxu0 0.0
      %2234 = vmatpush1.msra.mxu0 0.0
      %2235 = vmatprep.subr.mxu0 0.0
      %2236 = vmatpush1.msra.mxu0 0.0
      %2237 = vmatprep.subr.mxu0 0.0
      %2238 = vmatpush1.msra.mxu0 0.0
      %2239 = vmatprep.subr.mxu0 0.0
      %2240 = vmatpush1.msra.mxu0 0.0
      %2241 = vmatprep.subr.mxu0 0.0
      %2242 = vmatpush1.msra.mxu0 0.0
      %2243 = vmatprep.subr.mxu0 0.0
      %2244 = vmatpush1.msra.mxu0 0.0
      %2245 = vmatprep.subr.mxu0 0.0
      %2246 = vmatpush1.msra.mxu0 0.0
      %2247 = vmatprep.subr.mxu0 0.0
      %2248 = vmatpush1.msra.mxu0 0.0
      %2249 = vmatprep.subr.mxu0 0.0
      %2250 = vmatpush1.msra.mxu0 0.0
      %2251 = vmatprep.subr.mxu0 0.0
      %2252 = vmatpush1.msra.mxu0 0.0
      %2253 = vmatprep.subr.mxu0 0.0
      %2254 = vmatpush1.msra.mxu0 %v2215
      %2255 = vmatprep.subr.mxu0 0.0
      %2256 = vmatpush1.msra.mxu0 %v2214
      %2257 = vmatprep.subr.mxu0 0.0
      %2258 = vmatpush1.msra.mxu0 %v2213
      %2259 = vmatprep.subr.mxu0 0.0
      %2260 = vmatpush1.msra.mxu0 %v2212
      %2261 = vmatprep.subr.mxu0 0.0
      %2262 = vmatpush2.msra.mxu0 0.0
      %2263 = vmatprep.subr.mxu0 0.0
      %2264 = vmatpush2.msra.mxu0 0.0
      %2265 = vmatprep.subr.mxu0 0.0
      %2266 = vmatpush2.msra.mxu0 0.0
      %2267 = vmatprep.subr.mxu0 0.0
      %2268 = vmatpush2.msra.mxu0 0.0
      %2269 = vmatprep.subr.mxu0 0.0
      %2270 = vmatpush2.msra.mxu0 0.0
      %2271 = vmatprep.subr.mxu0 0.0
      %2272 = vmatpush2.msra.mxu0 0.0
      %2273 = vmatprep.subr.mxu0 0.0
      %2274 = vmatpush2.msra.mxu0 0.0
      %2275 = vmatprep.subr.mxu0 0.0
      %2276 = vmatpush2.msra.mxu0 0.0
      %2277 = vmatprep.subr.mxu0 0.0
      %2278 = vmatpush2.msra.mxu0 0.0
      %2279 = vmatprep.subr.mxu0 0.0
      %2280 = vmatpush2.msra.mxu0 0.0
      %2281 = vmatprep.subr.mxu0 0.0
      %2282 = vmatpush2.msra.mxu0 0.0
      %2283 = vmatprep.subr.mxu0 0.0
      %2284 = vmatpush2.msra.mxu0 0.0
      %2285 = vmatprep.subr.mxu0 0.0
      %2286 = vmatpush2.msra.mxu0 0.0
      %2287 = vmatprep.subr.mxu0 0.0
      %2288 = vmatpush2.msra.mxu0 0.0
      %2289 = vmatprep.subr.mxu0 0.0
      %2290 = vmatpush2.msra.mxu0 0.0
      %2291 = vmatprep.subr.mxu0 0.0
      %2292 = vmatpush2.msra.mxu0 0.0
      %2293 = vmatprep.mubr.f32.mxu0 0.0
      %2294 = vmatmul.mubr.f32.gmra.mxu0 %v2224
      %v2295 = vpop.f32.mrf.mxu0
      %v2296 = vadd.f32 %v2221, %v2295
      %v2297 = vpop.f32.mrf.mxu0
      %2298 = vmatprep.mubr.f32.mxu0 0.0
      %2299 = vmatmul.mubr.f32.gmra.mxu0 %v2227
      %v2300 = vpop.f32.mrf.mxu0
      %v2301 = vadd.f32 %v2221, %v2300
      %v2302 = vpop.f32.mrf.mxu0
      %2303 = vdwg.mxu0
      %v2304 = vld [vmem:[%s14] sm:$0xff]
      %v2305 = vld [vmem:[%s14 + $0x8] sm:$0xff]
      %v2306 = vld [vmem:[%s14 + $0x10] sm:$0xff]
      %v2307 = vld [vmem:[%s14 + $0x18] sm:$0xff]
      %v2308 = vld [vmem:[%s15] sm:$0x1]
      %v2310 = vsel %vm905, %v2204, 0
      %v2313 = vsel %vm905, %v2209, 0
      %v2316 = vsel %vm905, %v2296, 0
      %v2319 = vsel %vm905, %v2301, 0
      %2321 = vmatprep.subr.mxu0 0.0
      %2322 = vmatpush1.xpose.msra.mxu0 0.0
      %2323 = vmatprep.subr.mxu0 0.0
      %2324 = vmatpush1.xpose.msra.mxu0 0.0
      %2325 = vmatprep.subr.mxu0 0.0
      %2326 = vmatpush1.xpose.msra.mxu0 0.0
      %2327 = vmatprep.subr.mxu0 0.0
      %2328 = vmatpush1.xpose.msra.mxu0 0.0
      %2329 = vmatprep.subr.mxu0 0.0
      %2330 = vmatpush1.xpose.msra.mxu0 0.0
      %2331 = vmatprep.subr.mxu0 0.0
      %2332 = vmatpush1.xpose.msra.mxu0 0.0
      %2333 = vmatprep.subr.mxu0 0.0
      %2334 = vmatpush1.xpose.msra.mxu0 0.0
      %2335 = vmatprep.subr.mxu0 0.0
      %2336 = vmatpush1.xpose.msra.mxu0 0.0
      %2337 = vmatprep.subr.mxu0 0.0
      %2338 = vmatpush1.xpose.msra.mxu0 0.0
      %2339 = vmatprep.subr.mxu0 0.0
      %2340 = vmatpush1.xpose.msra.mxu0 0.0
      %2341 = vmatprep.subr.mxu0 0.0
      %2342 = vmatpush1.xpose.msra.mxu0 0.0
      %2343 = vmatprep.subr.mxu0 0.0
      %2344 = vmatpush1.xpose.msra.mxu0 0.0
      %2345 = vmatprep.subr.mxu0 0.0
      %2346 = vmatpush1.xpose.msra.mxu0 0.0
      %2347 = vmatprep.subr.mxu0 0.0
      %2348 = vmatpush1.xpose.msra.mxu0 0.0
      %2349 = vmatprep.subr.mxu0 0.0
      %2350 = vmatpush1.xpose.msra.mxu0 %v2319
      %2351 = vmatprep.subr.mxu0 0.0
      %2352 = vmatpush1.xpose.msra.mxu0 %v2316
      %2353 = vmatprep.subr.mxu0 0.0
      %2354 = vmatpush2.xpose.msra.mxu0 0.0
      %2355 = vmatprep.subr.mxu0 0.0
      %2356 = vmatpush2.xpose.msra.mxu0 0.0
      %2357 = vmatprep.subr.mxu0 0.0
      %2358 = vmatpush2.xpose.msra.mxu0 0.0
      %2359 = vmatprep.subr.mxu0 0.0
      %2360 = vmatpush2.xpose.msra.mxu0 0.0
      %2361 = vmatprep.subr.mxu0 0.0
      %2362 = vmatpush2.xpose.msra.mxu0 0.0
      %2363 = vmatprep.subr.mxu0 0.0
      %2364 = vmatpush2.xpose.msra.mxu0 0.0
      %2365 = vmatprep.subr.mxu0 0.0
      %2366 = vmatpush2.xpose.msra.mxu0 0.0
      %2367 = vmatprep.subr.mxu0 0.0
      %2368 = vmatpush2.xpose.msra.mxu0 0.0
      %2369 = vmatprep.subr.mxu0 0.0
      %2370 = vmatpush2.xpose.msra.mxu0 0.0
      %2371 = vmatprep.subr.mxu0 0.0
      %2372 = vmatpush2.xpose.msra.mxu0 0.0
      %2373 = vmatprep.subr.mxu0 0.0
      %2374 = vmatpush2.xpose.msra.mxu0 0.0
      %2375 = vmatprep.subr.mxu0 0.0
      %2376 = vmatpush2.xpose.msra.mxu0 0.0
      %2377 = vmatprep.subr.mxu0 0.0
      %2378 = vmatpush2.xpose.msra.mxu0 0.0
      %2379 = vmatprep.subr.mxu0 0.0
      %2380 = vmatpush2.xpose.msra.mxu0 0.0
      %2381 = vmatprep.subr.mxu0 0.0
      %2382 = vmatpush2.xpose.msra.mxu0 0.0
      %2383 = vmatprep.subr.mxu0 0.0
      %2384 = vmatpush2.xpose.msra.mxu0 0.0
      %2385 = vmatprep.mubr.f32.mxu0 0.0
      %2386 = vmatmul.mubr.f32.gmra.mxu0 %v2310
      %v2387 = vpop.f32.mrf.mxu0
      %v2388 = vadd.f32 0.0, %v2387
      %v2389 = vpop.f32.mrf.mxu0
      %2390 = vmatprep.mubr.f32.mxu0 0.0
      %2391 = vmatmul.mubr.f32.gmra.mxu0 %v2313
      %v2392 = vpop.f32.mrf.mxu0
      %v2393 = vadd.f32 0.0, %v2392
      %v2394 = vpop.f32.mrf.mxu0
      %2395 = vdwg.mxu0
      %v2396 = vsel %vm989, %v2388, -inf
      %2397 = vmax.xlane.f32.xlu0 %v2396
      %v2398 = vpop.xlane.xlu0 %2397
      %v2399 = vsel %vm989, %v2393, -inf
      %2400 = vmax.xlane.f32.xlu0 %v2399
      %v2401 = vpop.xlane.xlu0 %2400
      %v2402 = vsub.f32 %v2388, %v2398
      %v2403 = vsub.f32 %v2393, %v2401
      %v2404 = vmul.f32 %v2402, 1.442695
      %v2405 = vpow.pop %v2404
      %v2406 = vmul.f32 %v2403, 1.442695
      %v2407 = vpow.pop %v2406
      %v2408 = vsel %vm989, %v2405, 0.0
      %2409 = vadd.xlane.f32.xlu0 %v2408
      %v2410 = vpop.xlane.xlu0 %2409
      %v2411 = vsel %vm989, %v2407, 0.0
      %2412 = vadd.xlane.f32.xlu0 %v2411
      %v2413 = vpop.xlane.xlu0 %2412
      %v2414 = vrcp.pop %v2410
      %v2415 = vrcp.pop %v2413
      %v2416 = vmul.f32 %v2405, %v2414
      %v2417 = vmul.f32 %v2407, %v2415
      %2418 = vrot.lane.b32.xlu0 %v2296, 96
      %v2419 = vpop.permute.xlu0 %2418
      %2420 = vrot.lane.b32.xlu0 %v2301, 96
      %v2421 = vpop.permute.xlu0 %2420
      %v2425 = vsel %vm989, %v2416, 0
      %v2428 = vsel %vm989, %v2417, 0
      %2430 = vmatprep.subr.mxu0 0.0
      %2431 = vmatpush1.msra.mxu0 0.0
      %2432 = vmatprep.subr.mxu0 0.0
      %2433 = vmatpush1.msra.mxu0 0.0
      %2434 = vmatprep.subr.mxu0 0.0
      %2435 = vmatpush1.msra.mxu0 0.0
      %2436 = vmatprep.subr.mxu0 0.0
      %2437 = vmatpush1.msra.mxu0 0.0
      %2438 = vmatprep.subr.mxu0 0.0
      %2439 = vmatpush1.msra.mxu0 0.0
      %2440 = vmatprep.subr.mxu0 0.0
      %2441 = vmatpush1.msra.mxu0 0.0
      %2442 = vmatprep.subr.mxu0 0.0
      %2443 = vmatpush1.msra.mxu0 0.0
      %2444 = vmatprep.subr.mxu0 0.0
      %2445 = vmatpush1.msra.mxu0 0.0
      %2446 = vmatprep.subr.mxu0 0.0
      %2447 = vmatpush1.msra.mxu0 0.0
      %2448 = vmatprep.subr.mxu0 0.0
      %2449 = vmatpush1.msra.mxu0 0.0
      %2450 = vmatprep.subr.mxu0 0.0
      %2451 = vmatpush1.msra.mxu0 0.0
      %2452 = vmatprep.subr.mxu0 0.0
      %2453 = vmatpush1.msra.mxu0 0.0
      %2454 = vmatprep.subr.mxu0 0.0
      %2455 = vmatpush1.msra.mxu0 0.0
      %2456 = vmatprep.subr.mxu0 0.0
      %2457 = vmatpush1.msra.mxu0 0.0
      %2458 = vmatprep.subr.mxu0 0.0
      %2459 = vmatpush1.msra.mxu0 %v2421
      %2460 = vmatprep.subr.mxu0 0.0
      %2461 = vmatpush1.msra.mxu0 %v2419
      %2462 = vmatprep.subr.mxu0 0.0
      %2463 = vmatpush2.msra.mxu0 0.0
      %2464 = vmatprep.subr.mxu0 0.0
      %2465 = vmatpush2.msra.mxu0 0.0
      %2466 = vmatprep.subr.mxu0 0.0
      %2467 = vmatpush2.msra.mxu0 0.0
      %2468 = vmatprep.subr.mxu0 0.0
      %2469 = vmatpush2.msra.mxu0 0.0
      %2470 = vmatprep.subr.mxu0 0.0
      %2471 = vmatpush2.msra.mxu0 0.0
      %2472 = vmatprep.subr.mxu0 0.0
      %2473 = vmatpush2.msra.mxu0 0.0
      %2474 = vmatprep.subr.mxu0 0.0
      %2475 = vmatpush2.msra.mxu0 0.0
      %2476 = vmatprep.subr.mxu0 0.0
      %2477 = vmatpush2.msra.mxu0 0.0
      %2478 = vmatprep.subr.mxu0 0.0
      %2479 = vmatpush2.msra.mxu0 0.0
      %2480 = vmatprep.subr.mxu0 0.0
      %2481 = vmatpush2.msra.mxu0 0.0
      %2482 = vmatprep.subr.mxu0 0.0
      %2483 = vmatpush2.msra.mxu0 0.0
      %2484 = vmatprep.subr.mxu0 0.0
      %2485 = vmatpush2.msra.mxu0 0.0
      %2486 = vmatprep.subr.mxu0 0.0
      %2487 = vmatpush2.msra.mxu0 0.0
      %2488 = vmatprep.subr.mxu0 0.0
      %2489 = vmatpush2.msra.mxu0 0.0
      %2490 = vmatprep.subr.mxu0 0.0
      %2491 = vmatpush2.msra.mxu0 0.0
      %2492 = vmatprep.subr.mxu0 0.0
      %2493 = vmatpush2.msra.mxu0 0.0
      %2494 = vmatprep.mubr.f32.mxu0 0.0
      %2495 = vmatmul.mubr.f32.gmra.mxu0 %v2425
      %v2496 = vpop.f32.mrf.mxu0
      %v2497 = vadd.f32 0.0, %v2496
      %v2498 = vpop.f32.mrf.mxu0
      %2499 = vmatprep.mubr.f32.mxu0 0.0
      %2500 = vmatmul.mubr.f32.gmra.mxu0 %v2428
      %v2501 = vpop.f32.mrf.mxu0
      %v2502 = vadd.f32 0.0, %v2501
      %v2503 = vpop.f32.mrf.mxu0
      %2504 = vdwg.mxu0
      %2505 = vrot.lane.b32.xlu0 %v2204, 120
      %v2506 = vpop.permute.xlu0 %2505
      %2507 = vrot.lane.b32.xlu0 %v2209, 120
      %v2508 = vpop.permute.xlu0 %2507
      %2509 = vrot.lane.b32.xlu0 %v2296, 120
      %v2510 = vpop.permute.xlu0 %2509
      %2511 = vrot.lane.b32.xlu0 %v2301, 120
      %v2512 = vpop.permute.xlu0 %2511
      %v2513 = vsel %vm905, %v2506, 0
      %v2515 = vsel %vm905, %v2508, 0
      %v2517 = vsel %vm905, %v2510, 0
      %v2519 = vsel %vm905, %v2512, 0
      %2521 = vmatprep.subr.mxu0 0.0
      %2522 = vmatpush1.xpose.msra.mxu0 0.0
      %2523 = vmatprep.subr.mxu0 0.0
      %2524 = vmatpush1.xpose.msra.mxu0 0.0
      %2525 = vmatprep.subr.mxu0 0.0
      %2526 = vmatpush1.xpose.msra.mxu0 0.0
      %2527 = vmatprep.subr.mxu0 0.0
      %2528 = vmatpush1.xpose.msra.mxu0 0.0
      %2529 = vmatprep.subr.mxu0 0.0
      %2530 = vmatpush1.xpose.msra.mxu0 0.0
      %2531 = vmatprep.subr.mxu0 0.0
      %2532 = vmatpush1.xpose.msra.mxu0 0.0
      %2533 = vmatprep.subr.mxu0 0.0
      %2534 = vmatpush1.xpose.msra.mxu0 0.0
      %2535 = vmatprep.subr.mxu0 0.0
      %2536 = vmatpush1.xpose.msra.mxu0 0.0
      %2537 = vmatprep.subr.mxu0 0.0
      %2538 = vmatpush1.xpose.msra.mxu0 0.0
      %2539 = vmatprep.subr.mxu0 0.0
      %2540 = vmatpush1.xpose.msra.mxu0 0.0
      %2541 = vmatprep.subr.mxu0 0.0
      %2542 = vmatpush1.xpose.msra.mxu0 0.0
      %2543 = vmatprep.subr.mxu0 0.0
      %2544 = vmatpush1.xpose.msra.mxu0 0.0
      %2545 = vmatprep.subr.mxu0 0.0
      %2546 = vmatpush1.xpose.msra.mxu0 0.0
      %2547 = vmatprep.subr.mxu0 0.0
      %2548 = vmatpush1.xpose.msra.mxu0 0.0
      %2549 = vmatprep.subr.mxu0 0.0
      %2550 = vmatpush1.xpose.msra.mxu0 %v2519
      %2551 = vmatprep.subr.mxu0 0.0
      %2552 = vmatpush1.xpose.msra.mxu0 %v2517
      %2553 = vmatprep.subr.mxu0 0.0
      %2554 = vmatpush2.xpose.msra.mxu0 0.0
      %2555 = vmatprep.subr.mxu0 0.0
      %2556 = vmatpush2.xpose.msra.mxu0 0.0
      %2557 = vmatprep.subr.mxu0 0.0
      %2558 = vmatpush2.xpose.msra.mxu0 0.0
      %2559 = vmatprep.subr.mxu0 0.0
      %2560 = vmatpush2.xpose.msra.mxu0 0.0
      %2561 = vmatprep.subr.mxu0 0.0
      %2562 = vmatpush2.xpose.msra.mxu0 0.0
      %2563 = vmatprep.subr.mxu0 0.0
      %2564 = vmatpush2.xpose.msra.mxu0 0.0
      %2565 = vmatprep.subr.mxu0 0.0
      %2566 = vmatpush2.xpose.msra.mxu0 0.0
      %2567 = vmatprep.subr.mxu0 0.0
      %2568 = vmatpush2.xpose.msra.mxu0 0.0
      %2569 = vmatprep.subr.mxu0 0.0
      %2570 = vmatpush2.xpose.msra.mxu0 0.0
      %2571 = vmatprep.subr.mxu0 0.0
      %2572 = vmatpush2.xpose.msra.mxu0 0.0
      %2573 = vmatprep.subr.mxu0 0.0
      %2574 = vmatpush2.xpose.msra.mxu0 0.0
      %2575 = vmatprep.subr.mxu0 0.0
      %2576 = vmatpush2.xpose.msra.mxu0 0.0
      %2577 = vmatprep.subr.mxu0 0.0
      %2578 = vmatpush2.xpose.msra.mxu0 0.0
      %2579 = vmatprep.subr.mxu0 0.0
      %2580 = vmatpush2.xpose.msra.mxu0 0.0
      %2581 = vmatprep.subr.mxu0 0.0
      %2582 = vmatpush2.xpose.msra.mxu0 0.0
      %2583 = vmatprep.subr.mxu0 0.0
      %2584 = vmatpush2.xpose.msra.mxu0 0.0
      %2585 = vmatprep.mubr.f32.mxu0 0.0
      %2586 = vmatmul.mubr.f32.gmra.mxu0 %v2513
      %v2587 = vpop.f32.mrf.mxu0
      %v2588 = vadd.f32 0.0, %v2587
      %v2589 = vpop.f32.mrf.mxu0
      %2590 = vmatprep.mubr.f32.mxu0 0.0
      %2591 = vmatmul.mubr.f32.gmra.mxu0 %v2515
      %v2592 = vpop.f32.mrf.mxu0
      %v2593 = vadd.f32 0.0, %v2592
      %v2594 = vpop.f32.mrf.mxu0
      %2595 = vdwg.mxu0
      %v2596 = vsel %vm989, %v2588, -inf
      %2597 = vmax.xlane.f32.xlu0 %v2596
      %v2598 = vpop.xlane.xlu0 %2597
      %v2599 = vsel %vm989, %v2593, -inf
      %2600 = vmax.xlane.f32.xlu0 %v2599
      %v2601 = vpop.xlane.xlu0 %2600
      %v2602 = vsub.f32 %v2588, %v2598
      %v2603 = vsub.f32 %v2593, %v2601
      %v2604 = vmul.f32 %v2602, 1.442695
      %v2605 = vpow.pop %v2604
      %v2606 = vmul.f32 %v2603, 1.442695
      %v2607 = vpow.pop %v2606
      %v2608 = vsel %vm989, %v2605, 0.0
      %2609 = vadd.xlane.f32.xlu0 %v2608
      %v2610 = vpop.xlane.xlu0 %2609
      %v2611 = vsel %vm989, %v2607, 0.0
      %2612 = vadd.xlane.f32.xlu0 %v2611
      %v2613 = vpop.xlane.xlu0 %2612
      %v2614 = vrcp.pop %v2610
      %v2615 = vrcp.pop %v2613
      %v2616 = vmul.f32 %v2605, %v2614
      %v2617 = vmul.f32 %v2607, %v2615
      %2618 = vrot.lane.b32.xlu0 %v2296, 88
      %v2619 = vpop.permute.xlu0 %2618
      %2620 = vrot.lane.b32.xlu0 %v2301, 88
      %v2621 = vpop.permute.xlu0 %2620
      %v2625 = vsel %vm989, %v2616, 0
      %v2628 = vsel %vm989, %v2617, 0
      %2630 = vmatprep.subr.mxu0 0.0
      %2631 = vmatpush1.msra.mxu0 0.0
      %2632 = vmatprep.subr.mxu0 0.0
      %2633 = vmatpush1.msra.mxu0 0.0
      %2634 = vmatprep.subr.mxu0 0.0
      %2635 = vmatpush1.msra.mxu0 0.0
      %2636 = vmatprep.subr.mxu0 0.0
      %2637 = vmatpush1.msra.mxu0 0.0
      %2638 = vmatprep.subr.mxu0 0.0
      %2639 = vmatpush1.msra.mxu0 0.0
      %2640 = vmatprep.subr.mxu0 0.0
      %2641 = vmatpush1.msra.mxu0 0.0
      %2642 = vmatprep.subr.mxu0 0.0
      %2643 = vmatpush1.msra.mxu0 0.0
      %2644 = vmatprep.subr.mxu0 0.0
      %2645 = vmatpush1.msra.mxu0 0.0
      %2646 = vmatprep.subr.mxu0 0.0
      %2647 = vmatpush1.msra.mxu0 0.0
      %2648 = vmatprep.subr.mxu0 0.0
      %2649 = vmatpush1.msra.mxu0 0.0
      %2650 = vmatprep.subr.mxu0 0.0
      %2651 = vmatpush1.msra.mxu0 0.0
      %2652 = vmatprep.subr.mxu0 0.0
      %2653 = vmatpush1.msra.mxu0 0.0
      %2654 = vmatprep.subr.mxu0 0.0
      %2655 = vmatpush1.msra.mxu0 0.0
      %2656 = vmatprep.subr.mxu0 0.0
      %2657 = vmatpush1.msra.mxu0 0.0
      %2658 = vmatprep.subr.mxu0 0.0
      %2659 = vmatpush1.msra.mxu0 %v2621
      %2660 = vmatprep.subr.mxu0 0.0
      %2661 = vmatpush1.msra.mxu0 %v2619
      %2662 = vmatprep.subr.mxu0 0.0
      %2663 = vmatpush2.msra.mxu0 0.0
      %2664 = vmatprep.subr.mxu0 0.0
      %2665 = vmatpush2.msra.mxu0 0.0
      %2666 = vmatprep.subr.mxu0 0.0
      %2667 = vmatpush2.msra.mxu0 0.0
      %2668 = vmatprep.subr.mxu0 0.0
      %2669 = vmatpush2.msra.mxu0 0.0
      %2670 = vmatprep.subr.mxu0 0.0
      %2671 = vmatpush2.msra.mxu0 0.0
      %2672 = vmatprep.subr.mxu0 0.0
      %2673 = vmatpush2.msra.mxu0 0.0
      %2674 = vmatprep.subr.mxu0 0.0
      %2675 = vmatpush2.msra.mxu0 0.0
      %2676 = vmatprep.subr.mxu0 0.0
      %2677 = vmatpush2.msra.mxu0 0.0
      %2678 = vmatprep.subr.mxu0 0.0
      %2679 = vmatpush2.msra.mxu0 0.0
      %2680 = vmatprep.subr.mxu0 0.0
      %2681 = vmatpush2.msra.mxu0 0.0
      %2682 = vmatprep.subr.mxu0 0.0
      %2683 = vmatpush2.msra.mxu0 0.0
      %2684 = vmatprep.subr.mxu0 0.0
      %2685 = vmatpush2.msra.mxu0 0.0
      %2686 = vmatprep.subr.mxu0 0.0
      %2687 = vmatpush2.msra.mxu0 0.0
      %2688 = vmatprep.subr.mxu0 0.0
      %2689 = vmatpush2.msra.mxu0 0.0
      %2690 = vmatprep.subr.mxu0 0.0
      %2691 = vmatpush2.msra.mxu0 0.0
      %2692 = vmatprep.subr.mxu0 0.0
      %2693 = vmatpush2.msra.mxu0 0.0
      %2694 = vmatprep.mubr.f32.mxu0 0.0
      %2695 = vmatmul.mubr.f32.gmra.mxu0 %v2625
      %v2696 = vpop.f32.mrf.mxu0
      %v2697 = vadd.f32 0.0, %v2696
      %v2698 = vpop.f32.mrf.mxu0
      %2699 = vmatprep.mubr.f32.mxu0 0.0
      %2700 = vmatmul.mubr.f32.gmra.mxu0 %v2628
      %v2701 = vpop.f32.mrf.mxu0
      %v2702 = vadd.f32 0.0, %v2701
      %v2703 = vpop.f32.mrf.mxu0
      %2704 = vdwg.mxu0
      %v2706 = vsel %vm905, %v2697, 0
      %v2709 = vsel %vm905, %v2702, 0
      %2711 = vmatprep.subr.mxu0 0.0
      %2712 = vmatpush1.msra.mxu0 0.0
      %2713 = vmatprep.subr.mxu0 0.0
      %2714 = vmatpush1.msra.mxu0 0.0
      %2715 = vmatprep.subr.mxu0 0.0
      %2716 = vmatpush1.msra.mxu0 0.0
      %2717 = vmatprep.subr.mxu0 0.0
      %2718 = vmatpush1.msra.mxu0 0.0
      %2719 = vmatprep.subr.mxu0 0.0
      %2720 = vmatpush1.msra.mxu0 0.0
      %2721 = vmatprep.subr.mxu0 0.0
      %2722 = vmatpush1.msra.mxu0 0.0
      %2723 = vmatprep.subr.mxu0 0.0
      %2724 = vmatpush1.msra.mxu0 0.0
      %2725 = vmatprep.subr.mxu0 0.0
      %2726 = vmatpush1.msra.mxu0 0.0
      %2727 = vmatprep.subr.mxu0 0.0
      %2728 = vmatpush1.msra.mxu0 0.0
      %2729 = vmatprep.subr.mxu0 0.0
      %2730 = vmatpush1.msra.mxu0 0.0
      %2731 = vmatprep.subr.mxu0 0.0
      %2732 = vmatpush1.msra.mxu0 0.0
      %2733 = vmatprep.subr.mxu0 0.0
      %2734 = vmatpush1.msra.mxu0 0.0
      %2735 = vmatprep.subr.mxu0 0.0
      %2736 = vmatpush1.msra.mxu0 0.0
      %2737 = vmatprep.subr.mxu0 0.0
      %2738 = vmatpush1.msra.mxu0 0.0
      %2739 = vmatprep.subr.mxu0 0.0
      %2740 = vmatpush1.msra.mxu0 0.0
      %2741 = vmatprep.subr.mxu0 0.0
      %2742 = vmatpush1.msra.mxu0 %v2305
      %2743 = vmatprep.subr.mxu0 0.0
      %2744 = vmatpush2.msra.mxu0 0.0
      %2745 = vmatprep.subr.mxu0 0.0
      %2746 = vmatpush2.msra.mxu0 0.0
      %2747 = vmatprep.subr.mxu0 0.0
      %2748 = vmatpush2.msra.mxu0 0.0
      %2749 = vmatprep.subr.mxu0 0.0
      %2750 = vmatpush2.msra.mxu0 0.0
      %2751 = vmatprep.subr.mxu0 0.0
      %2752 = vmatpush2.msra.mxu0 0.0
      %2753 = vmatprep.subr.mxu0 0.0
      %2754 = vmatpush2.msra.mxu0 0.0
      %2755 = vmatprep.subr.mxu0 0.0
      %2756 = vmatpush2.msra.mxu0 0.0
      %2757 = vmatprep.subr.mxu0 0.0
      %2758 = vmatpush2.msra.mxu0 0.0
      %2759 = vmatprep.subr.mxu0 0.0
      %2760 = vmatpush2.msra.mxu0 0.0
      %2761 = vmatprep.subr.mxu0 0.0
      %2762 = vmatpush2.msra.mxu0 0.0
      %2763 = vmatprep.subr.mxu0 0.0
      %2764 = vmatpush2.msra.mxu0 0.0
      %2765 = vmatprep.subr.mxu0 0.0
      %2766 = vmatpush2.msra.mxu0 0.0
      %2767 = vmatprep.subr.mxu0 0.0
      %2768 = vmatpush2.msra.mxu0 0.0
      %2769 = vmatprep.subr.mxu0 0.0
      %2770 = vmatpush2.msra.mxu0 0.0
      %2771 = vmatprep.subr.mxu0 0.0
      %2772 = vmatpush2.msra.mxu0 0.0
      %2773 = vmatprep.subr.mxu0 0.0
      %2774 = vmatpush2.msra.mxu0 0.0
      %2775 = vmatprep.mubr.f32.mxu0 0.0
      %2776 = vmatmul.mubr.f32.gmra.mxu0 %v2706
      %v2777 = vpop.f32.mrf.mxu0
      %v2778 = vadd.f32 0.0, %v2777
      %v2779 = vpop.f32.mrf.mxu0
      %2780 = vmatprep.mubr.f32.mxu0 0.0
      %2781 = vmatmul.mubr.f32.gmra.mxu0 %v2709
      %v2782 = vpop.f32.mrf.mxu0
      %v2783 = vadd.f32 0.0, %v2782
      %v2784 = vpop.f32.mrf.mxu0
      %2785 = vdwg.mxu0
      %v2787 = vsel %vm905, %v2497, 0
      %v2790 = vsel %vm905, %v2502, 0
      %2792 = vmatprep.subr.mxu0 0.0
      %2793 = vmatpush1.msra.mxu0 0.0
      %2794 = vmatprep.subr.mxu0 0.0
      %2795 = vmatpush1.msra.mxu0 0.0
      %2796 = vmatprep.subr.mxu0 0.0
      %2797 = vmatpush1.msra.mxu0 0.0
      %2798 = vmatprep.subr.mxu0 0.0
      %2799 = vmatpush1.msra.mxu0 0.0
      %2800 = vmatprep.subr.mxu0 0.0
      %2801 = vmatpush1.msra.mxu0 0.0
      %2802 = vmatprep.subr.mxu0 0.0
      %2803 = vmatpush1.msra.mxu0 0.0
      %2804 = vmatprep.subr.mxu0 0.0
      %2805 = vmatpush1.msra.mxu0 0.0
      %2806 = vmatprep.subr.mxu0 0.0
      %2807 = vmatpush1.msra.mxu0 0.0
      %2808 = vmatprep.subr.mxu0 0.0
      %2809 = vmatpush1.msra.mxu0 0.0
      %2810 = vmatprep.subr.mxu0 0.0
      %2811 = vmatpush1.msra.mxu0 0.0
      %2812 = vmatprep.subr.mxu0 0.0
      %2813 = vmatpush1.msra.mxu0 0.0
      %2814 = vmatprep.subr.mxu0 0.0
      %2815 = vmatpush1.msra.mxu0 0.0
      %2816 = vmatprep.subr.mxu0 0.0
      %2817 = vmatpush1.msra.mxu0 0.0
      %2818 = vmatprep.subr.mxu0 0.0
      %2819 = vmatpush1.msra.mxu0 0.0
      %2820 = vmatprep.subr.mxu0 0.0
      %2821 = vmatpush1.msra.mxu0 0.0
      %2822 = vmatprep.subr.mxu0 0.0
      %2823 = vmatpush1.msra.mxu0 %v2304
      %2824 = vmatprep.subr.mxu0 0.0
      %2825 = vmatpush2.msra.mxu0 0.0
      %2826 = vmatprep.subr.mxu0 0.0
      %2827 = vmatpush2.msra.mxu0 0.0
      %2828 = vmatprep.subr.mxu0 0.0
      %2829 = vmatpush2.msra.mxu0 0.0
      %2830 = vmatprep.subr.mxu0 0.0
      %2831 = vmatpush2.msra.mxu0 0.0
      %2832 = vmatprep.subr.mxu0 0.0
      %2833 = vmatpush2.msra.mxu0 0.0
      %2834 = vmatprep.subr.mxu0 0.0
      %2835 = vmatpush2.msra.mxu0 0.0
      %2836 = vmatprep.subr.mxu0 0.0
      %2837 = vmatpush2.msra.mxu0 0.0
      %2838 = vmatprep.subr.mxu0 0.0
      %2839 = vmatpush2.msra.mxu0 0.0
      %2840 = vmatprep.subr.mxu0 0.0
      %2841 = vmatpush2.msra.mxu0 0.0
      %2842 = vmatprep.subr.mxu0 0.0
      %2843 = vmatpush2.msra.mxu0 0.0
      %2844 = vmatprep.subr.mxu0 0.0
      %2845 = vmatpush2.msra.mxu0 0.0
      %2846 = vmatprep.subr.mxu0 0.0
      %2847 = vmatpush2.msra.mxu0 0.0
      %2848 = vmatprep.subr.mxu0 0.0
      %2849 = vmatpush2.msra.mxu0 0.0
      %2850 = vmatprep.subr.mxu0 0.0
      %2851 = vmatpush2.msra.mxu0 0.0
      %2852 = vmatprep.subr.mxu0 0.0
      %2853 = vmatpush2.msra.mxu0 0.0
      %2854 = vmatprep.subr.mxu0 0.0
      %2855 = vmatpush2.msra.mxu0 0.0
      %2856 = vmatprep.mubr.f32.mxu0 0.0
      %2857 = vmatmul.mubr.f32.gmra.mxu0 %v2787
      %v2858 = vpop.f32.mrf.mxu0
      %v2859 = vadd.f32 %v2778, %v2858
      %v2860 = vpop.f32.mrf.mxu0
      %2861 = vmatprep.mubr.f32.mxu0 0.0
      %2862 = vmatmul.mubr.f32.gmra.mxu0 %v2790
      %v2863 = vpop.f32.mrf.mxu0
      %v2864 = vadd.f32 %v2783, %v2863
      %v2865 = vpop.f32.mrf.mxu0
      %2866 = vdwg.mxu0
      %2867 = vrot.lane.b32.xlu0 %v2204, 112
      %v2868 = vpop.permute.xlu0 %2867
      %2869 = vrot.lane.b32.xlu0 %v2209, 112
      %v2870 = vpop.permute.xlu0 %2869
      %2871 = vrot.lane.b32.xlu0 %v2296, 112
      %v2872 = vpop.permute.xlu0 %2871
      %2873 = vrot.lane.b32.xlu0 %v2301, 112
      %v2874 = vpop.permute.xlu0 %2873
      %v2875 = vsel %vm905, %v2868, 0
      %v2877 = vsel %vm905, %v2870, 0
      %v2879 = vsel %vm905, %v2872, 0
      %v2881 = vsel %vm905, %v2874, 0
      %2883 = vmatprep.subr.mxu0 0.0
      %2884 = vmatpush1.xpose.msra.mxu0 0.0
      %2885 = vmatprep.subr.mxu0 0.0
      %2886 = vmatpush1.xpose.msra.mxu0 0.0
      %2887 = vmatprep.subr.mxu0 0.0
      %2888 = vmatpush1.xpose.msra.mxu0 0.0
      %2889 = vmatprep.subr.mxu0 0.0
      %2890 = vmatpush1.xpose.msra.mxu0 0.0
      %2891 = vmatprep.subr.mxu0 0.0
      %2892 = vmatpush1.xpose.msra.mxu0 0.0
      %2893 = vmatprep.subr.mxu0 0.0
      %2894 = vmatpush1.xpose.msra.mxu0 0.0
      %2895 = vmatprep.subr.mxu0 0.0
      %2896 = vmatpush1.xpose.msra.mxu0 0.0
      %2897 = vmatprep.subr.mxu0 0.0
      %2898 = vmatpush1.xpose.msra.mxu0 0.0
      %2899 = vmatprep.subr.mxu0 0.0
      %2900 = vmatpush1.xpose.msra.mxu0 0.0
      %2901 = vmatprep.subr.mxu0 0.0
      %2902 = vmatpush1.xpose.msra.mxu0 0.0
      %2903 = vmatprep.subr.mxu0 0.0
      %2904 = vmatpush1.xpose.msra.mxu0 0.0
      %2905 = vmatprep.subr.mxu0 0.0
      %2906 = vmatpush1.xpose.msra.mxu0 0.0
      %2907 = vmatprep.subr.mxu0 0.0
      %2908 = vmatpush1.xpose.msra.mxu0 0.0
      %2909 = vmatprep.subr.mxu0 0.0
      %2910 = vmatpush1.xpose.msra.mxu0 0.0
      %2911 = vmatprep.subr.mxu0 0.0
      %2912 = vmatpush1.xpose.msra.mxu0 %v2881
      %2913 = vmatprep.subr.mxu0 0.0
      %2914 = vmatpush1.xpose.msra.mxu0 %v2879
      %2915 = vmatprep.subr.mxu0 0.0
      %2916 = vmatpush2.xpose.msra.mxu0 0.0
      %2917 = vmatprep.subr.mxu0 0.0
      %2918 = vmatpush2.xpose.msra.mxu0 0.0
      %2919 = vmatprep.subr.mxu0 0.0
      %2920 = vmatpush2.xpose.msra.mxu0 0.0
      %2921 = vmatprep.subr.mxu0 0.0
      %2922 = vmatpush2.xpose.msra.mxu0 0.0
      %2923 = vmatprep.subr.mxu0 0.0
      %2924 = vmatpush2.xpose.msra.mxu0 0.0
      %2925 = vmatprep.subr.mxu0 0.0
      %2926 = vmatpush2.xpose.msra.mxu0 0.0
      %2927 = vmatprep.subr.mxu0 0.0
      %2928 = vmatpush2.xpose.msra.mxu0 0.0
      %2929 = vmatprep.subr.mxu0 0.0
      %2930 = vmatpush2.xpose.msra.mxu0 0.0
      %2931 = vmatprep.subr.mxu0 0.0
      %2932 = vmatpush2.xpose.msra.mxu0 0.0
      %2933 = vmatprep.subr.mxu0 0.0
      %2934 = vmatpush2.xpose.msra.mxu0 0.0
      %2935 = vmatprep.subr.mxu0 0.0
      %2936 = vmatpush2.xpose.msra.mxu0 0.0
      %2937 = vmatprep.subr.mxu0 0.0
      %2938 = vmatpush2.xpose.msra.mxu0 0.0
      %2939 = vmatprep.subr.mxu0 0.0
      %2940 = vmatpush2.xpose.msra.mxu0 0.0
      %2941 = vmatprep.subr.mxu0 0.0
      %2942 = vmatpush2.xpose.msra.mxu0 0.0
      %2943 = vmatprep.subr.mxu0 0.0
      %2944 = vmatpush2.xpose.msra.mxu0 0.0
      %2945 = vmatprep.subr.mxu0 0.0
      %2946 = vmatpush2.xpose.msra.mxu0 0.0
      %2947 = vmatprep.mubr.f32.mxu0 0.0
      %2948 = vmatmul.mubr.f32.gmra.mxu0 %v2875
      %v2949 = vpop.f32.mrf.mxu0
      %v2950 = vadd.f32 0.0, %v2949
      %v2951 = vpop.f32.mrf.mxu0
      %2952 = vmatprep.mubr.f32.mxu0 0.0
      %2953 = vmatmul.mubr.f32.gmra.mxu0 %v2877
      %v2954 = vpop.f32.mrf.mxu0
      %v2955 = vadd.f32 0.0, %v2954
      %v2956 = vpop.f32.mrf.mxu0
      %2957 = vdwg.mxu0
      %v2958 = vsel %vm989, %v2950, -inf
      %2959 = vmax.xlane.f32.xlu0 %v2958
      %v2960 = vpop.xlane.xlu0 %2959
      %v2961 = vsel %vm989, %v2955, -inf
      %2962 = vmax.xlane.f32.xlu0 %v2961
      %v2963 = vpop.xlane.xlu0 %2962
      %v2964 = vsub.f32 %v2950, %v2960
      %v2965 = vsub.f32 %v2955, %v2963
      %v2966 = vmul.f32 %v2964, 1.442695
      %v2967 = vpow.pop %v2966
      %v2968 = vmul.f32 %v2965, 1.442695
      %v2969 = vpow.pop %v2968
      %v2970 = vsel %vm989, %v2967, 0.0
      %2971 = vadd.xlane.f32.xlu0 %v2970
      %v2972 = vpop.xlane.xlu0 %2971
      %v2973 = vsel %vm989, %v2969, 0.0
      %2974 = vadd.xlane.f32.xlu0 %v2973
      %v2975 = vpop.xlane.xlu0 %2974
      %v2976 = vrcp.pop %v2972
      %v2977 = vrcp.pop %v2975
      %v2978 = vmul.f32 %v2967, %v2976
      %v2979 = vmul.f32 %v2969, %v2977
      %2980 = vrot.lane.b32.xlu0 %v2296, 80
      %v2981 = vpop.permute.xlu0 %2980
      %2982 = vrot.lane.b32.xlu0 %v2301, 80
      %v2983 = vpop.permute.xlu0 %2982
      %v2987 = vsel %vm989, %v2978, 0
      %v2990 = vsel %vm989, %v2979, 0
      %2992 = vmatprep.subr.mxu0 0.0
      %2993 = vmatpush1.msra.mxu0 0.0
      %2994 = vmatprep.subr.mxu0 0.0
      %2995 = vmatpush1.msra.mxu0 0.0
      %2996 = vmatprep.subr.mxu0 0.0
      %2997 = vmatpush1.msra.mxu0 0.0
      %2998 = vmatprep.subr.mxu0 0.0
      %2999 = vmatpush1.msra.mxu0 0.0
      %3000 = vmatprep.subr.mxu0 0.0
      %3001 = vmatpush1.msra.mxu0 0.0
      %3002 = vmatprep.subr.mxu0 0.0
      %3003 = vmatpush1.msra.mxu0 0.0
      %3004 = vmatprep.subr.mxu0 0.0
      %3005 = vmatpush1.msra.mxu0 0.0
      %3006 = vmatprep.subr.mxu0 0.0
      %3007 = vmatpush1.msra.mxu0 0.0
      %3008 = vmatprep.subr.mxu0 0.0
      %3009 = vmatpush1.msra.mxu0 0.0
      %3010 = vmatprep.subr.mxu0 0.0
      %3011 = vmatpush1.msra.mxu0 0.0
      %3012 = vmatprep.subr.mxu0 0.0
      %3013 = vmatpush1.msra.mxu0 0.0
      %3014 = vmatprep.subr.mxu0 0.0
      %3015 = vmatpush1.msra.mxu0 0.0
      %3016 = vmatprep.subr.mxu0 0.0
      %3017 = vmatpush1.msra.mxu0 0.0
      %3018 = vmatprep.subr.mxu0 0.0
      %3019 = vmatpush1.msra.mxu0 0.0
      %3020 = vmatprep.subr.mxu0 0.0
      %3021 = vmatpush1.msra.mxu0 %v2983
      %3022 = vmatprep.subr.mxu0 0.0
      %3023 = vmatpush1.msra.mxu0 %v2981
      %3024 = vmatprep.subr.mxu0 0.0
      %3025 = vmatpush2.msra.mxu0 0.0
      %3026 = vmatprep.subr.mxu0 0.0
      %3027 = vmatpush2.msra.mxu0 0.0
      %3028 = vmatprep.subr.mxu0 0.0
      %3029 = vmatpush2.msra.mxu0 0.0
      %3030 = vmatprep.subr.mxu0 0.0
      %3031 = vmatpush2.msra.mxu0 0.0
      %3032 = vmatprep.subr.mxu0 0.0
      %3033 = vmatpush2.msra.mxu0 0.0
      %3034 = vmatprep.subr.mxu0 0.0
      %3035 = vmatpush2.msra.mxu0 0.0
      %3036 = vmatprep.subr.mxu0 0.0
      %3037 = vmatpush2.msra.mxu0 0.0
      %3038 = vmatprep.subr.mxu0 0.0
      %3039 = vmatpush2.msra.mxu0 0.0
      %3040 = vmatprep.subr.mxu0 0.0
      %3041 = vmatpush2.msra.mxu0 0.0
      %3042 = vmatprep.subr.mxu0 0.0
      %3043 = vmatpush2.msra.mxu0 0.0
      %3044 = vmatprep.subr.mxu0 0.0
      %3045 = vmatpush2.msra.mxu0 0.0
      %3046 = vmatprep.subr.mxu0 0.0
      %3047 = vmatpush2.msra.mxu0 0.0
      %3048 = vmatprep.subr.mxu0 0.0
      %3049 = vmatpush2.msra.mxu0 0.0
      %3050 = vmatprep.subr.mxu0 0.0
      %3051 = vmatpush2.msra.mxu0 0.0
      %3052 = vmatprep.subr.mxu0 0.0
      %3053 = vmatpush2.msra.mxu0 0.0
      %3054 = vmatprep.subr.mxu0 0.0
      %3055 = vmatpush2.msra.mxu0 0.0
      %3056 = vmatprep.mubr.f32.mxu0 0.0
      %3057 = vmatmul.mubr.f32.gmra.mxu0 %v2987
      %v3058 = vpop.f32.mrf.mxu0
      %v3059 = vadd.f32 0.0, %v3058
      %v3060 = vpop.f32.mrf.mxu0
      %3061 = vmatprep.mubr.f32.mxu0 0.0
      %3062 = vmatmul.mubr.f32.gmra.mxu0 %v2990
      %v3063 = vpop.f32.mrf.mxu0
      %v3064 = vadd.f32 0.0, %v3063
      %v3065 = vpop.f32.mrf.mxu0
      %3066 = vdwg.mxu0
      %v3068 = vsel %vm905, %v3059, 0
      %v3071 = vsel %vm905, %v3064, 0
      %3073 = vmatprep.subr.mxu0 0.0
      %3074 = vmatpush1.msra.mxu0 0.0
      %3075 = vmatprep.subr.mxu0 0.0
      %3076 = vmatpush1.msra.mxu0 0.0
      %3077 = vmatprep.subr.mxu0 0.0
      %3078 = vmatpush1.msra.mxu0 0.0
      %3079 = vmatprep.subr.mxu0 0.0
      %3080 = vmatpush1.msra.mxu0 0.0
      %3081 = vmatprep.subr.mxu0 0.0
      %3082 = vmatpush1.msra.mxu0 0.0
      %3083 = vmatprep.subr.mxu0 0.0
      %3084 = vmatpush1.msra.mxu0 0.0
      %3085 = vmatprep.subr.mxu0 0.0
      %3086 = vmatpush1.msra.mxu0 0.0
      %3087 = vmatprep.subr.mxu0 0.0
      %3088 = vmatpush1.msra.mxu0 0.0
      %3089 = vmatprep.subr.mxu0 0.0
      %3090 = vmatpush1.msra.mxu0 0.0
      %3091 = vmatprep.subr.mxu0 0.0
      %3092 = vmatpush1.msra.mxu0 0.0
      %3093 = vmatprep.subr.mxu0 0.0
      %3094 = vmatpush1.msra.mxu0 0.0
      %3095 = vmatprep.subr.mxu0 0.0
      %3096 = vmatpush1.msra.mxu0 0.0
      %3097 = vmatprep.subr.mxu0 0.0
      %3098 = vmatpush1.msra.mxu0 0.0
      %3099 = vmatprep.subr.mxu0 0.0
      %3100 = vmatpush1.msra.mxu0 0.0
      %3101 = vmatprep.subr.mxu0 0.0
      %3102 = vmatpush1.msra.mxu0 0.0
      %3103 = vmatprep.subr.mxu0 0.0
      %3104 = vmatpush1.msra.mxu0 %v2306
      %3105 = vmatprep.subr.mxu0 0.0
      %3106 = vmatpush2.msra.mxu0 0.0
      %3107 = vmatprep.subr.mxu0 0.0
      %3108 = vmatpush2.msra.mxu0 0.0
      %3109 = vmatprep.subr.mxu0 0.0
      %3110 = vmatpush2.msra.mxu0 0.0
      %3111 = vmatprep.subr.mxu0 0.0
      %3112 = vmatpush2.msra.mxu0 0.0
      %3113 = vmatprep.subr.mxu0 0.0
      %3114 = vmatpush2.msra.mxu0 0.0
      %3115 = vmatprep.subr.mxu0 0.0
      %3116 = vmatpush2.msra.mxu0 0.0
      %3117 = vmatprep.subr.mxu0 0.0
      %3118 = vmatpush2.msra.mxu0 0.0
      %3119 = vmatprep.subr.mxu0 0.0
      %3120 = vmatpush2.msra.mxu0 0.0
      %3121 = vmatprep.subr.mxu0 0.0
      %3122 = vmatpush2.msra.mxu0 0.0
      %3123 = vmatprep.subr.mxu0 0.0
      %3124 = vmatpush2.msra.mxu0 0.0
      %3125 = vmatprep.subr.mxu0 0.0
      %3126 = vmatpush2.msra.mxu0 0.0
      %3127 = vmatprep.subr.mxu0 0.0
      %3128 = vmatpush2.msra.mxu0 0.0
      %3129 = vmatprep.subr.mxu0 0.0
      %3130 = vmatpush2.msra.mxu0 0.0
      %3131 = vmatprep.subr.mxu0 0.0
      %3132 = vmatpush2.msra.mxu0 0.0
      %3133 = vmatprep.subr.mxu0 0.0
      %3134 = vmatpush2.msra.mxu0 0.0
      %3135 = vmatprep.subr.mxu0 0.0
      %3136 = vmatpush2.msra.mxu0 0.0
      %3137 = vmatprep.mubr.f32.mxu0 0.0
      %3138 = vmatmul.mubr.f32.gmra.mxu0 %v3068
      %v3139 = vpop.f32.mrf.mxu0
      %v3140 = vadd.f32 0.0, %v3139
      %v3141 = vpop.f32.mrf.mxu0
      %3142 = vmatprep.mubr.f32.mxu0 0.0
      %3143 = vmatmul.mubr.f32.gmra.mxu0 %v3071
      %v3144 = vpop.f32.mrf.mxu0
      %v3145 = vadd.f32 0.0, %v3144
      %v3146 = vpop.f32.mrf.mxu0
      %3147 = vdwg.mxu0
      %v3148 = vadd.f32 %v2859, %v3140
      %v3149 = vadd.f32 %v2864, %v3145
      %3150 = vrot.lane.b32.xlu0 %v2204, 104
      %v3151 = vpop.permute.xlu0 %3150
      %3152 = vrot.lane.b32.xlu0 %v2209, 104
      %v3153 = vpop.permute.xlu0 %3152
      %3154 = vrot.lane.b32.xlu0 %v2296, 104
      %v3155 = vpop.permute.xlu0 %3154
      %3156 = vrot.lane.b32.xlu0 %v2301, 104
      %v3157 = vpop.permute.xlu0 %3156
      %v3158 = vsel %vm905, %v3151, 0
      %v3160 = vsel %vm905, %v3153, 0
      %v3162 = vsel %vm905, %v3155, 0
      %v3164 = vsel %vm905, %v3157, 0
      %3166 = vmatprep.subr.mxu0 0.0
      %3167 = vmatpush1.xpose.msra.mxu0 0.0
      %3168 = vmatprep.subr.mxu0 0.0
      %3169 = vmatpush1.xpose.msra.mxu0 0.0
      %3170 = vmatprep.subr.mxu0 0.0
      %3171 = vmatpush1.xpose.msra.mxu0 0.0
      %3172 = vmatprep.subr.mxu0 0.0
      %3173 = vmatpush1.xpose.msra.mxu0 0.0
      %3174 = vmatprep.subr.mxu0 0.0
      %3175 = vmatpush1.xpose.msra.mxu0 0.0
      %3176 = vmatprep.subr.mxu0 0.0
      %3177 = vmatpush1.xpose.msra.mxu0 0.0
      %3178 = vmatprep.subr.mxu0 0.0
      %3179 = vmatpush1.xpose.msra.mxu0 0.0
      %3180 = vmatprep.subr.mxu0 0.0
      %3181 = vmatpush1.xpose.msra.mxu0 0.0
      %3182 = vmatprep.subr.mxu0 0.0
      %3183 = vmatpush1.xpose.msra.mxu0 0.0
      %3184 = vmatprep.subr.mxu0 0.0
      %3185 = vmatpush1.xpose.msra.mxu0 0.0
      %3186 = vmatprep.subr.mxu0 0.0
      %3187 = vmatpush1.xpose.msra.mxu0 0.0
      %3188 = vmatprep.subr.mxu0 0.0
      %3189 = vmatpush1.xpose.msra.mxu0 0.0
      %3190 = vmatprep.subr.mxu0 0.0
      %3191 = vmatpush1.xpose.msra.mxu0 0.0
      %3192 = vmatprep.subr.mxu0 0.0
      %3193 = vmatpush1.xpose.msra.mxu0 0.0
      %3194 = vmatprep.subr.mxu0 0.0
      %3195 = vmatpush1.xpose.msra.mxu0 %v3164
      %3196 = vmatprep.subr.mxu0 0.0
      %3197 = vmatpush1.xpose.msra.mxu0 %v3162
      %3198 = vmatprep.subr.mxu0 0.0
      %3199 = vmatpush2.xpose.msra.mxu0 0.0
      %3200 = vmatprep.subr.mxu0 0.0
      %3201 = vmatpush2.xpose.msra.mxu0 0.0
      %3202 = vmatprep.subr.mxu0 0.0
      %3203 = vmatpush2.xpose.msra.mxu0 0.0
      %3204 = vmatprep.subr.mxu0 0.0
      %3205 = vmatpush2.xpose.msra.mxu0 0.0
      %3206 = vmatprep.subr.mxu0 0.0
      %3207 = vmatpush2.xpose.msra.mxu0 0.0
      %3208 = vmatprep.subr.mxu0 0.0
      %3209 = vmatpush2.xpose.msra.mxu0 0.0
      %3210 = vmatprep.subr.mxu0 0.0
      %3211 = vmatpush2.xpose.msra.mxu0 0.0
      %3212 = vmatprep.subr.mxu0 0.0
      %3213 = vmatpush2.xpose.msra.mxu0 0.0
      %3214 = vmatprep.subr.mxu0 0.0
      %3215 = vmatpush2.xpose.msra.mxu0 0.0
      %3216 = vmatprep.subr.mxu0 0.0
      %3217 = vmatpush2.xpose.msra.mxu0 0.0
      %3218 = vmatprep.subr.mxu0 0.0
      %3219 = vmatpush2.xpose.msra.mxu0 0.0
      %3220 = vmatprep.subr.mxu0 0.0
      %3221 = vmatpush2.xpose.msra.mxu0 0.0
      %3222 = vmatprep.subr.mxu0 0.0
      %3223 = vmatpush2.xpose.msra.mxu0 0.0
      %3224 = vmatprep.subr.mxu0 0.0
      %3225 = vmatpush2.xpose.msra.mxu0 0.0
      %3226 = vmatprep.subr.mxu0 0.0
      %3227 = vmatpush2.xpose.msra.mxu0 0.0
      %3228 = vmatprep.subr.mxu0 0.0
      %3229 = vmatpush2.xpose.msra.mxu0 0.0
      %3230 = vmatprep.mubr.f32.mxu0 0.0
      %3231 = vmatmul.mubr.f32.gmra.mxu0 %v3158
      %v3232 = vpop.f32.mrf.mxu0
      %v3233 = vadd.f32 0.0, %v3232
      %v3234 = vpop.f32.mrf.mxu0
      %3235 = vmatprep.mubr.f32.mxu0 0.0
      %3236 = vmatmul.mubr.f32.gmra.mxu0 %v3160
      %v3237 = vpop.f32.mrf.mxu0
      %v3238 = vadd.f32 0.0, %v3237
      %v3239 = vpop.f32.mrf.mxu0
      %3240 = vdwg.mxu0
      %v3241 = vsel %vm989, %v3233, -inf
      %3242 = vmax.xlane.f32.xlu0 %v3241
      %v3243 = vpop.xlane.xlu0 %3242
      %v3244 = vsel %vm989, %v3238, -inf
      %3245 = vmax.xlane.f32.xlu0 %v3244
      %v3246 = vpop.xlane.xlu0 %3245
      %v3247 = vsub.f32 %v3233, %v3243
      %v3248 = vsub.f32 %v3238, %v3246
      %v3249 = vmul.f32 %v3247, 1.442695
      %v3250 = vpow.pop %v3249
      %v3251 = vmul.f32 %v3248, 1.442695
      %v3252 = vpow.pop %v3251
      %v3253 = vsel %vm989, %v3250, 0.0
      %3254 = vadd.xlane.f32.xlu0 %v3253
      %v3255 = vpop.xlane.xlu0 %3254
      %v3256 = vsel %vm989, %v3252, 0.0
      %3257 = vadd.xlane.f32.xlu0 %v3256
      %v3258 = vpop.xlane.xlu0 %3257
      %v3259 = vrcp.pop %v3255
      %v3260 = vrcp.pop %v3258
      %v3261 = vmul.f32 %v3250, %v3259
      %v3262 = vmul.f32 %v3252, %v3260
      %3263 = vrot.lane.b32.xlu0 %v2296, 72
      %v3264 = vpop.permute.xlu0 %3263
      %3265 = vrot.lane.b32.xlu0 %v2301, 72
      %v3266 = vpop.permute.xlu0 %3265
      %v3270 = vsel %vm989, %v3261, 0
      %v3273 = vsel %vm989, %v3262, 0
      %3275 = vmatprep.subr.mxu0 0.0
      %3276 = vmatpush1.msra.mxu0 0.0
      %3277 = vmatprep.subr.mxu0 0.0
      %3278 = vmatpush1.msra.mxu0 0.0
      %3279 = vmatprep.subr.mxu0 0.0
      %3280 = vmatpush1.msra.mxu0 0.0
      %3281 = vmatprep.subr.mxu0 0.0
      %3282 = vmatpush1.msra.mxu0 0.0
      %3283 = vmatprep.subr.mxu0 0.0
      %3284 = vmatpush1.msra.mxu0 0.0
      %3285 = vmatprep.subr.mxu0 0.0
      %3286 = vmatpush1.msra.mxu0 0.0
      %3287 = vmatprep.subr.mxu0 0.0
      %3288 = vmatpush1.msra.mxu0 0.0
      %3289 = vmatprep.subr.mxu0 0.0
      %3290 = vmatpush1.msra.mxu0 0.0
      %3291 = vmatprep.subr.mxu0 0.0
      %3292 = vmatpush1.msra.mxu0 0.0
      %3293 = vmatprep.subr.mxu0 0.0
      %3294 = vmatpush1.msra.mxu0 0.0
      %3295 = vmatprep.subr.mxu0 0.0
      %3296 = vmatpush1.msra.mxu0 0.0
      %3297 = vmatprep.subr.mxu0 0.0
      %3298 = vmatpush1.msra.mxu0 0.0
      %3299 = vmatprep.subr.mxu0 0.0
      %3300 = vmatpush1.msra.mxu0 0.0
      %3301 = vmatprep.subr.mxu0 0.0
      %3302 = vmatpush1.msra.mxu0 0.0
      %3303 = vmatprep.subr.mxu0 0.0
      %3304 = vmatpush1.msra.mxu0 %v3266
      %3305 = vmatprep.subr.mxu0 0.0
      %3306 = vmatpush1.msra.mxu0 %v3264
      %3307 = vmatprep.subr.mxu0 0.0
      %3308 = vmatpush2.msra.mxu0 0.0
      %3309 = vmatprep.subr.mxu0 0.0
      %3310 = vmatpush2.msra.mxu0 0.0
      %3311 = vmatprep.subr.mxu0 0.0
      %3312 = vmatpush2.msra.mxu0 0.0
      %3313 = vmatprep.subr.mxu0 0.0
      %3314 = vmatpush2.msra.mxu0 0.0
      %3315 = vmatprep.subr.mxu0 0.0
      %3316 = vmatpush2.msra.mxu0 0.0
      %3317 = vmatprep.subr.mxu0 0.0
      %3318 = vmatpush2.msra.mxu0 0.0
      %3319 = vmatprep.subr.mxu0 0.0
      %3320 = vmatpush2.msra.mxu0 0.0
      %3321 = vmatprep.subr.mxu0 0.0
      %3322 = vmatpush2.msra.mxu0 0.0
      %3323 = vmatprep.subr.mxu0 0.0
      %3324 = vmatpush2.msra.mxu0 0.0
      %3325 = vmatprep.subr.mxu0 0.0
      %3326 = vmatpush2.msra.mxu0 0.0
      %3327 = vmatprep.subr.mxu0 0.0
      %3328 = vmatpush2.msra.mxu0 0.0
      %3329 = vmatprep.subr.mxu0 0.0
      %3330 = vmatpush2.msra.mxu0 0.0
      %3331 = vmatprep.subr.mxu0 0.0
      %3332 = vmatpush2.msra.mxu0 0.0
      %3333 = vmatprep.subr.mxu0 0.0
      %3334 = vmatpush2.msra.mxu0 0.0
      %3335 = vmatprep.subr.mxu0 0.0
      %3336 = vmatpush2.msra.mxu0 0.0
      %3337 = vmatprep.subr.mxu0 0.0
      %3338 = vmatpush2.msra.mxu0 0.0
      %3339 = vmatprep.mubr.f32.mxu0 0.0
      %3340 = vmatmul.mubr.f32.gmra.mxu0 %v3270
      %v3341 = vpop.f32.mrf.mxu0
      %v3342 = vadd.f32 0.0, %v3341
      %v3343 = vpop.f32.mrf.mxu0
      %3344 = vmatprep.mubr.f32.mxu0 0.0
      %3345 = vmatmul.mubr.f32.gmra.mxu0 %v3273
      %v3346 = vpop.f32.mrf.mxu0
      %v3347 = vadd.f32 0.0, %v3346
      %v3348 = vpop.f32.mrf.mxu0
      %3349 = vdwg.mxu0
      %v3351 = vsel %vm905, %v3342, 0
      %v3354 = vsel %vm905, %v3347, 0
      %3356 = vmatprep.subr.mxu0 0.0
      %3357 = vmatpush1.msra.mxu0 0.0
      %3358 = vmatprep.subr.mxu0 0.0
      %3359 = vmatpush1.msra.mxu0 0.0
      %3360 = vmatprep.subr.mxu0 0.0
      %3361 = vmatpush1.msra.mxu0 0.0
      %3362 = vmatprep.subr.mxu0 0.0
      %3363 = vmatpush1.msra.mxu0 0.0
      %3364 = vmatprep.subr.mxu0 0.0
      %3365 = vmatpush1.msra.mxu0 0.0
      %3366 = vmatprep.subr.mxu0 0.0
      %3367 = vmatpush1.msra.mxu0 0.0
      %3368 = vmatprep.subr.mxu0 0.0
      %3369 = vmatpush1.msra.mxu0 0.0
      %3370 = vmatprep.subr.mxu0 0.0
      %3371 = vmatpush1.msra.mxu0 0.0
      %3372 = vmatprep.subr.mxu0 0.0
      %3373 = vmatpush1.msra.mxu0 0.0
      %3374 = vmatprep.subr.mxu0 0.0
      %3375 = vmatpush1.msra.mxu0 0.0
      %3376 = vmatprep.subr.mxu0 0.0
      %3377 = vmatpush1.msra.mxu0 0.0
      %3378 = vmatprep.subr.mxu0 0.0
      %3379 = vmatpush1.msra.mxu0 0.0
      %3380 = vmatprep.subr.mxu0 0.0
      %3381 = vmatpush1.msra.mxu0 0.0
      %3382 = vmatprep.subr.mxu0 0.0
      %3383 = vmatpush1.msra.mxu0 0.0
      %3384 = vmatprep.subr.mxu0 0.0
      %3385 = vmatpush1.msra.mxu0 0.0
      %3386 = vmatprep.subr.mxu0 0.0
      %3387 = vmatpush1.msra.mxu0 %v2307
      %3388 = vmatprep.subr.mxu0 0.0
      %3389 = vmatpush2.msra.mxu0 0.0
      %3390 = vmatprep.subr.mxu0 0.0
      %3391 = vmatpush2.msra.mxu0 0.0
      %3392 = vmatprep.subr.mxu0 0.0
      %3393 = vmatpush2.msra.mxu0 0.0
      %3394 = vmatprep.subr.mxu0 0.0
      %3395 = vmatpush2.msra.mxu0 0.0
      %3396 = vmatprep.subr.mxu0 0.0
      %3397 = vmatpush2.msra.mxu0 0.0
      %3398 = vmatprep.subr.mxu0 0.0
      %3399 = vmatpush2.msra.mxu0 0.0
      %3400 = vmatprep.subr.mxu0 0.0
      %3401 = vmatpush2.msra.mxu0 0.0
      %3402 = vmatprep.subr.mxu0 0.0
      %3403 = vmatpush2.msra.mxu0 0.0
      %3404 = vmatprep.subr.mxu0 0.0
      %3405 = vmatpush2.msra.mxu0 0.0
      %3406 = vmatprep.subr.mxu0 0.0
      %3407 = vmatpush2.msra.mxu0 0.0
      %3408 = vmatprep.subr.mxu0 0.0
      %3409 = vmatpush2.msra.mxu0 0.0
      %3410 = vmatprep.subr.mxu0 0.0
      %3411 = vmatpush2.msra.mxu0 0.0
      %3412 = vmatprep.subr.mxu0 0.0
      %3413 = vmatpush2.msra.mxu0 0.0
      %3414 = vmatprep.subr.mxu0 0.0
      %3415 = vmatpush2.msra.mxu0 0.0
      %3416 = vmatprep.subr.mxu0 0.0
      %3417 = vmatpush2.msra.mxu0 0.0
      %3418 = vmatprep.subr.mxu0 0.0
      %3419 = vmatpush2.msra.mxu0 0.0
      %3420 = vmatprep.mubr.f32.mxu0 0.0
      %3421 = vmatmul.mubr.f32.gmra.mxu0 %v3351
      %v3422 = vpop.f32.mrf.mxu0
      %v3423 = vadd.f32 0.0, %v3422
      %v3424 = vpop.f32.mrf.mxu0
      %3425 = vmatprep.mubr.f32.mxu0 0.0
      %3426 = vmatmul.mubr.f32.gmra.mxu0 %v3354
      %v3427 = vpop.f32.mrf.mxu0
      %v3428 = vadd.f32 0.0, %v3427
      %v3429 = vpop.f32.mrf.mxu0
      %3430 = vdwg.mxu0
      %v3431 = vadd.f32 %v3148, %v3423
      %v3432 = vadd.f32 %v3149, %v3428
      %v3434 = vlaneseq
      %v3435 = vshrl.u32 %v3434, 7
      %v3436 = vsub.s32 0, %v3435
      %v3437 = vrot.slane %v2308, %v3436
      %v3439 = vadd.f32 %v3431, %v3437
      %v3440 = vadd.f32 %v3432, %v3437
      %v3441 = vadd.f32 %v2118, %v3439
      %v3442 = vadd.f32 %v2119, %v3440
      %3443 = vmatprep.subr.mxu0 0.0
      %3444 = vmatpush1.msra.mxu0 0.0
      %3445 = vmatprep.subr.mxu0 0.0
      %3446 = vmatpush1.msra.mxu0 0.0
      %3447 = vmatprep.subr.mxu0 0.0
      %3448 = vmatpush1.msra.mxu0 0.0
      %3449 = vmatprep.subr.mxu0 0.0
      %3450 = vmatpush1.msra.mxu0 0.0
      %3451 = vmatprep.subr.mxu0 0.0
      %3452 = vmatpush1.msra.mxu0 0.0
      %3453 = vmatprep.subr.mxu0 0.0
      %3454 = vmatpush1.msra.mxu0 0.0
      %3455 = vmatprep.subr.mxu0 0.0
      %3456 = vmatpush1.msra.mxu0 0.0
      %3457 = vmatprep.subr.mxu0 0.0
      %3458 = vmatpush1.msra.mxu0 0.0
      %3459 = vmatprep.subr.mxu0 0.0
      %3460 = vmatpush1.msra.mxu0 0.0
      %3461 = vmatprep.subr.mxu0 0.0
      %3462 = vmatpush1.msra.mxu0 0.0
      %3463 = vmatprep.subr.mxu0 0.0
      %3464 = vmatpush1.msra.mxu0 0.0
      %3465 = vmatprep.subr.mxu0 0.0
      %3466 = vmatpush1.msra.mxu0 0.0
      %3467 = vmatprep.subr.mxu0 0.0
      %3468 = vmatpush1.msra.mxu0 0.0
      %3469 = vmatprep.subr.mxu0 0.0
      %3470 = vmatpush1.msra.mxu0 0.0
      %3471 = vmatprep.subr.mxu0 0.0
      %3472 = vmatpush1.msra.mxu0 %v3442
      %3473 = vmatprep.subr.mxu0 0.0
      %3474 = vmatpush1.msra.mxu0 %v3441
      %3475 = vmatprep.subr.mxu0 0.0
      %3476 = vmatpush2.msra.mxu0 0.0
      %3477 = vmatprep.subr.mxu0 0.0
      %3478 = vmatpush2.msra.mxu0 0.0
      %3479 = vmatprep.subr.mxu0 0.0
      %3480 = vmatpush2.msra.mxu0 0.0
      %3481 = vmatprep.subr.mxu0 0.0
      %3482 = vmatpush2.msra.mxu0 0.0
      %3483 = vmatprep.subr.mxu0 0.0
      %3484 = vmatpush2.msra.mxu0 0.0
      %3485 = vmatprep.subr.mxu0 0.0
      %3486 = vmatpush2.msra.mxu0 0.0
      %3487 = vmatprep.subr.mxu0 0.0
      %3488 = vmatpush2.msra.mxu0 0.0
      %3489 = vmatprep.subr.mxu0 0.0
      %3490 = vmatpush2.msra.mxu0 0.0
      %3491 = vmatprep.subr.mxu0 0.0
      %3492 = vmatpush2.msra.mxu0 0.0
      %3493 = vmatprep.subr.mxu0 0.0
      %3494 = vmatpush2.msra.mxu0 0.0
      %3495 = vmatprep.subr.mxu0 0.0
      %3496 = vmatpush2.msra.mxu0 0.0
      %3497 = vmatprep.subr.mxu0 0.0
      %3498 = vmatpush2.msra.mxu0 0.0
      %3499 = vmatprep.subr.mxu0 0.0
      %3500 = vmatpush2.msra.mxu0 0.0
      %3501 = vmatprep.subr.mxu0 0.0
      %3502 = vmatpush2.msra.mxu0 0.0
      %3503 = vmatprep.subr.mxu0 0.0
      %3504 = vmatpush2.msra.mxu0 0.0
      %3505 = vmatprep.subr.mxu0 0.0
      %3506 = vmatpush2.msra.mxu0 0.0
      %3507 = vmatprep.mubr.f32.mxu0 0.0
      %3508 = vmatmul.mubr.f32.gmra.mxu0 %v2038
      %v3509 = vpop.f32.mrf.mxu0
      %v3510 = vadd.f32 0.0, %v3509
      %v3511 = vpop.f32.mrf.mxu0
      %3512 = vmatprep.mubr.f32.mxu0 0.0
      %3513 = vmatmul.mubr.f32.gmra.mxu0 %v2041
      %v3514 = vpop.f32.mrf.mxu0
      %v3515 = vadd.f32 0.0, %v3514
      %v3516 = vpop.f32.mrf.mxu0
      %3517 = vdwg.mxu0
      %v3518 = vsub.f32 %v3441, %v3510
      %v3519 = vsub.f32 %v3442, %v3515
      %v3520 = vld [vmem:[%s16] sm:$0xff]
      %v3521 = vld [vmem:[%s16 + $0x8] sm:$0xff]
      %v3522 = vld [vmem:[%s16 + $0x10] sm:$0xff]
      %v3523 = vld [vmem:[%s16 + $0x18] sm:$0xff]
      %v3524 = vld [vmem:[%s17] sm:$0x1]
      %v3525 = vld [vmem:[%s18] sm:$0xff]
      %v3526 = vld [vmem:[%s18 + $0x8] sm:$0xff]
      %v3527 = vld [vmem:[%s18 + $0x10] sm:$0xff]
      %v3528 = vld [vmem:[%s18 + $0x18] sm:$0xff]
      %v3529 = vld [vmem:[%s18 + $0x20] sm:$0xff]
      %v3530 = vld [vmem:[%s18 + $0x28] sm:$0xff]
      %v3531 = vld [vmem:[%s18 + $0x30] sm:$0xff]
      %v3532 = vld [vmem:[%s18 + $0x38] sm:$0xff]
      %v3533 = vld [vmem:[%s19] sm:$0x1]
      %v3535 = vlaneseq
      %v3536 = vshrl.u32 %v3535, 7
      %v3537 = vsub.s32 0, %v3536
      %v3538 = vrot.slane %v3524, %v3537
      %v3541 = vsel %vm812, %v3518, 0
      %v3544 = vsel %vm812, %v3519, 0
      %3546 = vmatprep.subr.mxu0 0.0
      %3547 = vmatpush1.msra.mxu0 0.0
      %3548 = vmatprep.subr.mxu0 0.0
      %3549 = vmatpush1.msra.mxu0 0.0
      %3550 = vmatprep.subr.mxu0 0.0
      %3551 = vmatpush1.msra.mxu0 0.0
      %3552 = vmatprep.subr.mxu0 0.0
      %3553 = vmatpush1.msra.mxu0 0.0
      %3554 = vmatprep.subr.mxu0 0.0
      %3555 = vmatpush1.msra.mxu0 0.0
      %3556 = vmatprep.subr.mxu0 0.0
      %3557 = vmatpush1.msra.mxu0 0.0
      %3558 = vmatprep.subr.mxu0 0.0
      %3559 = vmatpush1.msra.mxu0 0.0
      %3560 = vmatprep.subr.mxu0 0.0
      %3561 = vmatpush1.msra.mxu0 0.0
      %3562 = vmatprep.subr.mxu0 0.0
      %3563 = vmatpush1.msra.mxu0 0.0
      %3564 = vmatprep.subr.mxu0 0.0
      %3565 = vmatpush1.msra.mxu0 0.0
      %3566 = vmatprep.subr.mxu0 0.0
      %3567 = vmatpush1.msra.mxu0 0.0
      %3568 = vmatprep.subr.mxu0 0.0
      %3569 = vmatpush1.msra.mxu0 0.0
      %3570 = vmatprep.subr.mxu0 0.0
      %3571 = vmatpush1.msra.mxu0 %v3523
      %3572 = vmatprep.subr.mxu0 0.0
      %3573 = vmatpush1.msra.mxu0 %v3522
      %3574 = vmatprep.subr.mxu0 0.0
      %3575 = vmatpush1.msra.mxu0 %v3521
      %3576 = vmatprep.subr.mxu0 0.0
      %3577 = vmatpush1.msra.mxu0 %v3520
      %3578 = vmatprep.subr.mxu0 0.0
      %3579 = vmatpush2.msra.mxu0 0.0
      %3580 = vmatprep.subr.mxu0 0.0
      %3581 = vmatpush2.msra.mxu0 0.0
      %3582 = vmatprep.subr.mxu0 0.0
      %3583 = vmatpush2.msra.mxu0 0.0
      %3584 = vmatprep.subr.mxu0 0.0
      %3585 = vmatpush2.msra.mxu0 0.0
      %3586 = vmatprep.subr.mxu0 0.0
      %3587 = vmatpush2.msra.mxu0 0.0
      %3588 = vmatprep.subr.mxu0 0.0
      %3589 = vmatpush2.msra.mxu0 0.0
      %3590 = vmatprep.subr.mxu0 0.0
      %3591 = vmatpush2.msra.mxu0 0.0
      %3592 = vmatprep.subr.mxu0 0.0
      %3593 = vmatpush2.msra.mxu0 0.0
      %3594 = vmatprep.subr.mxu0 0.0
      %3595 = vmatpush2.msra.mxu0 0.0
      %3596 = vmatprep.subr.mxu0 0.0
      %3597 = vmatpush2.msra.mxu0 0.0
      %3598 = vmatprep.subr.mxu0 0.0
      %3599 = vmatpush2.msra.mxu0 0.0
      %3600 = vmatprep.subr.mxu0 0.0
      %3601 = vmatpush2.msra.mxu0 0.0
      %3602 = vmatprep.subr.mxu0 0.0
      %3603 = vmatpush2.msra.mxu0 0.0
      %3604 = vmatprep.subr.mxu0 0.0
      %3605 = vmatpush2.msra.mxu0 0.0
      %3606 = vmatprep.subr.mxu0 0.0
      %3607 = vmatpush2.msra.mxu0 0.0
      %3608 = vmatprep.subr.mxu0 0.0
      %3609 = vmatpush2.msra.mxu0 0.0
      %3610 = vmatprep.mubr.f32.mxu0 0.0
      %3611 = vmatmul.mubr.f32.gmra.mxu0 %v3541
      %v3612 = vpop.f32.mrf.mxu0
      %v3613 = vadd.f32 %v3538, %v3612
      %v3614 = vpop.f32.mrf.mxu0
      %3615 = vmatprep.mubr.f32.mxu0 0.0
      %3616 = vmatmul.mubr.f32.gmra.mxu0 %v3544
      %v3617 = vpop.f32.mrf.mxu0
      %v3618 = vadd.f32 %v3538, %v3617
      %v3619 = vpop.f32.mrf.mxu0
      %3620 = vdwg.mxu0
      %v3621 = vmul.f32 %v3613, %v3613
      %v3622 = vmul.f32 %v3618, %v3618
      %v3623 = vmul.f32 %v3613, %v3621
      %v3624 = vmul.f32 %v3618, %v3622
      %v3625 = vmul.f32 %v3623, 0.044715
      %v3626 = vmul.f32 %v3624, 0.044715
      %v3627 = vadd.f32 %v3613, %v3625
      %v3628 = vadd.f32 %v3618, %v3626
      %v3629 = vmul.f32 %v3627, 0.7978846
      %v3630 = vmul.f32 %v3628, 0.7978846
      %v3631 = vtanh.pop %v3629
      %v3632 = vtanh.pop %v3630
      %v3633 = vadd.f32 %v3631, 1.0
      %v3634 = vadd.f32 %v3632, 1.0
      %v3635 = vmul.f32 %v3633, 0.5
      %v3636 = vmul.f32 %v3634, 0.5
      %v3637 = vmul.f32 %v3613, %v3635
      %v3638 = vmul.f32 %v3618, %v3636
      %v3640 = vlaneseq
      %v3641 = vshrl.u32 %v3640, 7
      %v3642 = vsub.s32 0, %v3641
      %v3643 = vrot.slane %v3533, %v3642
      %vm3645 = vcmask 523264
      %v3647 = vsel %vm3645, %v3637, 0
      %v3650 = vsel %vm3645, %v3638, 0
      %3652 = vmatprep.subr.mxu0 0.0
      %3653 = vmatpush1.msra.mxu0 0.0
      %3654 = vmatprep.subr.mxu0 0.0
      %3655 = vmatpush1.msra.mxu0 0.0
      %3656 = vmatprep.subr.mxu0 0.0
      %3657 = vmatpush1.msra.mxu0 0.0
      %3658 = vmatprep.subr.mxu0 0.0
      %3659 = vmatpush1.msra.mxu0 0.0
      %3660 = vmatprep.subr.mxu0 0.0
      %3661 = vmatpush1.msra.mxu0 0.0
      %3662 = vmatprep.subr.mxu0 0.0
      %3663 = vmatpush1.msra.mxu0 0.0
      %3664 = vmatprep.subr.mxu0 0.0
      %3665 = vmatpush1.msra.mxu0 0.0
      %3666 = vmatprep.subr.mxu0 0.0
      %3667 = vmatpush1.msra.mxu0 0.0
      %3668 = vmatprep.subr.mxu0 0.0
      %3669 = vmatpush1.msra.mxu0 %v3532
      %3670 = vmatprep.subr.mxu0 0.0
      %3671 = vmatpush1.msra.mxu0 %v3531
      %3672 = vmatprep.subr.mxu0 0.0
      %3673 = vmatpush1.msra.mxu0 %v3530
      %3674 = vmatprep.subr.mxu0 0.0
      %3675 = vmatpush1.msra.mxu0 %v3529
      %3676 = vmatprep.subr.mxu0 0.0
      %3677 = vmatpush1.msra.mxu0 %v3528
      %3678 = vmatprep.subr.mxu0 0.0
      %3679 = vmatpush1.msra.mxu0 %v3527
      %3680 = vmatprep.subr.mxu0 0.0
      %3681 = vmatpush1.msra.mxu0 %v3526
      %3682 = vmatprep.subr.mxu0 0.0
      %3683 = vmatpush1.msra.mxu0 %v3525
      %3684 = vmatprep.subr.mxu0 0.0
      %3685 = vmatpush2.msra.mxu0 0.0
      %3686 = vmatprep.subr.mxu0 0.0
      %3687 = vmatpush2.msra.mxu0 0.0
      %3688 = vmatprep.subr.mxu0 0.0
      %3689 = vmatpush2.msra.mxu0 0.0
      %3690 = vmatprep.subr.mxu0 0.0
      %3691 = vmatpush2.msra.mxu0 0.0
      %3692 = vmatprep.subr.mxu0 0.0
      %3693 = vmatpush2.msra.mxu0 0.0
      %3694 = vmatprep.subr.mxu0 0.0
      %3695 = vmatpush2.msra.mxu0 0.0
      %3696 = vmatprep.subr.mxu0 0.0
      %3697 = vmatpush2.msra.mxu0 0.0
      %3698 = vmatprep.subr.mxu0 0.0
      %3699 = vmatpush2.msra.mxu0 0.0
      %3700 = vmatprep.subr.mxu0 0.0
      %3701 = vmatpush2.msra.mxu0 0.0
      %3702 = vmatprep.subr.mxu0 0.0
      %3703 = vmatpush2.msra.mxu0 0.0
      %3704 = vmatprep.subr.mxu0 0.0
      %3705 = vmatpush2.msra.mxu0 0.0
      %3706 = vmatprep.subr.mxu0 0.0
      %3707 = vmatpush2.msra.mxu0 0.0
      %3708 = vmatprep.subr.mxu0 0.0
      %3709 = vmatpush2.msra.mxu0 0.0
      %3710 = vmatprep.subr.mxu0 0.0
      %3711 = vmatpush2.msra.mxu0 0.0
      %3712 = vmatprep.subr.mxu0 0.0
      %3713 = vmatpush2.msra.mxu0 0.0
      %3714 = vmatprep.subr.mxu0 0.0
      %3715 = vmatpush2.msra.mxu0 0.0
      %3716 = vmatprep.mubr.f32.mxu0 0.0
      %3717 = vmatmul.mubr.f32.gmra.mxu0 %v3647
      %v3718 = vpop.f32.mrf.mxu0
      %v3719 = vadd.f32 %v3643, %v3718
      %v3720 = vpop.f32.mrf.mxu0
      %3721 = vmatprep.mubr.f32.mxu0 0.0
      %3722 = vmatmul.mubr.f32.gmra.mxu0 %v3650
      %v3723 = vpop.f32.mrf.mxu0
      %v3724 = vadd.f32 %v3643, %v3723
      %v3725 = vpop.f32.mrf.mxu0
      %3726 = vdwg.mxu0
      %v3727 = vadd.f32 %v3518, %v3719
      %v3728 = vadd.f32 %v3519, %v3724
      %3729 = vmatprep.subr.mxu0 0.0
      %3730 = vmatpush1.msra.mxu0 0.0
      %3731 = vmatprep.subr.mxu0 0.0
      %3732 = vmatpush1.msra.mxu0 0.0
      %3733 = vmatprep.subr.mxu0 0.0
      %3734 = vmatpush1.msra.mxu0 0.0
      %3735 = vmatprep.subr.mxu0 0.0
      %3736 = vmatpush1.msra.mxu0 0.0
      %3737 = vmatprep.subr.mxu0 0.0
      %3738 = vmatpush1.msra.mxu0 0.0
      %3739 = vmatprep.subr.mxu0 0.0
      %3740 = vmatpush1.msra.mxu0 0.0
      %3741 = vmatprep.subr.mxu0 0.0
      %3742 = vmatpush1.msra.mxu0 0.0
      %3743 = vmatprep.subr.mxu0 0.0
      %3744 = vmatpush1.msra.mxu0 0.0
      %3745 = vmatprep.subr.mxu0 0.0
      %3746 = vmatpush1.msra.mxu0 0.0
      %3747 = vmatprep.subr.mxu0 0.0
      %3748 = vmatpush1.msra.mxu0 0.0
      %3749 = vmatprep.subr.mxu0 0.0
      %3750 = vmatpush1.msra.mxu0 0.0
      %3751 = vmatprep.subr.mxu0 0.0
      %3752 = vmatpush1.msra.mxu0 0.0
      %3753 = vmatprep.subr.mxu0 0.0
      %3754 = vmatpush1.msra.mxu0 0.0
      %3755 = vmatprep.subr.mxu0 0.0
      %3756 = vmatpush1.msra.mxu0 0.0
      %3757 = vmatprep.subr.mxu0 0.0
      %3758 = vmatpush1.msra.mxu0 %v3728
      %3759 = vmatprep.subr.mxu0 0.0
      %3760 = vmatpush1.msra.mxu0 %v3727
      %3761 = vmatprep.subr.mxu0 0.0
      %3762 = vmatpush2.msra.mxu0 0.0
      %3763 = vmatprep.subr.mxu0 0.0
      %3764 = vmatpush2.msra.mxu0 0.0
      %3765 = vmatprep.subr.mxu0 0.0
      %3766 = vmatpush2.msra.mxu0 0.0
      %3767 = vmatprep.subr.mxu0 0.0
      %3768 = vmatpush2.msra.mxu0 0.0
      %3769 = vmatprep.subr.mxu0 0.0
      %3770 = vmatpush2.msra.mxu0 0.0
      %3771 = vmatprep.subr.mxu0 0.0
      %3772 = vmatpush2.msra.mxu0 0.0
      %3773 = vmatprep.subr.mxu0 0.0
      %3774 = vmatpush2.msra.mxu0 0.0
      %3775 = vmatprep.subr.mxu0 0.0
      %3776 = vmatpush2.msra.mxu0 0.0
      %3777 = vmatprep.subr.mxu0 0.0
      %3778 = vmatpush2.msra.mxu0 0.0
      %3779 = vmatprep.subr.mxu0 0.0
      %3780 = vmatpush2.msra.mxu0 0.0
      %3781 = vmatprep.subr.mxu0 0.0
      %3782 = vmatpush2.msra.mxu0 0.0
      %3783 = vmatprep.subr.mxu0 0.0
      %3784 = vmatpush2.msra.mxu0 0.0
      %3785 = vmatprep.subr.mxu0 0.0
      %3786 = vmatpush2.msra.mxu0 0.0
      %3787 = vmatprep.subr.mxu0 0.0
      %3788 = vmatpush2.msra.mxu0 0.0
      %3789 = vmatprep.subr.mxu0 0.0
      %3790 = vmatpush2.msra.mxu0 0.0
      %3791 = vmatprep.subr.mxu0 0.0
      %3792 = vmatpush2.msra.mxu0 0.0
      %3793 = vmatprep.mubr.f32.mxu0 0.0
      %3794 = vmatmul.mubr.f32.gmra.mxu0 %v2038
      %v3795 = vpop.f32.mrf.mxu0
      %v3796 = vadd.f32 0.0, %v3795
      %v3797 = vpop.f32.mrf.mxu0
      %3798 = vmatprep.mubr.f32.mxu0 0.0
      %3799 = vmatmul.mubr.f32.gmra.mxu0 %v2041
      %v3800 = vpop.f32.mrf.mxu0
      %v3801 = vadd.f32 0.0, %v3800
      %v3802 = vpop.f32.mrf.mxu0
      %3803 = vdwg.mxu0
      %v3804 = vsub.f32 %v3727, %v3796
      %v3805 = vsub.f32 %v3728, %v3801
      %v3806 = vadd.f32 %v2110, %v3510
      %v3807 = vadd.f32 %v2115, %v3515
      %v3808 = vadd.f32 %v3806, %v3796
      %v3809 = vadd.f32 %v3807, %v3801
      %v3810 = vld [vmem:[%s4] sm:$0xff]
      %v3811 = vld [vmem:[%s4 + $0x8] sm:$0xff]
      %v3813 = vsel %vm989, %v3810, 0
      %v3816 = vsel %vm989, %v3811, 0
      %3818 = vmatprep.subr.mxu0 0.0
      %3819 = vmatpush1.msra.mxu0 0.0
      %3820 = vmatprep.subr.mxu0 0.0
      %3821 = vmatpush1.msra.mxu0 0.0
      %3822 = vmatprep.subr.mxu0 0.0
      %3823 = vmatpush1.msra.mxu0 0.0
      %3824 = vmatprep.subr.mxu0 0.0
      %3825 = vmatpush1.msra.mxu0 0.0
      %3826 = vmatprep.subr.mxu0 0.0
      %3827 = vmatpush1.msra.mxu0 0.0
      %3828 = vmatprep.subr.mxu0 0.0
      %3829 = vmatpush1.msra.mxu0 0.0
      %3830 = vmatprep.subr.mxu0 0.0
      %3831 = vmatpush1.msra.mxu0 0.0
      %3832 = vmatprep.subr.mxu0 0.0
      %3833 = vmatpush1.msra.mxu0 0.0
      %3834 = vmatprep.subr.mxu0 0.0
      %3835 = vmatpush1.msra.mxu0 0.0
      %3836 = vmatprep.subr.mxu0 0.0
      %3837 = vmatpush1.msra.mxu0 0.0
      %3838 = vmatprep.subr.mxu0 0.0
      %3839 = vmatpush1.msra.mxu0 0.0
      %3840 = vmatprep.subr.mxu0 0.0
      %3841 = vmatpush1.msra.mxu0 0.0
      %3842 = vmatprep.subr.mxu0 0.0
      %3843 = vmatpush1.msra.mxu0 0.0
      %3844 = vmatprep.subr.mxu0 0.0
      %3845 = vmatpush1.msra.mxu0 0.0
      %3846 = vmatprep.subr.mxu0 0.0
      %3847 = vmatpush1.msra.mxu0 %v3809
      %3848 = vmatprep.subr.mxu0 0.0
      %3849 = vmatpush1.msra.mxu0 %v3808
      %3850 = vmatprep.subr.mxu0 0.0
      %3851 = vmatpush2.msra.mxu0 0.0
      %3852 = vmatprep.subr.mxu0 0.0
      %3853 = vmatpush2.msra.mxu0 0.0
      %3854 = vmatprep.subr.mxu0 0.0
      %3855 = vmatpush2.msra.mxu0 0.0
      %3856 = vmatprep.subr.mxu0 0.0
      %3857 = vmatpush2.msra.mxu0 0.0
      %3858 = vmatprep.subr.mxu0 0.0
      %3859 = vmatpush2.msra.mxu0 0.0
      %3860 = vmatprep.subr.mxu0 0.0
      %3861 = vmatpush2.msra.mxu0 0.0
      %3862 = vmatprep.subr.mxu0 0.0
      %3863 = vmatpush2.msra.mxu0 0.0
      %3864 = vmatprep.subr.mxu0 0.0
      %3865 = vmatpush2.msra.mxu0 0.0
      %3866 = vmatprep.subr.mxu0 0.0
      %3867 = vmatpush2.msra.mxu0 0.0
      %3868 = vmatprep.subr.mxu0 0.0
      %3869 = vmatpush2.msra.mxu0 0.0
      %3870 = vmatprep.subr.mxu0 0.0
      %3871 = vmatpush2.msra.mxu0 0.0
      %3872 = vmatprep.subr.mxu0 0.0
      %3873 = vmatpush2.msra.mxu0 0.0
      %3874 = vmatprep.subr.mxu0 0.0
      %3875 = vmatpush2.msra.mxu0 0.0
      %3876 = vmatprep.subr.mxu0 0.0
      %3877 = vmatpush2.msra.mxu0 0.0
      %3878 = vmatprep.subr.mxu0 0.0
      %3879 = vmatpush2.msra.mxu0 0.0
      %3880 = vmatprep.subr.mxu0 0.0
      %3881 = vmatpush2.msra.mxu0 0.0
      %3882 = vmatprep.mubr.f32.mxu0 0.0
      %3883 = vmatmul.mubr.f32.gmra.mxu0 %v3813
      %v3884 = vpop.f32.mrf.mxu0
      %v3885 = vadd.f32 0.0, %v3884
      %v3886 = vpop.f32.mrf.mxu0
      %3887 = vmatprep.mubr.f32.mxu0 0.0
      %3888 = vmatmul.mubr.f32.gmra.mxu0 %v3816
      %v3889 = vpop.f32.mrf.mxu0
      %v3890 = vadd.f32 0.0, %v3889
      %v3891 = vpop.f32.mrf.mxu0
      %3892 = vdwg.mxu0
      %v3893 = vld [vmem:[%s5] sm:$0xff]
      %v3894 = vld [vmem:[%s5 + $0x8] sm:$0xff]
      %v3896 = vsel %vm989, %v3893, 0
      %v3899 = vsel %vm989, %v3894, 0
      %3901 = vmatprep.subr.mxu0 0.0
      %3902 = vmatpush1.msra.mxu0 0.0
      %3903 = vmatprep.subr.mxu0 0.0
      %3904 = vmatpush1.msra.mxu0 0.0
      %3905 = vmatprep.subr.mxu0 0.0
      %3906 = vmatpush1.msra.mxu0 0.0
      %3907 = vmatprep.subr.mxu0 0.0
      %3908 = vmatpush1.msra.mxu0 0.0
      %3909 = vmatprep.subr.mxu0 0.0
      %3910 = vmatpush1.msra.mxu0 0.0
      %3911 = vmatprep.subr.mxu0 0.0
      %3912 = vmatpush1.msra.mxu0 0.0
      %3913 = vmatprep.subr.mxu0 0.0
      %3914 = vmatpush1.msra.mxu0 0.0
      %3915 = vmatprep.subr.mxu0 0.0
      %3916 = vmatpush1.msra.mxu0 0.0
      %3917 = vmatprep.subr.mxu0 0.0
      %3918 = vmatpush1.msra.mxu0 0.0
      %3919 = vmatprep.subr.mxu0 0.0
      %3920 = vmatpush1.msra.mxu0 0.0
      %3921 = vmatprep.subr.mxu0 0.0
      %3922 = vmatpush1.msra.mxu0 0.0
      %3923 = vmatprep.subr.mxu0 0.0
      %3924 = vmatpush1.msra.mxu0 0.0
      %3925 = vmatprep.subr.mxu0 0.0
      %3926 = vmatpush1.msra.mxu0 0.0
      %3927 = vmatprep.subr.mxu0 0.0
      %3928 = vmatpush1.msra.mxu0 0.0
      %3929 = vmatprep.subr.mxu0 0.0
      %3930 = vmatpush1.msra.mxu0 %v3809
      %3931 = vmatprep.subr.mxu0 0.0
      %3932 = vmatpush1.msra.mxu0 %v3808
      %3933 = vmatprep.subr.mxu0 0.0
      %3934 = vmatpush2.msra.mxu0 0.0
      %3935 = vmatprep.subr.mxu0 0.0
      %3936 = vmatpush2.msra.mxu0 0.0
      %3937 = vmatprep.subr.mxu0 0.0
      %3938 = vmatpush2.msra.mxu0 0.0
      %3939 = vmatprep.subr.mxu0 0.0
      %3940 = vmatpush2.msra.mxu0 0.0
      %3941 = vmatprep.subr.mxu0 0.0
      %3942 = vmatpush2.msra.mxu0 0.0
      %3943 = vmatprep.subr.mxu0 0.0
      %3944 = vmatpush2.msra.mxu0 0.0
      %3945 = vmatprep.subr.mxu0 0.0
      %3946 = vmatpush2.msra.mxu0 0.0
      %3947 = vmatprep.subr.mxu0 0.0
      %3948 = vmatpush2.msra.mxu0 0.0
      %3949 = vmatprep.subr.mxu0 0.0
      %3950 = vmatpush2.msra.mxu0 0.0
      %3951 = vmatprep.subr.mxu0 0.0
      %3952 = vmatpush2.msra.mxu0 0.0
      %3953 = vmatprep.subr.mxu0 0.0
      %3954 = vmatpush2.msra.mxu0 0.0
      %3955 = vmatprep.subr.mxu0 0.0
      %3956 = vmatpush2.msra.mxu0 0.0
      %3957 = vmatprep.subr.mxu0 0.0
      %3958 = vmatpush2.msra.mxu0 0.0
      %3959 = vmatprep.subr.mxu0 0.0
      %3960 = vmatpush2.msra.mxu0 0.0
      %3961 = vmatprep.subr.mxu0 0.0
      %3962 = vmatpush2.msra.mxu0 0.0
      %3963 = vmatprep.subr.mxu0 0.0
      %3964 = vmatpush2.msra.mxu0 0.0
      %3965 = vmatprep.mubr.f32.mxu0 0.0
      %3966 = vmatmul.mubr.f32.gmra.mxu0 %v3896
      %v3967 = vpop.f32.mrf.mxu0
      %v3968 = vadd.f32 0.0, %v3967
      %v3969 = vpop.f32.mrf.mxu0
      %3970 = vmatprep.mubr.f32.mxu0 0.0
      %3971 = vmatmul.mubr.f32.gmra.mxu0 %v3899
      %v3972 = vpop.f32.mrf.mxu0
      %v3973 = vadd.f32 0.0, %v3972
      %v3974 = vpop.f32.mrf.mxu0
      %3975 = vdwg.mxu0
      %v3976 = vld [vmem:[%s20] sm:$0xff]
      %v3977 = vld [vmem:[%s20 + $0x8] sm:$0xff]
      %v3978 = vld [vmem:[%s20 + $0x10] sm:$0xff]
      %v3979 = vld [vmem:[%s20 + $0x18] sm:$0xff]
      %v3980 = vld [vmem:[%s21] sm:$0xff]
      %v3981 = vld [vmem:[%s21 + $0x8] sm:$0xff]
      %v3982 = vld [vmem:[%s21 + $0x10] sm:$0xff]
      %v3983 = vld [vmem:[%s21 + $0x18] sm:$0xff]
      %v3985 = vsel %vm812, %v3808, 0
      %v3988 = vsel %vm812, %v3809, 0
      %3990 = vmatprep.subr.mxu0 0.0
      %3991 = vmatpush1.msra.mxu0 0.0
      %3992 = vmatprep.subr.mxu0 0.0
      %3993 = vmatpush1.msra.mxu0 0.0
      %3994 = vmatprep.subr.mxu0 0.0
      %3995 = vmatpush1.msra.mxu0 0.0
      %3996 = vmatprep.subr.mxu0 0.0
      %3997 = vmatpush1.msra.mxu0 0.0
      %3998 = vmatprep.subr.mxu0 0.0
      %3999 = vmatpush1.msra.mxu0 0.0
      %4000 = vmatprep.subr.mxu0 0.0
      %4001 = vmatpush1.msra.mxu0 0.0
      %4002 = vmatprep.subr.mxu0 0.0
      %4003 = vmatpush1.msra.mxu0 0.0
      %4004 = vmatprep.subr.mxu0 0.0
      %4005 = vmatpush1.msra.mxu0 0.0
      %4006 = vmatprep.subr.mxu0 0.0
      %4007 = vmatpush1.msra.mxu0 0.0
      %4008 = vmatprep.subr.mxu0 0.0
      %4009 = vmatpush1.msra.mxu0 0.0
      %4010 = vmatprep.subr.mxu0 0.0
      %4011 = vmatpush1.msra.mxu0 0.0
      %4012 = vmatprep.subr.mxu0 0.0
      %4013 = vmatpush1.msra.mxu0 0.0
      %4014 = vmatprep.subr.mxu0 0.0
      %4015 = vmatpush1.msra.mxu0 %v3983
      %4016 = vmatprep.subr.mxu0 0.0
      %4017 = vmatpush1.msra.mxu0 %v3982
      %4018 = vmatprep.subr.mxu0 0.0
      %4019 = vmatpush1.msra.mxu0 %v3981
      %4020 = vmatprep.subr.mxu0 0.0
      %4021 = vmatpush1.msra.mxu0 %v3980
      %4022 = vmatprep.subr.mxu0 0.0
      %4023 = vmatpush2.msra.mxu0 0.0
      %4024 = vmatprep.subr.mxu0 0.0
      %4025 = vmatpush2.msra.mxu0 0.0
      %4026 = vmatprep.subr.mxu0 0.0
      %4027 = vmatpush2.msra.mxu0 0.0
      %4028 = vmatprep.subr.mxu0 0.0
      %4029 = vmatpush2.msra.mxu0 0.0
      %4030 = vmatprep.subr.mxu0 0.0
      %4031 = vmatpush2.msra.mxu0 0.0
      %4032 = vmatprep.subr.mxu0 0.0
      %4033 = vmatpush2.msra.mxu0 0.0
      %4034 = vmatprep.subr.mxu0 0.0
      %4035 = vmatpush2.msra.mxu0 0.0
      %4036 = vmatprep.subr.mxu0 0.0
      %4037 = vmatpush2.msra.mxu0 0.0
      %4038 = vmatprep.subr.mxu0 0.0
      %4039 = vmatpush2.msra.mxu0 0.0
      %4040 = vmatprep.subr.mxu0 0.0
      %4041 = vmatpush2.msra.mxu0 0.0
      %4042 = vmatprep.subr.mxu0 0.0
      %4043 = vmatpush2.msra.mxu0 0.0
      %4044 = vmatprep.subr.mxu0 0.0
      %4045 = vmatpush2.msra.mxu0 0.0
      %4046 = vmatprep.subr.mxu0 0.0
      %4047 = vmatpush2.msra.mxu0 0.0
      %4048 = vmatprep.subr.mxu0 0.0
      %4049 = vmatpush2.msra.mxu0 0.0
      %4050 = vmatprep.subr.mxu0 0.0
      %4051 = vmatpush2.msra.mxu0 0.0
      %4052 = vmatprep.subr.mxu0 0.0
      %4053 = vmatpush2.msra.mxu0 0.0
      %4054 = vmatprep.mubr.f32.mxu0 0.0
      %4055 = vmatmul.mubr.f32.gmra.mxu0 %v3985
      %v4056 = vpop.f32.mrf.mxu0
      %v4057 = vadd.f32 0.0, %v4056
      %v4058 = vpop.f32.mrf.mxu0
      %4059 = vmatprep.mubr.f32.mxu0 0.0
      %4060 = vmatmul.mubr.f32.gmra.mxu0 %v3988
      %v4061 = vpop.f32.mrf.mxu0
      %v4062 = vadd.f32 0.0, %v4061
      %v4063 = vpop.f32.mrf.mxu0
      %4064 = vdwg.mxu0
      %v4066 = vsel %vm812, %v3885, 0
      %v4069 = vsel %vm812, %v3890, 0
      %4071 = vmatprep.subr.mxu0 0.0
      %4072 = vmatpush1.msra.mxu0 0.0
      %4073 = vmatprep.subr.mxu0 0.0
      %4074 = vmatpush1.msra.mxu0 0.0
      %4075 = vmatprep.subr.mxu0 0.0
      %4076 = vmatpush1.msra.mxu0 0.0
      %4077 = vmatprep.subr.mxu0 0.0
      %4078 = vmatpush1.msra.mxu0 0.0
      %4079 = vmatprep.subr.mxu0 0.0
      %4080 = vmatpush1.msra.mxu0 0.0
      %4081 = vmatprep.subr.mxu0 0.0
      %4082 = vmatpush1.msra.mxu0 0.0
      %4083 = vmatprep.subr.mxu0 0.0
      %4084 = vmatpush1.msra.mxu0 0.0
      %4085 = vmatprep.subr.mxu0 0.0
      %4086 = vmatpush1.msra.mxu0 0.0
      %4087 = vmatprep.subr.mxu0 0.0
      %4088 = vmatpush1.msra.mxu0 0.0
      %4089 = vmatprep.subr.mxu0 0.0
      %4090 = vmatpush1.msra.mxu0 0.0
      %4091 = vmatprep.subr.mxu0 0.0
      %4092 = vmatpush1.msra.mxu0 0.0
      %4093 = vmatprep.subr.mxu0 0.0
      %4094 = vmatpush1.msra.mxu0 0.0
      %4095 = vmatprep.subr.mxu0 0.0
      %4096 = vmatpush1.msra.mxu0 %v3979
      %4097 = vmatprep.subr.mxu0 0.0
      %4098 = vmatpush1.msra.mxu0 %v3978
      %4099 = vmatprep.subr.mxu0 0.0
      %4100 = vmatpush1.msra.mxu0 %v3977
      %4101 = vmatprep.subr.mxu0 0.0
      %4102 = vmatpush1.msra.mxu0 %v3976
      %4103 = vmatprep.subr.mxu0 0.0
      %4104 = vmatpush2.msra.mxu0 0.0
      %4105 = vmatprep.subr.mxu0 0.0
      %4106 = vmatpush2.msra.mxu0 0.0
      %4107 = vmatprep.subr.mxu0 0.0
      %4108 = vmatpush2.msra.mxu0 0.0
      %4109 = vmatprep.subr.mxu0 0.0
      %4110 = vmatpush2.msra.mxu0 0.0
      %4111 = vmatprep.subr.mxu0 0.0
      %4112 = vmatpush2.msra.mxu0 0.0
      %4113 = vmatprep.subr.mxu0 0.0
      %4114 = vmatpush2.msra.mxu0 0.0
      %4115 = vmatprep.subr.mxu0 0.0
      %4116 = vmatpush2.msra.mxu0 0.0
      %4117 = vmatprep.subr.mxu0 0.0
      %4118 = vmatpush2.msra.mxu0 0.0
      %4119 = vmatprep.subr.mxu0 0.0
      %4120 = vmatpush2.msra.mxu0 0.0
      %4121 = vmatprep.subr.mxu0 0.0
      %4122 = vmatpush2.msra.mxu0 0.0
      %4123 = vmatprep.subr.mxu0 0.0
      %4124 = vmatpush2.msra.mxu0 0.0
      %4125 = vmatprep.subr.mxu0 0.0
      %4126 = vmatpush2.msra.mxu0 0.0
      %4127 = vmatprep.subr.mxu0 0.0
      %4128 = vmatpush2.msra.mxu0 0.0
      %4129 = vmatprep.subr.mxu0 0.0
      %4130 = vmatpush2.msra.mxu0 0.0
      %4131 = vmatprep.subr.mxu0 0.0
      %4132 = vmatpush2.msra.mxu0 0.0
      %4133 = vmatprep.subr.mxu0 0.0
      %4134 = vmatpush2.msra.mxu0 0.0
      %4135 = vmatprep.mubr.f32.mxu0 0.0
      %4136 = vmatmul.mubr.f32.gmra.mxu0 %v4066
      %v4137 = vpop.f32.mrf.mxu0
      %v4138 = vadd.f32 %v4057, %v4137
      %v4139 = vpop.f32.mrf.mxu0
      %4140 = vmatprep.mubr.f32.mxu0 0.0
      %4141 = vmatmul.mubr.f32.gmra.mxu0 %v4069
      %v4142 = vpop.f32.mrf.mxu0
      %v4143 = vadd.f32 %v4062, %v4142
      %v4144 = vpop.f32.mrf.mxu0
      %4145 = vdwg.mxu0
      %v4146 = vld [vmem:[%s22] sm:$0xff]
      %v4147 = vld [vmem:[%s22 + $0x8] sm:$0xff]
      %v4148 = vld [vmem:[%s22 + $0x10] sm:$0xff]
      %v4149 = vld [vmem:[%s22 + $0x18] sm:$0xff]
      %v4151 = vsel %vm812, %v3968, 0
      %v4154 = vsel %vm812, %v3973, 0
      %4156 = vmatprep.subr.mxu0 0.0
      %4157 = vmatpush1.msra.mxu0 0.0
      %4158 = vmatprep.subr.mxu0 0.0
      %4159 = vmatpush1.msra.mxu0 0.0
      %4160 = vmatprep.subr.mxu0 0.0
      %4161 = vmatpush1.msra.mxu0 0.0
      %4162 = vmatprep.subr.mxu0 0.0
      %4163 = vmatpush1.msra.mxu0 0.0
      %4164 = vmatprep.subr.mxu0 0.0
      %4165 = vmatpush1.msra.mxu0 0.0
      %4166 = vmatprep.subr.mxu0 0.0
      %4167 = vmatpush1.msra.mxu0 0.0
      %4168 = vmatprep.subr.mxu0 0.0
      %4169 = vmatpush1.msra.mxu0 0.0
      %4170 = vmatprep.subr.mxu0 0.0
      %4171 = vmatpush1.msra.mxu0 0.0
      %4172 = vmatprep.subr.mxu0 0.0
      %4173 = vmatpush1.msra.mxu0 0.0
      %4174 = vmatprep.subr.mxu0 0.0
      %4175 = vmatpush1.msra.mxu0 0.0
      %4176 = vmatprep.subr.mxu0 0.0
      %4177 = vmatpush1.msra.mxu0 0.0
      %4178 = vmatprep.subr.mxu0 0.0
      %4179 = vmatpush1.msra.mxu0 0.0
      %4180 = vmatprep.subr.mxu0 0.0
      %4181 = vmatpush1.msra.mxu0 %v4149
      %4182 = vmatprep.subr.mxu0 0.0
      %4183 = vmatpush1.msra.mxu0 %v4148
      %4184 = vmatprep.subr.mxu0 0.0
      %4185 = vmatpush1.msra.mxu0 %v4147
      %4186 = vmatprep.subr.mxu0 0.0
      %4187 = vmatpush1.msra.mxu0 %v4146
      %4188 = vmatprep.subr.mxu0 0.0
      %4189 = vmatpush2.msra.mxu0 0.0
      %4190 = vmatprep.subr.mxu0 0.0
      %4191 = vmatpush2.msra.mxu0 0.0
      %4192 = vmatprep.subr.mxu0 0.0
      %4193 = vmatpush2.msra.mxu0 0.0
      %4194 = vmatprep.subr.mxu0 0.0
      %4195 = vmatpush2.msra.mxu0 0.0
      %4196 = vmatprep.subr.mxu0 0.0
      %4197 = vmatpush2.msra.mxu0 0.0
      %4198 = vmatprep.subr.mxu0 0.0
      %4199 = vmatpush2.msra.mxu0 0.0
      %4200 = vmatprep.subr.mxu0 0.0
      %4201 = vmatpush2.msra.mxu0 0.0
      %4202 = vmatprep.subr.mxu0 0.0
      %4203 = vmatpush2.msra.mxu0 0.0
      %4204 = vmatprep.subr.mxu0 0.0
      %4205 = vmatpush2.msra.mxu0 0.0
      %4206 = vmatprep.subr.mxu0 0.0
      %4207 = vmatpush2.msra.mxu0 0.0
      %4208 = vmatprep.subr.mxu0 0.0
      %4209 = vmatpush2.msra.mxu0 0.0
      %4210 = vmatprep.subr.mxu0 0.0
      %4211 = vmatpush2.msra.mxu0 0.0
      %4212 = vmatprep.subr.mxu0 0.0
      %4213 = vmatpush2.msra.mxu0 0.0
      %4214 = vmatprep.subr.mxu0 0.0
      %4215 = vmatpush2.msra.mxu0 0.0
      %4216 = vmatprep.subr.mxu0 0.0
      %4217 = vmatpush2.msra.mxu0 0.0
      %4218 = vmatprep.subr.mxu0 0.0
      %4219 = vmatpush2.msra.mxu0 0.0
      %4220 = vmatprep.mubr.f32.mxu0 0.0
      %4221 = vmatmul.mubr.f32.gmra.mxu0 %v4151
      %v4222 = vpop.f32.mrf.mxu0
      %v4223 = vadd.f32 0.0, %v4222
      %v4224 = vpop.f32.mrf.mxu0
      %4225 = vmatprep.mubr.f32.mxu0 0.0
      %4226 = vmatmul.mubr.f32.gmra.mxu0 %v4154
      %v4227 = vpop.f32.mrf.mxu0
      %v4228 = vadd.f32 0.0, %v4227
      %v4229 = vpop.f32.mrf.mxu0
      %4230 = vdwg.mxu0
      %v4231 = vadd.f32 %v4138, %v4223
      %v4232 = vadd.f32 %v4143, %v4228
      %4233 = vst.msk [vmem:[%s785] sm:$0xff] %vm812, %v3804
      %4234 = vst.msk [vmem:[%s785 + $0x8] sm:$0xff] %vm812, %v3805
      %4235 = vst [vmem:[%s790] sm:$0xff] %v4231
      %4236 = vst [vmem:[%s790 + $0x8] sm:$0xff] %v4232
      %p4237 = scmp.lt.s32.totalorder %s36, 1
      %s4238 = scalar_select %p4237, %s36, 1
      %s4239 = smul.addr %s4238, 2
      %s4240 = smul.addr %s4239, 8
      %s4241 = scalar_lea.vmem %s23, %s4240
      %p4242 = scmp.lt.s32.totalorder %s36, 1
      %s4243 = scalar_select %p4242, %s36, 1
      %s4244 = smul.addr %s4243, 2
      %s4245 = smul.addr %s4244, 8
      %s4246 = scalar_lea.vmem %s24, %s4245
      // Predicated region
      $region113: #{forward.12} parent=111 // pred_check
        %p4247 = pneg %p552
      $region114: #{forward.12} parent=111 // pred_check_branch
        %4249 = sbr.rel (%p4247) target = $region116
      $region115: #{forward.12} parent=111 // pred_region
        _
      $region116: #{forward.12} parent=111 // pred_fallthru
        _
      // Predicated region
      $region117: #{forward.12} parent=111 // pred_check
        %p4250 = pneg %p578
      $region118: #{forward.12} parent=111 // pred_check_branch
        %4252 = sbr.rel (%p4250) target = $region120
      $region119: #{forward.12} parent=111 // pred_region
        _
      $region120: #{forward.12} parent=111 // pred_fallthru
        _
    $region112: #{forward.12} parent=5 // pred_fallthru
      _
    %p4253 = scmp.le.s32.totalorder 2, %s31
    // Predicated region
    $region121: #{forward.12} parent=5 // pred_check
      %p4254 = pneg %p4253
    $region122: #{forward.12} parent=5 // pred_check_branch
      %4256 = sbr.rel (%p4254) target = $region124
    $region123: #{forward.12} parent=5 // pred_region
      %s4257 = ssub.s32 %s31, 2
      // Predicated region
      $region125: #{forward.12} parent=123 // pred_check
        %p4258 = pneg %p558
      $region126: #{forward.12} parent=123 // pred_check_branch
        %4260 = sbr.rel (%p4258) target = $region128
      $region127: #{forward.12} parent=123 // pred_region
        %p4261 = scmp.lt.s32.totalorder %s37, 1
        %s4262 = scalar_select %p4261, %s37, 1
        %s4263 = smul.addr %s4262, 2
        %s4264 = smul.addr %s4263, 8
        %s4265 = scalar_lea.vmem %s23, %s4264
      $region128: #{forward.12} parent=123 // pred_fallthru
        _
      // Predicated region
      $region129: #{forward.12} parent=123 // pred_check
        %p4266 = pneg %p584
      $region130: #{forward.12} parent=123 // pred_check_branch
        %4268 = sbr.rel (%p4266) target = $region132
      $region131: #{forward.12} parent=123 // pred_region
        %p4269 = scmp.lt.s32.totalorder %s37, 1
        %s4270 = scalar_select %p4269, %s37, 1
        %s4271 = smul.addr %s4270, 2
        %s4272 = smul.addr %s4271, 8
        %s4273 = scalar_lea.vmem %s24, %s4272
      $region132: #{forward.12} parent=123 // pred_fallthru
        _
    $region124: #{forward.12} parent=5 // pred_fallthru
      _
  $region6: #{forward.12} parent=0 // loop_footer
    %s35 = sadd.s32 1, %s31
  $region7: #{forward.12} parent=0 // loop_footer_branch
    %30 = sbr.rel target = $region3
  $region8: #{forward.12} parent=0 // loop_exit
    _

</llo_original>
